<compile_context>
chip_gen: v6e
topology: v6e:2x2x1
jax: 0.10.0
libtpu: 0.0.40
codegen_flags: <defaults>
</compile_context>

<pallas_src>
import jax
import jax.numpy as jnp
from jax import lax
from jax.experimental import pallas as pl
from jax.experimental.pallas import tpu as pltpu

NEG_SLOPE = 0.01   # nn.LeakyReLU default
BN_EPS = 1e-5      # nn.BatchNorm2d default
LANES = 128


def _round_up(x, m):
    return (x + m - 1) // m * m


def _make_kernel(upsample):
    def kernel(*refs):
        if upsample:
            (xp1_ref, resw_ref, w1_ref, g1_ref, be1_ref,
             w2_ref, g2_ref, be2_ref, out_ref, pad_ref) = refs
        else:
            (xp1_ref, w1_ref, g1_ref, be1_ref,
             w2_ref, g2_ref, be2_ref, out_ref, pad_ref) = refs

        N, Ho, Wo, Cp = out_ref.shape
        M = N * Ho * Wo
        inv_m = 1.0 / M
        Wp2 = pad_ref.shape[2]          # padded-W (multiple of 8 sublanes)

        def conv3x3(src_ref, w_ref):
            # 3 MXU matmuls per conv (one per kernel row); the 3 kw taps are
            # fused along the contraction dim.  bf16 operands, f32 accumulate.
            acc = jnp.zeros((M, Cp), jnp.float32)
            for kh in range(3):
                slab = src_ref[:, kh:kh + Ho, :, :]            # (N,Ho,Wp2,Cp)
                patch = jnp.concatenate(
                    [slab[:, :, 0:Wo, :],
                     slab[:, :, 1:Wo + 1, :],
                     slab[:, :, 2:Wo + 2, :]], axis=-1)        # (N,Ho,Wo,3Cp)
                patch = patch.reshape(M, 3 * Cp).astype(jnp.bfloat16)
                acc = acc + jnp.dot(patch, w_ref[kh],
                                    preferred_element_type=jnp.float32)
            return acc

        def bn_affine(y, g_ref, be_ref):
            # Training-mode BatchNorm2d folded into one affine pass:
            # single sum / sum-of-squares reduction, then y*scale + shift.
            s1 = jnp.sum(y, axis=0, keepdims=True)
            s2 = jnp.sum(y * y, axis=0, keepdims=True)
            mean = s1 * inv_m
            var = s2 * inv_m - mean * mean
            scale = g_ref[...] * lax.rsqrt(var + BN_EPS)
            shift = be_ref[...] - mean * scale
            return y * scale + shift

        # conv1 -> BN1 -> LeakyReLU (bias-free: cancelled by BN mean subtract)
        h = conv3x3(xp1_ref, w1_ref)
        h = bn_affine(h, g1_ref, be1_ref)
        h = jnp.where(h >= 0, h, NEG_SLOPE * h)

        # Re-pad for conv2: zero only the 1-wide halo, then one interior store.
        pad_ref[:, 0:1, :, :] = jnp.zeros((N, 1, Wp2, Cp), jnp.float32)
        pad_ref[:, Ho + 1:Ho + 2, :, :] = jnp.zeros((N, 1, Wp2, Cp), jnp.float32)
        pad_ref[:, :, 0:1, :] = jnp.zeros((N, Ho + 2, 1, Cp), jnp.float32)
        pad_ref[:, :, Wo + 1:Wo + 2, :] = jnp.zeros((N, Ho + 2, 1, Cp), jnp.float32)
        pad_ref[:, 1:Ho + 1, 1:Wo + 1, :] = h.reshape(N, Ho, Wo, Cp)

        # conv2 -> BN2
        y = conv3x3(pad_ref, w2_ref)
        y = bn_affine(y, g2_ref, be2_ref)

        # Residual branch.
        if upsample:
            # W already 2x nearest-replicated by the wrapper; replicate H here
            # (leading-dim broadcast + reshape == cheap tile-row duplication).
            Hh = Ho // 2
            rw = resw_ref[...].reshape(N * Hh, 1, Wo, Cp)
            res = jnp.broadcast_to(rw, (N * Hh, 2, Wo, Cp)).reshape(N, Ho, Wo, Cp)
        else:
            res = xp1_ref[:, 1:Ho + 1, 1:Wo + 1, :]   # interior of padded x

        out_ref[...] = res + y.reshape(N, Ho, Wo, Cp)

    return kernel


def init_params(key, C, upsample):
    k = jax.random.split(key, 4)
    # upsample=True : w1 is ConvTranspose2d weight (Cin, Cout, kh, kw)
    # upsample=False: w1 is Conv2d weight          (Cout, Cin, kh, kw)
    w1 = 0.1 * jax.random.normal(k[0], (C, C, 3, 3), jnp.float32)
    b1 = 0.1 * jax.random.normal(k[1], (C,), jnp.float32)
    w2 = 0.1 * jax.random.normal(k[2], (C, C, 3, 3), jnp.float32)  # Conv2d
    b2 = 0.1 * jax.random.normal(k[3], (C,), jnp.float32)
    return dict(
        w1=w1, b1=b1, w2=w2, b2=b2,
        g1=jnp.ones((C,), jnp.float32), be1=jnp.zeros((C,), jnp.float32),
        g2=jnp.ones((C,), jnp.float32), be2=jnp.zeros((C,), jnp.float32),
    )


def resnet_block_pallas(x, params, upsample):
    """x: NCHW float32 (PyTorch convention). Returns NCHW."""
    N, C, H, W = x.shape
    Cp = _round_up(max(C, LANES), LANES)        # lane-dense channel padding
    cpad = Cp - C

    xh = jnp.transpose(x, (0, 2, 3, 1)).astype(jnp.float32)       # NHWC
    xh = jnp.pad(xh, ((0, 0), (0, 0), (0, 0), (0, cpad)))

    if upsample:
        Ho, Wo = 2 * H, 2 * W
        # ConvTranspose2d(k=3, s=2, p=1, out_p=1) == 3x3 conv over a zero-
        # dilated input padded (low=1, high=2) with spatially flipped,
        # channel-swapped weights.
        xd = jnp.zeros((N, 2 * H - 1, 2 * W - 1, Cp), jnp.float32)
        xd = xd.at[:, ::2, ::2, :].set(xh)
        xp1 = jnp.pad(xd, ((0, 0), (1, 2), (1, 2), (0, 0)))
        w1_hwio = jnp.flip(jnp.transpose(params["w1"], (2, 3, 0, 1)), axis=(0, 1))
        # Residual nearest-2x: W replicated here, H replicated in-kernel.
        resw = jnp.repeat(xh, 2, axis=2)                          # (N,H,Wo,Cp)
    else:
        Ho, Wo = H, W
        xp1 = jnp.pad(xh, ((0, 0), (1, 1), (1, 1), (0, 0)))
        w1_hwio = jnp.transpose(params["w1"], (2, 3, 1, 0))       # (kh,kw,Ci,Co)
        resw = None

    # Pad the W axis of the padded buffers up to a multiple of 8 sublanes.
    Wp2 = _round_up(Wo + 2, 8)
    xp1 = jnp.pad(xp1, ((0, 0), (0, 0), (0, Wp2 - (Wo + 2)), (0, 0)))

    w2_hwio = jnp.transpose(params["w2"], (2, 3, 1, 0))

    def prep_taps(w_hwio):
        # (3,3,C,C)(kh,kw,Ci,Co) -> (3, 3*Cp, Cp) bf16; kw fused along K.
        wp = jnp.pad(w_hwio, ((0, 0), (0, 0), (0, cpad), (0, cpad)))
        return wp.reshape(3, 3 * Cp, Cp).astype(jnp.bfloat16)

    row = lambda v: jnp.pad(v, (0, cpad)).reshape(1, Cp).astype(jnp.float32)
    # Conv biases b1/b2 are intentionally not passed to the kernel:
    # training-mode BN subtracts the batch mean, which cancels them exactly.

    inputs = [xp1] + ([resw] if upsample else []) + [
        prep_taps(w1_hwio), row(params["g1"]), row(params["be1"]),
        prep_taps(w2_hwio), row(params["g2"]), row(params["be2"]),
    ]

    vmem = pl.BlockSpec(memory_space=pltpu.MemorySpace.VMEM)
    out = pl.pallas_call(
        _make_kernel(upsample),
        out_shape=jax.ShapeDtypeStruct((N, Ho, Wo, Cp), jnp.float32),
        in_specs=[vmem] * len(inputs),
        out_specs=vmem,
        scratch_shapes=[pltpu.VMEM((N, Ho + 2, Wp2, Cp), jnp.float32)],
    )(*inputs)

    return jnp.transpose(out[:, :, :, :C], (0, 3, 1, 2))          # back to NCHW


def resnet_block_ref(x, params, upsample):
    """Pure-JAX reference of the PyTorch forward (training-mode BN, f32)."""
    dn = ("NCHW", "OIHW", "NCHW")

    def bn(y, g, b):
        mean = jnp.mean(y, axis=(0, 2, 3), keepdims=True)
        var = jnp.mean((y - mean) ** 2, axis=(0, 2, 3), keepdims=True)
        return ((y - mean) * lax.rsqrt(var + BN_EPS)
                * g[None, :, None, None] + b[None, :, None, None])

    if upsample:
        w1_oihw = jnp.flip(jnp.transpose(params["w1"], (1, 0, 2, 3)), axis=(2, 3))
        y = lax.conv_general_dilated(x, w1_oihw, (1, 1), ((1, 2), (1, 2)),
                                     lhs_dilation=(2, 2), dimension_numbers=dn)
        res = jnp.repeat(jnp.repeat(x, 2, axis=2), 2, axis=3)
    else:
        y = lax.conv_general_dilated(x, params["w1"], (1, 1), ((1, 1), (1, 1)),
                                     dimension_numbers=dn)
        res = x
    y = y + params["b1"][None, :, None, None]
    y = bn(y, params["g1"], params["be1"])
    y = jnp.where(y >= 0, y, NEG_SLOPE * y)
    y = lax.conv_general_dilated(y, params["w2"], (1, 1), ((1, 1), (1, 1)),
                                 dimension_numbers=dn)
    y = y + params["b2"][None, :, None, None]
    y = bn(y, params["g2"], params["be2"])
    return res + y


if __name__ == "__main__":
    key = jax.random.PRNGKey(0)
    kx, kp0, kp1 = jax.random.split(key, 3)
    x = jax.random.normal(kx, (2, 4, 16, 16), jnp.float32)  # N=2, C=4, H=W=16

    for upsample, kp in ((False, kp0), (True, kp1)):
        params = init_params(kp, 4, upsample)
        out = jax.block_until_ready(resnet_block_pallas(x, params, upsample))
        ref = resnet_block_ref(x, params, upsample)
        assert out.shape == ref.shape, (out.shape, ref.shape)
        err = float(jnp.max(jnp.abs(out - ref)))
        # bf16 MXU operands (f32 accumulate / f32 reference) -> relaxed tol.
        assert err < 5e-2, f"max abs err {err} (upsample={upsample})"

    print("KERNEL_OK")
</pallas_src>

<mosaic_0001>
module attributes {stable_mosaic.version = 11 : i64} {
  func.func @kernel(%arg0: memref<2x18x24x128xf32, #tpu.memory_space<vmem>>, %arg1: memref<3x384x128xbf16, #tpu.memory_space<vmem>>, %arg2: memref<1x128xf32, #tpu.memory_space<vmem>>, %arg3: memref<1x128xf32, #tpu.memory_space<vmem>>, %arg4: memref<3x384x128xbf16, #tpu.memory_space<vmem>>, %arg5: memref<1x128xf32, #tpu.memory_space<vmem>>, %arg6: memref<1x128xf32, #tpu.memory_space<vmem>>, %arg7: memref<2x16x16x128xf32, #tpu.memory_space<vmem>>, %arg8: memref<2x18x24x128xf32, #tpu.memory_space<vmem>>) attributes {dimension_semantics = [], scalar_prefetch = 0 : i64, scratch_operands = 1 : i64, tpu.core_type = #tpu.core_type<tc>} {
    %cst = arith.constant 0.000000e+00 : f32
    %0 = vector.broadcast %cst : f32 to vector<512x128xf32>
    %c0 = arith.constant 0 : index
    %c0_0 = arith.constant 0 : index
    %c0_1 = arith.constant 0 : index
    %c0_2 = arith.constant 0 : index
    %1 = vector.load %arg0[%c0, %c0_0, %c0_1, %c0_2] : memref<2x18x24x128xf32, #tpu.memory_space<vmem>>, vector<2x16x24x128xf32>
    %2 = vector.extract_strided_slice %1 {offsets = [0, 0, 0, 0], sizes = [2, 16, 16, 128], strides = [1, 1, 1, 1]} : vector<2x16x24x128xf32> to vector<2x16x16x128xf32>
    %3 = vector.extract_strided_slice %1 {offsets = [0, 0, 1, 0], sizes = [2, 16, 16, 128], strides = [1, 1, 1, 1]} : vector<2x16x24x128xf32> to vector<2x16x16x128xf32>
    %4 = vector.extract_strided_slice %1 {offsets = [0, 0, 2, 0], sizes = [2, 16, 16, 128], strides = [1, 1, 1, 1]} : vector<2x16x24x128xf32> to vector<2x16x16x128xf32>
    %5 = tpu.concatenate %2, %3, %4 in 3 : vector<2x16x16x128xf32>, vector<2x16x16x128xf32>, vector<2x16x16x128xf32> -> vector<2x16x16x384xf32>
    %6 = vector.shape_cast %5 : vector<2x16x16x384xf32> to vector<512x384xf32>
    %7 = arith.truncf %6 : vector<512x384xf32> to vector<512x384xbf16>
    %c0_3 = arith.constant 0 : index
    %c0_4 = arith.constant 0 : index
    %c0_5 = arith.constant 0 : index
    %8 = vector.load %arg1[%c0_3, %c0_4, %c0_5] : memref<3x384x128xbf16, #tpu.memory_space<vmem>>, vector<1x384x128xbf16>
    %9 = vector.shape_cast %8 : vector<1x384x128xbf16> to vector<384x128xbf16>
    %cst_6 = arith.constant dense<0.000000e+00> : vector<512x128xf32>
    %10 = tpu.matmul %7, %9, %cst_6 {dimension_numbers = #tpu.dot_dimension_numbers<[1], [0], [0], [1], [0, 0, 1, 1], [], []>} : vector<512x384xbf16>, vector<384x128xbf16>, vector<512x128xf32> -> vector<512x128xf32>
    %11 = arith.addf %0, %10 : vector<512x128xf32>
    %c0_7 = arith.constant 0 : index
    %c1 = arith.constant 1 : index
    %c0_8 = arith.constant 0 : index
    %c0_9 = arith.constant 0 : index
    %12 = vector.load %arg0[%c0_7, %c1, %c0_8, %c0_9] : memref<2x18x24x128xf32, #tpu.memory_space<vmem>>, vector<2x16x24x128xf32>
    %13 = vector.extract_strided_slice %12 {offsets = [0, 0, 0, 0], sizes = [2, 16, 16, 128], strides = [1, 1, 1, 1]} : vector<2x16x24x128xf32> to vector<2x16x16x128xf32>
    %14 = vector.extract_strided_slice %12 {offsets = [0, 0, 1, 0], sizes = [2, 16, 16, 128], strides = [1, 1, 1, 1]} : vector<2x16x24x128xf32> to vector<2x16x16x128xf32>
    %15 = vector.extract_strided_slice %12 {offsets = [0, 0, 2, 0], sizes = [2, 16, 16, 128], strides = [1, 1, 1, 1]} : vector<2x16x24x128xf32> to vector<2x16x16x128xf32>
    %16 = tpu.concatenate %13, %14, %15 in 3 : vector<2x16x16x128xf32>, vector<2x16x16x128xf32>, vector<2x16x16x128xf32> -> vector<2x16x16x384xf32>
    %17 = vector.shape_cast %16 : vector<2x16x16x384xf32> to vector<512x384xf32>
    %18 = arith.truncf %17 : vector<512x384xf32> to vector<512x384xbf16>
    %c1_10 = arith.constant 1 : index
    %c0_11 = arith.constant 0 : index
    %c0_12 = arith.constant 0 : index
    %19 = vector.load %arg1[%c1_10, %c0_11, %c0_12] : memref<3x384x128xbf16, #tpu.memory_space<vmem>>, vector<1x384x128xbf16>
    %20 = vector.shape_cast %19 : vector<1x384x128xbf16> to vector<384x128xbf16>
    %cst_13 = arith.constant dense<0.000000e+00> : vector<512x128xf32>
    %21 = tpu.matmul %18, %20, %cst_13 {dimension_numbers = #tpu.dot_dimension_numbers<[1], [0], [0], [1], [0, 0, 1, 1], [], []>} : vector<512x384xbf16>, vector<384x128xbf16>, vector<512x128xf32> -> vector<512x128xf32>
    %22 = arith.addf %11, %21 : vector<512x128xf32>
    %c0_14 = arith.constant 0 : index
    %c2 = arith.constant 2 : index
    %c0_15 = arith.constant 0 : index
    %c0_16 = arith.constant 0 : index
    %23 = vector.load %arg0[%c0_14, %c2, %c0_15, %c0_16] : memref<2x18x24x128xf32, #tpu.memory_space<vmem>>, vector<2x16x24x128xf32>
    %24 = vector.extract_strided_slice %23 {offsets = [0, 0, 0, 0], sizes = [2, 16, 16, 128], strides = [1, 1, 1, 1]} : vector<2x16x24x128xf32> to vector<2x16x16x128xf32>
    %25 = vector.extract_strided_slice %23 {offsets = [0, 0, 1, 0], sizes = [2, 16, 16, 128], strides = [1, 1, 1, 1]} : vector<2x16x24x128xf32> to vector<2x16x16x128xf32>
    %26 = vector.extract_strided_slice %23 {offsets = [0, 0, 2, 0], sizes = [2, 16, 16, 128], strides = [1, 1, 1, 1]} : vector<2x16x24x128xf32> to vector<2x16x16x128xf32>
    %27 = tpu.concatenate %24, %25, %26 in 3 : vector<2x16x16x128xf32>, vector<2x16x16x128xf32>, vector<2x16x16x128xf32> -> vector<2x16x16x384xf32>
    %28 = vector.shape_cast %27 : vector<2x16x16x384xf32> to vector<512x384xf32>
    %29 = arith.truncf %28 : vector<512x384xf32> to vector<512x384xbf16>
    %c2_17 = arith.constant 2 : index
    %c0_18 = arith.constant 0 : index
    %c0_19 = arith.constant 0 : index
    %30 = vector.load %arg1[%c2_17, %c0_18, %c0_19] : memref<3x384x128xbf16, #tpu.memory_space<vmem>>, vector<1x384x128xbf16>
    %31 = vector.shape_cast %30 : vector<1x384x128xbf16> to vector<384x128xbf16>
    %cst_20 = arith.constant dense<0.000000e+00> : vector<512x128xf32>
    %32 = tpu.matmul %29, %31, %cst_20 {dimension_numbers = #tpu.dot_dimension_numbers<[1], [0], [0], [1], [0, 0, 1, 1], [], []>} : vector<512x384xbf16>, vector<384x128xbf16>, vector<512x128xf32> -> vector<512x128xf32>
    %33 = arith.addf %22, %32 : vector<512x128xf32>
    %cst_21 = arith.constant dense<0.000000e+00> : vector<128xf32>
    %34 = vector.multi_reduction <add>, %33, %cst_21 [0] : vector<512x128xf32> to vector<128xf32>
    %35 = vector.shape_cast %34 : vector<128xf32> to vector<1x128xf32>
    %36 = arith.mulf %33, %33 : vector<512x128xf32>
    %cst_22 = arith.constant dense<0.000000e+00> : vector<128xf32>
    %37 = vector.multi_reduction <add>, %36, %cst_22 [0] : vector<512x128xf32> to vector<128xf32>
    %38 = vector.shape_cast %37 : vector<128xf32> to vector<1x128xf32>
    %cst_23 = arith.constant 0.001953125 : f32
    %39 = vector.broadcast %cst_23 : f32 to vector<1x128xf32>
    %40 = arith.mulf %35, %39 : vector<1x128xf32>
    %cst_24 = arith.constant 0.001953125 : f32
    %41 = vector.broadcast %cst_24 : f32 to vector<1x128xf32>
    %42 = arith.mulf %38, %41 : vector<1x128xf32>
    %43 = arith.mulf %40, %40 : vector<1x128xf32>
    %44 = arith.subf %42, %43 : vector<1x128xf32>
    %c0_25 = arith.constant 0 : index
    %c0_26 = arith.constant 0 : index
    %45 = vector.load %arg2[%c0_25, %c0_26] : memref<1x128xf32, #tpu.memory_space<vmem>>, vector<1x128xf32>
    %cst_27 = arith.constant 9.99999974E-6 : f32
    %46 = vector.broadcast %cst_27 : f32 to vector<1x128xf32>
    %47 = arith.addf %44, %46 : vector<1x128xf32>
    %48 = math.rsqrt %47 : vector<1x128xf32>
    %49 = arith.mulf %45, %48 : vector<1x128xf32>
    %c0_28 = arith.constant 0 : index
    %c0_29 = arith.constant 0 : index
    %50 = vector.load %arg3[%c0_28, %c0_29] : memref<1x128xf32, #tpu.memory_space<vmem>>, vector<1x128xf32>
    %51 = arith.mulf %40, %49 : vector<1x128xf32>
    %52 = arith.subf %50, %51 : vector<1x128xf32>
    %53 = vector.broadcast %49 : vector<1x128xf32> to vector<512x128xf32>
    %54 = arith.mulf %33, %53 : vector<512x128xf32>
    %55 = vector.broadcast %52 : vector<1x128xf32> to vector<512x128xf32>
    %56 = arith.addf %54, %55 : vector<512x128xf32>
    %cst_30 = arith.constant 0.000000e+00 : f32
    %57 = vector.broadcast %cst_30 : f32 to vector<512x128xf32>
    %58 = arith.cmpf oge, %56, %57 : vector<512x128xf32>
    %cst_31 = arith.constant 0.00999999977 : f32
    %59 = vector.broadcast %cst_31 : f32 to vector<512x128xf32>
    %60 = arith.mulf %59, %56 : vector<512x128xf32>
    %61 = arith.select %58, %56, %60 : vector<512x128xi1>, vector<512x128xf32>
    %cst_32 = arith.constant 0.000000e+00 : f32
    %62 = vector.broadcast %cst_32 : f32 to vector<2x1x24x128xf32>
    %c0_33 = arith.constant 0 : index
    %c0_34 = arith.constant 0 : index
    %c0_35 = arith.constant 0 : index
    %c0_36 = arith.constant 0 : index
    %63 = vector.load %arg8[%c0_33, %c0_34, %c0_35, %c0_36] : memref<2x18x24x128xf32, #tpu.memory_space<vmem>>, vector<2x1x24x128xf32>
    tpu.vector_store %arg8[%c0_33, %c0_34, %c0_35, %c0_36], %62 {strides = array<i32>} : memref<2x18x24x128xf32, #tpu.memory_space<vmem>>, vector<2x1x24x128xf32>,
    %cst_37 = arith.constant 0.000000e+00 : f32
    %64 = vector.broadcast %cst_37 : f32 to vector<2x1x24x128xf32>
    %c0_38 = arith.constant 0 : index
    %c17 = arith.constant 17 : index
    %c0_39 = arith.constant 0 : index
    %c0_40 = arith.constant 0 : index
    %65 = vector.load %arg8[%c0_38, %c17, %c0_39, %c0_40] : memref<2x18x24x128xf32, #tpu.memory_space<vmem>>, vector<2x1x24x128xf32>
    tpu.vector_store %arg8[%c0_38, %c17, %c0_39, %c0_40], %64 {strides = array<i32>} : memref<2x18x24x128xf32, #tpu.memory_space<vmem>>, vector<2x1x24x128xf32>,
    %cst_41 = arith.constant 0.000000e+00 : f32
    %66 = vector.broadcast %cst_41 : f32 to vector<2x18x1x128xf32>
    %c0_42 = arith.constant 0 : index
    %c0_43 = arith.constant 0 : index
    %c0_44 = arith.constant 0 : index
    %c0_45 = arith.constant 0 : index
    %67 = vector.load %arg8[%c0_42, %c0_43, %c0_44, %c0_45] : memref<2x18x24x128xf32, #tpu.memory_space<vmem>>, vector<2x18x1x128xf32>
    tpu.vector_store %arg8[%c0_42, %c0_43, %c0_44, %c0_45], %66 {strides = array<i32>} : memref<2x18x24x128xf32, #tpu.memory_space<vmem>>, vector<2x18x1x128xf32>,
    %cst_46 = arith.constant 0.000000e+00 : f32
    %68 = vector.broadcast %cst_46 : f32 to vector<2x18x1x128xf32>
    %c0_47 = arith.constant 0 : index
    %c0_48 = arith.constant 0 : index
    %c17_49 = arith.constant 17 : index
    %c0_50 = arith.constant 0 : index
    %69 = vector.load %arg8[%c0_47, %c0_48, %c17_49, %c0_50] : memref<2x18x24x128xf32, #tpu.memory_space<vmem>>, vector<2x18x1x128xf32>
    tpu.vector_store %arg8[%c0_47, %c0_48, %c17_49, %c0_50], %68 {strides = array<i32>} : memref<2x18x24x128xf32, #tpu.memory_space<vmem>>, vector<2x18x1x128xf32>,
    %70 = vector.shape_cast %61 : vector<512x128xf32> to vector<2x16x16x128xf32>
    %c0_51 = arith.constant 0 : index
    %c1_52 = arith.constant 1 : index
    %c1_53 = arith.constant 1 : index
    %c0_54 = arith.constant 0 : index
    %71 = vector.load %arg8[%c0_51, %c1_52, %c1_53, %c0_54] : memref<2x18x24x128xf32, #tpu.memory_space<vmem>>, vector<2x16x16x128xf32>
    tpu.vector_store %arg8[%c0_51, %c1_52, %c1_53, %c0_54], %70 {strides = array<i32>} : memref<2x18x24x128xf32, #tpu.memory_space<vmem>>, vector<2x16x16x128xf32>,
    %cst_55 = arith.constant 0.000000e+00 : f32
    %72 = vector.broadcast %cst_55 : f32 to vector<512x128xf32>
    %c0_56 = arith.constant 0 : index
    %c0_57 = arith.constant 0 : index
    %c0_58 = arith.constant 0 : index
    %c0_59 = arith.constant 0 : index
    %73 = vector.load %arg8[%c0_56, %c0_57, %c0_58, %c0_59] : memref<2x18x24x128xf32, #tpu.memory_space<vmem>>, vector<2x16x24x128xf32>
    %74 = vector.extract_strided_slice %73 {offsets = [0, 0, 0, 0], sizes = [2, 16, 16, 128], strides = [1, 1, 1, 1]} : vector<2x16x24x128xf32> to vector<2x16x16x128xf32>
    %75 = vector.extract_strided_slice %73 {offsets = [0, 0, 1, 0], sizes = [2, 16, 16, 128], strides = [1, 1, 1, 1]} : vector<2x16x24x128xf32> to vector<2x16x16x128xf32>
    %76 = vector.extract_strided_slice %73 {offsets = [0, 0, 2, 0], sizes = [2, 16, 16, 128], strides = [1, 1, 1, 1]} : vector<2x16x24x128xf32> to vector<2x16x16x128xf32>
    %77 = tpu.concatenate %74, %75, %76 in 3 : vector<2x16x16x128xf32>, vector<2x16x16x128xf32>, vector<2x16x16x128xf32> -> vector<2x16x16x384xf32>
    %78 = vector.shape_cast %77 : vector<2x16x16x384xf32> to vector<512x384xf32>
    %79 = arith.truncf %78 : vector<512x384xf32> to vector<512x384xbf16>
    %c0_60 = arith.constant 0 : index
    %c0_61 = arith.constant 0 : index
    %c0_62 = arith.constant 0 : index
    %80 = vector.load %arg4[%c0_60, %c0_61, %c0_62] : memref<3x384x128xbf16, #tpu.memory_space<vmem>>, vector<1x384x128xbf16>
    %81 = vector.shape_cast %80 : vector<1x384x128xbf16> to vector<384x128xbf16>
    %cst_63 = arith.constant dense<0.000000e+00> : vector<512x128xf32>
    %82 = tpu.matmul %79, %81, %cst_63 {dimension_numbers = #tpu.dot_dimension_numbers<[1], [0], [0], [1], [0, 0, 1, 1], [], []>} : vector<512x384xbf16>, vector<384x128xbf16>, vector<512x128xf32> -> vector<512x128xf32>
    %83 = arith.addf %72, %82 : vector<512x128xf32>
    %c0_64 = arith.constant 0 : index
    %c1_65 = arith.constant 1 : index
    %c0_66 = arith.constant 0 : index
    %c0_67 = arith.constant 0 : index
    %84 = vector.load %arg8[%c0_64, %c1_65, %c0_66, %c0_67] : memref<2x18x24x128xf32, #tpu.memory_space<vmem>>, vector<2x16x24x128xf32>
    %85 = vector.extract_strided_slice %84 {offsets = [0, 0, 0, 0], sizes = [2, 16, 16, 128], strides = [1, 1, 1, 1]} : vector<2x16x24x128xf32> to vector<2x16x16x128xf32>
    %86 = vector.extract_strided_slice %84 {offsets = [0, 0, 1, 0], sizes = [2, 16, 16, 128], strides = [1, 1, 1, 1]} : vector<2x16x24x128xf32> to vector<2x16x16x128xf32>
    %87 = vector.extract_strided_slice %84 {offsets = [0, 0, 2, 0], sizes = [2, 16, 16, 128], strides = [1, 1, 1, 1]} : vector<2x16x24x128xf32> to vector<2x16x16x128xf32>
    %88 = tpu.concatenate %85, %86, %87 in 3 : vector<2x16x16x128xf32>, vector<2x16x16x128xf32>, vector<2x16x16x128xf32> -> vector<2x16x16x384xf32>
    %89 = vector.shape_cast %88 : vector<2x16x16x384xf32> to vector<512x384xf32>
    %90 = arith.truncf %89 : vector<512x384xf32> to vector<512x384xbf16>
    %c1_68 = arith.constant 1 : index
    %c0_69 = arith.constant 0 : index
    %c0_70 = arith.constant 0 : index
    %91 = vector.load %arg4[%c1_68, %c0_69, %c0_70] : memref<3x384x128xbf16, #tpu.memory_space<vmem>>, vector<1x384x128xbf16>
    %92 = vector.shape_cast %91 : vector<1x384x128xbf16> to vector<384x128xbf16>
    %cst_71 = arith.constant dense<0.000000e+00> : vector<512x128xf32>
    %93 = tpu.matmul %90, %92, %cst_71 {dimension_numbers = #tpu.dot_dimension_numbers<[1], [0], [0], [1], [0, 0, 1, 1], [], []>} : vector<512x384xbf16>, vector<384x128xbf16>, vector<512x128xf32> -> vector<512x128xf32>
    %94 = arith.addf %83, %93 : vector<512x128xf32>
    %c0_72 = arith.constant 0 : index
    %c2_73 = arith.constant 2 : index
    %c0_74 = arith.constant 0 : index
    %c0_75 = arith.constant 0 : index
    %95 = vector.load %arg8[%c0_72, %c2_73, %c0_74, %c0_75] : memref<2x18x24x128xf32, #tpu.memory_space<vmem>>, vector<2x16x24x128xf32>
    %96 = vector.extract_strided_slice %95 {offsets = [0, 0, 0, 0], sizes = [2, 16, 16, 128], strides = [1, 1, 1, 1]} : vector<2x16x24x128xf32> to vector<2x16x16x128xf32>
    %97 = vector.extract_strided_slice %95 {offsets = [0, 0, 1, 0], sizes = [2, 16, 16, 128], strides = [1, 1, 1, 1]} : vector<2x16x24x128xf32> to vector<2x16x16x128xf32>
    %98 = vector.extract_strided_slice %95 {offsets = [0, 0, 2, 0], sizes = [2, 16, 16, 128], strides = [1, 1, 1, 1]} : vector<2x16x24x128xf32> to vector<2x16x16x128xf32>
    %99 = tpu.concatenate %96, %97, %98 in 3 : vector<2x16x16x128xf32>, vector<2x16x16x128xf32>, vector<2x16x16x128xf32> -> vector<2x16x16x384xf32>
    %100 = vector.shape_cast %99 : vector<2x16x16x384xf32> to vector<512x384xf32>
    %101 = arith.truncf %100 : vector<512x384xf32> to vector<512x384xbf16>
    %c2_76 = arith.constant 2 : index
    %c0_77 = arith.constant 0 : index
    %c0_78 = arith.constant 0 : index
    %102 = vector.load %arg4[%c2_76, %c0_77, %c0_78] : memref<3x384x128xbf16, #tpu.memory_space<vmem>>, vector<1x384x128xbf16>
    %103 = vector.shape_cast %102 : vector<1x384x128xbf16> to vector<384x128xbf16>
    %cst_79 = arith.constant dense<0.000000e+00> : vector<512x128xf32>
    %104 = tpu.matmul %101, %103, %cst_79 {dimension_numbers = #tpu.dot_dimension_numbers<[1], [0], [0], [1], [0, 0, 1, 1], [], []>} : vector<512x384xbf16>, vector<384x128xbf16>, vector<512x128xf32> -> vector<512x128xf32>
    %105 = arith.addf %94, %104 : vector<512x128xf32>
    %cst_80 = arith.constant dense<0.000000e+00> : vector<128xf32>
    %106 = vector.multi_reduction <add>, %105, %cst_80 [0] : vector<512x128xf32> to vector<128xf32>
    %107 = vector.shape_cast %106 : vector<128xf32> to vector<1x128xf32>
    %108 = arith.mulf %105, %105 : vector<512x128xf32>
    %cst_81 = arith.constant dense<0.000000e+00> : vector<128xf32>
    %109 = vector.multi_reduction <add>, %108, %cst_81 [0] : vector<512x128xf32> to vector<128xf32>
    %110 = vector.shape_cast %109 : vector<128xf32> to vector<1x128xf32>
    %cst_82 = arith.constant 0.001953125 : f32
    %111 = vector.broadcast %cst_82 : f32 to vector<1x128xf32>
    %112 = arith.mulf %107, %111 : vector<1x128xf32>
    %cst_83 = arith.constant 0.001953125 : f32
    %113 = vector.broadcast %cst_83 : f32 to vector<1x128xf32>
    %114 = arith.mulf %110, %113 : vector<1x128xf32>
    %115 = arith.mulf %112, %112 : vector<1x128xf32>
    %116 = arith.subf %114, %115 : vector<1x128xf32>
    %c0_84 = arith.constant 0 : index
    %c0_85 = arith.constant 0 : index
    %117 = vector.load %arg5[%c0_84, %c0_85] : memref<1x128xf32, #tpu.memory_space<vmem>>, vector<1x128xf32>
    %cst_86 = arith.constant 9.99999974E-6 : f32
    %118 = vector.broadcast %cst_86 : f32 to vector<1x128xf32>
    %119 = arith.addf %116, %118 : vector<1x128xf32>
    %120 = math.rsqrt %119 : vector<1x128xf32>
    %121 = arith.mulf %117, %120 : vector<1x128xf32>
    %c0_87 = arith.constant 0 : index
    %c0_88 = arith.constant 0 : index
    %122 = vector.load %arg6[%c0_87, %c0_88] : memref<1x128xf32, #tpu.memory_space<vmem>>, vector<1x128xf32>
    %123 = arith.mulf %112, %121 : vector<1x128xf32>
    %124 = arith.subf %122, %123 : vector<1x128xf32>
    %125 = vector.broadcast %121 : vector<1x128xf32> to vector<512x128xf32>
    %126 = arith.mulf %105, %125 : vector<512x128xf32>
    %127 = vector.broadcast %124 : vector<1x128xf32> to vector<512x128xf32>
    %128 = arith.addf %126, %127 : vector<512x128xf32>
    %c0_89 = arith.constant 0 : index
    %c1_90 = arith.constant 1 : index
    %c1_91 = arith.constant 1 : index
    %c0_92 = arith.constant 0 : index
    %129 = vector.load %arg0[%c0_89, %c1_90, %c1_91, %c0_92] : memref<2x18x24x128xf32, #tpu.memory_space<vmem>>, vector<2x16x16x128xf32>
    %130 = vector.shape_cast %128 : vector<512x128xf32> to vector<2x16x16x128xf32>
    %131 = arith.addf %129, %130 : vector<2x16x16x128xf32>
    %c0_93 = arith.constant 0 : index
    %c0_94 = arith.constant 0 : index
    %c0_95 = arith.constant 0 : index
    %c0_96 = arith.constant 0 : index
    %132 = vector.load %arg7[%c0_93, %c0_94, %c0_95, %c0_96] : memref<2x16x16x128xf32, #tpu.memory_space<vmem>>, vector<2x16x16x128xf32>
    tpu.vector_store %arg7[%c0_93, %c0_94, %c0_95, %c0_96], %131 {strides = array<i32>} : memref<2x16x16x128xf32, #tpu.memory_space<vmem>>, vector<2x16x16x128xf32>,
    return
  }
}

</mosaic_0001>

<llo_original>
// kernel: tpu_custom_call.1
$region0: #{tpu_custom_call.1}
  #allocation0 [shape = 'u32[]', space=smem, size = 0x4, offset = 0x4, fixed_abs, tag = 'smem constant byte address 0x4 - core index']
  #allocation1 [shape = 'u32[144,128]{1,0:T(1,128)}', space=vmem, size = 0x12000, scoped, tag = 'internal scratch']
  #allocation2 [shape = 'f32[2,18,24,128]{3,2,1,0:T(8,128)}', space=vmem, size = 0x6c000, scoped, tag = 'scratch operand']
  %s0 = inlined_call_operand.hbm [shape: f32[2,18,24,128], index: 0, kind: input, shape index: {}]
  %s1 = inlined_call_operand.hbm [shape: bf16[3,384,128], index: 1, kind: input, shape index: {}]
  %s2 = inlined_call_operand.vmem [shape: f32[1,128], index: 2, kind: input, shape index: {}]
  %s3 = inlined_call_operand.vmem [shape: f32[1,128], index: 3, kind: input, shape index: {}]
  %s4 = inlined_call_operand.hbm [shape: bf16[3,384,128], index: 4, kind: input, shape index: {}]
  %s5 = inlined_call_operand.vmem [shape: f32[1,128], index: 5, kind: input, shape index: {}]
  %s6 = inlined_call_operand.vmem [shape: f32[1,128], index: 6, kind: input, shape index: {}]
  %s7 = inlined_call_operand.hbm [shape: f32[2,16,16,128], index: 7, kind: output, shape index: {}]
  %s8 = sld [smem:[#allocation0]]
  $region50: #{tpu_custom_call.1} parent=0
    _
  %s10 = ssub.s32 1, %s8
  %s11 = scalar_select 0, %s10, %s8
  $region1: #{tpu_custom_call.1} parent=0
    #allocation3 [shape = 'u8[442368]{0}', space=vmem, size = 0x6c000, scoped, tag = 'input window, operand 0, single buffered']
    #allocation4 [shape = 's32[1]{0}', space=sflag, size = 0x4, scoped, tag = 'scoped memory for tpu_custom_call.1']
    #allocation5 [shape = 's32[1]{0}', space=sflag, size = 0x4, scoped, tag = 'scoped memory for tpu_custom_call.1']
    #allocation6 [shape = 'u8[294912]{0}', space=vmem, size = 0x48000, scoped, tag = 'input window, operand 1, single buffered']
    #allocation7 [shape = 's32[1]{0}', space=sflag, size = 0x4, scoped, tag = 'scoped memory for tpu_custom_call.1']
    #allocation8 [shape = 'u8[294912]{0}', space=vmem, size = 0x48000, scoped, tag = 'input window, operand 4, single buffered']
    #allocation9 [shape = 'u8[262144]{0}', space=vmem, size = 0x40000, scoped, tag = 'output window, operand 0, single buffered']
    %12 = vsyncpa [#allocation4], 0
    %13 = vsyncpa [#allocation7], 0
    %14 = vsyncpa [#allocation5], 0
    // Predicated region
    $region2: #{tpu_custom_call.1} parent=1 // pred_check
      _
    $region3: #{tpu_custom_call.1} parent=1 // pred_check_branch
      %16 = sbr.rel (0) target = $region5
    $region4: #{tpu_custom_call.1} parent=1 // pred_region
      %s18 = ssub.s32 13824, 13824
      %19 = vsyncadd [#allocation4], %s18
      %s20 = sshll.u32 [#allocation3], 4
      %s21 = int_to_ptr.vmem [resolvable:$true] %s20
      %26 = dma.hbm_to_vmem [thread:$0]  %s0, 13824, %s21, [#allocation4], 128, 128, 8
    $region5: #{tpu_custom_call.1} parent=1 // pred_fallthru
      _
    // Predicated region
    $region6: #{tpu_custom_call.1} parent=1 // pred_check
      _
    $region7: #{tpu_custom_call.1} parent=1 // pred_check_branch
      %28 = sbr.rel (0) target = $region9
    $region8: #{tpu_custom_call.1} parent=1 // pred_region
      %s30 = ssub.s32 9216, 9216
      %31 = vsyncadd [#allocation7], %s30
      %s32 = sshll.u32 [#allocation6], 4
      %s33 = int_to_ptr.vmem [resolvable:$true] %s32
      %38 = dma.hbm_to_vmem [thread:$0]  %s1, 9216, %s33, [#allocation7], 64, 64, 4
    $region9: #{tpu_custom_call.1} parent=1 // pred_fallthru
      _
    // Predicated region
    $region10: #{tpu_custom_call.1} parent=1 // pred_check
      _
    $region11: #{tpu_custom_call.1} parent=1 // pred_check_branch
      %40 = sbr.rel (0) target = $region13
    $region12: #{tpu_custom_call.1} parent=1 // pred_region
      _
    $region13: #{tpu_custom_call.1} parent=1 // pred_fallthru
      _
    // Predicated region
    $region14: #{tpu_custom_call.1} parent=1 // pred_check
      _
    $region15: #{tpu_custom_call.1} parent=1 // pred_check_branch
      %42 = sbr.rel (0) target = $region17
    $region16: #{tpu_custom_call.1} parent=1 // pred_region
      _
    $region17: #{tpu_custom_call.1} parent=1 // pred_fallthru
      _
    // Predicated region
    $region18: #{tpu_custom_call.1} parent=1 // pred_check
      _
    $region19: #{tpu_custom_call.1} parent=1 // pred_check_branch
      %44 = sbr.rel (0) target = $region21
    $region20: #{tpu_custom_call.1} parent=1 // pred_region
      %s46 = ssub.s32 9216, 9216
      %47 = vsyncadd [#allocation7], %s46
      %s48 = sshll.u32 [#allocation8], 4
      %s49 = int_to_ptr.vmem [resolvable:$true] %s48
      %54 = dma.hbm_to_vmem [thread:$0]  %s4, 9216, %s49, [#allocation7], 64, 64, 4
    $region21: #{tpu_custom_call.1} parent=1 // pred_fallthru
      _
    // Predicated region
    $region22: #{tpu_custom_call.1} parent=1 // pred_check
      _
    $region23: #{tpu_custom_call.1} parent=1 // pred_check_branch
      %56 = sbr.rel (0) target = $region25
    $region24: #{tpu_custom_call.1} parent=1 // pred_region
      _
    $region25: #{tpu_custom_call.1} parent=1 // pred_fallthru
      _
    // Predicated region
    $region26: #{tpu_custom_call.1} parent=1 // pred_check
      _
    $region27: #{tpu_custom_call.1} parent=1 // pred_check_branch
      %58 = sbr.rel (0) target = $region29
    $region28: #{tpu_custom_call.1} parent=1 // pred_region
      _
    $region29: #{tpu_custom_call.1} parent=1 // pred_fallthru
      _
    // Predicated region
    $region30: #{tpu_custom_call.1} parent=1 // pred_check
      _
    $region31: #{tpu_custom_call.1} parent=1 // pred_check_branch
      %60 = sbr.rel (0) target = $region33
    $region32: #{tpu_custom_call.1} parent=1 // pred_region
      %61 = dma.done [#allocation4], 13824
    $region33: #{tpu_custom_call.1} parent=1 // pred_fallthru
      _
    // Predicated region
    $region34: #{tpu_custom_call.1} parent=1 // pred_check
      _
    $region35: #{tpu_custom_call.1} parent=1 // pred_check_branch
      %63 = sbr.rel (0) target = $region37
    $region36: #{tpu_custom_call.1} parent=1 // pred_region
      %64 = dma.done [#allocation7], 9216
    $region37: #{tpu_custom_call.1} parent=1 // pred_fallthru
      _
    // Predicated region
    $region38: #{tpu_custom_call.1} parent=1 // pred_check
      _
    $region39: #{tpu_custom_call.1} parent=1 // pred_check_branch
      %66 = sbr.rel (0) target = $region41
    $region40: #{tpu_custom_call.1} parent=1 // pred_region
      %67 = dma.done [#allocation7], 9216
    $region41: #{tpu_custom_call.1} parent=1 // pred_fallthru
      _
    %v69 = vld [vmem:[#allocation3] sm:$0xff]
    %v70 = vld [vmem:[#allocation3 + $0x8] sm:$0xff]
    %v71 = vld [vmem:[#allocation3 + $0x10] sm:$0xff]
    %v72 = vld [vmem:[#allocation3 + $0x18] sm:$0xff]
    %v73 = vld [vmem:[#allocation3 + $0x20] sm:$0xff]
    %v74 = vld [vmem:[#allocation3 + $0x28] sm:$0xff]
    %v75 = vld [vmem:[#allocation3 + $0x30] sm:$0xff]
    %v76 = vld [vmem:[#allocation3 + $0x38] sm:$0xff]
    %v77 = vld [vmem:[#allocation3 + $0x40] sm:$0xff]
    %v78 = vld [vmem:[#allocation3 + $0x48] sm:$0xff]
    %v79 = vld [vmem:[#allocation3 + $0x50] sm:$0xff]
    %v80 = vld [vmem:[#allocation3 + $0x58] sm:$0xff]
    %v81 = vld [vmem:[#allocation3 + $0x60] sm:$0xff]
    %v82 = vld [vmem:[#allocation3 + $0x68] sm:$0xff]
    %v83 = vld [vmem:[#allocation3 + $0x70] sm:$0xff]
    %v84 = vld [vmem:[#allocation3 + $0x78] sm:$0xff]
    %v85 = vld [vmem:[#allocation3 + $0x80] sm:$0xff]
    %v86 = vld [vmem:[#allocation3 + $0x88] sm:$0xff]
    %v87 = vld [vmem:[#allocation3 + $0x90] sm:$0xff]
    %v88 = vld [vmem:[#allocation3 + $0x98] sm:$0xff]
    %v89 = vld [vmem:[#allocation3 + $0xa0] sm:$0xff]
    %v90 = vld [vmem:[#allocation3 + $0xa8] sm:$0xff]
    %v91 = vld [vmem:[#allocation3 + $0xb0] sm:$0xff]
    %v92 = vld [vmem:[#allocation3 + $0xb8] sm:$0xff]
    %v93 = vld [vmem:[#allocation3 + $0xc0] sm:$0xff]
    %v94 = vld [vmem:[#allocation3 + $0xc8] sm:$0xff]
    %v95 = vld [vmem:[#allocation3 + $0xd0] sm:$0xff]
    %v96 = vld [vmem:[#allocation3 + $0xd8] sm:$0xff]
    %v97 = vld [vmem:[#allocation3 + $0xe0] sm:$0xff]
    %v98 = vld [vmem:[#allocation3 + $0xe8] sm:$0xff]
    %v99 = vld [vmem:[#allocation3 + $0xf0] sm:$0xff]
    %v100 = vld [vmem:[#allocation3 + $0xf8] sm:$0xff]
    %v101 = vld [vmem:[#allocation3 + $0x100] sm:$0xff]
    %v102 = vld [vmem:[#allocation3 + $0x108] sm:$0xff]
    %v103 = vld [vmem:[#allocation3 + $0x110] sm:$0xff]
    %v104 = vld [vmem:[#allocation3 + $0x118] sm:$0xff]
    %v105 = vld [vmem:[#allocation3 + $0x120] sm:$0xff]
    %v106 = vld [vmem:[#allocation3 + $0x128] sm:$0xff]
    %v107 = vld [vmem:[#allocation3 + $0x130] sm:$0xff]
    %v108 = vld [vmem:[#allocation3 + $0x138] sm:$0xff]
    %v109 = vld [vmem:[#allocation3 + $0x140] sm:$0xff]
    %v110 = vld [vmem:[#allocation3 + $0x148] sm:$0xff]
    %v111 = vld [vmem:[#allocation3 + $0x150] sm:$0xff]
    %v112 = vld [vmem:[#allocation3 + $0x158] sm:$0xff]
    %v113 = vld [vmem:[#allocation3 + $0x160] sm:$0xff]
    %v114 = vld [vmem:[#allocation3 + $0x168] sm:$0xff]
    %v115 = vld [vmem:[#allocation3 + $0x170] sm:$0xff]
    %v116 = vld [vmem:[#allocation3 + $0x178] sm:$0xff]
    %v117 = vld [vmem:[#allocation3 + $0x1b0] sm:$0xff]
    %v118 = vld [vmem:[#allocation3 + $0x1b8] sm:$0xff]
    %v119 = vld [vmem:[#allocation3 + $0x1c0] sm:$0xff]
    %v120 = vld [vmem:[#allocation3 + $0x1c8] sm:$0xff]
    %v121 = vld [vmem:[#allocation3 + $0x1d0] sm:$0xff]
    %v122 = vld [vmem:[#allocation3 + $0x1d8] sm:$0xff]
    %v123 = vld [vmem:[#allocation3 + $0x1e0] sm:$0xff]
    %v124 = vld [vmem:[#allocation3 + $0x1e8] sm:$0xff]
    %v125 = vld [vmem:[#allocation3 + $0x1f0] sm:$0xff]
    %v126 = vld [vmem:[#allocation3 + $0x1f8] sm:$0xff]
    %v127 = vld [vmem:[#allocation3 + $0x200] sm:$0xff]
    %v128 = vld [vmem:[#allocation3 + $0x208] sm:$0xff]
    %v129 = vld [vmem:[#allocation3 + $0x210] sm:$0xff]
    %v130 = vld [vmem:[#allocation3 + $0x218] sm:$0xff]
    %v131 = vld [vmem:[#allocation3 + $0x220] sm:$0xff]
    %v132 = vld [vmem:[#allocation3 + $0x228] sm:$0xff]
    %v133 = vld [vmem:[#allocation3 + $0x230] sm:$0xff]
    %v134 = vld [vmem:[#allocation3 + $0x238] sm:$0xff]
    %v135 = vld [vmem:[#allocation3 + $0x240] sm:$0xff]
    %v136 = vld [vmem:[#allocation3 + $0x248] sm:$0xff]
    %v137 = vld [vmem:[#allocation3 + $0x250] sm:$0xff]
    %v138 = vld [vmem:[#allocation3 + $0x258] sm:$0xff]
    %v139 = vld [vmem:[#allocation3 + $0x260] sm:$0xff]
    %v140 = vld [vmem:[#allocation3 + $0x268] sm:$0xff]
    %v141 = vld [vmem:[#allocation3 + $0x270] sm:$0xff]
    %v142 = vld [vmem:[#allocation3 + $0x278] sm:$0xff]
    %v143 = vld [vmem:[#allocation3 + $0x280] sm:$0xff]
    %v144 = vld [vmem:[#allocation3 + $0x288] sm:$0xff]
    %v145 = vld [vmem:[#allocation3 + $0x290] sm:$0xff]
    %v146 = vld [vmem:[#allocation3 + $0x298] sm:$0xff]
    %v147 = vld [vmem:[#allocation3 + $0x2a0] sm:$0xff]
    %v148 = vld [vmem:[#allocation3 + $0x2a8] sm:$0xff]
    %v149 = vld [vmem:[#allocation3 + $0x2b0] sm:$0xff]
    %v150 = vld [vmem:[#allocation3 + $0x2b8] sm:$0xff]
    %v151 = vld [vmem:[#allocation3 + $0x2c0] sm:$0xff]
    %v152 = vld [vmem:[#allocation3 + $0x2c8] sm:$0xff]
    %v153 = vld [vmem:[#allocation3 + $0x2d0] sm:$0xff]
    %v154 = vld [vmem:[#allocation3 + $0x2d8] sm:$0xff]
    %v155 = vld [vmem:[#allocation3 + $0x2e0] sm:$0xff]
    %v156 = vld [vmem:[#allocation3 + $0x2e8] sm:$0xff]
    %v157 = vld [vmem:[#allocation3 + $0x2f0] sm:$0xff]
    %v158 = vld [vmem:[#allocation3 + $0x2f8] sm:$0xff]
    %v159 = vld [vmem:[#allocation3 + $0x300] sm:$0xff]
    %v160 = vld [vmem:[#allocation3 + $0x308] sm:$0xff]
    %v161 = vld [vmem:[#allocation3 + $0x310] sm:$0xff]
    %v162 = vld [vmem:[#allocation3 + $0x318] sm:$0xff]
    %v163 = vld [vmem:[#allocation3 + $0x320] sm:$0xff]
    %v164 = vld [vmem:[#allocation3 + $0x328] sm:$0xff]
    %vm261 = vcmask 1046528
    %v262 = vrot.slane %v69, 1
    %v263 = vrot.slane %v70, 1
    %v264 = vsel %vm261, %v262, %v263
    %v265 = vrot.slane %v71, 1
    %v266 = vsel %vm261, %v263, %v265
    %v267 = vrot.slane %v72, 1
    %v268 = vrot.slane %v73, 1
    %v269 = vsel %vm261, %v267, %v268
    %v270 = vrot.slane %v74, 1
    %v271 = vsel %vm261, %v268, %v270
    %v272 = vrot.slane %v75, 1
    %v273 = vrot.slane %v76, 1
    %v274 = vsel %vm261, %v272, %v273
    %v275 = vrot.slane %v77, 1
    %v276 = vsel %vm261, %v273, %v275
    %v277 = vrot.slane %v78, 1
    %v278 = vrot.slane %v79, 1
    %v279 = vsel %vm261, %v277, %v278
    %v280 = vrot.slane %v80, 1
    %v281 = vsel %vm261, %v278, %v280
    %v282 = vrot.slane %v81, 1
    %v283 = vrot.slane %v82, 1
    %v284 = vsel %vm261, %v282, %v283
    %v285 = vrot.slane %v83, 1
    %v286 = vsel %vm261, %v283, %v285
    %v287 = vrot.slane %v84, 1
    %v288 = vrot.slane %v85, 1
    %v289 = vsel %vm261, %v287, %v288
    %v290 = vrot.slane %v86, 1
    %v291 = vsel %vm261, %v288, %v290
    %v292 = vrot.slane %v87, 1
    %v293 = vrot.slane %v88, 1
    %v294 = vsel %vm261, %v292, %v293
    %v295 = vrot.slane %v89, 1
    %v296 = vsel %vm261, %v293, %v295
    %v297 = vrot.slane %v90, 1
    %v298 = vrot.slane %v91, 1
    %v299 = vsel %vm261, %v297, %v298
    %v300 = vrot.slane %v92, 1
    %v301 = vsel %vm261, %v298, %v300
    %v302 = vrot.slane %v93, 1
    %v303 = vrot.slane %v94, 1
    %v304 = vsel %vm261, %v302, %v303
    %v305 = vrot.slane %v95, 1
    %v306 = vsel %vm261, %v303, %v305
    %v307 = vrot.slane %v96, 1
    %v308 = vrot.slane %v97, 1
    %v309 = vsel %vm261, %v307, %v308
    %v310 = vrot.slane %v98, 1
    %v311 = vsel %vm261, %v308, %v310
    %v312 = vrot.slane %v99, 1
    %v313 = vrot.slane %v100, 1
    %v314 = vsel %vm261, %v312, %v313
    %v315 = vrot.slane %v101, 1
    %v316 = vsel %vm261, %v313, %v315
    %v317 = vrot.slane %v102, 1
    %v318 = vrot.slane %v103, 1
    %v319 = vsel %vm261, %v317, %v318
    %v320 = vrot.slane %v104, 1
    %v321 = vsel %vm261, %v318, %v320
    %v322 = vrot.slane %v105, 1
    %v323 = vrot.slane %v106, 1
    %v324 = vsel %vm261, %v322, %v323
    %v325 = vrot.slane %v107, 1
    %v326 = vsel %vm261, %v323, %v325
    %v327 = vrot.slane %v108, 1
    %v328 = vrot.slane %v109, 1
    %v329 = vsel %vm261, %v327, %v328
    %v330 = vrot.slane %v110, 1
    %v331 = vsel %vm261, %v328, %v330
    %v332 = vrot.slane %v111, 1
    %v333 = vrot.slane %v112, 1
    %v334 = vsel %vm261, %v332, %v333
    %v335 = vrot.slane %v113, 1
    %v336 = vsel %vm261, %v333, %v335
    %v337 = vrot.slane %v114, 1
    %v338 = vrot.slane %v115, 1
    %v339 = vsel %vm261, %v337, %v338
    %v340 = vrot.slane %v116, 1
    %v341 = vsel %vm261, %v338, %v340
    %v342 = vrot.slane %v117, 1
    %v343 = vrot.slane %v118, 1
    %v344 = vsel %vm261, %v342, %v343
    %v345 = vrot.slane %v119, 1
    %v346 = vsel %vm261, %v343, %v345
    %v347 = vrot.slane %v120, 1
    %v348 = vrot.slane %v121, 1
    %v349 = vsel %vm261, %v347, %v348
    %v350 = vrot.slane %v122, 1
    %v351 = vsel %vm261, %v348, %v350
    %v352 = vrot.slane %v123, 1
    %v353 = vrot.slane %v124, 1
    %v354 = vsel %vm261, %v352, %v353
    %v355 = vrot.slane %v125, 1
    %v356 = vsel %vm261, %v353, %v355
    %v357 = vrot.slane %v126, 1
    %v358 = vrot.slane %v127, 1
    %v359 = vsel %vm261, %v357, %v358
    %v360 = vrot.slane %v128, 1
    %v361 = vsel %vm261, %v358, %v360
    %v362 = vrot.slane %v129, 1
    %v363 = vrot.slane %v130, 1
    %v364 = vsel %vm261, %v362, %v363
    %v365 = vrot.slane %v131, 1
    %v366 = vsel %vm261, %v363, %v365
    %v367 = vrot.slane %v132, 1
    %v368 = vrot.slane %v133, 1
    %v369 = vsel %vm261, %v367, %v368
    %v370 = vrot.slane %v134, 1
    %v371 = vsel %vm261, %v368, %v370
    %v372 = vrot.slane %v135, 1
    %v373 = vrot.slane %v136, 1
    %v374 = vsel %vm261, %v372, %v373
    %v375 = vrot.slane %v137, 1
    %v376 = vsel %vm261, %v373, %v375
    %v377 = vrot.slane %v138, 1
    %v378 = vrot.slane %v139, 1
    %v379 = vsel %vm261, %v377, %v378
    %v380 = vrot.slane %v140, 1
    %v381 = vsel %vm261, %v378, %v380
    %v382 = vrot.slane %v141, 1
    %v383 = vrot.slane %v142, 1
    %v384 = vsel %vm261, %v382, %v383
    %v385 = vrot.slane %v143, 1
    %v386 = vsel %vm261, %v383, %v385
    %v387 = vrot.slane %v144, 1
    %v388 = vrot.slane %v145, 1
    %v389 = vsel %vm261, %v387, %v388
    %v390 = vrot.slane %v146, 1
    %v391 = vsel %vm261, %v388, %v390
    %v392 = vrot.slane %v147, 1
    %v393 = vrot.slane %v148, 1
    %v394 = vsel %vm261, %v392, %v393
    %v395 = vrot.slane %v149, 1
    %v396 = vsel %vm261, %v393, %v395
    %v397 = vrot.slane %v150, 1
    %v398 = vrot.slane %v151, 1
    %v399 = vsel %vm261, %v397, %v398
    %v400 = vrot.slane %v152, 1
    %v401 = vsel %vm261, %v398, %v400
    %v402 = vrot.slane %v153, 1
    %v403 = vrot.slane %v154, 1
    %v404 = vsel %vm261, %v402, %v403
    %v405 = vrot.slane %v155, 1
    %v406 = vsel %vm261, %v403, %v405
    %v407 = vrot.slane %v156, 1
    %v408 = vrot.slane %v157, 1
    %v409 = vsel %vm261, %v407, %v408
    %v410 = vrot.slane %v158, 1
    %v411 = vsel %vm261, %v408, %v410
    %v412 = vrot.slane %v159, 1
    %v413 = vrot.slane %v160, 1
    %v414 = vsel %vm261, %v412, %v413
    %v415 = vrot.slane %v161, 1
    %v416 = vsel %vm261, %v413, %v415
    %v417 = vrot.slane %v162, 1
    %v418 = vrot.slane %v163, 1
    %v419 = vsel %vm261, %v417, %v418
    %v420 = vrot.slane %v164, 1
    %v421 = vsel %vm261, %v418, %v420
    %vm486 = vcmask 1045504
    %v487 = vrot.slane %v69, 2
    %v488 = vrot.slane %v70, 2
    %v489 = vsel %vm486, %v487, %v488
    %v490 = vrot.slane %v71, 2
    %v491 = vsel %vm486, %v488, %v490
    %v492 = vrot.slane %v72, 2
    %v493 = vrot.slane %v73, 2
    %v494 = vsel %vm486, %v492, %v493
    %v495 = vrot.slane %v74, 2
    %v496 = vsel %vm486, %v493, %v495
    %v497 = vrot.slane %v75, 2
    %v498 = vrot.slane %v76, 2
    %v499 = vsel %vm486, %v497, %v498
    %v500 = vrot.slane %v77, 2
    %v501 = vsel %vm486, %v498, %v500
    %v502 = vrot.slane %v78, 2
    %v503 = vrot.slane %v79, 2
    %v504 = vsel %vm486, %v502, %v503
    %v505 = vrot.slane %v80, 2
    %v506 = vsel %vm486, %v503, %v505
    %v507 = vrot.slane %v81, 2
    %v508 = vrot.slane %v82, 2
    %v509 = vsel %vm486, %v507, %v508
    %v510 = vrot.slane %v83, 2
    %v511 = vsel %vm486, %v508, %v510
    %v512 = vrot.slane %v84, 2
    %v513 = vrot.slane %v85, 2
    %v514 = vsel %vm486, %v512, %v513
    %v515 = vrot.slane %v86, 2
    %v516 = vsel %vm486, %v513, %v515
    %v517 = vrot.slane %v87, 2
    %v518 = vrot.slane %v88, 2
    %v519 = vsel %vm486, %v517, %v518
    %v520 = vrot.slane %v89, 2
    %v521 = vsel %vm486, %v518, %v520
    %v522 = vrot.slane %v90, 2
    %v523 = vrot.slane %v91, 2
    %v524 = vsel %vm486, %v522, %v523
    %v525 = vrot.slane %v92, 2
    %v526 = vsel %vm486, %v523, %v525
    %v527 = vrot.slane %v93, 2
    %v528 = vrot.slane %v94, 2
    %v529 = vsel %vm486, %v527, %v528
    %v530 = vrot.slane %v95, 2
    %v531 = vsel %vm486, %v528, %v530
    %v532 = vrot.slane %v96, 2
    %v533 = vrot.slane %v97, 2
    %v534 = vsel %vm486, %v532, %v533
    %v535 = vrot.slane %v98, 2
    %v536 = vsel %vm486, %v533, %v535
    %v537 = vrot.slane %v99, 2
    %v538 = vrot.slane %v100, 2
    %v539 = vsel %vm486, %v537, %v538
    %v540 = vrot.slane %v101, 2
    %v541 = vsel %vm486, %v538, %v540
    %v542 = vrot.slane %v102, 2
    %v543 = vrot.slane %v103, 2
    %v544 = vsel %vm486, %v542, %v543
    %v545 = vrot.slane %v104, 2
    %v546 = vsel %vm486, %v543, %v545
    %v547 = vrot.slane %v105, 2
    %v548 = vrot.slane %v106, 2
    %v549 = vsel %vm486, %v547, %v548
    %v550 = vrot.slane %v107, 2
    %v551 = vsel %vm486, %v548, %v550
    %v552 = vrot.slane %v108, 2
    %v553 = vrot.slane %v109, 2
    %v554 = vsel %vm486, %v552, %v553
    %v555 = vrot.slane %v110, 2
    %v556 = vsel %vm486, %v553, %v555
    %v557 = vrot.slane %v111, 2
    %v558 = vrot.slane %v112, 2
    %v559 = vsel %vm486, %v557, %v558
    %v560 = vrot.slane %v113, 2
    %v561 = vsel %vm486, %v558, %v560
    %v562 = vrot.slane %v114, 2
    %v563 = vrot.slane %v115, 2
    %v564 = vsel %vm486, %v562, %v563
    %v565 = vrot.slane %v116, 2
    %v566 = vsel %vm486, %v563, %v565
    %v567 = vrot.slane %v117, 2
    %v568 = vrot.slane %v118, 2
    %v569 = vsel %vm486, %v567, %v568
    %v570 = vrot.slane %v119, 2
    %v571 = vsel %vm486, %v568, %v570
    %v572 = vrot.slane %v120, 2
    %v573 = vrot.slane %v121, 2
    %v574 = vsel %vm486, %v572, %v573
    %v575 = vrot.slane %v122, 2
    %v576 = vsel %vm486, %v573, %v575
    %v577 = vrot.slane %v123, 2
    %v578 = vrot.slane %v124, 2
    %v579 = vsel %vm486, %v577, %v578
    %v580 = vrot.slane %v125, 2
    %v581 = vsel %vm486, %v578, %v580
    %v582 = vrot.slane %v126, 2
    %v583 = vrot.slane %v127, 2
    %v584 = vsel %vm486, %v582, %v583
    %v585 = vrot.slane %v128, 2
    %v586 = vsel %vm486, %v583, %v585
    %v587 = vrot.slane %v129, 2
    %v588 = vrot.slane %v130, 2
    %v589 = vsel %vm486, %v587, %v588
    %v590 = vrot.slane %v131, 2
    %v591 = vsel %vm486, %v588, %v590
    %v592 = vrot.slane %v132, 2
    %v593 = vrot.slane %v133, 2
    %v594 = vsel %vm486, %v592, %v593
    %v595 = vrot.slane %v134, 2
    %v596 = vsel %vm486, %v593, %v595
    %v597 = vrot.slane %v135, 2
    %v598 = vrot.slane %v136, 2
    %v599 = vsel %vm486, %v597, %v598
    %v600 = vrot.slane %v137, 2
    %v601 = vsel %vm486, %v598, %v600
    %v602 = vrot.slane %v138, 2
    %v603 = vrot.slane %v139, 2
    %v604 = vsel %vm486, %v602, %v603
    %v605 = vrot.slane %v140, 2
    %v606 = vsel %vm486, %v603, %v605
    %v607 = vrot.slane %v141, 2
    %v608 = vrot.slane %v142, 2
    %v609 = vsel %vm486, %v607, %v608
    %v610 = vrot.slane %v143, 2
    %v611 = vsel %vm486, %v608, %v610
    %v612 = vrot.slane %v144, 2
    %v613 = vrot.slane %v145, 2
    %v614 = vsel %vm486, %v612, %v613
    %v615 = vrot.slane %v146, 2
    %v616 = vsel %vm486, %v613, %v615
    %v617 = vrot.slane %v147, 2
    %v618 = vrot.slane %v148, 2
    %v619 = vsel %vm486, %v617, %v618
    %v620 = vrot.slane %v149, 2
    %v621 = vsel %vm486, %v618, %v620
    %v622 = vrot.slane %v150, 2
    %v623 = vrot.slane %v151, 2
    %v624 = vsel %vm486, %v622, %v623
    %v625 = vrot.slane %v152, 2
    %v626 = vsel %vm486, %v623, %v625
    %v627 = vrot.slane %v153, 2
    %v628 = vrot.slane %v154, 2
    %v629 = vsel %vm486, %v627, %v628
    %v630 = vrot.slane %v155, 2
    %v631 = vsel %vm486, %v628, %v630
    %v632 = vrot.slane %v156, 2
    %v633 = vrot.slane %v157, 2
    %v634 = vsel %vm486, %v632, %v633
    %v635 = vrot.slane %v158, 2
    %v636 = vsel %vm486, %v633, %v635
    %v637 = vrot.slane %v159, 2
    %v638 = vrot.slane %v160, 2
    %v639 = vsel %vm486, %v637, %v638
    %v640 = vrot.slane %v161, 2
    %v641 = vsel %vm486, %v638, %v640
    %v642 = vrot.slane %v162, 2
    %v643 = vrot.slane %v163, 2
    %v644 = vsel %vm486, %v642, %v643
    %v645 = vrot.slane %v164, 2
    %v646 = vsel %vm486, %v643, %v645
    %v711 = vpack.c.bf16 %v70, %v69
    %v712 = vpack.c.bf16 %v266, %v264
    %v713 = vpack.c.bf16 %v491, %v489
    %v714 = vpack.c.bf16 %v73, %v72
    %v715 = vpack.c.bf16 %v271, %v269
    %v716 = vpack.c.bf16 %v496, %v494
    %v717 = vpack.c.bf16 %v76, %v75
    %v718 = vpack.c.bf16 %v276, %v274
    %v719 = vpack.c.bf16 %v501, %v499
    %v720 = vpack.c.bf16 %v79, %v78
    %v721 = vpack.c.bf16 %v281, %v279
    %v722 = vpack.c.bf16 %v506, %v504
    %v723 = vpack.c.bf16 %v82, %v81
    %v724 = vpack.c.bf16 %v286, %v284
    %v725 = vpack.c.bf16 %v511, %v509
    %v726 = vpack.c.bf16 %v85, %v84
    %v727 = vpack.c.bf16 %v291, %v289
    %v728 = vpack.c.bf16 %v516, %v514
    %v729 = vpack.c.bf16 %v88, %v87
    %v730 = vpack.c.bf16 %v296, %v294
    %v731 = vpack.c.bf16 %v521, %v519
    %v732 = vpack.c.bf16 %v91, %v90
    %v733 = vpack.c.bf16 %v301, %v299
    %v734 = vpack.c.bf16 %v526, %v524
    %v735 = vpack.c.bf16 %v94, %v93
    %v736 = vpack.c.bf16 %v306, %v304
    %v737 = vpack.c.bf16 %v531, %v529
    %v738 = vpack.c.bf16 %v97, %v96
    %v739 = vpack.c.bf16 %v311, %v309
    %v740 = vpack.c.bf16 %v536, %v534
    %v741 = vpack.c.bf16 %v100, %v99
    %v742 = vpack.c.bf16 %v316, %v314
    %v743 = vpack.c.bf16 %v541, %v539
    %v744 = vpack.c.bf16 %v103, %v102
    %v745 = vpack.c.bf16 %v321, %v319
    %v746 = vpack.c.bf16 %v546, %v544
    %v747 = vpack.c.bf16 %v106, %v105
    %v748 = vpack.c.bf16 %v326, %v324
    %v749 = vpack.c.bf16 %v551, %v549
    %v750 = vpack.c.bf16 %v109, %v108
    %v751 = vpack.c.bf16 %v331, %v329
    %v752 = vpack.c.bf16 %v556, %v554
    %v753 = vpack.c.bf16 %v112, %v111
    %v754 = vpack.c.bf16 %v336, %v334
    %v755 = vpack.c.bf16 %v561, %v559
    %v756 = vpack.c.bf16 %v115, %v114
    %v757 = vpack.c.bf16 %v341, %v339
    %v758 = vpack.c.bf16 %v566, %v564
    %v759 = vpack.c.bf16 %v118, %v117
    %v760 = vpack.c.bf16 %v346, %v344
    %v761 = vpack.c.bf16 %v571, %v569
    %v762 = vpack.c.bf16 %v121, %v120
    %v763 = vpack.c.bf16 %v351, %v349
    %v764 = vpack.c.bf16 %v576, %v574
    %v765 = vpack.c.bf16 %v124, %v123
    %v766 = vpack.c.bf16 %v356, %v354
    %v767 = vpack.c.bf16 %v581, %v579
    %v768 = vpack.c.bf16 %v127, %v126
    %v769 = vpack.c.bf16 %v361, %v359
    %v770 = vpack.c.bf16 %v586, %v584
    %v771 = vpack.c.bf16 %v130, %v129
    %v772 = vpack.c.bf16 %v366, %v364
    %v773 = vpack.c.bf16 %v591, %v589
    %v774 = vpack.c.bf16 %v133, %v132
    %v775 = vpack.c.bf16 %v371, %v369
    %v776 = vpack.c.bf16 %v596, %v594
    %v777 = vpack.c.bf16 %v136, %v135
    %v778 = vpack.c.bf16 %v376, %v374
    %v779 = vpack.c.bf16 %v601, %v599
    %v780 = vpack.c.bf16 %v139, %v138
    %v781 = vpack.c.bf16 %v381, %v379
    %v782 = vpack.c.bf16 %v606, %v604
    %v783 = vpack.c.bf16 %v142, %v141
    %v784 = vpack.c.bf16 %v386, %v384
    %v785 = vpack.c.bf16 %v611, %v609
    %v786 = vpack.c.bf16 %v145, %v144
    %v787 = vpack.c.bf16 %v391, %v389
    %v788 = vpack.c.bf16 %v616, %v614
    %v789 = vpack.c.bf16 %v148, %v147
    %v790 = vpack.c.bf16 %v396, %v394
    %v791 = vpack.c.bf16 %v621, %v619
    %v792 = vpack.c.bf16 %v151, %v150
    %v793 = vpack.c.bf16 %v401, %v399
    %v794 = vpack.c.bf16 %v626, %v624
    %v795 = vpack.c.bf16 %v154, %v153
    %v796 = vpack.c.bf16 %v406, %v404
    %v797 = vpack.c.bf16 %v631, %v629
    %v798 = vpack.c.bf16 %v157, %v156
    %v799 = vpack.c.bf16 %v411, %v409
    %v800 = vpack.c.bf16 %v636, %v634
    %v801 = vpack.c.bf16 %v160, %v159
    %v802 = vpack.c.bf16 %v416, %v414
    %v803 = vpack.c.bf16 %v641, %v639
    %v804 = vpack.c.bf16 %v163, %v162
    %v805 = vpack.c.bf16 %v421, %v419
    %v806 = vpack.c.bf16 %v646, %v644
    %v807 = vld [vmem:[#allocation6] sm:$0xf]
    %v808 = vld [vmem:[#allocation6 + $0x4] sm:$0xf]
    %v809 = vld [vmem:[#allocation6 + $0x8] sm:$0xf]
    %v810 = vld [vmem:[#allocation6 + $0xc] sm:$0xf]
    %v811 = vld [vmem:[#allocation6 + $0x10] sm:$0xf]
    %v812 = vld [vmem:[#allocation6 + $0x14] sm:$0xf]
    %v813 = vld [vmem:[#allocation6 + $0x18] sm:$0xf]
    %v814 = vld [vmem:[#allocation6 + $0x1c] sm:$0xf]
    %v815 = vld [vmem:[#allocation6 + $0x20] sm:$0xf]
    %v816 = vld [vmem:[#allocation6 + $0x24] sm:$0xf]
    %v817 = vld [vmem:[#allocation6 + $0x28] sm:$0xf]
    %v818 = vld [vmem:[#allocation6 + $0x2c] sm:$0xf]
    %v819 = vld [vmem:[#allocation6 + $0x30] sm:$0xf]
    %v820 = vld [vmem:[#allocation6 + $0x34] sm:$0xf]
    %v821 = vld [vmem:[#allocation6 + $0x38] sm:$0xf]
    %v822 = vld [vmem:[#allocation6 + $0x3c] sm:$0xf]
    %v823 = vld [vmem:[#allocation6 + $0x40] sm:$0xf]
    %v824 = vld [vmem:[#allocation6 + $0x44] sm:$0xf]
    %v825 = vld [vmem:[#allocation6 + $0x48] sm:$0xf]
    %v826 = vld [vmem:[#allocation6 + $0x4c] sm:$0xf]
    %v827 = vld [vmem:[#allocation6 + $0x50] sm:$0xf]
    %v828 = vld [vmem:[#allocation6 + $0x54] sm:$0xf]
    %v829 = vld [vmem:[#allocation6 + $0x58] sm:$0xf]
    %v830 = vld [vmem:[#allocation6 + $0x5c] sm:$0xf]
    %v831 = vld [vmem:[#allocation6 + $0x60] sm:$0xf]
    %v832 = vld [vmem:[#allocation6 + $0x64] sm:$0xf]
    %v833 = vld [vmem:[#allocation6 + $0x68] sm:$0xf]
    %v834 = vld [vmem:[#allocation6 + $0x6c] sm:$0xf]
    %v835 = vld [vmem:[#allocation6 + $0x70] sm:$0xf]
    %v836 = vld [vmem:[#allocation6 + $0x74] sm:$0xf]
    %v837 = vld [vmem:[#allocation6 + $0x78] sm:$0xf]
    %v838 = vld [vmem:[#allocation6 + $0x7c] sm:$0xf]
    %v839 = vld [vmem:[#allocation6 + $0x80] sm:$0xf]
    %v840 = vld [vmem:[#allocation6 + $0x84] sm:$0xf]
    %v841 = vld [vmem:[#allocation6 + $0x88] sm:$0xf]
    %v842 = vld [vmem:[#allocation6 + $0x8c] sm:$0xf]
    %v843 = vld [vmem:[#allocation6 + $0x90] sm:$0xf]
    %v844 = vld [vmem:[#allocation6 + $0x94] sm:$0xf]
    %v845 = vld [vmem:[#allocation6 + $0x98] sm:$0xf]
    %v846 = vld [vmem:[#allocation6 + $0x9c] sm:$0xf]
    %v847 = vld [vmem:[#allocation6 + $0xa0] sm:$0xf]
    %v848 = vld [vmem:[#allocation6 + $0xa4] sm:$0xf]
    %v849 = vld [vmem:[#allocation6 + $0xa8] sm:$0xf]
    %v850 = vld [vmem:[#allocation6 + $0xac] sm:$0xf]
    %v851 = vld [vmem:[#allocation6 + $0xb0] sm:$0xf]
    %v852 = vld [vmem:[#allocation6 + $0xb4] sm:$0xf]
    %v853 = vld [vmem:[#allocation6 + $0xb8] sm:$0xf]
    %v854 = vld [vmem:[#allocation6 + $0xbc] sm:$0xf]
    %s855 = scalar_lea.vmem [#allocation3], 24
    %v856 = vld [vmem:[%s855] sm:$0xff]
    %v857 = vld [vmem:[%s855 + $0x8] sm:$0xff]
    %v858 = vld [vmem:[%s855 + $0x10] sm:$0xff]
    %v859 = vld [vmem:[%s855 + $0x18] sm:$0xff]
    %v860 = vld [vmem:[%s855 + $0x20] sm:$0xff]
    %v861 = vld [vmem:[%s855 + $0x28] sm:$0xff]
    %v862 = vld [vmem:[%s855 + $0x30] sm:$0xff]
    %v863 = vld [vmem:[%s855 + $0x38] sm:$0xff]
    %v864 = vld [vmem:[%s855 + $0x40] sm:$0xff]
    %v865 = vld [vmem:[%s855 + $0x48] sm:$0xff]
    %v866 = vld [vmem:[%s855 + $0x50] sm:$0xff]
    %v867 = vld [vmem:[%s855 + $0x58] sm:$0xff]
    %v868 = vld [vmem:[%s855 + $0x60] sm:$0xff]
    %v869 = vld [vmem:[%s855 + $0x68] sm:$0xff]
    %v870 = vld [vmem:[%s855 + $0x70] sm:$0xff]
    %v871 = vld [vmem:[%s855 + $0x78] sm:$0xff]
    %v872 = vld [vmem:[%s855 + $0x80] sm:$0xff]
    %v873 = vld [vmem:[%s855 + $0x88] sm:$0xff]
    %v874 = vld [vmem:[%s855 + $0x90] sm:$0xff]
    %v875 = vld [vmem:[%s855 + $0x98] sm:$0xff]
    %v876 = vld [vmem:[%s855 + $0xa0] sm:$0xff]
    %v877 = vld [vmem:[%s855 + $0xa8] sm:$0xff]
    %v878 = vld [vmem:[%s855 + $0xb0] sm:$0xff]
    %v879 = vld [vmem:[%s855 + $0xb8] sm:$0xff]
    %v880 = vld [vmem:[%s855 + $0xc0] sm:$0xff]
    %v881 = vld [vmem:[%s855 + $0xc8] sm:$0xff]
    %v882 = vld [vmem:[%s855 + $0xd0] sm:$0xff]
    %v883 = vld [vmem:[%s855 + $0xd8] sm:$0xff]
    %v884 = vld [vmem:[%s855 + $0xe0] sm:$0xff]
    %v885 = vld [vmem:[%s855 + $0xe8] sm:$0xff]
    %v886 = vld [vmem:[%s855 + $0xf0] sm:$0xff]
    %v887 = vld [vmem:[%s855 + $0xf8] sm:$0xff]
    %v888 = vld [vmem:[%s855 + $0x100] sm:$0xff]
    %v889 = vld [vmem:[%s855 + $0x108] sm:$0xff]
    %v890 = vld [vmem:[%s855 + $0x110] sm:$0xff]
    %v891 = vld [vmem:[%s855 + $0x118] sm:$0xff]
    %v892 = vld [vmem:[%s855 + $0x120] sm:$0xff]
    %v893 = vld [vmem:[%s855 + $0x128] sm:$0xff]
    %v894 = vld [vmem:[%s855 + $0x130] sm:$0xff]
    %v895 = vld [vmem:[%s855 + $0x138] sm:$0xff]
    %v896 = vld [vmem:[%s855 + $0x140] sm:$0xff]
    %v897 = vld [vmem:[%s855 + $0x148] sm:$0xff]
    %v898 = vld [vmem:[%s855 + $0x150] sm:$0xff]
    %v899 = vld [vmem:[%s855 + $0x158] sm:$0xff]
    %v900 = vld [vmem:[%s855 + $0x160] sm:$0xff]
    %v901 = vld [vmem:[%s855 + $0x168] sm:$0xff]
    %v902 = vld [vmem:[%s855 + $0x170] sm:$0xff]
    %v903 = vld [vmem:[%s855 + $0x178] sm:$0xff]
    %v904 = vld [vmem:[%s855 + $0x1b0] sm:$0xff]
    %v905 = vld [vmem:[%s855 + $0x1b8] sm:$0xff]
    %v906 = vld [vmem:[%s855 + $0x1c0] sm:$0xff]
    %v907 = vld [vmem:[%s855 + $0x1c8] sm:$0xff]
    %v908 = vld [vmem:[%s855 + $0x1d0] sm:$0xff]
    %v909 = vld [vmem:[%s855 + $0x1d8] sm:$0xff]
    %v910 = vld [vmem:[%s855 + $0x1e0] sm:$0xff]
    %v911 = vld [vmem:[%s855 + $0x1e8] sm:$0xff]
    %v912 = vld [vmem:[%s855 + $0x1f0] sm:$0xff]
    %v913 = vld [vmem:[%s855 + $0x1f8] sm:$0xff]
    %v914 = vld [vmem:[%s855 + $0x200] sm:$0xff]
    %v915 = vld [vmem:[%s855 + $0x208] sm:$0xff]
    %v916 = vld [vmem:[%s855 + $0x210] sm:$0xff]
    %v917 = vld [vmem:[%s855 + $0x218] sm:$0xff]
    %v918 = vld [vmem:[%s855 + $0x220] sm:$0xff]
    %v919 = vld [vmem:[%s855 + $0x228] sm:$0xff]
    %v920 = vld [vmem:[%s855 + $0x230] sm:$0xff]
    %v921 = vld [vmem:[%s855 + $0x238] sm:$0xff]
    %v922 = vld [vmem:[%s855 + $0x240] sm:$0xff]
    %v923 = vld [vmem:[%s855 + $0x248] sm:$0xff]
    %v924 = vld [vmem:[%s855 + $0x250] sm:$0xff]
    %v925 = vld [vmem:[%s855 + $0x258] sm:$0xff]
    %v926 = vld [vmem:[%s855 + $0x260] sm:$0xff]
    %v927 = vld [vmem:[%s855 + $0x268] sm:$0xff]
    %v928 = vld [vmem:[%s855 + $0x270] sm:$0xff]
    %v929 = vld [vmem:[%s855 + $0x278] sm:$0xff]
    %v930 = vld [vmem:[%s855 + $0x280] sm:$0xff]
    %v931 = vld [vmem:[%s855 + $0x288] sm:$0xff]
    %v932 = vld [vmem:[%s855 + $0x290] sm:$0xff]
    %v933 = vld [vmem:[%s855 + $0x298] sm:$0xff]
    %v934 = vld [vmem:[%s855 + $0x2a0] sm:$0xff]
    %v935 = vld [vmem:[%s855 + $0x2a8] sm:$0xff]
    %v936 = vld [vmem:[%s855 + $0x2b0] sm:$0xff]
    %v937 = vld [vmem:[%s855 + $0x2b8] sm:$0xff]
    %v938 = vld [vmem:[%s855 + $0x2c0] sm:$0xff]
    %v939 = vld [vmem:[%s855 + $0x2c8] sm:$0xff]
    %v940 = vld [vmem:[%s855 + $0x2d0] sm:$0xff]
    %v941 = vld [vmem:[%s855 + $0x2d8] sm:$0xff]
    %v942 = vld [vmem:[%s855 + $0x2e0] sm:$0xff]
    %v943 = vld [vmem:[%s855 + $0x2e8] sm:$0xff]
    %v944 = vld [vmem:[%s855 + $0x2f0] sm:$0xff]
    %v945 = vld [vmem:[%s855 + $0x2f8] sm:$0xff]
    %v946 = vld [vmem:[%s855 + $0x300] sm:$0xff]
    %v947 = vld [vmem:[%s855 + $0x308] sm:$0xff]
    %v948 = vld [vmem:[%s855 + $0x310] sm:$0xff]
    %v949 = vld [vmem:[%s855 + $0x318] sm:$0xff]
    %v950 = vld [vmem:[%s855 + $0x320] sm:$0xff]
    %v951 = vld [vmem:[%s855 + $0x328] sm:$0xff]
    %v1048 = vrot.slane %v856, 1
    %v1049 = vrot.slane %v857, 1
    %v1050 = vsel %vm261, %v1048, %v1049
    %v1051 = vrot.slane %v858, 1
    %v1052 = vsel %vm261, %v1049, %v1051
    %v1053 = vrot.slane %v859, 1
    %v1054 = vrot.slane %v860, 1
    %v1055 = vsel %vm261, %v1053, %v1054
    %v1056 = vrot.slane %v861, 1
    %v1057 = vsel %vm261, %v1054, %v1056
    %v1058 = vrot.slane %v862, 1
    %v1059 = vrot.slane %v863, 1
    %v1060 = vsel %vm261, %v1058, %v1059
    %v1061 = vrot.slane %v864, 1
    %v1062 = vsel %vm261, %v1059, %v1061
    %v1063 = vrot.slane %v865, 1
    %v1064 = vrot.slane %v866, 1
    %v1065 = vsel %vm261, %v1063, %v1064
    %v1066 = vrot.slane %v867, 1
    %v1067 = vsel %vm261, %v1064, %v1066
    %v1068 = vrot.slane %v868, 1
    %v1069 = vrot.slane %v869, 1
    %v1070 = vsel %vm261, %v1068, %v1069
    %v1071 = vrot.slane %v870, 1
    %v1072 = vsel %vm261, %v1069, %v1071
    %v1073 = vrot.slane %v871, 1
    %v1074 = vrot.slane %v872, 1
    %v1075 = vsel %vm261, %v1073, %v1074
    %v1076 = vrot.slane %v873, 1
    %v1077 = vsel %vm261, %v1074, %v1076
    %v1078 = vrot.slane %v874, 1
    %v1079 = vrot.slane %v875, 1
    %v1080 = vsel %vm261, %v1078, %v1079
    %v1081 = vrot.slane %v876, 1
    %v1082 = vsel %vm261, %v1079, %v1081
    %v1083 = vrot.slane %v877, 1
    %v1084 = vrot.slane %v878, 1
    %v1085 = vsel %vm261, %v1083, %v1084
    %v1086 = vrot.slane %v879, 1
    %v1087 = vsel %vm261, %v1084, %v1086
    %v1088 = vrot.slane %v880, 1
    %v1089 = vrot.slane %v881, 1
    %v1090 = vsel %vm261, %v1088, %v1089
    %v1091 = vrot.slane %v882, 1
    %v1092 = vsel %vm261, %v1089, %v1091
    %v1093 = vrot.slane %v883, 1
    %v1094 = vrot.slane %v884, 1
    %v1095 = vsel %vm261, %v1093, %v1094
    %v1096 = vrot.slane %v885, 1
    %v1097 = vsel %vm261, %v1094, %v1096
    %v1098 = vrot.slane %v886, 1
    %v1099 = vrot.slane %v887, 1
    %v1100 = vsel %vm261, %v1098, %v1099
    %v1101 = vrot.slane %v888, 1
    %v1102 = vsel %vm261, %v1099, %v1101
    %v1103 = vrot.slane %v889, 1
    %v1104 = vrot.slane %v890, 1
    %v1105 = vsel %vm261, %v1103, %v1104
    %v1106 = vrot.slane %v891, 1
    %v1107 = vsel %vm261, %v1104, %v1106
    %v1108 = vrot.slane %v892, 1
    %v1109 = vrot.slane %v893, 1
    %v1110 = vsel %vm261, %v1108, %v1109
    %v1111 = vrot.slane %v894, 1
    %v1112 = vsel %vm261, %v1109, %v1111
    %v1113 = vrot.slane %v895, 1
    %v1114 = vrot.slane %v896, 1
    %v1115 = vsel %vm261, %v1113, %v1114
    %v1116 = vrot.slane %v897, 1
    %v1117 = vsel %vm261, %v1114, %v1116
    %v1118 = vrot.slane %v898, 1
    %v1119 = vrot.slane %v899, 1
    %v1120 = vsel %vm261, %v1118, %v1119
    %v1121 = vrot.slane %v900, 1
    %v1122 = vsel %vm261, %v1119, %v1121
    %v1123 = vrot.slane %v901, 1
    %v1124 = vrot.slane %v902, 1
    %v1125 = vsel %vm261, %v1123, %v1124
    %v1126 = vrot.slane %v903, 1
    %v1127 = vsel %vm261, %v1124, %v1126
    %v1128 = vrot.slane %v904, 1
    %v1129 = vrot.slane %v905, 1
    %v1130 = vsel %vm261, %v1128, %v1129
    %v1131 = vrot.slane %v906, 1
    %v1132 = vsel %vm261, %v1129, %v1131
    %v1133 = vrot.slane %v907, 1
    %v1134 = vrot.slane %v908, 1
    %v1135 = vsel %vm261, %v1133, %v1134
    %v1136 = vrot.slane %v909, 1
    %v1137 = vsel %vm261, %v1134, %v1136
    %v1138 = vrot.slane %v910, 1
    %v1139 = vrot.slane %v911, 1
    %v1140 = vsel %vm261, %v1138, %v1139
    %v1141 = vrot.slane %v912, 1
    %v1142 = vsel %vm261, %v1139, %v1141
    %v1143 = vrot.slane %v913, 1
    %v1144 = vrot.slane %v914, 1
    %v1145 = vsel %vm261, %v1143, %v1144
    %v1146 = vrot.slane %v915, 1
    %v1147 = vsel %vm261, %v1144, %v1146
    %v1148 = vrot.slane %v916, 1
    %v1149 = vrot.slane %v917, 1
    %v1150 = vsel %vm261, %v1148, %v1149
    %v1151 = vrot.slane %v918, 1
    %v1152 = vsel %vm261, %v1149, %v1151
    %v1153 = vrot.slane %v919, 1
    %v1154 = vrot.slane %v920, 1
    %v1155 = vsel %vm261, %v1153, %v1154
    %v1156 = vrot.slane %v921, 1
    %v1157 = vsel %vm261, %v1154, %v1156
    %v1158 = vrot.slane %v922, 1
    %v1159 = vrot.slane %v923, 1
    %v1160 = vsel %vm261, %v1158, %v1159
    %v1161 = vrot.slane %v924, 1
    %v1162 = vsel %vm261, %v1159, %v1161
    %v1163 = vrot.slane %v925, 1
    %v1164 = vrot.slane %v926, 1
    %v1165 = vsel %vm261, %v1163, %v1164
    %v1166 = vrot.slane %v927, 1
    %v1167 = vsel %vm261, %v1164, %v1166
    %v1168 = vrot.slane %v928, 1
    %v1169 = vrot.slane %v929, 1
    %v1170 = vsel %vm261, %v1168, %v1169
    %v1171 = vrot.slane %v930, 1
    %v1172 = vsel %vm261, %v1169, %v1171
    %v1173 = vrot.slane %v931, 1
    %v1174 = vrot.slane %v932, 1
    %v1175 = vsel %vm261, %v1173, %v1174
    %v1176 = vrot.slane %v933, 1
    %v1177 = vsel %vm261, %v1174, %v1176
    %v1178 = vrot.slane %v934, 1
    %v1179 = vrot.slane %v935, 1
    %v1180 = vsel %vm261, %v1178, %v1179
    %v1181 = vrot.slane %v936, 1
    %v1182 = vsel %vm261, %v1179, %v1181
    %v1183 = vrot.slane %v937, 1
    %v1184 = vrot.slane %v938, 1
    %v1185 = vsel %vm261, %v1183, %v1184
    %v1186 = vrot.slane %v939, 1
    %v1187 = vsel %vm261, %v1184, %v1186
    %v1188 = vrot.slane %v940, 1
    %v1189 = vrot.slane %v941, 1
    %v1190 = vsel %vm261, %v1188, %v1189
    %v1191 = vrot.slane %v942, 1
    %v1192 = vsel %vm261, %v1189, %v1191
    %v1193 = vrot.slane %v943, 1
    %v1194 = vrot.slane %v944, 1
    %v1195 = vsel %vm261, %v1193, %v1194
    %v1196 = vrot.slane %v945, 1
    %v1197 = vsel %vm261, %v1194, %v1196
    %v1198 = vrot.slane %v946, 1
    %v1199 = vrot.slane %v947, 1
    %v1200 = vsel %vm261, %v1198, %v1199
    %v1201 = vrot.slane %v948, 1
    %v1202 = vsel %vm261, %v1199, %v1201
    %v1203 = vrot.slane %v949, 1
    %v1204 = vrot.slane %v950, 1
    %v1205 = vsel %vm261, %v1203, %v1204
    %v1206 = vrot.slane %v951, 1
    %v1207 = vsel %vm261, %v1204, %v1206
    %v1272 = vrot.slane %v856, 2
    %v1273 = vrot.slane %v857, 2
    %v1274 = vsel %vm486, %v1272, %v1273
    %v1275 = vrot.slane %v858, 2
    %v1276 = vsel %vm486, %v1273, %v1275
    %v1277 = vrot.slane %v859, 2
    %v1278 = vrot.slane %v860, 2
    %v1279 = vsel %vm486, %v1277, %v1278
    %v1280 = vrot.slane %v861, 2
    %v1281 = vsel %vm486, %v1278, %v1280
    %v1282 = vrot.slane %v862, 2
    %v1283 = vrot.slane %v863, 2
    %v1284 = vsel %vm486, %v1282, %v1283
    %v1285 = vrot.slane %v864, 2
    %v1286 = vsel %vm486, %v1283, %v1285
    %v1287 = vrot.slane %v865, 2
    %v1288 = vrot.slane %v866, 2
    %v1289 = vsel %vm486, %v1287, %v1288
    %v1290 = vrot.slane %v867, 2
    %v1291 = vsel %vm486, %v1288, %v1290
    %v1292 = vrot.slane %v868, 2
    %v1293 = vrot.slane %v869, 2
    %v1294 = vsel %vm486, %v1292, %v1293
    %v1295 = vrot.slane %v870, 2
    %v1296 = vsel %vm486, %v1293, %v1295
    %v1297 = vrot.slane %v871, 2
    %v1298 = vrot.slane %v872, 2
    %v1299 = vsel %vm486, %v1297, %v1298
    %v1300 = vrot.slane %v873, 2
    %v1301 = vsel %vm486, %v1298, %v1300
    %v1302 = vrot.slane %v874, 2
    %v1303 = vrot.slane %v875, 2
    %v1304 = vsel %vm486, %v1302, %v1303
    %v1305 = vrot.slane %v876, 2
    %v1306 = vsel %vm486, %v1303, %v1305
    %v1307 = vrot.slane %v877, 2
    %v1308 = vrot.slane %v878, 2
    %v1309 = vsel %vm486, %v1307, %v1308
    %v1310 = vrot.slane %v879, 2
    %v1311 = vsel %vm486, %v1308, %v1310
    %v1312 = vrot.slane %v880, 2
    %v1313 = vrot.slane %v881, 2
    %v1314 = vsel %vm486, %v1312, %v1313
    %v1315 = vrot.slane %v882, 2
    %v1316 = vsel %vm486, %v1313, %v1315
    %v1317 = vrot.slane %v883, 2
    %v1318 = vrot.slane %v884, 2
    %v1319 = vsel %vm486, %v1317, %v1318
    %v1320 = vrot.slane %v885, 2
    %v1321 = vsel %vm486, %v1318, %v1320
    %v1322 = vrot.slane %v886, 2
    %v1323 = vrot.slane %v887, 2
    %v1324 = vsel %vm486, %v1322, %v1323
    %v1325 = vrot.slane %v888, 2
    %v1326 = vsel %vm486, %v1323, %v1325
    %v1327 = vrot.slane %v889, 2
    %v1328 = vrot.slane %v890, 2
    %v1329 = vsel %vm486, %v1327, %v1328
    %v1330 = vrot.slane %v891, 2
    %v1331 = vsel %vm486, %v1328, %v1330
    %v1332 = vrot.slane %v892, 2
    %v1333 = vrot.slane %v893, 2
    %v1334 = vsel %vm486, %v1332, %v1333
    %v1335 = vrot.slane %v894, 2
    %v1336 = vsel %vm486, %v1333, %v1335
    %v1337 = vrot.slane %v895, 2
    %v1338 = vrot.slane %v896, 2
    %v1339 = vsel %vm486, %v1337, %v1338
    %v1340 = vrot.slane %v897, 2
    %v1341 = vsel %vm486, %v1338, %v1340
    %v1342 = vrot.slane %v898, 2
    %v1343 = vrot.slane %v899, 2
    %v1344 = vsel %vm486, %v1342, %v1343
    %v1345 = vrot.slane %v900, 2
    %v1346 = vsel %vm486, %v1343, %v1345
    %v1347 = vrot.slane %v901, 2
    %v1348 = vrot.slane %v902, 2
    %v1349 = vsel %vm486, %v1347, %v1348
    %v1350 = vrot.slane %v903, 2
    %v1351 = vsel %vm486, %v1348, %v1350
    %v1352 = vrot.slane %v904, 2
    %v1353 = vrot.slane %v905, 2
    %v1354 = vsel %vm486, %v1352, %v1353
    %v1355 = vrot.slane %v906, 2
    %v1356 = vsel %vm486, %v1353, %v1355
    %v1357 = vrot.slane %v907, 2
    %v1358 = vrot.slane %v908, 2
    %v1359 = vsel %vm486, %v1357, %v1358
    %v1360 = vrot.slane %v909, 2
    %v1361 = vsel %vm486, %v1358, %v1360
    %v1362 = vrot.slane %v910, 2
    %v1363 = vrot.slane %v911, 2
    %v1364 = vsel %vm486, %v1362, %v1363
    %v1365 = vrot.slane %v912, 2
    %v1366 = vsel %vm486, %v1363, %v1365
    %v1367 = vrot.slane %v913, 2
    %v1368 = vrot.slane %v914, 2
    %v1369 = vsel %vm486, %v1367, %v1368
    %v1370 = vrot.slane %v915, 2
    %v1371 = vsel %vm486, %v1368, %v1370
    %v1372 = vrot.slane %v916, 2
    %v1373 = vrot.slane %v917, 2
    %v1374 = vsel %vm486, %v1372, %v1373
    %v1375 = vrot.slane %v918, 2
    %v1376 = vsel %vm486, %v1373, %v1375
    %v1377 = vrot.slane %v919, 2
    %v1378 = vrot.slane %v920, 2
    %v1379 = vsel %vm486, %v1377, %v1378
    %v1380 = vrot.slane %v921, 2
    %v1381 = vsel %vm486, %v1378, %v1380
    %v1382 = vrot.slane %v922, 2
    %v1383 = vrot.slane %v923, 2
    %v1384 = vsel %vm486, %v1382, %v1383
    %v1385 = vrot.slane %v924, 2
    %v1386 = vsel %vm486, %v1383, %v1385
    %v1387 = vrot.slane %v925, 2
    %v1388 = vrot.slane %v926, 2
    %v1389 = vsel %vm486, %v1387, %v1388
    %v1390 = vrot.slane %v927, 2
    %v1391 = vsel %vm486, %v1388, %v1390
    %v1392 = vrot.slane %v928, 2
    %v1393 = vrot.slane %v929, 2
    %v1394 = vsel %vm486, %v1392, %v1393
    %v1395 = vrot.slane %v930, 2
    %v1396 = vsel %vm486, %v1393, %v1395
    %v1397 = vrot.slane %v931, 2
    %v1398 = vrot.slane %v932, 2
    %v1399 = vsel %vm486, %v1397, %v1398
    %v1400 = vrot.slane %v933, 2
    %v1401 = vsel %vm486, %v1398, %v1400
    %v1402 = vrot.slane %v934, 2
    %v1403 = vrot.slane %v935, 2
    %v1404 = vsel %vm486, %v1402, %v1403
    %v1405 = vrot.slane %v936, 2
    %v1406 = vsel %vm486, %v1403, %v1405
    %v1407 = vrot.slane %v937, 2
    %v1408 = vrot.slane %v938, 2
    %v1409 = vsel %vm486, %v1407, %v1408
    %v1410 = vrot.slane %v939, 2
    %v1411 = vsel %vm486, %v1408, %v1410
    %v1412 = vrot.slane %v940, 2
    %v1413 = vrot.slane %v941, 2
    %v1414 = vsel %vm486, %v1412, %v1413
    %v1415 = vrot.slane %v942, 2
    %v1416 = vsel %vm486, %v1413, %v1415
    %v1417 = vrot.slane %v943, 2
    %v1418 = vrot.slane %v944, 2
    %v1419 = vsel %vm486, %v1417, %v1418
    %v1420 = vrot.slane %v945, 2
    %v1421 = vsel %vm486, %v1418, %v1420
    %v1422 = vrot.slane %v946, 2
    %v1423 = vrot.slane %v947, 2
    %v1424 = vsel %vm486, %v1422, %v1423
    %v1425 = vrot.slane %v948, 2
    %v1426 = vsel %vm486, %v1423, %v1425
    %v1427 = vrot.slane %v949, 2
    %v1428 = vrot.slane %v950, 2
    %v1429 = vsel %vm486, %v1427, %v1428
    %v1430 = vrot.slane %v951, 2
    %v1431 = vsel %vm486, %v1428, %v1430
    %v1496 = vpack.c.bf16 %v857, %v856
    %v1497 = vpack.c.bf16 %v1052, %v1050
    %v1498 = vpack.c.bf16 %v1276, %v1274
    %v1499 = vpack.c.bf16 %v860, %v859
    %v1500 = vpack.c.bf16 %v1057, %v1055
    %v1501 = vpack.c.bf16 %v1281, %v1279
    %v1502 = vpack.c.bf16 %v863, %v862
    %v1503 = vpack.c.bf16 %v1062, %v1060
    %v1504 = vpack.c.bf16 %v1286, %v1284
    %v1505 = vpack.c.bf16 %v866, %v865
    %v1506 = vpack.c.bf16 %v1067, %v1065
    %v1507 = vpack.c.bf16 %v1291, %v1289
    %v1508 = vpack.c.bf16 %v869, %v868
    %v1509 = vpack.c.bf16 %v1072, %v1070
    %v1510 = vpack.c.bf16 %v1296, %v1294
    %v1511 = vpack.c.bf16 %v872, %v871
    %v1512 = vpack.c.bf16 %v1077, %v1075
    %v1513 = vpack.c.bf16 %v1301, %v1299
    %v1514 = vpack.c.bf16 %v875, %v874
    %v1515 = vpack.c.bf16 %v1082, %v1080
    %v1516 = vpack.c.bf16 %v1306, %v1304
    %v1517 = vpack.c.bf16 %v878, %v877
    %v1518 = vpack.c.bf16 %v1087, %v1085
    %v1519 = vpack.c.bf16 %v1311, %v1309
    %v1520 = vpack.c.bf16 %v881, %v880
    %v1521 = vpack.c.bf16 %v1092, %v1090
    %v1522 = vpack.c.bf16 %v1316, %v1314
    %v1523 = vpack.c.bf16 %v884, %v883
    %v1524 = vpack.c.bf16 %v1097, %v1095
    %v1525 = vpack.c.bf16 %v1321, %v1319
    %v1526 = vpack.c.bf16 %v887, %v886
    %v1527 = vpack.c.bf16 %v1102, %v1100
    %v1528 = vpack.c.bf16 %v1326, %v1324
    %v1529 = vpack.c.bf16 %v890, %v889
    %v1530 = vpack.c.bf16 %v1107, %v1105
    %v1531 = vpack.c.bf16 %v1331, %v1329
    %v1532 = vpack.c.bf16 %v893, %v892
    %v1533 = vpack.c.bf16 %v1112, %v1110
    %v1534 = vpack.c.bf16 %v1336, %v1334
    %v1535 = vpack.c.bf16 %v896, %v895
    %v1536 = vpack.c.bf16 %v1117, %v1115
    %v1537 = vpack.c.bf16 %v1341, %v1339
    %v1538 = vpack.c.bf16 %v899, %v898
    %v1539 = vpack.c.bf16 %v1122, %v1120
    %v1540 = vpack.c.bf16 %v1346, %v1344
    %v1541 = vpack.c.bf16 %v902, %v901
    %v1542 = vpack.c.bf16 %v1127, %v1125
    %v1543 = vpack.c.bf16 %v1351, %v1349
    %v1544 = vpack.c.bf16 %v905, %v904
    %v1545 = vpack.c.bf16 %v1132, %v1130
    %v1546 = vpack.c.bf16 %v1356, %v1354
    %v1547 = vpack.c.bf16 %v908, %v907
    %v1548 = vpack.c.bf16 %v1137, %v1135
    %v1549 = vpack.c.bf16 %v1361, %v1359
    %v1550 = vpack.c.bf16 %v911, %v910
    %v1551 = vpack.c.bf16 %v1142, %v1140
    %v1552 = vpack.c.bf16 %v1366, %v1364
    %v1553 = vpack.c.bf16 %v914, %v913
    %v1554 = vpack.c.bf16 %v1147, %v1145
    %v1555 = vpack.c.bf16 %v1371, %v1369
    %v1556 = vpack.c.bf16 %v917, %v916
    %v1557 = vpack.c.bf16 %v1152, %v1150
    %v1558 = vpack.c.bf16 %v1376, %v1374
    %v1559 = vpack.c.bf16 %v920, %v919
    %v1560 = vpack.c.bf16 %v1157, %v1155
    %v1561 = vpack.c.bf16 %v1381, %v1379
    %v1562 = vpack.c.bf16 %v923, %v922
    %v1563 = vpack.c.bf16 %v1162, %v1160
    %v1564 = vpack.c.bf16 %v1386, %v1384
    %v1565 = vpack.c.bf16 %v926, %v925
    %v1566 = vpack.c.bf16 %v1167, %v1165
    %v1567 = vpack.c.bf16 %v1391, %v1389
    %v1568 = vpack.c.bf16 %v929, %v928
    %v1569 = vpack.c.bf16 %v1172, %v1170
    %v1570 = vpack.c.bf16 %v1396, %v1394
    %v1571 = vpack.c.bf16 %v932, %v931
    %v1572 = vpack.c.bf16 %v1177, %v1175
    %v1573 = vpack.c.bf16 %v1401, %v1399
    %v1574 = vpack.c.bf16 %v935, %v934
    %v1575 = vpack.c.bf16 %v1182, %v1180
    %v1576 = vpack.c.bf16 %v1406, %v1404
    %v1577 = vpack.c.bf16 %v938, %v937
    %v1578 = vpack.c.bf16 %v1187, %v1185
    %v1579 = vpack.c.bf16 %v1411, %v1409
    %v1580 = vpack.c.bf16 %v941, %v940
    %v1581 = vpack.c.bf16 %v1192, %v1190
    %v1582 = vpack.c.bf16 %v1416, %v1414
    %v1583 = vpack.c.bf16 %v944, %v943
    %v1584 = vpack.c.bf16 %v1197, %v1195
    %v1585 = vpack.c.bf16 %v1421, %v1419
    %v1586 = vpack.c.bf16 %v947, %v946
    %v1587 = vpack.c.bf16 %v1202, %v1200
    %v1588 = vpack.c.bf16 %v1426, %v1424
    %v1589 = vpack.c.bf16 %v950, %v949
    %v1590 = vpack.c.bf16 %v1207, %v1205
    %v1591 = vpack.c.bf16 %v1431, %v1429
    %s1592 = scalar_lea.vmem [#allocation6], 192
    %v1593 = vld [vmem:[%s1592] sm:$0xf]
    %v1594 = vld [vmem:[%s1592 + $0x4] sm:$0xf]
    %v1595 = vld [vmem:[%s1592 + $0x8] sm:$0xf]
    %v1596 = vld [vmem:[%s1592 + $0xc] sm:$0xf]
    %v1597 = vld [vmem:[%s1592 + $0x10] sm:$0xf]
    %v1598 = vld [vmem:[%s1592 + $0x14] sm:$0xf]
    %v1599 = vld [vmem:[%s1592 + $0x18] sm:$0xf]
    %v1600 = vld [vmem:[%s1592 + $0x1c] sm:$0xf]
    %v1601 = vld [vmem:[%s1592 + $0x20] sm:$0xf]
    %v1602 = vld [vmem:[%s1592 + $0x24] sm:$0xf]
    %v1603 = vld [vmem:[%s1592 + $0x28] sm:$0xf]
    %v1604 = vld [vmem:[%s1592 + $0x2c] sm:$0xf]
    %v1605 = vld [vmem:[%s1592 + $0x30] sm:$0xf]
    %v1606 = vld [vmem:[%s1592 + $0x34] sm:$0xf]
    %v1607 = vld [vmem:[%s1592 + $0x38] sm:$0xf]
    %v1608 = vld [vmem:[%s1592 + $0x3c] sm:$0xf]
    %v1609 = vld [vmem:[%s1592 + $0x40] sm:$0xf]
    %v1610 = vld [vmem:[%s1592 + $0x44] sm:$0xf]
    %v1611 = vld [vmem:[%s1592 + $0x48] sm:$0xf]
    %v1612 = vld [vmem:[%s1592 + $0x4c] sm:$0xf]
    %v1613 = vld [vmem:[%s1592 + $0x50] sm:$0xf]
    %v1614 = vld [vmem:[%s1592 + $0x54] sm:$0xf]
    %v1615 = vld [vmem:[%s1592 + $0x58] sm:$0xf]
    %v1616 = vld [vmem:[%s1592 + $0x5c] sm:$0xf]
    %v1617 = vld [vmem:[%s1592 + $0x60] sm:$0xf]
    %v1618 = vld [vmem:[%s1592 + $0x64] sm:$0xf]
    %v1619 = vld [vmem:[%s1592 + $0x68] sm:$0xf]
    %v1620 = vld [vmem:[%s1592 + $0x6c] sm:$0xf]
    %v1621 = vld [vmem:[%s1592 + $0x70] sm:$0xf]
    %v1622 = vld [vmem:[%s1592 + $0x74] sm:$0xf]
    %v1623 = vld [vmem:[%s1592 + $0x78] sm:$0xf]
    %v1624 = vld [vmem:[%s1592 + $0x7c] sm:$0xf]
    %v1625 = vld [vmem:[%s1592 + $0x80] sm:$0xf]
    %v1626 = vld [vmem:[%s1592 + $0x84] sm:$0xf]
    %v1627 = vld [vmem:[%s1592 + $0x88] sm:$0xf]
    %v1628 = vld [vmem:[%s1592 + $0x8c] sm:$0xf]
    %v1629 = vld [vmem:[%s1592 + $0x90] sm:$0xf]
    %v1630 = vld [vmem:[%s1592 + $0x94] sm:$0xf]
    %v1631 = vld [vmem:[%s1592 + $0x98] sm:$0xf]
    %v1632 = vld [vmem:[%s1592 + $0x9c] sm:$0xf]
    %v1633 = vld [vmem:[%s1592 + $0xa0] sm:$0xf]
    %v1634 = vld [vmem:[%s1592 + $0xa4] sm:$0xf]
    %v1635 = vld [vmem:[%s1592 + $0xa8] sm:$0xf]
    %v1636 = vld [vmem:[%s1592 + $0xac] sm:$0xf]
    %v1637 = vld [vmem:[%s1592 + $0xb0] sm:$0xf]
    %v1638 = vld [vmem:[%s1592 + $0xb4] sm:$0xf]
    %v1639 = vld [vmem:[%s1592 + $0xb8] sm:$0xf]
    %v1640 = vld [vmem:[%s1592 + $0xbc] sm:$0xf]
    %v1689 = vunpack.c.l.b16 %v1593
    %v1690 = vunpack.c.l.b16 %v1594
    %v1691 = vunpack.c.l.b16 %v1595
    %v1692 = vunpack.c.l.b16 %v1596
    %v1693 = vunpack.c.l.b16 %v1597
    %v1694 = vunpack.c.l.b16 %v1598
    %v1695 = vunpack.c.l.b16 %v1599
    %v1696 = vunpack.c.l.b16 %v1600
    %v1697 = vunpack.c.l.b16 %v1601
    %v1698 = vunpack.c.l.b16 %v1602
    %v1699 = vunpack.c.l.b16 %v1603
    %v1700 = vunpack.c.l.b16 %v1604
    %v1701 = vunpack.c.l.b16 %v1605
    %v1702 = vunpack.c.l.b16 %v1606
    %v1703 = vunpack.c.l.b16 %v1607
    %v1704 = vunpack.c.l.b16 %v1608
    %v1705 = vunpack.c.l.b16 %v1609
    %v1706 = vunpack.c.l.b16 %v1610
    %v1707 = vunpack.c.l.b16 %v1611
    %v1708 = vunpack.c.l.b16 %v1612
    %v1709 = vunpack.c.l.b16 %v1613
    %v1710 = vunpack.c.l.b16 %v1614
    %v1711 = vunpack.c.l.b16 %v1615
    %v1712 = vunpack.c.l.b16 %v1616
    %v1713 = vunpack.c.l.b16 %v1617
    %v1714 = vunpack.c.l.b16 %v1618
    %v1715 = vunpack.c.l.b16 %v1619
    %v1716 = vunpack.c.l.b16 %v1620
    %v1717 = vunpack.c.l.b16 %v1621
    %v1718 = vunpack.c.l.b16 %v1622
    %v1719 = vunpack.c.l.b16 %v1623
    %v1720 = vunpack.c.l.b16 %v1624
    %v1721 = vunpack.c.l.b16 %v1625
    %v1722 = vunpack.c.l.b16 %v1626
    %v1723 = vunpack.c.l.b16 %v1627
    %v1724 = vunpack.c.l.b16 %v1628
    %v1725 = vunpack.c.l.b16 %v1629
    %v1726 = vunpack.c.l.b16 %v1630
    %v1727 = vunpack.c.l.b16 %v1631
    %v1728 = vunpack.c.l.b16 %v1632
    %v1729 = vunpack.c.l.b16 %v1633
    %v1730 = vunpack.c.l.b16 %v1634
    %v1731 = vunpack.c.l.b16 %v1635
    %v1732 = vunpack.c.l.b16 %v1636
    %v1733 = vunpack.c.l.b16 %v1637
    %v1734 = vunpack.c.l.b16 %v1638
    %v1735 = vunpack.c.l.b16 %v1639
    %v1736 = vunpack.c.l.b16 %v1640
    %v1737 = vpack.c.b16 %v1690, %v1689
    %v1738 = vpack.c.b16 %v1692, %v1691
    %v1739 = vpack.c.b16 %v1694, %v1693
    %v1740 = vpack.c.b16 %v1696, %v1695
    %v1741 = vpack.c.b16 %v1698, %v1697
    %v1742 = vpack.c.b16 %v1700, %v1699
    %v1743 = vpack.c.b16 %v1702, %v1701
    %v1744 = vpack.c.b16 %v1704, %v1703
    %v1745 = vpack.c.b16 %v1706, %v1705
    %v1746 = vpack.c.b16 %v1708, %v1707
    %v1747 = vpack.c.b16 %v1710, %v1709
    %v1748 = vpack.c.b16 %v1712, %v1711
    %v1749 = vpack.c.b16 %v1714, %v1713
    %v1750 = vpack.c.b16 %v1716, %v1715
    %v1751 = vpack.c.b16 %v1718, %v1717
    %v1752 = vpack.c.b16 %v1720, %v1719
    %v1753 = vpack.c.b16 %v1722, %v1721
    %v1754 = vpack.c.b16 %v1724, %v1723
    %v1755 = vpack.c.b16 %v1726, %v1725
    %v1756 = vpack.c.b16 %v1728, %v1727
    %v1757 = vpack.c.b16 %v1730, %v1729
    %v1758 = vpack.c.b16 %v1732, %v1731
    %v1759 = vpack.c.b16 %v1734, %v1733
    %v1760 = vpack.c.b16 %v1736, %v1735
    %1785 = vmatprep.subr.bf16.mxu0 0
    %1786 = vmatpush1.bf16.msra.mxu0 %v1744
    %1787 = vmatprep.subr.bf16.mxu0 0
    %1788 = vmatpush1.bf16.msra.mxu0 %v1743
    %1789 = vmatprep.subr.bf16.mxu0 0
    %1790 = vmatpush1.bf16.msra.mxu0 %v1742
    %1791 = vmatprep.subr.bf16.mxu0 0
    %1792 = vmatpush1.bf16.msra.mxu0 %v1741
    %1793 = vmatprep.subr.bf16.mxu0 0
    %1794 = vmatpush1.bf16.msra.mxu0 %v1740
    %1795 = vmatprep.subr.bf16.mxu0 0
    %1796 = vmatpush1.bf16.msra.mxu0 %v1739
    %1797 = vmatprep.subr.bf16.mxu0 0
    %1798 = vmatpush1.bf16.msra.mxu0 %v1738
    %1799 = vmatprep.subr.bf16.mxu0 0
    %1800 = vmatpush1.bf16.msra.mxu0 %v1737
    %1801 = vmatprep.subr.bf16.mxu0 0
    %1802 = vmatpush2.bf16.msra.mxu0 %v1752
    %1803 = vmatprep.subr.bf16.mxu0 0
    %1804 = vmatpush2.bf16.msra.mxu0 %v1751
    %1805 = vmatprep.subr.bf16.mxu0 0
    %1806 = vmatpush2.bf16.msra.mxu0 %v1750
    %1807 = vmatprep.subr.bf16.mxu0 0
    %1808 = vmatpush2.bf16.msra.mxu0 %v1749
    %1809 = vmatprep.subr.bf16.mxu0 0
    %1810 = vmatpush2.bf16.msra.mxu0 %v1748
    %1811 = vmatprep.subr.bf16.mxu0 0
    %1812 = vmatpush2.bf16.msra.mxu0 %v1747
    %1813 = vmatprep.subr.bf16.mxu0 0
    %1814 = vmatpush2.bf16.msra.mxu0 %v1746
    %1815 = vmatprep.subr.bf16.mxu0 0
    %1816 = vmatpush2.bf16.msra.mxu0 %v1745
    %1817 = vmatprep.mubr.bf16.mxu0 %v1497
    %1818 = vmatmul.mubr.bf16.gmra.mxu0 %v1496
    %v1819 = vpop.f32.mrf.mxu0
    %v1820 = vadd.f32 0.0, %v1819
    %v1821 = vpop.f32.mrf.mxu0
    %v1822 = vpop.f32.mrf.mxu0
    %v1823 = vadd.f32 0.0, %v1822
    %v1824 = vpop.f32.mrf.mxu0
    %1825 = vmatprep.mubr.bf16.mxu0 %v1500
    %1826 = vmatmul.mubr.bf16.gmra.mxu0 %v1499
    %v1827 = vpop.f32.mrf.mxu0
    %v1828 = vadd.f32 0.0, %v1827
    %v1829 = vpop.f32.mrf.mxu0
    %v1830 = vpop.f32.mrf.mxu0
    %v1831 = vadd.f32 0.0, %v1830
    %v1832 = vpop.f32.mrf.mxu0
    %1833 = vmatprep.mubr.bf16.mxu0 %v1503
    %1834 = vmatmul.mubr.bf16.gmra.mxu0 %v1502
    %v1835 = vpop.f32.mrf.mxu0
    %v1836 = vadd.f32 0.0, %v1835
    %v1837 = vpop.f32.mrf.mxu0
    %v1838 = vpop.f32.mrf.mxu0
    %v1839 = vadd.f32 0.0, %v1838
    %v1840 = vpop.f32.mrf.mxu0
    %1841 = vmatprep.mubr.bf16.mxu0 %v1506
    %1842 = vmatmul.mubr.bf16.gmra.mxu0 %v1505
    %v1843 = vpop.f32.mrf.mxu0
    %v1844 = vadd.f32 0.0, %v1843
    %v1845 = vpop.f32.mrf.mxu0
    %v1846 = vpop.f32.mrf.mxu0
    %v1847 = vadd.f32 0.0, %v1846
    %v1848 = vpop.f32.mrf.mxu0
    %1849 = vmatprep.mubr.bf16.mxu0 %v1509
    %1850 = vmatmul.mubr.bf16.gmra.mxu0 %v1508
    %v1851 = vpop.f32.mrf.mxu0
    %v1852 = vadd.f32 0.0, %v1851
    %v1853 = vpop.f32.mrf.mxu0
    %v1854 = vpop.f32.mrf.mxu0
    %v1855 = vadd.f32 0.0, %v1854
    %v1856 = vpop.f32.mrf.mxu0
    %1857 = vmatprep.mubr.bf16.mxu0 %v1512
    %1858 = vmatmul.mubr.bf16.gmra.mxu0 %v1511
    %v1859 = vpop.f32.mrf.mxu0
    %v1860 = vadd.f32 0.0, %v1859
    %v1861 = vpop.f32.mrf.mxu0
    %v1862 = vpop.f32.mrf.mxu0
    %v1863 = vadd.f32 0.0, %v1862
    %v1864 = vpop.f32.mrf.mxu0
    %1865 = vmatprep.mubr.bf16.mxu0 %v1515
    %1866 = vmatmul.mubr.bf16.gmra.mxu0 %v1514
    %v1867 = vpop.f32.mrf.mxu0
    %v1868 = vadd.f32 0.0, %v1867
    %v1869 = vpop.f32.mrf.mxu0
    %v1870 = vpop.f32.mrf.mxu0
    %v1871 = vadd.f32 0.0, %v1870
    %v1872 = vpop.f32.mrf.mxu0
    %1873 = vmatprep.mubr.bf16.mxu0 %v1518
    %1874 = vmatmul.mubr.bf16.gmra.mxu0 %v1517
    %v1875 = vpop.f32.mrf.mxu0
    %v1876 = vadd.f32 0.0, %v1875
    %v1877 = vpop.f32.mrf.mxu0
    %v1878 = vpop.f32.mrf.mxu0
    %v1879 = vadd.f32 0.0, %v1878
    %v1880 = vpop.f32.mrf.mxu0
    %1881 = vmatprep.mubr.bf16.mxu0 %v1521
    %1882 = vmatmul.mubr.bf16.gmra.mxu0 %v1520
    %v1883 = vpop.f32.mrf.mxu0
    %v1884 = vadd.f32 0.0, %v1883
    %v1885 = vpop.f32.mrf.mxu0
    %v1886 = vpop.f32.mrf.mxu0
    %v1887 = vadd.f32 0.0, %v1886
    %v1888 = vpop.f32.mrf.mxu0
    %1889 = vmatprep.mubr.bf16.mxu0 %v1524
    %1890 = vmatmul.mubr.bf16.gmra.mxu0 %v1523
    %v1891 = vpop.f32.mrf.mxu0
    %v1892 = vadd.f32 0.0, %v1891
    %v1893 = vpop.f32.mrf.mxu0
    %v1894 = vpop.f32.mrf.mxu0
    %v1895 = vadd.f32 0.0, %v1894
    %v1896 = vpop.f32.mrf.mxu0
    %1897 = vmatprep.mubr.bf16.mxu0 %v1527
    %1898 = vmatmul.mubr.bf16.gmra.mxu0 %v1526
    %v1899 = vpop.f32.mrf.mxu0
    %v1900 = vadd.f32 0.0, %v1899
    %v1901 = vpop.f32.mrf.mxu0
    %v1902 = vpop.f32.mrf.mxu0
    %v1903 = vadd.f32 0.0, %v1902
    %v1904 = vpop.f32.mrf.mxu0
    %1905 = vmatprep.mubr.bf16.mxu0 %v1530
    %1906 = vmatmul.mubr.bf16.gmra.mxu0 %v1529
    %v1907 = vpop.f32.mrf.mxu0
    %v1908 = vadd.f32 0.0, %v1907
    %v1909 = vpop.f32.mrf.mxu0
    %v1910 = vpop.f32.mrf.mxu0
    %v1911 = vadd.f32 0.0, %v1910
    %v1912 = vpop.f32.mrf.mxu0
    %1913 = vmatprep.mubr.bf16.mxu0 %v1533
    %1914 = vmatmul.mubr.bf16.gmra.mxu0 %v1532
    %v1915 = vpop.f32.mrf.mxu0
    %v1916 = vadd.f32 0.0, %v1915
    %v1917 = vpop.f32.mrf.mxu0
    %v1918 = vpop.f32.mrf.mxu0
    %v1919 = vadd.f32 0.0, %v1918
    %v1920 = vpop.f32.mrf.mxu0
    %1921 = vmatprep.mubr.bf16.mxu0 %v1536
    %1922 = vmatmul.mubr.bf16.gmra.mxu0 %v1535
    %v1923 = vpop.f32.mrf.mxu0
    %v1924 = vadd.f32 0.0, %v1923
    %v1925 = vpop.f32.mrf.mxu0
    %v1926 = vpop.f32.mrf.mxu0
    %v1927 = vadd.f32 0.0, %v1926
    %v1928 = vpop.f32.mrf.mxu0
    %1929 = vmatprep.mubr.bf16.mxu0 %v1539
    %1930 = vmatmul.mubr.bf16.gmra.mxu0 %v1538
    %v1931 = vpop.f32.mrf.mxu0
    %v1932 = vadd.f32 0.0, %v1931
    %v1933 = vpop.f32.mrf.mxu0
    %v1934 = vpop.f32.mrf.mxu0
    %v1935 = vadd.f32 0.0, %v1934
    %v1936 = vpop.f32.mrf.mxu0
    %1937 = vmatprep.mubr.bf16.mxu0 %v1542
    %1938 = vmatmul.mubr.bf16.gmra.mxu0 %v1541
    %v1939 = vpop.f32.mrf.mxu0
    %v1940 = vadd.f32 0.0, %v1939
    %v1941 = vpop.f32.mrf.mxu0
    %v1942 = vpop.f32.mrf.mxu0
    %v1943 = vadd.f32 0.0, %v1942
    %v1944 = vpop.f32.mrf.mxu0
    %1945 = vmatprep.mubr.bf16.mxu0 %v1545
    %1946 = vmatmul.mubr.bf16.gmra.mxu0 %v1544
    %v1947 = vpop.f32.mrf.mxu0
    %v1948 = vadd.f32 0.0, %v1947
    %v1949 = vpop.f32.mrf.mxu0
    %v1950 = vpop.f32.mrf.mxu0
    %v1951 = vadd.f32 0.0, %v1950
    %v1952 = vpop.f32.mrf.mxu0
    %1953 = vmatprep.mubr.bf16.mxu0 %v1548
    %1954 = vmatmul.mubr.bf16.gmra.mxu0 %v1547
    %v1955 = vpop.f32.mrf.mxu0
    %v1956 = vadd.f32 0.0, %v1955
    %v1957 = vpop.f32.mrf.mxu0
    %v1958 = vpop.f32.mrf.mxu0
    %v1959 = vadd.f32 0.0, %v1958
    %v1960 = vpop.f32.mrf.mxu0
    %1961 = vmatprep.mubr.bf16.mxu0 %v1551
    %1962 = vmatmul.mubr.bf16.gmra.mxu0 %v1550
    %v1963 = vpop.f32.mrf.mxu0
    %v1964 = vadd.f32 0.0, %v1963
    %v1965 = vpop.f32.mrf.mxu0
    %v1966 = vpop.f32.mrf.mxu0
    %v1967 = vadd.f32 0.0, %v1966
    %v1968 = vpop.f32.mrf.mxu0
    %1969 = vmatprep.mubr.bf16.mxu0 %v1554
    %1970 = vmatmul.mubr.bf16.gmra.mxu0 %v1553
    %v1971 = vpop.f32.mrf.mxu0
    %v1972 = vadd.f32 0.0, %v1971
    %v1973 = vpop.f32.mrf.mxu0
    %v1974 = vpop.f32.mrf.mxu0
    %v1975 = vadd.f32 0.0, %v1974
    %v1976 = vpop.f32.mrf.mxu0
    %1977 = vmatprep.mubr.bf16.mxu0 %v1557
    %1978 = vmatmul.mubr.bf16.gmra.mxu0 %v1556
    %v1979 = vpop.f32.mrf.mxu0
    %v1980 = vadd.f32 0.0, %v1979
    %v1981 = vpop.f32.mrf.mxu0
    %v1982 = vpop.f32.mrf.mxu0
    %v1983 = vadd.f32 0.0, %v1982
    %v1984 = vpop.f32.mrf.mxu0
    %1985 = vmatprep.mubr.bf16.mxu0 %v1560
    %1986 = vmatmul.mubr.bf16.gmra.mxu0 %v1559
    %v1987 = vpop.f32.mrf.mxu0
    %v1988 = vadd.f32 0.0, %v1987
    %v1989 = vpop.f32.mrf.mxu0
    %v1990 = vpop.f32.mrf.mxu0
    %v1991 = vadd.f32 0.0, %v1990
    %v1992 = vpop.f32.mrf.mxu0
    %1993 = vmatprep.mubr.bf16.mxu0 %v1563
    %1994 = vmatmul.mubr.bf16.gmra.mxu0 %v1562
    %v1995 = vpop.f32.mrf.mxu0
    %v1996 = vadd.f32 0.0, %v1995
    %v1997 = vpop.f32.mrf.mxu0
    %v1998 = vpop.f32.mrf.mxu0
    %v1999 = vadd.f32 0.0, %v1998
    %v2000 = vpop.f32.mrf.mxu0
    %2001 = vmatprep.mubr.bf16.mxu0 %v1566
    %2002 = vmatmul.mubr.bf16.gmra.mxu0 %v1565
    %v2003 = vpop.f32.mrf.mxu0
    %v2004 = vadd.f32 0.0, %v2003
    %v2005 = vpop.f32.mrf.mxu0
    %v2006 = vpop.f32.mrf.mxu0
    %v2007 = vadd.f32 0.0, %v2006
    %v2008 = vpop.f32.mrf.mxu0
    %2009 = vmatprep.mubr.bf16.mxu0 %v1569
    %2010 = vmatmul.mubr.bf16.gmra.mxu0 %v1568
    %v2011 = vpop.f32.mrf.mxu0
    %v2012 = vadd.f32 0.0, %v2011
    %v2013 = vpop.f32.mrf.mxu0
    %v2014 = vpop.f32.mrf.mxu0
    %v2015 = vadd.f32 0.0, %v2014
    %v2016 = vpop.f32.mrf.mxu0
    %2017 = vmatprep.mubr.bf16.mxu0 %v1572
    %2018 = vmatmul.mubr.bf16.gmra.mxu0 %v1571
    %v2019 = vpop.f32.mrf.mxu0
    %v2020 = vadd.f32 0.0, %v2019
    %v2021 = vpop.f32.mrf.mxu0
    %v2022 = vpop.f32.mrf.mxu0
    %v2023 = vadd.f32 0.0, %v2022
    %v2024 = vpop.f32.mrf.mxu0
    %2025 = vmatprep.mubr.bf16.mxu0 %v1575
    %2026 = vmatmul.mubr.bf16.gmra.mxu0 %v1574
    %v2027 = vpop.f32.mrf.mxu0
    %v2028 = vadd.f32 0.0, %v2027
    %v2029 = vpop.f32.mrf.mxu0
    %v2030 = vpop.f32.mrf.mxu0
    %v2031 = vadd.f32 0.0, %v2030
    %v2032 = vpop.f32.mrf.mxu0
    %2033 = vmatprep.mubr.bf16.mxu0 %v1578
    %2034 = vmatmul.mubr.bf16.gmra.mxu0 %v1577
    %v2035 = vpop.f32.mrf.mxu0
    %v2036 = vadd.f32 0.0, %v2035
    %v2037 = vpop.f32.mrf.mxu0
    %v2038 = vpop.f32.mrf.mxu0
    %v2039 = vadd.f32 0.0, %v2038
    %v2040 = vpop.f32.mrf.mxu0
    %2041 = vmatprep.mubr.bf16.mxu0 %v1581
    %2042 = vmatmul.mubr.bf16.gmra.mxu0 %v1580
    %v2043 = vpop.f32.mrf.mxu0
    %v2044 = vadd.f32 0.0, %v2043
    %v2045 = vpop.f32.mrf.mxu0
    %v2046 = vpop.f32.mrf.mxu0
    %v2047 = vadd.f32 0.0, %v2046
    %v2048 = vpop.f32.mrf.mxu0
    %2049 = vmatprep.mubr.bf16.mxu0 %v1584
    %2050 = vmatmul.mubr.bf16.gmra.mxu0 %v1583
    %v2051 = vpop.f32.mrf.mxu0
    %v2052 = vadd.f32 0.0, %v2051
    %v2053 = vpop.f32.mrf.mxu0
    %v2054 = vpop.f32.mrf.mxu0
    %v2055 = vadd.f32 0.0, %v2054
    %v2056 = vpop.f32.mrf.mxu0
    %2057 = vmatprep.mubr.bf16.mxu0 %v1587
    %2058 = vmatmul.mubr.bf16.gmra.mxu0 %v1586
    %v2059 = vpop.f32.mrf.mxu0
    %v2060 = vadd.f32 0.0, %v2059
    %v2061 = vpop.f32.mrf.mxu0
    %v2062 = vpop.f32.mrf.mxu0
    %v2063 = vadd.f32 0.0, %v2062
    %v2064 = vpop.f32.mrf.mxu0
    %2065 = vmatprep.mubr.bf16.mxu0 %v1590
    %2066 = vmatmul.mubr.bf16.gmra.mxu0 %v1589
    %v2067 = vpop.f32.mrf.mxu0
    %v2068 = vadd.f32 0.0, %v2067
    %v2069 = vpop.f32.mrf.mxu0
    %v2070 = vpop.f32.mrf.mxu0
    %v2071 = vadd.f32 0.0, %v2070
    %v2072 = vpop.f32.mrf.mxu0
    %2073 = vdwg.mxu0
    %2074 = vmatprep.subr.bf16.mxu0 0
    %2075 = vmatpush1.bf16.msra.mxu0 %v1760
    %2076 = vmatprep.subr.bf16.mxu0 0
    %2077 = vmatpush1.bf16.msra.mxu0 %v1759
    %2078 = vmatprep.subr.bf16.mxu0 0
    %2079 = vmatpush1.bf16.msra.mxu0 %v1758
    %2080 = vmatprep.subr.bf16.mxu0 0
    %2081 = vmatpush1.bf16.msra.mxu0 %v1757
    %2082 = vmatprep.subr.bf16.mxu0 0
    %2083 = vmatpush1.bf16.msra.mxu0 %v1756
    %2084 = vmatprep.subr.bf16.mxu0 0
    %2085 = vmatpush1.bf16.msra.mxu0 %v1755
    %2086 = vmatprep.subr.bf16.mxu0 0
    %2087 = vmatpush1.bf16.msra.mxu0 %v1754
    %2088 = vmatprep.subr.bf16.mxu0 0
    %2089 = vmatpush1.bf16.msra.mxu0 %v1753
    %2090 = vmatprep.subr.bf16.mxu0 0
    %2091 = vmatpush2.bf16.msra.mxu0 0
    %2092 = vmatprep.subr.bf16.mxu0 0
    %2093 = vmatpush2.bf16.msra.mxu0 0
    %2094 = vmatprep.subr.bf16.mxu0 0
    %2095 = vmatpush2.bf16.msra.mxu0 0
    %2096 = vmatprep.subr.bf16.mxu0 0
    %2097 = vmatpush2.bf16.msra.mxu0 0
    %2098 = vmatprep.subr.bf16.mxu0 0
    %2099 = vmatpush2.bf16.msra.mxu0 0
    %2100 = vmatprep.subr.bf16.mxu0 0
    %2101 = vmatpush2.bf16.msra.mxu0 0
    %2102 = vmatprep.subr.bf16.mxu0 0
    %2103 = vmatpush2.bf16.msra.mxu0 0
    %2104 = vmatprep.subr.bf16.mxu0 0
    %2105 = vmatpush2.bf16.msra.mxu0 0
    %2106 = vmatprep.mubr.bf16.mxu0 0
    %2107 = vmatmul.mubr.bf16.gmra.mxu0 %v1498
    %v2108 = vpop.f32.mrf.mxu0
    %v2109 = vadd.f32 %v1820, %v2108
    %v2110 = vpop.f32.mrf.mxu0
    %v2111 = vpop.f32.mrf.mxu0
    %v2112 = vadd.f32 %v1823, %v2111
    %v2113 = vpop.f32.mrf.mxu0
    %2114 = vmatprep.mubr.bf16.mxu0 0
    %2115 = vmatmul.mubr.bf16.gmra.mxu0 %v1501
    %v2116 = vpop.f32.mrf.mxu0
    %v2117 = vadd.f32 %v1828, %v2116
    %v2118 = vpop.f32.mrf.mxu0
    %v2119 = vpop.f32.mrf.mxu0
    %v2120 = vadd.f32 %v1831, %v2119
    %v2121 = vpop.f32.mrf.mxu0
    %2122 = vmatprep.mubr.bf16.mxu0 0
    %2123 = vmatmul.mubr.bf16.gmra.mxu0 %v1504
    %v2124 = vpop.f32.mrf.mxu0
    %v2125 = vadd.f32 %v1836, %v2124
    %v2126 = vpop.f32.mrf.mxu0
    %v2127 = vpop.f32.mrf.mxu0
    %v2128 = vadd.f32 %v1839, %v2127
    %v2129 = vpop.f32.mrf.mxu0
    %2130 = vmatprep.mubr.bf16.mxu0 0
    %2131 = vmatmul.mubr.bf16.gmra.mxu0 %v1507
    %v2132 = vpop.f32.mrf.mxu0
    %v2133 = vadd.f32 %v1844, %v2132
    %v2134 = vpop.f32.mrf.mxu0
    %v2135 = vpop.f32.mrf.mxu0
    %v2136 = vadd.f32 %v1847, %v2135
    %v2137 = vpop.f32.mrf.mxu0
    %2138 = vmatprep.mubr.bf16.mxu0 0
    %2139 = vmatmul.mubr.bf16.gmra.mxu0 %v1510
    %v2140 = vpop.f32.mrf.mxu0
    %v2141 = vadd.f32 %v1852, %v2140
    %v2142 = vpop.f32.mrf.mxu0
    %v2143 = vpop.f32.mrf.mxu0
    %v2144 = vadd.f32 %v1855, %v2143
    %v2145 = vpop.f32.mrf.mxu0
    %2146 = vmatprep.mubr.bf16.mxu0 0
    %2147 = vmatmul.mubr.bf16.gmra.mxu0 %v1513
    %v2148 = vpop.f32.mrf.mxu0
    %v2149 = vadd.f32 %v1860, %v2148
    %v2150 = vpop.f32.mrf.mxu0
    %v2151 = vpop.f32.mrf.mxu0
    %v2152 = vadd.f32 %v1863, %v2151
    %v2153 = vpop.f32.mrf.mxu0
    %2154 = vmatprep.mubr.bf16.mxu0 0
    %2155 = vmatmul.mubr.bf16.gmra.mxu0 %v1516
    %v2156 = vpop.f32.mrf.mxu0
    %v2157 = vadd.f32 %v1868, %v2156
    %v2158 = vpop.f32.mrf.mxu0
    %v2159 = vpop.f32.mrf.mxu0
    %v2160 = vadd.f32 %v1871, %v2159
    %v2161 = vpop.f32.mrf.mxu0
    %2162 = vmatprep.mubr.bf16.mxu0 0
    %2163 = vmatmul.mubr.bf16.gmra.mxu0 %v1519
    %v2164 = vpop.f32.mrf.mxu0
    %v2165 = vadd.f32 %v1876, %v2164
    %v2166 = vpop.f32.mrf.mxu0
    %v2167 = vpop.f32.mrf.mxu0
    %v2168 = vadd.f32 %v1879, %v2167
    %v2169 = vpop.f32.mrf.mxu0
    %2170 = vmatprep.mubr.bf16.mxu0 0
    %2171 = vmatmul.mubr.bf16.gmra.mxu0 %v1522
    %v2172 = vpop.f32.mrf.mxu0
    %v2173 = vadd.f32 %v1884, %v2172
    %v2174 = vpop.f32.mrf.mxu0
    %v2175 = vpop.f32.mrf.mxu0
    %v2176 = vadd.f32 %v1887, %v2175
    %v2177 = vpop.f32.mrf.mxu0
    %2178 = vmatprep.mubr.bf16.mxu0 0
    %2179 = vmatmul.mubr.bf16.gmra.mxu0 %v1525
    %v2180 = vpop.f32.mrf.mxu0
    %v2181 = vadd.f32 %v1892, %v2180
    %v2182 = vpop.f32.mrf.mxu0
    %v2183 = vpop.f32.mrf.mxu0
    %v2184 = vadd.f32 %v1895, %v2183
    %v2185 = vpop.f32.mrf.mxu0
    %2186 = vmatprep.mubr.bf16.mxu0 0
    %2187 = vmatmul.mubr.bf16.gmra.mxu0 %v1528
    %v2188 = vpop.f32.mrf.mxu0
    %v2189 = vadd.f32 %v1900, %v2188
    %v2190 = vpop.f32.mrf.mxu0
    %v2191 = vpop.f32.mrf.mxu0
    %v2192 = vadd.f32 %v1903, %v2191
    %v2193 = vpop.f32.mrf.mxu0
    %2194 = vmatprep.mubr.bf16.mxu0 0
    %2195 = vmatmul.mubr.bf16.gmra.mxu0 %v1531
    %v2196 = vpop.f32.mrf.mxu0
    %v2197 = vadd.f32 %v1908, %v2196
    %v2198 = vpop.f32.mrf.mxu0
    %v2199 = vpop.f32.mrf.mxu0
    %v2200 = vadd.f32 %v1911, %v2199
    %v2201 = vpop.f32.mrf.mxu0
    %2202 = vmatprep.mubr.bf16.mxu0 0
    %2203 = vmatmul.mubr.bf16.gmra.mxu0 %v1534
    %v2204 = vpop.f32.mrf.mxu0
    %v2205 = vadd.f32 %v1916, %v2204
    %v2206 = vpop.f32.mrf.mxu0
    %v2207 = vpop.f32.mrf.mxu0
    %v2208 = vadd.f32 %v1919, %v2207
    %v2209 = vpop.f32.mrf.mxu0
    %2210 = vmatprep.mubr.bf16.mxu0 0
    %2211 = vmatmul.mubr.bf16.gmra.mxu0 %v1537
    %v2212 = vpop.f32.mrf.mxu0
    %v2213 = vadd.f32 %v1924, %v2212
    %v2214 = vpop.f32.mrf.mxu0
    %v2215 = vpop.f32.mrf.mxu0
    %v2216 = vadd.f32 %v1927, %v2215
    %v2217 = vpop.f32.mrf.mxu0
    %2218 = vmatprep.mubr.bf16.mxu0 0
    %2219 = vmatmul.mubr.bf16.gmra.mxu0 %v1540
    %v2220 = vpop.f32.mrf.mxu0
    %v2221 = vadd.f32 %v1932, %v2220
    %v2222 = vpop.f32.mrf.mxu0
    %v2223 = vpop.f32.mrf.mxu0
    %v2224 = vadd.f32 %v1935, %v2223
    %v2225 = vpop.f32.mrf.mxu0
    %2226 = vmatprep.mubr.bf16.mxu0 0
    %2227 = vmatmul.mubr.bf16.gmra.mxu0 %v1543
    %v2228 = vpop.f32.mrf.mxu0
    %v2229 = vadd.f32 %v1940, %v2228
    %v2230 = vpop.f32.mrf.mxu0
    %v2231 = vpop.f32.mrf.mxu0
    %v2232 = vadd.f32 %v1943, %v2231
    %v2233 = vpop.f32.mrf.mxu0
    %2234 = vmatprep.mubr.bf16.mxu0 0
    %2235 = vmatmul.mubr.bf16.gmra.mxu0 %v1546
    %v2236 = vpop.f32.mrf.mxu0
    %v2237 = vadd.f32 %v1948, %v2236
    %v2238 = vpop.f32.mrf.mxu0
    %v2239 = vpop.f32.mrf.mxu0
    %v2240 = vadd.f32 %v1951, %v2239
    %v2241 = vpop.f32.mrf.mxu0
    %2242 = vmatprep.mubr.bf16.mxu0 0
    %2243 = vmatmul.mubr.bf16.gmra.mxu0 %v1549
    %v2244 = vpop.f32.mrf.mxu0
    %v2245 = vadd.f32 %v1956, %v2244
    %v2246 = vpop.f32.mrf.mxu0
    %v2247 = vpop.f32.mrf.mxu0
    %v2248 = vadd.f32 %v1959, %v2247
    %v2249 = vpop.f32.mrf.mxu0
    %2250 = vmatprep.mubr.bf16.mxu0 0
    %2251 = vmatmul.mubr.bf16.gmra.mxu0 %v1552
    %v2252 = vpop.f32.mrf.mxu0
    %v2253 = vadd.f32 %v1964, %v2252
    %v2254 = vpop.f32.mrf.mxu0
    %v2255 = vpop.f32.mrf.mxu0
    %v2256 = vadd.f32 %v1967, %v2255
    %v2257 = vpop.f32.mrf.mxu0
    %2258 = vmatprep.mubr.bf16.mxu0 0
    %2259 = vmatmul.mubr.bf16.gmra.mxu0 %v1555
    %v2260 = vpop.f32.mrf.mxu0
    %v2261 = vadd.f32 %v1972, %v2260
    %v2262 = vpop.f32.mrf.mxu0
    %v2263 = vpop.f32.mrf.mxu0
    %v2264 = vadd.f32 %v1975, %v2263
    %v2265 = vpop.f32.mrf.mxu0
    %2266 = vmatprep.mubr.bf16.mxu0 0
    %2267 = vmatmul.mubr.bf16.gmra.mxu0 %v1558
    %v2268 = vpop.f32.mrf.mxu0
    %v2269 = vadd.f32 %v1980, %v2268
    %v2270 = vpop.f32.mrf.mxu0
    %v2271 = vpop.f32.mrf.mxu0
    %v2272 = vadd.f32 %v1983, %v2271
    %v2273 = vpop.f32.mrf.mxu0
    %2274 = vmatprep.mubr.bf16.mxu0 0
    %2275 = vmatmul.mubr.bf16.gmra.mxu0 %v1561
    %v2276 = vpop.f32.mrf.mxu0
    %v2277 = vadd.f32 %v1988, %v2276
    %v2278 = vpop.f32.mrf.mxu0
    %v2279 = vpop.f32.mrf.mxu0
    %v2280 = vadd.f32 %v1991, %v2279
    %v2281 = vpop.f32.mrf.mxu0
    %2282 = vmatprep.mubr.bf16.mxu0 0
    %2283 = vmatmul.mubr.bf16.gmra.mxu0 %v1564
    %v2284 = vpop.f32.mrf.mxu0
    %v2285 = vadd.f32 %v1996, %v2284
    %v2286 = vpop.f32.mrf.mxu0
    %v2287 = vpop.f32.mrf.mxu0
    %v2288 = vadd.f32 %v1999, %v2287
    %v2289 = vpop.f32.mrf.mxu0
    %2290 = vmatprep.mubr.bf16.mxu0 0
    %2291 = vmatmul.mubr.bf16.gmra.mxu0 %v1567
    %v2292 = vpop.f32.mrf.mxu0
    %v2293 = vadd.f32 %v2004, %v2292
    %v2294 = vpop.f32.mrf.mxu0
    %v2295 = vpop.f32.mrf.mxu0
    %v2296 = vadd.f32 %v2007, %v2295
    %v2297 = vpop.f32.mrf.mxu0
    %2298 = vmatprep.mubr.bf16.mxu0 0
    %2299 = vmatmul.mubr.bf16.gmra.mxu0 %v1570
    %v2300 = vpop.f32.mrf.mxu0
    %v2301 = vadd.f32 %v2012, %v2300
    %v2302 = vpop.f32.mrf.mxu0
    %v2303 = vpop.f32.mrf.mxu0
    %v2304 = vadd.f32 %v2015, %v2303
    %v2305 = vpop.f32.mrf.mxu0
    %2306 = vmatprep.mubr.bf16.mxu0 0
    %2307 = vmatmul.mubr.bf16.gmra.mxu0 %v1573
    %v2308 = vpop.f32.mrf.mxu0
    %v2309 = vadd.f32 %v2020, %v2308
    %v2310 = vpop.f32.mrf.mxu0
    %v2311 = vpop.f32.mrf.mxu0
    %v2312 = vadd.f32 %v2023, %v2311
    %v2313 = vpop.f32.mrf.mxu0
    %2314 = vmatprep.mubr.bf16.mxu0 0
    %2315 = vmatmul.mubr.bf16.gmra.mxu0 %v1576
    %v2316 = vpop.f32.mrf.mxu0
    %v2317 = vadd.f32 %v2028, %v2316
    %v2318 = vpop.f32.mrf.mxu0
    %v2319 = vpop.f32.mrf.mxu0
    %v2320 = vadd.f32 %v2031, %v2319
    %v2321 = vpop.f32.mrf.mxu0
    %2322 = vmatprep.mubr.bf16.mxu0 0
    %2323 = vmatmul.mubr.bf16.gmra.mxu0 %v1579
    %v2324 = vpop.f32.mrf.mxu0
    %v2325 = vadd.f32 %v2036, %v2324
    %v2326 = vpop.f32.mrf.mxu0
    %v2327 = vpop.f32.mrf.mxu0
    %v2328 = vadd.f32 %v2039, %v2327
    %v2329 = vpop.f32.mrf.mxu0
    %2330 = vmatprep.mubr.bf16.mxu0 0
    %2331 = vmatmul.mubr.bf16.gmra.mxu0 %v1582
    %v2332 = vpop.f32.mrf.mxu0
    %v2333 = vadd.f32 %v2044, %v2332
    %v2334 = vpop.f32.mrf.mxu0
    %v2335 = vpop.f32.mrf.mxu0
    %v2336 = vadd.f32 %v2047, %v2335
    %v2337 = vpop.f32.mrf.mxu0
    %2338 = vmatprep.mubr.bf16.mxu0 0
    %2339 = vmatmul.mubr.bf16.gmra.mxu0 %v1585
    %v2340 = vpop.f32.mrf.mxu0
    %v2341 = vadd.f32 %v2052, %v2340
    %v2342 = vpop.f32.mrf.mxu0
    %v2343 = vpop.f32.mrf.mxu0
    %v2344 = vadd.f32 %v2055, %v2343
    %v2345 = vpop.f32.mrf.mxu0
    %2346 = vmatprep.mubr.bf16.mxu0 0
    %2347 = vmatmul.mubr.bf16.gmra.mxu0 %v1588
    %v2348 = vpop.f32.mrf.mxu0
    %v2349 = vadd.f32 %v2060, %v2348
    %v2350 = vpop.f32.mrf.mxu0
    %v2351 = vpop.f32.mrf.mxu0
    %v2352 = vadd.f32 %v2063, %v2351
    %v2353 = vpop.f32.mrf.mxu0
    %2354 = vmatprep.mubr.bf16.mxu0 0
    %2355 = vmatmul.mubr.bf16.gmra.mxu0 %v1591
    %v2356 = vpop.f32.mrf.mxu0
    %v2357 = vadd.f32 %v2068, %v2356
    %v2358 = vpop.f32.mrf.mxu0
    %v2359 = vpop.f32.mrf.mxu0
    %v2360 = vadd.f32 %v2071, %v2359
    %v2361 = vpop.f32.mrf.mxu0
    %2362 = vdwg.mxu0
    %v2411 = vunpack.c.l.b16 %v807
    %v2412 = vunpack.c.l.b16 %v808
    %v2413 = vunpack.c.l.b16 %v809
    %v2414 = vunpack.c.l.b16 %v810
    %v2415 = vunpack.c.l.b16 %v811
    %v2416 = vunpack.c.l.b16 %v812
    %v2417 = vunpack.c.l.b16 %v813
    %v2418 = vunpack.c.l.b16 %v814
    %v2419 = vunpack.c.l.b16 %v815
    %v2420 = vunpack.c.l.b16 %v816
    %v2421 = vunpack.c.l.b16 %v817
    %v2422 = vunpack.c.l.b16 %v818
    %v2423 = vunpack.c.l.b16 %v819
    %v2424 = vunpack.c.l.b16 %v820
    %v2425 = vunpack.c.l.b16 %v821
    %v2426 = vunpack.c.l.b16 %v822
    %v2427 = vunpack.c.l.b16 %v823
    %v2428 = vunpack.c.l.b16 %v824
    %v2429 = vunpack.c.l.b16 %v825
    %v2430 = vunpack.c.l.b16 %v826
    %v2431 = vunpack.c.l.b16 %v827
    %v2432 = vunpack.c.l.b16 %v828
    %v2433 = vunpack.c.l.b16 %v829
    %v2434 = vunpack.c.l.b16 %v830
    %v2435 = vunpack.c.l.b16 %v831
    %v2436 = vunpack.c.l.b16 %v832
    %v2437 = vunpack.c.l.b16 %v833
    %v2438 = vunpack.c.l.b16 %v834
    %v2439 = vunpack.c.l.b16 %v835
    %v2440 = vunpack.c.l.b16 %v836
    %v2441 = vunpack.c.l.b16 %v837
    %v2442 = vunpack.c.l.b16 %v838
    %v2443 = vunpack.c.l.b16 %v839
    %v2444 = vunpack.c.l.b16 %v840
    %v2445 = vunpack.c.l.b16 %v841
    %v2446 = vunpack.c.l.b16 %v842
    %v2447 = vunpack.c.l.b16 %v843
    %v2448 = vunpack.c.l.b16 %v844
    %v2449 = vunpack.c.l.b16 %v845
    %v2450 = vunpack.c.l.b16 %v846
    %v2451 = vunpack.c.l.b16 %v847
    %v2452 = vunpack.c.l.b16 %v848
    %v2453 = vunpack.c.l.b16 %v849
    %v2454 = vunpack.c.l.b16 %v850
    %v2455 = vunpack.c.l.b16 %v851
    %v2456 = vunpack.c.l.b16 %v852
    %v2457 = vunpack.c.l.b16 %v853
    %v2458 = vunpack.c.l.b16 %v854
    %v2459 = vpack.c.b16 %v2412, %v2411
    %v2460 = vpack.c.b16 %v2414, %v2413
    %v2461 = vpack.c.b16 %v2416, %v2415
    %v2462 = vpack.c.b16 %v2418, %v2417
    %v2463 = vpack.c.b16 %v2420, %v2419
    %v2464 = vpack.c.b16 %v2422, %v2421
    %v2465 = vpack.c.b16 %v2424, %v2423
    %v2466 = vpack.c.b16 %v2426, %v2425
    %v2467 = vpack.c.b16 %v2428, %v2427
    %v2468 = vpack.c.b16 %v2430, %v2429
    %v2469 = vpack.c.b16 %v2432, %v2431
    %v2470 = vpack.c.b16 %v2434, %v2433
    %v2471 = vpack.c.b16 %v2436, %v2435
    %v2472 = vpack.c.b16 %v2438, %v2437
    %v2473 = vpack.c.b16 %v2440, %v2439
    %v2474 = vpack.c.b16 %v2442, %v2441
    %v2475 = vpack.c.b16 %v2444, %v2443
    %v2476 = vpack.c.b16 %v2446, %v2445
    %v2477 = vpack.c.b16 %v2448, %v2447
    %v2478 = vpack.c.b16 %v2450, %v2449
    %v2479 = vpack.c.b16 %v2452, %v2451
    %v2480 = vpack.c.b16 %v2454, %v2453
    %v2481 = vpack.c.b16 %v2456, %v2455
    %v2482 = vpack.c.b16 %v2458, %v2457
    %2507 = vmatprep.subr.bf16.mxu0 0
    %2508 = vmatpush1.bf16.msra.mxu0 %v2466
    %2509 = vmatprep.subr.bf16.mxu0 0
    %2510 = vmatpush1.bf16.msra.mxu0 %v2465
    %2511 = vmatprep.subr.bf16.mxu0 0
    %2512 = vmatpush1.bf16.msra.mxu0 %v2464
    %2513 = vmatprep.subr.bf16.mxu0 0
    %2514 = vmatpush1.bf16.msra.mxu0 %v2463
    %2515 = vmatprep.subr.bf16.mxu0 0
    %2516 = vmatpush1.bf16.msra.mxu0 %v2462
    %2517 = vmatprep.subr.bf16.mxu0 0
    %2518 = vmatpush1.bf16.msra.mxu0 %v2461
    %2519 = vmatprep.subr.bf16.mxu0 0
    %2520 = vmatpush1.bf16.msra.mxu0 %v2460
    %2521 = vmatprep.subr.bf16.mxu0 0
    %2522 = vmatpush1.bf16.msra.mxu0 %v2459
    %2523 = vmatprep.subr.bf16.mxu0 0
    %2524 = vmatpush2.bf16.msra.mxu0 %v2474
    %2525 = vmatprep.subr.bf16.mxu0 0
    %2526 = vmatpush2.bf16.msra.mxu0 %v2473
    %2527 = vmatprep.subr.bf16.mxu0 0
    %2528 = vmatpush2.bf16.msra.mxu0 %v2472
    %2529 = vmatprep.subr.bf16.mxu0 0
    %2530 = vmatpush2.bf16.msra.mxu0 %v2471
    %2531 = vmatprep.subr.bf16.mxu0 0
    %2532 = vmatpush2.bf16.msra.mxu0 %v2470
    %2533 = vmatprep.subr.bf16.mxu0 0
    %2534 = vmatpush2.bf16.msra.mxu0 %v2469
    %2535 = vmatprep.subr.bf16.mxu0 0
    %2536 = vmatpush2.bf16.msra.mxu0 %v2468
    %2537 = vmatprep.subr.bf16.mxu0 0
    %2538 = vmatpush2.bf16.msra.mxu0 %v2467
    %2539 = vmatprep.mubr.bf16.mxu0 %v712
    %2540 = vmatmul.mubr.bf16.gmra.mxu0 %v711
    %v2541 = vpop.f32.mrf.mxu0
    %v2542 = vadd.f32 %v2109, %v2541
    %v2543 = vpop.f32.mrf.mxu0
    %v2544 = vpop.f32.mrf.mxu0
    %v2545 = vadd.f32 %v2112, %v2544
    %v2546 = vpop.f32.mrf.mxu0
    %2547 = vmatprep.mubr.bf16.mxu0 %v715
    %2548 = vmatmul.mubr.bf16.gmra.mxu0 %v714
    %v2549 = vpop.f32.mrf.mxu0
    %v2550 = vadd.f32 %v2117, %v2549
    %v2551 = vpop.f32.mrf.mxu0
    %v2552 = vpop.f32.mrf.mxu0
    %v2553 = vadd.f32 %v2120, %v2552
    %v2554 = vpop.f32.mrf.mxu0
    %2555 = vmatprep.mubr.bf16.mxu0 %v718
    %2556 = vmatmul.mubr.bf16.gmra.mxu0 %v717
    %v2557 = vpop.f32.mrf.mxu0
    %v2558 = vadd.f32 %v2125, %v2557
    %v2559 = vpop.f32.mrf.mxu0
    %v2560 = vpop.f32.mrf.mxu0
    %v2561 = vadd.f32 %v2128, %v2560
    %v2562 = vpop.f32.mrf.mxu0
    %2563 = vmatprep.mubr.bf16.mxu0 %v721
    %2564 = vmatmul.mubr.bf16.gmra.mxu0 %v720
    %v2565 = vpop.f32.mrf.mxu0
    %v2566 = vadd.f32 %v2133, %v2565
    %v2567 = vpop.f32.mrf.mxu0
    %v2568 = vpop.f32.mrf.mxu0
    %v2569 = vadd.f32 %v2136, %v2568
    %v2570 = vpop.f32.mrf.mxu0
    %2571 = vmatprep.mubr.bf16.mxu0 %v724
    %2572 = vmatmul.mubr.bf16.gmra.mxu0 %v723
    %v2573 = vpop.f32.mrf.mxu0
    %v2574 = vadd.f32 %v2141, %v2573
    %v2575 = vpop.f32.mrf.mxu0
    %v2576 = vpop.f32.mrf.mxu0
    %v2577 = vadd.f32 %v2144, %v2576
    %v2578 = vpop.f32.mrf.mxu0
    %2579 = vmatprep.mubr.bf16.mxu0 %v727
    %2580 = vmatmul.mubr.bf16.gmra.mxu0 %v726
    %v2581 = vpop.f32.mrf.mxu0
    %v2582 = vadd.f32 %v2149, %v2581
    %v2583 = vpop.f32.mrf.mxu0
    %v2584 = vpop.f32.mrf.mxu0
    %v2585 = vadd.f32 %v2152, %v2584
    %v2586 = vpop.f32.mrf.mxu0
    %2587 = vmatprep.mubr.bf16.mxu0 %v730
    %2588 = vmatmul.mubr.bf16.gmra.mxu0 %v729
    %v2589 = vpop.f32.mrf.mxu0
    %v2590 = vadd.f32 %v2157, %v2589
    %v2591 = vpop.f32.mrf.mxu0
    %v2592 = vpop.f32.mrf.mxu0
    %v2593 = vadd.f32 %v2160, %v2592
    %v2594 = vpop.f32.mrf.mxu0
    %2595 = vmatprep.mubr.bf16.mxu0 %v733
    %2596 = vmatmul.mubr.bf16.gmra.mxu0 %v732
    %v2597 = vpop.f32.mrf.mxu0
    %v2598 = vadd.f32 %v2165, %v2597
    %v2599 = vpop.f32.mrf.mxu0
    %v2600 = vpop.f32.mrf.mxu0
    %v2601 = vadd.f32 %v2168, %v2600
    %v2602 = vpop.f32.mrf.mxu0
    %2603 = vmatprep.mubr.bf16.mxu0 %v736
    %2604 = vmatmul.mubr.bf16.gmra.mxu0 %v735
    %v2605 = vpop.f32.mrf.mxu0
    %v2606 = vadd.f32 %v2173, %v2605
    %v2607 = vpop.f32.mrf.mxu0
    %v2608 = vpop.f32.mrf.mxu0
    %v2609 = vadd.f32 %v2176, %v2608
    %v2610 = vpop.f32.mrf.mxu0
    %2611 = vmatprep.mubr.bf16.mxu0 %v739
    %2612 = vmatmul.mubr.bf16.gmra.mxu0 %v738
    %v2613 = vpop.f32.mrf.mxu0
    %v2614 = vadd.f32 %v2181, %v2613
    %v2615 = vpop.f32.mrf.mxu0
    %v2616 = vpop.f32.mrf.mxu0
    %v2617 = vadd.f32 %v2184, %v2616
    %v2618 = vpop.f32.mrf.mxu0
    %2619 = vmatprep.mubr.bf16.mxu0 %v742
    %2620 = vmatmul.mubr.bf16.gmra.mxu0 %v741
    %v2621 = vpop.f32.mrf.mxu0
    %v2622 = vadd.f32 %v2189, %v2621
    %v2623 = vpop.f32.mrf.mxu0
    %v2624 = vpop.f32.mrf.mxu0
    %v2625 = vadd.f32 %v2192, %v2624
    %v2626 = vpop.f32.mrf.mxu0
    %2627 = vmatprep.mubr.bf16.mxu0 %v745
    %2628 = vmatmul.mubr.bf16.gmra.mxu0 %v744
    %v2629 = vpop.f32.mrf.mxu0
    %v2630 = vadd.f32 %v2197, %v2629
    %v2631 = vpop.f32.mrf.mxu0
    %v2632 = vpop.f32.mrf.mxu0
    %v2633 = vadd.f32 %v2200, %v2632
    %v2634 = vpop.f32.mrf.mxu0
    %2635 = vmatprep.mubr.bf16.mxu0 %v748
    %2636 = vmatmul.mubr.bf16.gmra.mxu0 %v747
    %v2637 = vpop.f32.mrf.mxu0
    %v2638 = vadd.f32 %v2205, %v2637
    %v2639 = vpop.f32.mrf.mxu0
    %v2640 = vpop.f32.mrf.mxu0
    %v2641 = vadd.f32 %v2208, %v2640
    %v2642 = vpop.f32.mrf.mxu0
    %2643 = vmatprep.mubr.bf16.mxu0 %v751
    %2644 = vmatmul.mubr.bf16.gmra.mxu0 %v750
    %v2645 = vpop.f32.mrf.mxu0
    %v2646 = vadd.f32 %v2213, %v2645
    %v2647 = vpop.f32.mrf.mxu0
    %v2648 = vpop.f32.mrf.mxu0
    %v2649 = vadd.f32 %v2216, %v2648
    %v2650 = vpop.f32.mrf.mxu0
    %2651 = vmatprep.mubr.bf16.mxu0 %v754
    %2652 = vmatmul.mubr.bf16.gmra.mxu0 %v753
    %v2653 = vpop.f32.mrf.mxu0
    %v2654 = vadd.f32 %v2221, %v2653
    %v2655 = vpop.f32.mrf.mxu0
    %v2656 = vpop.f32.mrf.mxu0
    %v2657 = vadd.f32 %v2224, %v2656
    %v2658 = vpop.f32.mrf.mxu0
    %2659 = vmatprep.mubr.bf16.mxu0 %v757
    %2660 = vmatmul.mubr.bf16.gmra.mxu0 %v756
    %v2661 = vpop.f32.mrf.mxu0
    %v2662 = vadd.f32 %v2229, %v2661
    %v2663 = vpop.f32.mrf.mxu0
    %v2664 = vpop.f32.mrf.mxu0
    %v2665 = vadd.f32 %v2232, %v2664
    %v2666 = vpop.f32.mrf.mxu0
    %2667 = vmatprep.mubr.bf16.mxu0 %v760
    %2668 = vmatmul.mubr.bf16.gmra.mxu0 %v759
    %v2669 = vpop.f32.mrf.mxu0
    %v2670 = vadd.f32 %v2237, %v2669
    %v2671 = vpop.f32.mrf.mxu0
    %v2672 = vpop.f32.mrf.mxu0
    %v2673 = vadd.f32 %v2240, %v2672
    %v2674 = vpop.f32.mrf.mxu0
    %2675 = vmatprep.mubr.bf16.mxu0 %v763
    %2676 = vmatmul.mubr.bf16.gmra.mxu0 %v762
    %v2677 = vpop.f32.mrf.mxu0
    %v2678 = vadd.f32 %v2245, %v2677
    %v2679 = vpop.f32.mrf.mxu0
    %v2680 = vpop.f32.mrf.mxu0
    %v2681 = vadd.f32 %v2248, %v2680
    %v2682 = vpop.f32.mrf.mxu0
    %2683 = vmatprep.mubr.bf16.mxu0 %v766
    %2684 = vmatmul.mubr.bf16.gmra.mxu0 %v765
    %v2685 = vpop.f32.mrf.mxu0
    %v2686 = vadd.f32 %v2253, %v2685
    %v2687 = vpop.f32.mrf.mxu0
    %v2688 = vpop.f32.mrf.mxu0
    %v2689 = vadd.f32 %v2256, %v2688
    %v2690 = vpop.f32.mrf.mxu0
    %2691 = vmatprep.mubr.bf16.mxu0 %v769
    %2692 = vmatmul.mubr.bf16.gmra.mxu0 %v768
    %v2693 = vpop.f32.mrf.mxu0
    %v2694 = vadd.f32 %v2261, %v2693
    %v2695 = vpop.f32.mrf.mxu0
    %v2696 = vpop.f32.mrf.mxu0
    %v2697 = vadd.f32 %v2264, %v2696
    %v2698 = vpop.f32.mrf.mxu0
    %2699 = vmatprep.mubr.bf16.mxu0 %v772
    %2700 = vmatmul.mubr.bf16.gmra.mxu0 %v771
    %v2701 = vpop.f32.mrf.mxu0
    %v2702 = vadd.f32 %v2269, %v2701
    %v2703 = vpop.f32.mrf.mxu0
    %v2704 = vpop.f32.mrf.mxu0
    %v2705 = vadd.f32 %v2272, %v2704
    %v2706 = vpop.f32.mrf.mxu0
    %2707 = vmatprep.mubr.bf16.mxu0 %v775
    %2708 = vmatmul.mubr.bf16.gmra.mxu0 %v774
    %v2709 = vpop.f32.mrf.mxu0
    %v2710 = vadd.f32 %v2277, %v2709
    %v2711 = vpop.f32.mrf.mxu0
    %v2712 = vpop.f32.mrf.mxu0
    %v2713 = vadd.f32 %v2280, %v2712
    %v2714 = vpop.f32.mrf.mxu0
    %2715 = vmatprep.mubr.bf16.mxu0 %v778
    %2716 = vmatmul.mubr.bf16.gmra.mxu0 %v777
    %v2717 = vpop.f32.mrf.mxu0
    %v2718 = vadd.f32 %v2285, %v2717
    %v2719 = vpop.f32.mrf.mxu0
    %v2720 = vpop.f32.mrf.mxu0
    %v2721 = vadd.f32 %v2288, %v2720
    %v2722 = vpop.f32.mrf.mxu0
    %2723 = vmatprep.mubr.bf16.mxu0 %v781
    %2724 = vmatmul.mubr.bf16.gmra.mxu0 %v780
    %v2725 = vpop.f32.mrf.mxu0
    %v2726 = vadd.f32 %v2293, %v2725
    %v2727 = vpop.f32.mrf.mxu0
    %v2728 = vpop.f32.mrf.mxu0
    %v2729 = vadd.f32 %v2296, %v2728
    %v2730 = vpop.f32.mrf.mxu0
    %2731 = vmatprep.mubr.bf16.mxu0 %v784
    %2732 = vmatmul.mubr.bf16.gmra.mxu0 %v783
    %v2733 = vpop.f32.mrf.mxu0
    %v2734 = vadd.f32 %v2301, %v2733
    %v2735 = vpop.f32.mrf.mxu0
    %v2736 = vpop.f32.mrf.mxu0
    %v2737 = vadd.f32 %v2304, %v2736
    %v2738 = vpop.f32.mrf.mxu0
    %2739 = vmatprep.mubr.bf16.mxu0 %v787
    %2740 = vmatmul.mubr.bf16.gmra.mxu0 %v786
    %v2741 = vpop.f32.mrf.mxu0
    %v2742 = vadd.f32 %v2309, %v2741
    %v2743 = vpop.f32.mrf.mxu0
    %v2744 = vpop.f32.mrf.mxu0
    %v2745 = vadd.f32 %v2312, %v2744
    %v2746 = vpop.f32.mrf.mxu0
    %2747 = vmatprep.mubr.bf16.mxu0 %v790
    %2748 = vmatmul.mubr.bf16.gmra.mxu0 %v789
    %v2749 = vpop.f32.mrf.mxu0
    %v2750 = vadd.f32 %v2317, %v2749
    %v2751 = vpop.f32.mrf.mxu0
    %v2752 = vpop.f32.mrf.mxu0
    %v2753 = vadd.f32 %v2320, %v2752
    %v2754 = vpop.f32.mrf.mxu0
    %2755 = vmatprep.mubr.bf16.mxu0 %v793
    %2756 = vmatmul.mubr.bf16.gmra.mxu0 %v792
    %v2757 = vpop.f32.mrf.mxu0
    %v2758 = vadd.f32 %v2325, %v2757
    %v2759 = vpop.f32.mrf.mxu0
    %v2760 = vpop.f32.mrf.mxu0
    %v2761 = vadd.f32 %v2328, %v2760
    %v2762 = vpop.f32.mrf.mxu0
    %2763 = vmatprep.mubr.bf16.mxu0 %v796
    %2764 = vmatmul.mubr.bf16.gmra.mxu0 %v795
    %v2765 = vpop.f32.mrf.mxu0
    %v2766 = vadd.f32 %v2333, %v2765
    %v2767 = vpop.f32.mrf.mxu0
    %v2768 = vpop.f32.mrf.mxu0
    %v2769 = vadd.f32 %v2336, %v2768
    %v2770 = vpop.f32.mrf.mxu0
    %2771 = vmatprep.mubr.bf16.mxu0 %v799
    %2772 = vmatmul.mubr.bf16.gmra.mxu0 %v798
    %v2773 = vpop.f32.mrf.mxu0
    %v2774 = vadd.f32 %v2341, %v2773
    %v2775 = vpop.f32.mrf.mxu0
    %v2776 = vpop.f32.mrf.mxu0
    %v2777 = vadd.f32 %v2344, %v2776
    %v2778 = vpop.f32.mrf.mxu0
    %2779 = vmatprep.mubr.bf16.mxu0 %v802
    %2780 = vmatmul.mubr.bf16.gmra.mxu0 %v801
    %v2781 = vpop.f32.mrf.mxu0
    %v2782 = vadd.f32 %v2349, %v2781
    %v2783 = vpop.f32.mrf.mxu0
    %v2784 = vpop.f32.mrf.mxu0
    %v2785 = vadd.f32 %v2352, %v2784
    %v2786 = vpop.f32.mrf.mxu0
    %2787 = vmatprep.mubr.bf16.mxu0 %v805
    %2788 = vmatmul.mubr.bf16.gmra.mxu0 %v804
    %v2789 = vpop.f32.mrf.mxu0
    %v2790 = vadd.f32 %v2357, %v2789
    %v2791 = vpop.f32.mrf.mxu0
    %v2792 = vpop.f32.mrf.mxu0
    %v2793 = vadd.f32 %v2360, %v2792
    %v2794 = vpop.f32.mrf.mxu0
    %2795 = vdwg.mxu0
    %2796 = vmatprep.subr.bf16.mxu0 0
    %2797 = vmatpush1.bf16.msra.mxu0 %v2482
    %2798 = vmatprep.subr.bf16.mxu0 0
    %2799 = vmatpush1.bf16.msra.mxu0 %v2481
    %2800 = vmatprep.subr.bf16.mxu0 0
    %2801 = vmatpush1.bf16.msra.mxu0 %v2480
    %2802 = vmatprep.subr.bf16.mxu0 0
    %2803 = vmatpush1.bf16.msra.mxu0 %v2479
    %2804 = vmatprep.subr.bf16.mxu0 0
    %2805 = vmatpush1.bf16.msra.mxu0 %v2478
    %2806 = vmatprep.subr.bf16.mxu0 0
    %2807 = vmatpush1.bf16.msra.mxu0 %v2477
    %2808 = vmatprep.subr.bf16.mxu0 0
    %2809 = vmatpush1.bf16.msra.mxu0 %v2476
    %2810 = vmatprep.subr.bf16.mxu0 0
    %2811 = vmatpush1.bf16.msra.mxu0 %v2475
    %2812 = vmatprep.subr.bf16.mxu0 0
    %2813 = vmatpush2.bf16.msra.mxu0 0
    %2814 = vmatprep.subr.bf16.mxu0 0
    %2815 = vmatpush2.bf16.msra.mxu0 0
    %2816 = vmatprep.subr.bf16.mxu0 0
    %2817 = vmatpush2.bf16.msra.mxu0 0
    %2818 = vmatprep.subr.bf16.mxu0 0
    %2819 = vmatpush2.bf16.msra.mxu0 0
    %2820 = vmatprep.subr.bf16.mxu0 0
    %2821 = vmatpush2.bf16.msra.mxu0 0
    %2822 = vmatprep.subr.bf16.mxu0 0
    %2823 = vmatpush2.bf16.msra.mxu0 0
    %2824 = vmatprep.subr.bf16.mxu0 0
    %2825 = vmatpush2.bf16.msra.mxu0 0
    %2826 = vmatprep.subr.bf16.mxu0 0
    %2827 = vmatpush2.bf16.msra.mxu0 0
    %2828 = vmatprep.mubr.bf16.mxu0 0
    %2829 = vmatmul.mubr.bf16.gmra.mxu0 %v713
    %v2830 = vpop.f32.mrf.mxu0
    %v2831 = vadd.f32 %v2542, %v2830
    %v2832 = vpop.f32.mrf.mxu0
    %v2833 = vpop.f32.mrf.mxu0
    %v2834 = vadd.f32 %v2545, %v2833
    %v2835 = vpop.f32.mrf.mxu0
    %2836 = vmatprep.mubr.bf16.mxu0 0
    %2837 = vmatmul.mubr.bf16.gmra.mxu0 %v716
    %v2838 = vpop.f32.mrf.mxu0
    %v2839 = vadd.f32 %v2550, %v2838
    %v2840 = vpop.f32.mrf.mxu0
    %v2841 = vpop.f32.mrf.mxu0
    %v2842 = vadd.f32 %v2553, %v2841
    %v2843 = vpop.f32.mrf.mxu0
    %2844 = vmatprep.mubr.bf16.mxu0 0
    %2845 = vmatmul.mubr.bf16.gmra.mxu0 %v719
    %v2846 = vpop.f32.mrf.mxu0
    %v2847 = vadd.f32 %v2558, %v2846
    %v2848 = vpop.f32.mrf.mxu0
    %v2849 = vpop.f32.mrf.mxu0
    %v2850 = vadd.f32 %v2561, %v2849
    %v2851 = vpop.f32.mrf.mxu0
    %2852 = vmatprep.mubr.bf16.mxu0 0
    %2853 = vmatmul.mubr.bf16.gmra.mxu0 %v722
    %v2854 = vpop.f32.mrf.mxu0
    %v2855 = vadd.f32 %v2566, %v2854
    %v2856 = vpop.f32.mrf.mxu0
    %v2857 = vpop.f32.mrf.mxu0
    %v2858 = vadd.f32 %v2569, %v2857
    %v2859 = vpop.f32.mrf.mxu0
    %2860 = vmatprep.mubr.bf16.mxu0 0
    %2861 = vmatmul.mubr.bf16.gmra.mxu0 %v725
    %v2862 = vpop.f32.mrf.mxu0
    %v2863 = vadd.f32 %v2574, %v2862
    %v2864 = vpop.f32.mrf.mxu0
    %v2865 = vpop.f32.mrf.mxu0
    %v2866 = vadd.f32 %v2577, %v2865
    %v2867 = vpop.f32.mrf.mxu0
    %2868 = vmatprep.mubr.bf16.mxu0 0
    %2869 = vmatmul.mubr.bf16.gmra.mxu0 %v728
    %v2870 = vpop.f32.mrf.mxu0
    %v2871 = vadd.f32 %v2582, %v2870
    %v2872 = vpop.f32.mrf.mxu0
    %v2873 = vpop.f32.mrf.mxu0
    %v2874 = vadd.f32 %v2585, %v2873
    %v2875 = vpop.f32.mrf.mxu0
    %2876 = vmatprep.mubr.bf16.mxu0 0
    %2877 = vmatmul.mubr.bf16.gmra.mxu0 %v731
    %v2878 = vpop.f32.mrf.mxu0
    %v2879 = vadd.f32 %v2590, %v2878
    %v2880 = vpop.f32.mrf.mxu0
    %v2881 = vpop.f32.mrf.mxu0
    %v2882 = vadd.f32 %v2593, %v2881
    %v2883 = vpop.f32.mrf.mxu0
    %2884 = vmatprep.mubr.bf16.mxu0 0
    %2885 = vmatmul.mubr.bf16.gmra.mxu0 %v734
    %v2886 = vpop.f32.mrf.mxu0
    %v2887 = vadd.f32 %v2598, %v2886
    %v2888 = vpop.f32.mrf.mxu0
    %v2889 = vpop.f32.mrf.mxu0
    %v2890 = vadd.f32 %v2601, %v2889
    %v2891 = vpop.f32.mrf.mxu0
    %2892 = vmatprep.mubr.bf16.mxu0 0
    %2893 = vmatmul.mubr.bf16.gmra.mxu0 %v737
    %v2894 = vpop.f32.mrf.mxu0
    %v2895 = vadd.f32 %v2606, %v2894
    %v2896 = vpop.f32.mrf.mxu0
    %v2897 = vpop.f32.mrf.mxu0
    %v2898 = vadd.f32 %v2609, %v2897
    %v2899 = vpop.f32.mrf.mxu0
    %2900 = vmatprep.mubr.bf16.mxu0 0
    %2901 = vmatmul.mubr.bf16.gmra.mxu0 %v740
    %v2902 = vpop.f32.mrf.mxu0
    %v2903 = vadd.f32 %v2614, %v2902
    %v2904 = vpop.f32.mrf.mxu0
    %v2905 = vpop.f32.mrf.mxu0
    %v2906 = vadd.f32 %v2617, %v2905
    %v2907 = vpop.f32.mrf.mxu0
    %2908 = vmatprep.mubr.bf16.mxu0 0
    %2909 = vmatmul.mubr.bf16.gmra.mxu0 %v743
    %v2910 = vpop.f32.mrf.mxu0
    %v2911 = vadd.f32 %v2622, %v2910
    %v2912 = vpop.f32.mrf.mxu0
    %v2913 = vpop.f32.mrf.mxu0
    %v2914 = vadd.f32 %v2625, %v2913
    %v2915 = vpop.f32.mrf.mxu0
    %2916 = vmatprep.mubr.bf16.mxu0 0
    %2917 = vmatmul.mubr.bf16.gmra.mxu0 %v746
    %v2918 = vpop.f32.mrf.mxu0
    %v2919 = vadd.f32 %v2630, %v2918
    %v2920 = vpop.f32.mrf.mxu0
    %v2921 = vpop.f32.mrf.mxu0
    %v2922 = vadd.f32 %v2633, %v2921
    %v2923 = vpop.f32.mrf.mxu0
    %2924 = vmatprep.mubr.bf16.mxu0 0
    %2925 = vmatmul.mubr.bf16.gmra.mxu0 %v749
    %v2926 = vpop.f32.mrf.mxu0
    %v2927 = vadd.f32 %v2638, %v2926
    %v2928 = vpop.f32.mrf.mxu0
    %v2929 = vpop.f32.mrf.mxu0
    %v2930 = vadd.f32 %v2641, %v2929
    %v2931 = vpop.f32.mrf.mxu0
    %2932 = vmatprep.mubr.bf16.mxu0 0
    %2933 = vmatmul.mubr.bf16.gmra.mxu0 %v752
    %v2934 = vpop.f32.mrf.mxu0
    %v2935 = vadd.f32 %v2646, %v2934
    %v2936 = vpop.f32.mrf.mxu0
    %v2937 = vpop.f32.mrf.mxu0
    %v2938 = vadd.f32 %v2649, %v2937
    %v2939 = vpop.f32.mrf.mxu0
    %2940 = vmatprep.mubr.bf16.mxu0 0
    %2941 = vmatmul.mubr.bf16.gmra.mxu0 %v755
    %v2942 = vpop.f32.mrf.mxu0
    %v2943 = vadd.f32 %v2654, %v2942
    %v2944 = vpop.f32.mrf.mxu0
    %v2945 = vpop.f32.mrf.mxu0
    %v2946 = vadd.f32 %v2657, %v2945
    %v2947 = vpop.f32.mrf.mxu0
    %2948 = vmatprep.mubr.bf16.mxu0 0
    %2949 = vmatmul.mubr.bf16.gmra.mxu0 %v758
    %v2950 = vpop.f32.mrf.mxu0
    %v2951 = vadd.f32 %v2662, %v2950
    %v2952 = vpop.f32.mrf.mxu0
    %v2953 = vpop.f32.mrf.mxu0
    %v2954 = vadd.f32 %v2665, %v2953
    %v2955 = vpop.f32.mrf.mxu0
    %2956 = vmatprep.mubr.bf16.mxu0 0
    %2957 = vmatmul.mubr.bf16.gmra.mxu0 %v761
    %v2958 = vpop.f32.mrf.mxu0
    %v2959 = vadd.f32 %v2670, %v2958
    %v2960 = vpop.f32.mrf.mxu0
    %v2961 = vpop.f32.mrf.mxu0
    %v2962 = vadd.f32 %v2673, %v2961
    %v2963 = vpop.f32.mrf.mxu0
    %2964 = vmatprep.mubr.bf16.mxu0 0
    %2965 = vmatmul.mubr.bf16.gmra.mxu0 %v764
    %v2966 = vpop.f32.mrf.mxu0
    %v2967 = vadd.f32 %v2678, %v2966
    %v2968 = vpop.f32.mrf.mxu0
    %v2969 = vpop.f32.mrf.mxu0
    %v2970 = vadd.f32 %v2681, %v2969
    %v2971 = vpop.f32.mrf.mxu0
    %2972 = vmatprep.mubr.bf16.mxu0 0
    %2973 = vmatmul.mubr.bf16.gmra.mxu0 %v767
    %v2974 = vpop.f32.mrf.mxu0
    %v2975 = vadd.f32 %v2686, %v2974
    %v2976 = vpop.f32.mrf.mxu0
    %v2977 = vpop.f32.mrf.mxu0
    %v2978 = vadd.f32 %v2689, %v2977
    %v2979 = vpop.f32.mrf.mxu0
    %2980 = vmatprep.mubr.bf16.mxu0 0
    %2981 = vmatmul.mubr.bf16.gmra.mxu0 %v770
    %v2982 = vpop.f32.mrf.mxu0
    %v2983 = vadd.f32 %v2694, %v2982
    %v2984 = vpop.f32.mrf.mxu0
    %v2985 = vpop.f32.mrf.mxu0
    %v2986 = vadd.f32 %v2697, %v2985
    %v2987 = vpop.f32.mrf.mxu0
    %2988 = vmatprep.mubr.bf16.mxu0 0
    %2989 = vmatmul.mubr.bf16.gmra.mxu0 %v773
    %v2990 = vpop.f32.mrf.mxu0
    %v2991 = vadd.f32 %v2702, %v2990
    %v2992 = vpop.f32.mrf.mxu0
    %v2993 = vpop.f32.mrf.mxu0
    %v2994 = vadd.f32 %v2705, %v2993
    %v2995 = vpop.f32.mrf.mxu0
    %2996 = vmatprep.mubr.bf16.mxu0 0
    %2997 = vmatmul.mubr.bf16.gmra.mxu0 %v776
    %v2998 = vpop.f32.mrf.mxu0
    %v2999 = vadd.f32 %v2710, %v2998
    %v3000 = vpop.f32.mrf.mxu0
    %v3001 = vpop.f32.mrf.mxu0
    %v3002 = vadd.f32 %v2713, %v3001
    %v3003 = vpop.f32.mrf.mxu0
    %3004 = vmatprep.mubr.bf16.mxu0 0
    %3005 = vmatmul.mubr.bf16.gmra.mxu0 %v779
    %v3006 = vpop.f32.mrf.mxu0
    %v3007 = vadd.f32 %v2718, %v3006
    %v3008 = vpop.f32.mrf.mxu0
    %v3009 = vpop.f32.mrf.mxu0
    %v3010 = vadd.f32 %v2721, %v3009
    %v3011 = vpop.f32.mrf.mxu0
    %3012 = vmatprep.mubr.bf16.mxu0 0
    %3013 = vmatmul.mubr.bf16.gmra.mxu0 %v782
    %v3014 = vpop.f32.mrf.mxu0
    %v3015 = vadd.f32 %v2726, %v3014
    %v3016 = vpop.f32.mrf.mxu0
    %v3017 = vpop.f32.mrf.mxu0
    %v3018 = vadd.f32 %v2729, %v3017
    %v3019 = vpop.f32.mrf.mxu0
    %3020 = vmatprep.mubr.bf16.mxu0 0
    %3021 = vmatmul.mubr.bf16.gmra.mxu0 %v785
    %v3022 = vpop.f32.mrf.mxu0
    %v3023 = vadd.f32 %v2734, %v3022
    %v3024 = vpop.f32.mrf.mxu0
    %v3025 = vpop.f32.mrf.mxu0
    %v3026 = vadd.f32 %v2737, %v3025
    %v3027 = vpop.f32.mrf.mxu0
    %3028 = vmatprep.mubr.bf16.mxu0 0
    %3029 = vmatmul.mubr.bf16.gmra.mxu0 %v788
    %v3030 = vpop.f32.mrf.mxu0
    %v3031 = vadd.f32 %v2742, %v3030
    %v3032 = vpop.f32.mrf.mxu0
    %v3033 = vpop.f32.mrf.mxu0
    %v3034 = vadd.f32 %v2745, %v3033
    %v3035 = vpop.f32.mrf.mxu0
    %3036 = vmatprep.mubr.bf16.mxu0 0
    %3037 = vmatmul.mubr.bf16.gmra.mxu0 %v791
    %v3038 = vpop.f32.mrf.mxu0
    %v3039 = vadd.f32 %v2750, %v3038
    %v3040 = vpop.f32.mrf.mxu0
    %v3041 = vpop.f32.mrf.mxu0
    %v3042 = vadd.f32 %v2753, %v3041
    %v3043 = vpop.f32.mrf.mxu0
    %3044 = vmatprep.mubr.bf16.mxu0 0
    %3045 = vmatmul.mubr.bf16.gmra.mxu0 %v794
    %v3046 = vpop.f32.mrf.mxu0
    %v3047 = vadd.f32 %v2758, %v3046
    %v3048 = vpop.f32.mrf.mxu0
    %v3049 = vpop.f32.mrf.mxu0
    %v3050 = vadd.f32 %v2761, %v3049
    %v3051 = vpop.f32.mrf.mxu0
    %3052 = vmatprep.mubr.bf16.mxu0 0
    %3053 = vmatmul.mubr.bf16.gmra.mxu0 %v797
    %v3054 = vpop.f32.mrf.mxu0
    %v3055 = vadd.f32 %v2766, %v3054
    %v3056 = vpop.f32.mrf.mxu0
    %v3057 = vpop.f32.mrf.mxu0
    %v3058 = vadd.f32 %v2769, %v3057
    %v3059 = vpop.f32.mrf.mxu0
    %3060 = vmatprep.mubr.bf16.mxu0 0
    %3061 = vmatmul.mubr.bf16.gmra.mxu0 %v800
    %v3062 = vpop.f32.mrf.mxu0
    %v3063 = vadd.f32 %v2774, %v3062
    %v3064 = vpop.f32.mrf.mxu0
    %v3065 = vpop.f32.mrf.mxu0
    %v3066 = vadd.f32 %v2777, %v3065
    %v3067 = vpop.f32.mrf.mxu0
    %3068 = vmatprep.mubr.bf16.mxu0 0
    %3069 = vmatmul.mubr.bf16.gmra.mxu0 %v803
    %v3070 = vpop.f32.mrf.mxu0
    %v3071 = vadd.f32 %v2782, %v3070
    %v3072 = vpop.f32.mrf.mxu0
    %v3073 = vpop.f32.mrf.mxu0
    %v3074 = vadd.f32 %v2785, %v3073
    %v3075 = vpop.f32.mrf.mxu0
    %3076 = vmatprep.mubr.bf16.mxu0 0
    %3077 = vmatmul.mubr.bf16.gmra.mxu0 %v806
    %v3078 = vpop.f32.mrf.mxu0
    %v3079 = vadd.f32 %v2790, %v3078
    %v3080 = vpop.f32.mrf.mxu0
    %v3081 = vpop.f32.mrf.mxu0
    %v3082 = vadd.f32 %v2793, %v3081
    %v3083 = vpop.f32.mrf.mxu0
    %3084 = vdwg.mxu0
    %s3085 = scalar_lea.vmem [#allocation3], 48
    %v3086 = vld [vmem:[%s3085] sm:$0xff]
    %v3087 = vld [vmem:[%s3085 + $0x8] sm:$0xff]
    %v3088 = vld [vmem:[%s3085 + $0x10] sm:$0xff]
    %v3089 = vld [vmem:[%s3085 + $0x18] sm:$0xff]
    %v3090 = vld [vmem:[%s3085 + $0x20] sm:$0xff]
    %v3091 = vld [vmem:[%s3085 + $0x28] sm:$0xff]
    %v3092 = vld [vmem:[%s3085 + $0x30] sm:$0xff]
    %v3093 = vld [vmem:[%s3085 + $0x38] sm:$0xff]
    %v3094 = vld [vmem:[%s3085 + $0x40] sm:$0xff]
    %v3095 = vld [vmem:[%s3085 + $0x48] sm:$0xff]
    %v3096 = vld [vmem:[%s3085 + $0x50] sm:$0xff]
    %v3097 = vld [vmem:[%s3085 + $0x58] sm:$0xff]
    %v3098 = vld [vmem:[%s3085 + $0x60] sm:$0xff]
    %v3099 = vld [vmem:[%s3085 + $0x68] sm:$0xff]
    %v3100 = vld [vmem:[%s3085 + $0x70] sm:$0xff]
    %v3101 = vld [vmem:[%s3085 + $0x78] sm:$0xff]
    %v3102 = vld [vmem:[%s3085 + $0x80] sm:$0xff]
    %v3103 = vld [vmem:[%s3085 + $0x88] sm:$0xff]
    %v3104 = vld [vmem:[%s3085 + $0x90] sm:$0xff]
    %v3105 = vld [vmem:[%s3085 + $0x98] sm:$0xff]
    %v3106 = vld [vmem:[%s3085 + $0xa0] sm:$0xff]
    %v3107 = vld [vmem:[%s3085 + $0xa8] sm:$0xff]
    %v3108 = vld [vmem:[%s3085 + $0xb0] sm:$0xff]
    %v3109 = vld [vmem:[%s3085 + $0xb8] sm:$0xff]
    %v3110 = vld [vmem:[%s3085 + $0xc0] sm:$0xff]
    %v3111 = vld [vmem:[%s3085 + $0xc8] sm:$0xff]
    %v3112 = vld [vmem:[%s3085 + $0xd0] sm:$0xff]
    %v3113 = vld [vmem:[%s3085 + $0xd8] sm:$0xff]
    %v3114 = vld [vmem:[%s3085 + $0xe0] sm:$0xff]
    %v3115 = vld [vmem:[%s3085 + $0xe8] sm:$0xff]
    %v3116 = vld [vmem:[%s3085 + $0xf0] sm:$0xff]
    %v3117 = vld [vmem:[%s3085 + $0xf8] sm:$0xff]
    %v3118 = vld [vmem:[%s3085 + $0x100] sm:$0xff]
    %v3119 = vld [vmem:[%s3085 + $0x108] sm:$0xff]
    %v3120 = vld [vmem:[%s3085 + $0x110] sm:$0xff]
    %v3121 = vld [vmem:[%s3085 + $0x118] sm:$0xff]
    %v3122 = vld [vmem:[%s3085 + $0x120] sm:$0xff]
    %v3123 = vld [vmem:[%s3085 + $0x128] sm:$0xff]
    %v3124 = vld [vmem:[%s3085 + $0x130] sm:$0xff]
    %v3125 = vld [vmem:[%s3085 + $0x138] sm:$0xff]
    %v3126 = vld [vmem:[%s3085 + $0x140] sm:$0xff]
    %v3127 = vld [vmem:[%s3085 + $0x148] sm:$0xff]
    %v3128 = vld [vmem:[%s3085 + $0x150] sm:$0xff]
    %v3129 = vld [vmem:[%s3085 + $0x158] sm:$0xff]
    %v3130 = vld [vmem:[%s3085 + $0x160] sm:$0xff]
    %v3131 = vld [vmem:[%s3085 + $0x168] sm:$0xff]
    %v3132 = vld [vmem:[%s3085 + $0x170] sm:$0xff]
    %v3133 = vld [vmem:[%s3085 + $0x178] sm:$0xff]
    %v3134 = vld [vmem:[%s3085 + $0x1b0] sm:$0xff]
    %v3135 = vld [vmem:[%s3085 + $0x1b8] sm:$0xff]
    %v3136 = vld [vmem:[%s3085 + $0x1c0] sm:$0xff]
    %v3137 = vld [vmem:[%s3085 + $0x1c8] sm:$0xff]
    %v3138 = vld [vmem:[%s3085 + $0x1d0] sm:$0xff]
    %v3139 = vld [vmem:[%s3085 + $0x1d8] sm:$0xff]
    %v3140 = vld [vmem:[%s3085 + $0x1e0] sm:$0xff]
    %v3141 = vld [vmem:[%s3085 + $0x1e8] sm:$0xff]
    %v3142 = vld [vmem:[%s3085 + $0x1f0] sm:$0xff]
    %v3143 = vld [vmem:[%s3085 + $0x1f8] sm:$0xff]
    %v3144 = vld [vmem:[%s3085 + $0x200] sm:$0xff]
    %v3145 = vld [vmem:[%s3085 + $0x208] sm:$0xff]
    %v3146 = vld [vmem:[%s3085 + $0x210] sm:$0xff]
    %v3147 = vld [vmem:[%s3085 + $0x218] sm:$0xff]
    %v3148 = vld [vmem:[%s3085 + $0x220] sm:$0xff]
    %v3149 = vld [vmem:[%s3085 + $0x228] sm:$0xff]
    %v3150 = vld [vmem:[%s3085 + $0x230] sm:$0xff]
    %v3151 = vld [vmem:[%s3085 + $0x238] sm:$0xff]
    %v3152 = vld [vmem:[%s3085 + $0x240] sm:$0xff]
    %v3153 = vld [vmem:[%s3085 + $0x248] sm:$0xff]
    %v3154 = vld [vmem:[%s3085 + $0x250] sm:$0xff]
    %v3155 = vld [vmem:[%s3085 + $0x258] sm:$0xff]
    %v3156 = vld [vmem:[%s3085 + $0x260] sm:$0xff]
    %v3157 = vld [vmem:[%s3085 + $0x268] sm:$0xff]
    %v3158 = vld [vmem:[%s3085 + $0x270] sm:$0xff]
    %v3159 = vld [vmem:[%s3085 + $0x278] sm:$0xff]
    %v3160 = vld [vmem:[%s3085 + $0x280] sm:$0xff]
    %v3161 = vld [vmem:[%s3085 + $0x288] sm:$0xff]
    %v3162 = vld [vmem:[%s3085 + $0x290] sm:$0xff]
    %v3163 = vld [vmem:[%s3085 + $0x298] sm:$0xff]
    %v3164 = vld [vmem:[%s3085 + $0x2a0] sm:$0xff]
    %v3165 = vld [vmem:[%s3085 + $0x2a8] sm:$0xff]
    %v3166 = vld [vmem:[%s3085 + $0x2b0] sm:$0xff]
    %v3167 = vld [vmem:[%s3085 + $0x2b8] sm:$0xff]
    %v3168 = vld [vmem:[%s3085 + $0x2c0] sm:$0xff]
    %v3169 = vld [vmem:[%s3085 + $0x2c8] sm:$0xff]
    %v3170 = vld [vmem:[%s3085 + $0x2d0] sm:$0xff]
    %v3171 = vld [vmem:[%s3085 + $0x2d8] sm:$0xff]
    %v3172 = vld [vmem:[%s3085 + $0x2e0] sm:$0xff]
    %v3173 = vld [vmem:[%s3085 + $0x2e8] sm:$0xff]
    %v3174 = vld [vmem:[%s3085 + $0x2f0] sm:$0xff]
    %v3175 = vld [vmem:[%s3085 + $0x2f8] sm:$0xff]
    %v3176 = vld [vmem:[%s3085 + $0x300] sm:$0xff]
    %v3177 = vld [vmem:[%s3085 + $0x308] sm:$0xff]
    %v3178 = vld [vmem:[%s3085 + $0x310] sm:$0xff]
    %v3179 = vld [vmem:[%s3085 + $0x318] sm:$0xff]
    %v3180 = vld [vmem:[%s3085 + $0x320] sm:$0xff]
    %v3181 = vld [vmem:[%s3085 + $0x328] sm:$0xff]
    %v3278 = vrot.slane %v3086, 1
    %v3279 = vrot.slane %v3087, 1
    %v3280 = vsel %vm261, %v3278, %v3279
    %v3281 = vrot.slane %v3088, 1
    %v3282 = vsel %vm261, %v3279, %v3281
    %v3283 = vrot.slane %v3089, 1
    %v3284 = vrot.slane %v3090, 1
    %v3285 = vsel %vm261, %v3283, %v3284
    %v3286 = vrot.slane %v3091, 1
    %v3287 = vsel %vm261, %v3284, %v3286
    %v3288 = vrot.slane %v3092, 1
    %v3289 = vrot.slane %v3093, 1
    %v3290 = vsel %vm261, %v3288, %v3289
    %v3291 = vrot.slane %v3094, 1
    %v3292 = vsel %vm261, %v3289, %v3291
    %v3293 = vrot.slane %v3095, 1
    %v3294 = vrot.slane %v3096, 1
    %v3295 = vsel %vm261, %v3293, %v3294
    %v3296 = vrot.slane %v3097, 1
    %v3297 = vsel %vm261, %v3294, %v3296
    %v3298 = vrot.slane %v3098, 1
    %v3299 = vrot.slane %v3099, 1
    %v3300 = vsel %vm261, %v3298, %v3299
    %v3301 = vrot.slane %v3100, 1
    %v3302 = vsel %vm261, %v3299, %v3301
    %v3303 = vrot.slane %v3101, 1
    %v3304 = vrot.slane %v3102, 1
    %v3305 = vsel %vm261, %v3303, %v3304
    %v3306 = vrot.slane %v3103, 1
    %v3307 = vsel %vm261, %v3304, %v3306
    %v3308 = vrot.slane %v3104, 1
    %v3309 = vrot.slane %v3105, 1
    %v3310 = vsel %vm261, %v3308, %v3309
    %v3311 = vrot.slane %v3106, 1
    %v3312 = vsel %vm261, %v3309, %v3311
    %v3313 = vrot.slane %v3107, 1
    %v3314 = vrot.slane %v3108, 1
    %v3315 = vsel %vm261, %v3313, %v3314
    %v3316 = vrot.slane %v3109, 1
    %v3317 = vsel %vm261, %v3314, %v3316
    %v3318 = vrot.slane %v3110, 1
    %v3319 = vrot.slane %v3111, 1
    %v3320 = vsel %vm261, %v3318, %v3319
    %v3321 = vrot.slane %v3112, 1
    %v3322 = vsel %vm261, %v3319, %v3321
    %v3323 = vrot.slane %v3113, 1
    %v3324 = vrot.slane %v3114, 1
    %v3325 = vsel %vm261, %v3323, %v3324
    %v3326 = vrot.slane %v3115, 1
    %v3327 = vsel %vm261, %v3324, %v3326
    %v3328 = vrot.slane %v3116, 1
    %v3329 = vrot.slane %v3117, 1
    %v3330 = vsel %vm261, %v3328, %v3329
    %v3331 = vrot.slane %v3118, 1
    %v3332 = vsel %vm261, %v3329, %v3331
    %v3333 = vrot.slane %v3119, 1
    %v3334 = vrot.slane %v3120, 1
    %v3335 = vsel %vm261, %v3333, %v3334
    %v3336 = vrot.slane %v3121, 1
    %v3337 = vsel %vm261, %v3334, %v3336
    %v3338 = vrot.slane %v3122, 1
    %v3339 = vrot.slane %v3123, 1
    %v3340 = vsel %vm261, %v3338, %v3339
    %v3341 = vrot.slane %v3124, 1
    %v3342 = vsel %vm261, %v3339, %v3341
    %v3343 = vrot.slane %v3125, 1
    %v3344 = vrot.slane %v3126, 1
    %v3345 = vsel %vm261, %v3343, %v3344
    %v3346 = vrot.slane %v3127, 1
    %v3347 = vsel %vm261, %v3344, %v3346
    %v3348 = vrot.slane %v3128, 1
    %v3349 = vrot.slane %v3129, 1
    %v3350 = vsel %vm261, %v3348, %v3349
    %v3351 = vrot.slane %v3130, 1
    %v3352 = vsel %vm261, %v3349, %v3351
    %v3353 = vrot.slane %v3131, 1
    %v3354 = vrot.slane %v3132, 1
    %v3355 = vsel %vm261, %v3353, %v3354
    %v3356 = vrot.slane %v3133, 1
    %v3357 = vsel %vm261, %v3354, %v3356
    %v3358 = vrot.slane %v3134, 1
    %v3359 = vrot.slane %v3135, 1
    %v3360 = vsel %vm261, %v3358, %v3359
    %v3361 = vrot.slane %v3136, 1
    %v3362 = vsel %vm261, %v3359, %v3361
    %v3363 = vrot.slane %v3137, 1
    %v3364 = vrot.slane %v3138, 1
    %v3365 = vsel %vm261, %v3363, %v3364
    %v3366 = vrot.slane %v3139, 1
    %v3367 = vsel %vm261, %v3364, %v3366
    %v3368 = vrot.slane %v3140, 1
    %v3369 = vrot.slane %v3141, 1
    %v3370 = vsel %vm261, %v3368, %v3369
    %v3371 = vrot.slane %v3142, 1
    %v3372 = vsel %vm261, %v3369, %v3371
    %v3373 = vrot.slane %v3143, 1
    %v3374 = vrot.slane %v3144, 1
    %v3375 = vsel %vm261, %v3373, %v3374
    %v3376 = vrot.slane %v3145, 1
    %v3377 = vsel %vm261, %v3374, %v3376
    %v3378 = vrot.slane %v3146, 1
    %v3379 = vrot.slane %v3147, 1
    %v3380 = vsel %vm261, %v3378, %v3379
    %v3381 = vrot.slane %v3148, 1
    %v3382 = vsel %vm261, %v3379, %v3381
    %v3383 = vrot.slane %v3149, 1
    %v3384 = vrot.slane %v3150, 1
    %v3385 = vsel %vm261, %v3383, %v3384
    %v3386 = vrot.slane %v3151, 1
    %v3387 = vsel %vm261, %v3384, %v3386
    %v3388 = vrot.slane %v3152, 1
    %v3389 = vrot.slane %v3153, 1
    %v3390 = vsel %vm261, %v3388, %v3389
    %v3391 = vrot.slane %v3154, 1
    %v3392 = vsel %vm261, %v3389, %v3391
    %v3393 = vrot.slane %v3155, 1
    %v3394 = vrot.slane %v3156, 1
    %v3395 = vsel %vm261, %v3393, %v3394
    %v3396 = vrot.slane %v3157, 1
    %v3397 = vsel %vm261, %v3394, %v3396
    %v3398 = vrot.slane %v3158, 1
    %v3399 = vrot.slane %v3159, 1
    %v3400 = vsel %vm261, %v3398, %v3399
    %v3401 = vrot.slane %v3160, 1
    %v3402 = vsel %vm261, %v3399, %v3401
    %v3403 = vrot.slane %v3161, 1
    %v3404 = vrot.slane %v3162, 1
    %v3405 = vsel %vm261, %v3403, %v3404
    %v3406 = vrot.slane %v3163, 1
    %v3407 = vsel %vm261, %v3404, %v3406
    %v3408 = vrot.slane %v3164, 1
    %v3409 = vrot.slane %v3165, 1
    %v3410 = vsel %vm261, %v3408, %v3409
    %v3411 = vrot.slane %v3166, 1
    %v3412 = vsel %vm261, %v3409, %v3411
    %v3413 = vrot.slane %v3167, 1
    %v3414 = vrot.slane %v3168, 1
    %v3415 = vsel %vm261, %v3413, %v3414
    %v3416 = vrot.slane %v3169, 1
    %v3417 = vsel %vm261, %v3414, %v3416
    %v3418 = vrot.slane %v3170, 1
    %v3419 = vrot.slane %v3171, 1
    %v3420 = vsel %vm261, %v3418, %v3419
    %v3421 = vrot.slane %v3172, 1
    %v3422 = vsel %vm261, %v3419, %v3421
    %v3423 = vrot.slane %v3173, 1
    %v3424 = vrot.slane %v3174, 1
    %v3425 = vsel %vm261, %v3423, %v3424
    %v3426 = vrot.slane %v3175, 1
    %v3427 = vsel %vm261, %v3424, %v3426
    %v3428 = vrot.slane %v3176, 1
    %v3429 = vrot.slane %v3177, 1
    %v3430 = vsel %vm261, %v3428, %v3429
    %v3431 = vrot.slane %v3178, 1
    %v3432 = vsel %vm261, %v3429, %v3431
    %v3433 = vrot.slane %v3179, 1
    %v3434 = vrot.slane %v3180, 1
    %v3435 = vsel %vm261, %v3433, %v3434
    %v3436 = vrot.slane %v3181, 1
    %v3437 = vsel %vm261, %v3434, %v3436
    %v3502 = vrot.slane %v3086, 2
    %v3503 = vrot.slane %v3087, 2
    %v3504 = vsel %vm486, %v3502, %v3503
    %v3505 = vrot.slane %v3088, 2
    %v3506 = vsel %vm486, %v3503, %v3505
    %v3507 = vrot.slane %v3089, 2
    %v3508 = vrot.slane %v3090, 2
    %v3509 = vsel %vm486, %v3507, %v3508
    %v3510 = vrot.slane %v3091, 2
    %v3511 = vsel %vm486, %v3508, %v3510
    %v3512 = vrot.slane %v3092, 2
    %v3513 = vrot.slane %v3093, 2
    %v3514 = vsel %vm486, %v3512, %v3513
    %v3515 = vrot.slane %v3094, 2
    %v3516 = vsel %vm486, %v3513, %v3515
    %v3517 = vrot.slane %v3095, 2
    %v3518 = vrot.slane %v3096, 2
    %v3519 = vsel %vm486, %v3517, %v3518
    %v3520 = vrot.slane %v3097, 2
    %v3521 = vsel %vm486, %v3518, %v3520
    %v3522 = vrot.slane %v3098, 2
    %v3523 = vrot.slane %v3099, 2
    %v3524 = vsel %vm486, %v3522, %v3523
    %v3525 = vrot.slane %v3100, 2
    %v3526 = vsel %vm486, %v3523, %v3525
    %v3527 = vrot.slane %v3101, 2
    %v3528 = vrot.slane %v3102, 2
    %v3529 = vsel %vm486, %v3527, %v3528
    %v3530 = vrot.slane %v3103, 2
    %v3531 = vsel %vm486, %v3528, %v3530
    %v3532 = vrot.slane %v3104, 2
    %v3533 = vrot.slane %v3105, 2
    %v3534 = vsel %vm486, %v3532, %v3533
    %v3535 = vrot.slane %v3106, 2
    %v3536 = vsel %vm486, %v3533, %v3535
    %v3537 = vrot.slane %v3107, 2
    %v3538 = vrot.slane %v3108, 2
    %v3539 = vsel %vm486, %v3537, %v3538
    %v3540 = vrot.slane %v3109, 2
    %v3541 = vsel %vm486, %v3538, %v3540
    %v3542 = vrot.slane %v3110, 2
    %v3543 = vrot.slane %v3111, 2
    %v3544 = vsel %vm486, %v3542, %v3543
    %v3545 = vrot.slane %v3112, 2
    %v3546 = vsel %vm486, %v3543, %v3545
    %v3547 = vrot.slane %v3113, 2
    %v3548 = vrot.slane %v3114, 2
    %v3549 = vsel %vm486, %v3547, %v3548
    %v3550 = vrot.slane %v3115, 2
    %v3551 = vsel %vm486, %v3548, %v3550
    %v3552 = vrot.slane %v3116, 2
    %v3553 = vrot.slane %v3117, 2
    %v3554 = vsel %vm486, %v3552, %v3553
    %v3555 = vrot.slane %v3118, 2
    %v3556 = vsel %vm486, %v3553, %v3555
    %v3557 = vrot.slane %v3119, 2
    %v3558 = vrot.slane %v3120, 2
    %v3559 = vsel %vm486, %v3557, %v3558
    %v3560 = vrot.slane %v3121, 2
    %v3561 = vsel %vm486, %v3558, %v3560
    %v3562 = vrot.slane %v3122, 2
    %v3563 = vrot.slane %v3123, 2
    %v3564 = vsel %vm486, %v3562, %v3563
    %v3565 = vrot.slane %v3124, 2
    %v3566 = vsel %vm486, %v3563, %v3565
    %v3567 = vrot.slane %v3125, 2
    %v3568 = vrot.slane %v3126, 2
    %v3569 = vsel %vm486, %v3567, %v3568
    %v3570 = vrot.slane %v3127, 2
    %v3571 = vsel %vm486, %v3568, %v3570
    %v3572 = vrot.slane %v3128, 2
    %v3573 = vrot.slane %v3129, 2
    %v3574 = vsel %vm486, %v3572, %v3573
    %v3575 = vrot.slane %v3130, 2
    %v3576 = vsel %vm486, %v3573, %v3575
    %v3577 = vrot.slane %v3131, 2
    %v3578 = vrot.slane %v3132, 2
    %v3579 = vsel %vm486, %v3577, %v3578
    %v3580 = vrot.slane %v3133, 2
    %v3581 = vsel %vm486, %v3578, %v3580
    %v3582 = vrot.slane %v3134, 2
    %v3583 = vrot.slane %v3135, 2
    %v3584 = vsel %vm486, %v3582, %v3583
    %v3585 = vrot.slane %v3136, 2
    %v3586 = vsel %vm486, %v3583, %v3585
    %v3587 = vrot.slane %v3137, 2
    %v3588 = vrot.slane %v3138, 2
    %v3589 = vsel %vm486, %v3587, %v3588
    %v3590 = vrot.slane %v3139, 2
    %v3591 = vsel %vm486, %v3588, %v3590
    %v3592 = vrot.slane %v3140, 2
    %v3593 = vrot.slane %v3141, 2
    %v3594 = vsel %vm486, %v3592, %v3593
    %v3595 = vrot.slane %v3142, 2
    %v3596 = vsel %vm486, %v3593, %v3595
    %v3597 = vrot.slane %v3143, 2
    %v3598 = vrot.slane %v3144, 2
    %v3599 = vsel %vm486, %v3597, %v3598
    %v3600 = vrot.slane %v3145, 2
    %v3601 = vsel %vm486, %v3598, %v3600
    %v3602 = vrot.slane %v3146, 2
    %v3603 = vrot.slane %v3147, 2
    %v3604 = vsel %vm486, %v3602, %v3603
    %v3605 = vrot.slane %v3148, 2
    %v3606 = vsel %vm486, %v3603, %v3605
    %v3607 = vrot.slane %v3149, 2
    %v3608 = vrot.slane %v3150, 2
    %v3609 = vsel %vm486, %v3607, %v3608
    %v3610 = vrot.slane %v3151, 2
    %v3611 = vsel %vm486, %v3608, %v3610
    %v3612 = vrot.slane %v3152, 2
    %v3613 = vrot.slane %v3153, 2
    %v3614 = vsel %vm486, %v3612, %v3613
    %v3615 = vrot.slane %v3154, 2
    %v3616 = vsel %vm486, %v3613, %v3615
    %v3617 = vrot.slane %v3155, 2
    %v3618 = vrot.slane %v3156, 2
    %v3619 = vsel %vm486, %v3617, %v3618
    %v3620 = vrot.slane %v3157, 2
    %v3621 = vsel %vm486, %v3618, %v3620
    %v3622 = vrot.slane %v3158, 2
    %v3623 = vrot.slane %v3159, 2
    %v3624 = vsel %vm486, %v3622, %v3623
    %v3625 = vrot.slane %v3160, 2
    %v3626 = vsel %vm486, %v3623, %v3625
    %v3627 = vrot.slane %v3161, 2
    %v3628 = vrot.slane %v3162, 2
    %v3629 = vsel %vm486, %v3627, %v3628
    %v3630 = vrot.slane %v3163, 2
    %v3631 = vsel %vm486, %v3628, %v3630
    %v3632 = vrot.slane %v3164, 2
    %v3633 = vrot.slane %v3165, 2
    %v3634 = vsel %vm486, %v3632, %v3633
    %v3635 = vrot.slane %v3166, 2
    %v3636 = vsel %vm486, %v3633, %v3635
    %v3637 = vrot.slane %v3167, 2
    %v3638 = vrot.slane %v3168, 2
    %v3639 = vsel %vm486, %v3637, %v3638
    %v3640 = vrot.slane %v3169, 2
    %v3641 = vsel %vm486, %v3638, %v3640
    %v3642 = vrot.slane %v3170, 2
    %v3643 = vrot.slane %v3171, 2
    %v3644 = vsel %vm486, %v3642, %v3643
    %v3645 = vrot.slane %v3172, 2
    %v3646 = vsel %vm486, %v3643, %v3645
    %v3647 = vrot.slane %v3173, 2
    %v3648 = vrot.slane %v3174, 2
    %v3649 = vsel %vm486, %v3647, %v3648
    %v3650 = vrot.slane %v3175, 2
    %v3651 = vsel %vm486, %v3648, %v3650
    %v3652 = vrot.slane %v3176, 2
    %v3653 = vrot.slane %v3177, 2
    %v3654 = vsel %vm486, %v3652, %v3653
    %v3655 = vrot.slane %v3178, 2
    %v3656 = vsel %vm486, %v3653, %v3655
    %v3657 = vrot.slane %v3179, 2
    %v3658 = vrot.slane %v3180, 2
    %v3659 = vsel %vm486, %v3657, %v3658
    %v3660 = vrot.slane %v3181, 2
    %v3661 = vsel %vm486, %v3658, %v3660
    %v3726 = vpack.c.bf16 %v3087, %v3086
    %v3727 = vpack.c.bf16 %v3282, %v3280
    %v3728 = vpack.c.bf16 %v3506, %v3504
    %v3729 = vpack.c.bf16 %v3090, %v3089
    %v3730 = vpack.c.bf16 %v3287, %v3285
    %v3731 = vpack.c.bf16 %v3511, %v3509
    %v3732 = vpack.c.bf16 %v3093, %v3092
    %v3733 = vpack.c.bf16 %v3292, %v3290
    %v3734 = vpack.c.bf16 %v3516, %v3514
    %v3735 = vpack.c.bf16 %v3096, %v3095
    %v3736 = vpack.c.bf16 %v3297, %v3295
    %v3737 = vpack.c.bf16 %v3521, %v3519
    %v3738 = vpack.c.bf16 %v3099, %v3098
    %v3739 = vpack.c.bf16 %v3302, %v3300
    %v3740 = vpack.c.bf16 %v3526, %v3524
    %v3741 = vpack.c.bf16 %v3102, %v3101
    %v3742 = vpack.c.bf16 %v3307, %v3305
    %v3743 = vpack.c.bf16 %v3531, %v3529
    %v3744 = vpack.c.bf16 %v3105, %v3104
    %v3745 = vpack.c.bf16 %v3312, %v3310
    %v3746 = vpack.c.bf16 %v3536, %v3534
    %v3747 = vpack.c.bf16 %v3108, %v3107
    %v3748 = vpack.c.bf16 %v3317, %v3315
    %v3749 = vpack.c.bf16 %v3541, %v3539
    %v3750 = vpack.c.bf16 %v3111, %v3110
    %v3751 = vpack.c.bf16 %v3322, %v3320
    %v3752 = vpack.c.bf16 %v3546, %v3544
    %v3753 = vpack.c.bf16 %v3114, %v3113
    %v3754 = vpack.c.bf16 %v3327, %v3325
    %v3755 = vpack.c.bf16 %v3551, %v3549
    %v3756 = vpack.c.bf16 %v3117, %v3116
    %v3757 = vpack.c.bf16 %v3332, %v3330
    %v3758 = vpack.c.bf16 %v3556, %v3554
    %v3759 = vpack.c.bf16 %v3120, %v3119
    %v3760 = vpack.c.bf16 %v3337, %v3335
    %v3761 = vpack.c.bf16 %v3561, %v3559
    %v3762 = vpack.c.bf16 %v3123, %v3122
    %v3763 = vpack.c.bf16 %v3342, %v3340
    %v3764 = vpack.c.bf16 %v3566, %v3564
    %v3765 = vpack.c.bf16 %v3126, %v3125
    %v3766 = vpack.c.bf16 %v3347, %v3345
    %v3767 = vpack.c.bf16 %v3571, %v3569
    %v3768 = vpack.c.bf16 %v3129, %v3128
    %v3769 = vpack.c.bf16 %v3352, %v3350
    %v3770 = vpack.c.bf16 %v3576, %v3574
    %v3771 = vpack.c.bf16 %v3132, %v3131
    %v3772 = vpack.c.bf16 %v3357, %v3355
    %v3773 = vpack.c.bf16 %v3581, %v3579
    %v3774 = vpack.c.bf16 %v3135, %v3134
    %v3775 = vpack.c.bf16 %v3362, %v3360
    %v3776 = vpack.c.bf16 %v3586, %v3584
    %v3777 = vpack.c.bf16 %v3138, %v3137
    %v3778 = vpack.c.bf16 %v3367, %v3365
    %v3779 = vpack.c.bf16 %v3591, %v3589
    %v3780 = vpack.c.bf16 %v3141, %v3140
    %v3781 = vpack.c.bf16 %v3372, %v3370
    %v3782 = vpack.c.bf16 %v3596, %v3594
    %v3783 = vpack.c.bf16 %v3144, %v3143
    %v3784 = vpack.c.bf16 %v3377, %v3375
    %v3785 = vpack.c.bf16 %v3601, %v3599
    %v3786 = vpack.c.bf16 %v3147, %v3146
    %v3787 = vpack.c.bf16 %v3382, %v3380
    %v3788 = vpack.c.bf16 %v3606, %v3604
    %v3789 = vpack.c.bf16 %v3150, %v3149
    %v3790 = vpack.c.bf16 %v3387, %v3385
    %v3791 = vpack.c.bf16 %v3611, %v3609
    %v3792 = vpack.c.bf16 %v3153, %v3152
    %v3793 = vpack.c.bf16 %v3392, %v3390
    %v3794 = vpack.c.bf16 %v3616, %v3614
    %v3795 = vpack.c.bf16 %v3156, %v3155
    %v3796 = vpack.c.bf16 %v3397, %v3395
    %v3797 = vpack.c.bf16 %v3621, %v3619
    %v3798 = vpack.c.bf16 %v3159, %v3158
    %v3799 = vpack.c.bf16 %v3402, %v3400
    %v3800 = vpack.c.bf16 %v3626, %v3624
    %v3801 = vpack.c.bf16 %v3162, %v3161
    %v3802 = vpack.c.bf16 %v3407, %v3405
    %v3803 = vpack.c.bf16 %v3631, %v3629
    %v3804 = vpack.c.bf16 %v3165, %v3164
    %v3805 = vpack.c.bf16 %v3412, %v3410
    %v3806 = vpack.c.bf16 %v3636, %v3634
    %v3807 = vpack.c.bf16 %v3168, %v3167
    %v3808 = vpack.c.bf16 %v3417, %v3415
    %v3809 = vpack.c.bf16 %v3641, %v3639
    %v3810 = vpack.c.bf16 %v3171, %v3170
    %v3811 = vpack.c.bf16 %v3422, %v3420
    %v3812 = vpack.c.bf16 %v3646, %v3644
    %v3813 = vpack.c.bf16 %v3174, %v3173
    %v3814 = vpack.c.bf16 %v3427, %v3425
    %v3815 = vpack.c.bf16 %v3651, %v3649
    %v3816 = vpack.c.bf16 %v3177, %v3176
    %v3817 = vpack.c.bf16 %v3432, %v3430
    %v3818 = vpack.c.bf16 %v3656, %v3654
    %v3819 = vpack.c.bf16 %v3180, %v3179
    %v3820 = vpack.c.bf16 %v3437, %v3435
    %v3821 = vpack.c.bf16 %v3661, %v3659
    %s3822 = scalar_lea.vmem [#allocation6], 384
    %v3823 = vld [vmem:[%s3822] sm:$0xf]
    %v3824 = vld [vmem:[%s3822 + $0x4] sm:$0xf]
    %v3825 = vld [vmem:[%s3822 + $0x8] sm:$0xf]
    %v3826 = vld [vmem:[%s3822 + $0xc] sm:$0xf]
    %v3827 = vld [vmem:[%s3822 + $0x10] sm:$0xf]
    %v3828 = vld [vmem:[%s3822 + $0x14] sm:$0xf]
    %v3829 = vld [vmem:[%s3822 + $0x18] sm:$0xf]
    %v3830 = vld [vmem:[%s3822 + $0x1c] sm:$0xf]
    %v3831 = vld [vmem:[%s3822 + $0x20] sm:$0xf]
    %v3832 = vld [vmem:[%s3822 + $0x24] sm:$0xf]
    %v3833 = vld [vmem:[%s3822 + $0x28] sm:$0xf]
    %v3834 = vld [vmem:[%s3822 + $0x2c] sm:$0xf]
    %v3835 = vld [vmem:[%s3822 + $0x30] sm:$0xf]
    %v3836 = vld [vmem:[%s3822 + $0x34] sm:$0xf]
    %v3837 = vld [vmem:[%s3822 + $0x38] sm:$0xf]
    %v3838 = vld [vmem:[%s3822 + $0x3c] sm:$0xf]
    %v3839 = vld [vmem:[%s3822 + $0x40] sm:$0xf]
    %v3840 = vld [vmem:[%s3822 + $0x44] sm:$0xf]
    %v3841 = vld [vmem:[%s3822 + $0x48] sm:$0xf]
    %v3842 = vld [vmem:[%s3822 + $0x4c] sm:$0xf]
    %v3843 = vld [vmem:[%s3822 + $0x50] sm:$0xf]
    %v3844 = vld [vmem:[%s3822 + $0x54] sm:$0xf]
    %v3845 = vld [vmem:[%s3822 + $0x58] sm:$0xf]
    %v3846 = vld [vmem:[%s3822 + $0x5c] sm:$0xf]
    %v3847 = vld [vmem:[%s3822 + $0x60] sm:$0xf]
    %v3848 = vld [vmem:[%s3822 + $0x64] sm:$0xf]
    %v3849 = vld [vmem:[%s3822 + $0x68] sm:$0xf]
    %v3850 = vld [vmem:[%s3822 + $0x6c] sm:$0xf]
    %v3851 = vld [vmem:[%s3822 + $0x70] sm:$0xf]
    %v3852 = vld [vmem:[%s3822 + $0x74] sm:$0xf]
    %v3853 = vld [vmem:[%s3822 + $0x78] sm:$0xf]
    %v3854 = vld [vmem:[%s3822 + $0x7c] sm:$0xf]
    %v3855 = vld [vmem:[%s3822 + $0x80] sm:$0xf]
    %v3856 = vld [vmem:[%s3822 + $0x84] sm:$0xf]
    %v3857 = vld [vmem:[%s3822 + $0x88] sm:$0xf]
    %v3858 = vld [vmem:[%s3822 + $0x8c] sm:$0xf]
    %v3859 = vld [vmem:[%s3822 + $0x90] sm:$0xf]
    %v3860 = vld [vmem:[%s3822 + $0x94] sm:$0xf]
    %v3861 = vld [vmem:[%s3822 + $0x98] sm:$0xf]
    %v3862 = vld [vmem:[%s3822 + $0x9c] sm:$0xf]
    %v3863 = vld [vmem:[%s3822 + $0xa0] sm:$0xf]
    %v3864 = vld [vmem:[%s3822 + $0xa4] sm:$0xf]
    %v3865 = vld [vmem:[%s3822 + $0xa8] sm:$0xf]
    %v3866 = vld [vmem:[%s3822 + $0xac] sm:$0xf]
    %v3867 = vld [vmem:[%s3822 + $0xb0] sm:$0xf]
    %v3868 = vld [vmem:[%s3822 + $0xb4] sm:$0xf]
    %v3869 = vld [vmem:[%s3822 + $0xb8] sm:$0xf]
    %v3870 = vld [vmem:[%s3822 + $0xbc] sm:$0xf]
    %v3919 = vunpack.c.l.b16 %v3823
    %v3920 = vunpack.c.l.b16 %v3824
    %v3921 = vunpack.c.l.b16 %v3825
    %v3922 = vunpack.c.l.b16 %v3826
    %v3923 = vunpack.c.l.b16 %v3827
    %v3924 = vunpack.c.l.b16 %v3828
    %v3925 = vunpack.c.l.b16 %v3829
    %v3926 = vunpack.c.l.b16 %v3830
    %v3927 = vunpack.c.l.b16 %v3831
    %v3928 = vunpack.c.l.b16 %v3832
    %v3929 = vunpack.c.l.b16 %v3833
    %v3930 = vunpack.c.l.b16 %v3834
    %v3931 = vunpack.c.l.b16 %v3835
    %v3932 = vunpack.c.l.b16 %v3836
    %v3933 = vunpack.c.l.b16 %v3837
    %v3934 = vunpack.c.l.b16 %v3838
    %v3935 = vunpack.c.l.b16 %v3839
    %v3936 = vunpack.c.l.b16 %v3840
    %v3937 = vunpack.c.l.b16 %v3841
    %v3938 = vunpack.c.l.b16 %v3842
    %v3939 = vunpack.c.l.b16 %v3843
    %v3940 = vunpack.c.l.b16 %v3844
    %v3941 = vunpack.c.l.b16 %v3845
    %v3942 = vunpack.c.l.b16 %v3846
    %v3943 = vunpack.c.l.b16 %v3847
    %v3944 = vunpack.c.l.b16 %v3848
    %v3945 = vunpack.c.l.b16 %v3849
    %v3946 = vunpack.c.l.b16 %v3850
    %v3947 = vunpack.c.l.b16 %v3851
    %v3948 = vunpack.c.l.b16 %v3852
    %v3949 = vunpack.c.l.b16 %v3853
    %v3950 = vunpack.c.l.b16 %v3854
    %v3951 = vunpack.c.l.b16 %v3855
    %v3952 = vunpack.c.l.b16 %v3856
    %v3953 = vunpack.c.l.b16 %v3857
    %v3954 = vunpack.c.l.b16 %v3858
    %v3955 = vunpack.c.l.b16 %v3859
    %v3956 = vunpack.c.l.b16 %v3860
    %v3957 = vunpack.c.l.b16 %v3861
    %v3958 = vunpack.c.l.b16 %v3862
    %v3959 = vunpack.c.l.b16 %v3863
    %v3960 = vunpack.c.l.b16 %v3864
    %v3961 = vunpack.c.l.b16 %v3865
    %v3962 = vunpack.c.l.b16 %v3866
    %v3963 = vunpack.c.l.b16 %v3867
    %v3964 = vunpack.c.l.b16 %v3868
    %v3965 = vunpack.c.l.b16 %v3869
    %v3966 = vunpack.c.l.b16 %v3870
    %v3967 = vpack.c.b16 %v3920, %v3919
    %v3968 = vpack.c.b16 %v3922, %v3921
    %v3969 = vpack.c.b16 %v3924, %v3923
    %v3970 = vpack.c.b16 %v3926, %v3925
    %v3971 = vpack.c.b16 %v3928, %v3927
    %v3972 = vpack.c.b16 %v3930, %v3929
    %v3973 = vpack.c.b16 %v3932, %v3931
    %v3974 = vpack.c.b16 %v3934, %v3933
    %v3975 = vpack.c.b16 %v3936, %v3935
    %v3976 = vpack.c.b16 %v3938, %v3937
    %v3977 = vpack.c.b16 %v3940, %v3939
    %v3978 = vpack.c.b16 %v3942, %v3941
    %v3979 = vpack.c.b16 %v3944, %v3943
    %v3980 = vpack.c.b16 %v3946, %v3945
    %v3981 = vpack.c.b16 %v3948, %v3947
    %v3982 = vpack.c.b16 %v3950, %v3949
    %v3983 = vpack.c.b16 %v3952, %v3951
    %v3984 = vpack.c.b16 %v3954, %v3953
    %v3985 = vpack.c.b16 %v3956, %v3955
    %v3986 = vpack.c.b16 %v3958, %v3957
    %v3987 = vpack.c.b16 %v3960, %v3959
    %v3988 = vpack.c.b16 %v3962, %v3961
    %v3989 = vpack.c.b16 %v3964, %v3963
    %v3990 = vpack.c.b16 %v3966, %v3965
    %4015 = vmatprep.subr.bf16.mxu0 0
    %4016 = vmatpush1.bf16.msra.mxu0 %v3974
    %4017 = vmatprep.subr.bf16.mxu0 0
    %4018 = vmatpush1.bf16.msra.mxu0 %v3973
    %4019 = vmatprep.subr.bf16.mxu0 0
    %4020 = vmatpush1.bf16.msra.mxu0 %v3972
    %4021 = vmatprep.subr.bf16.mxu0 0
    %4022 = vmatpush1.bf16.msra.mxu0 %v3971
    %4023 = vmatprep.subr.bf16.mxu0 0
    %4024 = vmatpush1.bf16.msra.mxu0 %v3970
    %4025 = vmatprep.subr.bf16.mxu0 0
    %4026 = vmatpush1.bf16.msra.mxu0 %v3969
    %4027 = vmatprep.subr.bf16.mxu0 0
    %4028 = vmatpush1.bf16.msra.mxu0 %v3968
    %4029 = vmatprep.subr.bf16.mxu0 0
    %4030 = vmatpush1.bf16.msra.mxu0 %v3967
    %4031 = vmatprep.subr.bf16.mxu0 0
    %4032 = vmatpush2.bf16.msra.mxu0 %v3982
    %4033 = vmatprep.subr.bf16.mxu0 0
    %4034 = vmatpush2.bf16.msra.mxu0 %v3981
    %4035 = vmatprep.subr.bf16.mxu0 0
    %4036 = vmatpush2.bf16.msra.mxu0 %v3980
    %4037 = vmatprep.subr.bf16.mxu0 0
    %4038 = vmatpush2.bf16.msra.mxu0 %v3979
    %4039 = vmatprep.subr.bf16.mxu0 0
    %4040 = vmatpush2.bf16.msra.mxu0 %v3978
    %4041 = vmatprep.subr.bf16.mxu0 0
    %4042 = vmatpush2.bf16.msra.mxu0 %v3977
    %4043 = vmatprep.subr.bf16.mxu0 0
    %4044 = vmatpush2.bf16.msra.mxu0 %v3976
    %4045 = vmatprep.subr.bf16.mxu0 0
    %4046 = vmatpush2.bf16.msra.mxu0 %v3975
    %4047 = vmatprep.mubr.bf16.mxu0 %v3727
    %4048 = vmatmul.mubr.bf16.gmra.mxu0 %v3726
    %v4049 = vpop.f32.mrf.mxu0
    %v4050 = vadd.f32 0.0, %v4049
    %v4051 = vpop.f32.mrf.mxu0
    %v4052 = vpop.f32.mrf.mxu0
    %v4053 = vadd.f32 0.0, %v4052
    %v4054 = vpop.f32.mrf.mxu0
    %4055 = vmatprep.mubr.bf16.mxu0 %v3730
    %4056 = vmatmul.mubr.bf16.gmra.mxu0 %v3729
    %v4057 = vpop.f32.mrf.mxu0
    %v4058 = vadd.f32 0.0, %v4057
    %v4059 = vpop.f32.mrf.mxu0
    %v4060 = vpop.f32.mrf.mxu0
    %v4061 = vadd.f32 0.0, %v4060
    %v4062 = vpop.f32.mrf.mxu0
    %4063 = vmatprep.mubr.bf16.mxu0 %v3733
    %4064 = vmatmul.mubr.bf16.gmra.mxu0 %v3732
    %v4065 = vpop.f32.mrf.mxu0
    %v4066 = vadd.f32 0.0, %v4065
    %v4067 = vpop.f32.mrf.mxu0
    %v4068 = vpop.f32.mrf.mxu0
    %v4069 = vadd.f32 0.0, %v4068
    %v4070 = vpop.f32.mrf.mxu0
    %4071 = vmatprep.mubr.bf16.mxu0 %v3736
    %4072 = vmatmul.mubr.bf16.gmra.mxu0 %v3735
    %v4073 = vpop.f32.mrf.mxu0
    %v4074 = vadd.f32 0.0, %v4073
    %v4075 = vpop.f32.mrf.mxu0
    %v4076 = vpop.f32.mrf.mxu0
    %v4077 = vadd.f32 0.0, %v4076
    %v4078 = vpop.f32.mrf.mxu0
    %4079 = vmatprep.mubr.bf16.mxu0 %v3739
    %4080 = vmatmul.mubr.bf16.gmra.mxu0 %v3738
    %v4081 = vpop.f32.mrf.mxu0
    %v4082 = vadd.f32 0.0, %v4081
    %v4083 = vpop.f32.mrf.mxu0
    %v4084 = vpop.f32.mrf.mxu0
    %v4085 = vadd.f32 0.0, %v4084
    %v4086 = vpop.f32.mrf.mxu0
    %4087 = vmatprep.mubr.bf16.mxu0 %v3742
    %4088 = vmatmul.mubr.bf16.gmra.mxu0 %v3741
    %v4089 = vpop.f32.mrf.mxu0
    %v4090 = vadd.f32 0.0, %v4089
    %v4091 = vpop.f32.mrf.mxu0
    %v4092 = vpop.f32.mrf.mxu0
    %v4093 = vadd.f32 0.0, %v4092
    %v4094 = vpop.f32.mrf.mxu0
    %4095 = vmatprep.mubr.bf16.mxu0 %v3745
    %4096 = vmatmul.mubr.bf16.gmra.mxu0 %v3744
    %v4097 = vpop.f32.mrf.mxu0
    %v4098 = vadd.f32 0.0, %v4097
    %v4099 = vpop.f32.mrf.mxu0
    %v4100 = vpop.f32.mrf.mxu0
    %v4101 = vadd.f32 0.0, %v4100
    %v4102 = vpop.f32.mrf.mxu0
    %4103 = vmatprep.mubr.bf16.mxu0 %v3748
    %4104 = vmatmul.mubr.bf16.gmra.mxu0 %v3747
    %v4105 = vpop.f32.mrf.mxu0
    %v4106 = vadd.f32 0.0, %v4105
    %v4107 = vpop.f32.mrf.mxu0
    %v4108 = vpop.f32.mrf.mxu0
    %v4109 = vadd.f32 0.0, %v4108
    %v4110 = vpop.f32.mrf.mxu0
    %4111 = vmatprep.mubr.bf16.mxu0 %v3751
    %4112 = vmatmul.mubr.bf16.gmra.mxu0 %v3750
    %v4113 = vpop.f32.mrf.mxu0
    %v4114 = vadd.f32 0.0, %v4113
    %v4115 = vpop.f32.mrf.mxu0
    %v4116 = vpop.f32.mrf.mxu0
    %v4117 = vadd.f32 0.0, %v4116
    %v4118 = vpop.f32.mrf.mxu0
    %4119 = vmatprep.mubr.bf16.mxu0 %v3754
    %4120 = vmatmul.mubr.bf16.gmra.mxu0 %v3753
    %v4121 = vpop.f32.mrf.mxu0
    %v4122 = vadd.f32 0.0, %v4121
    %v4123 = vpop.f32.mrf.mxu0
    %v4124 = vpop.f32.mrf.mxu0
    %v4125 = vadd.f32 0.0, %v4124
    %v4126 = vpop.f32.mrf.mxu0
    %4127 = vmatprep.mubr.bf16.mxu0 %v3757
    %4128 = vmatmul.mubr.bf16.gmra.mxu0 %v3756
    %v4129 = vpop.f32.mrf.mxu0
    %v4130 = vadd.f32 0.0, %v4129
    %v4131 = vpop.f32.mrf.mxu0
    %v4132 = vpop.f32.mrf.mxu0
    %v4133 = vadd.f32 0.0, %v4132
    %v4134 = vpop.f32.mrf.mxu0
    %4135 = vmatprep.mubr.bf16.mxu0 %v3760
    %4136 = vmatmul.mubr.bf16.gmra.mxu0 %v3759
    %v4137 = vpop.f32.mrf.mxu0
    %v4138 = vadd.f32 0.0, %v4137
    %v4139 = vpop.f32.mrf.mxu0
    %v4140 = vpop.f32.mrf.mxu0
    %v4141 = vadd.f32 0.0, %v4140
    %v4142 = vpop.f32.mrf.mxu0
    %4143 = vmatprep.mubr.bf16.mxu0 %v3763
    %4144 = vmatmul.mubr.bf16.gmra.mxu0 %v3762
    %v4145 = vpop.f32.mrf.mxu0
    %v4146 = vadd.f32 0.0, %v4145
    %v4147 = vpop.f32.mrf.mxu0
    %v4148 = vpop.f32.mrf.mxu0
    %v4149 = vadd.f32 0.0, %v4148
    %v4150 = vpop.f32.mrf.mxu0
    %4151 = vmatprep.mubr.bf16.mxu0 %v3766
    %4152 = vmatmul.mubr.bf16.gmra.mxu0 %v3765
    %v4153 = vpop.f32.mrf.mxu0
    %v4154 = vadd.f32 0.0, %v4153
    %v4155 = vpop.f32.mrf.mxu0
    %v4156 = vpop.f32.mrf.mxu0
    %v4157 = vadd.f32 0.0, %v4156
    %v4158 = vpop.f32.mrf.mxu0
    %4159 = vmatprep.mubr.bf16.mxu0 %v3769
    %4160 = vmatmul.mubr.bf16.gmra.mxu0 %v3768
    %v4161 = vpop.f32.mrf.mxu0
    %v4162 = vadd.f32 0.0, %v4161
    %v4163 = vpop.f32.mrf.mxu0
    %v4164 = vpop.f32.mrf.mxu0
    %v4165 = vadd.f32 0.0, %v4164
    %v4166 = vpop.f32.mrf.mxu0
    %4167 = vmatprep.mubr.bf16.mxu0 %v3772
    %4168 = vmatmul.mubr.bf16.gmra.mxu0 %v3771
    %v4169 = vpop.f32.mrf.mxu0
    %v4170 = vadd.f32 0.0, %v4169
    %v4171 = vpop.f32.mrf.mxu0
    %v4172 = vpop.f32.mrf.mxu0
    %v4173 = vadd.f32 0.0, %v4172
    %v4174 = vpop.f32.mrf.mxu0
    %4175 = vmatprep.mubr.bf16.mxu0 %v3775
    %4176 = vmatmul.mubr.bf16.gmra.mxu0 %v3774
    %v4177 = vpop.f32.mrf.mxu0
    %v4178 = vadd.f32 0.0, %v4177
    %v4179 = vpop.f32.mrf.mxu0
    %v4180 = vpop.f32.mrf.mxu0
    %v4181 = vadd.f32 0.0, %v4180
    %v4182 = vpop.f32.mrf.mxu0
    %4183 = vmatprep.mubr.bf16.mxu0 %v3778
    %4184 = vmatmul.mubr.bf16.gmra.mxu0 %v3777
    %v4185 = vpop.f32.mrf.mxu0
    %v4186 = vadd.f32 0.0, %v4185
    %v4187 = vpop.f32.mrf.mxu0
    %v4188 = vpop.f32.mrf.mxu0
    %v4189 = vadd.f32 0.0, %v4188
    %v4190 = vpop.f32.mrf.mxu0
    %4191 = vmatprep.mubr.bf16.mxu0 %v3781
    %4192 = vmatmul.mubr.bf16.gmra.mxu0 %v3780
    %v4193 = vpop.f32.mrf.mxu0
    %v4194 = vadd.f32 0.0, %v4193
    %v4195 = vpop.f32.mrf.mxu0
    %v4196 = vpop.f32.mrf.mxu0
    %v4197 = vadd.f32 0.0, %v4196
    %v4198 = vpop.f32.mrf.mxu0
    %4199 = vmatprep.mubr.bf16.mxu0 %v3784
    %4200 = vmatmul.mubr.bf16.gmra.mxu0 %v3783
    %v4201 = vpop.f32.mrf.mxu0
    %v4202 = vadd.f32 0.0, %v4201
    %v4203 = vpop.f32.mrf.mxu0
    %v4204 = vpop.f32.mrf.mxu0
    %v4205 = vadd.f32 0.0, %v4204
    %v4206 = vpop.f32.mrf.mxu0
    %4207 = vmatprep.mubr.bf16.mxu0 %v3787
    %4208 = vmatmul.mubr.bf16.gmra.mxu0 %v3786
    %v4209 = vpop.f32.mrf.mxu0
    %v4210 = vadd.f32 0.0, %v4209
    %v4211 = vpop.f32.mrf.mxu0
    %v4212 = vpop.f32.mrf.mxu0
    %v4213 = vadd.f32 0.0, %v4212
    %v4214 = vpop.f32.mrf.mxu0
    %4215 = vmatprep.mubr.bf16.mxu0 %v3790
    %4216 = vmatmul.mubr.bf16.gmra.mxu0 %v3789
    %v4217 = vpop.f32.mrf.mxu0
    %v4218 = vadd.f32 0.0, %v4217
    %v4219 = vpop.f32.mrf.mxu0
    %v4220 = vpop.f32.mrf.mxu0
    %v4221 = vadd.f32 0.0, %v4220
    %v4222 = vpop.f32.mrf.mxu0
    %4223 = vmatprep.mubr.bf16.mxu0 %v3793
    %4224 = vmatmul.mubr.bf16.gmra.mxu0 %v3792
    %v4225 = vpop.f32.mrf.mxu0
    %v4226 = vadd.f32 0.0, %v4225
    %v4227 = vpop.f32.mrf.mxu0
    %v4228 = vpop.f32.mrf.mxu0
    %v4229 = vadd.f32 0.0, %v4228
    %v4230 = vpop.f32.mrf.mxu0
    %4231 = vmatprep.mubr.bf16.mxu0 %v3796
    %4232 = vmatmul.mubr.bf16.gmra.mxu0 %v3795
    %v4233 = vpop.f32.mrf.mxu0
    %v4234 = vadd.f32 0.0, %v4233
    %v4235 = vpop.f32.mrf.mxu0
    %v4236 = vpop.f32.mrf.mxu0
    %v4237 = vadd.f32 0.0, %v4236
    %v4238 = vpop.f32.mrf.mxu0
    %4239 = vmatprep.mubr.bf16.mxu0 %v3799
    %4240 = vmatmul.mubr.bf16.gmra.mxu0 %v3798
    %v4241 = vpop.f32.mrf.mxu0
    %v4242 = vadd.f32 0.0, %v4241
    %v4243 = vpop.f32.mrf.mxu0
    %v4244 = vpop.f32.mrf.mxu0
    %v4245 = vadd.f32 0.0, %v4244
    %v4246 = vpop.f32.mrf.mxu0
    %4247 = vmatprep.mubr.bf16.mxu0 %v3802
    %4248 = vmatmul.mubr.bf16.gmra.mxu0 %v3801
    %v4249 = vpop.f32.mrf.mxu0
    %v4250 = vadd.f32 0.0, %v4249
    %v4251 = vpop.f32.mrf.mxu0
    %v4252 = vpop.f32.mrf.mxu0
    %v4253 = vadd.f32 0.0, %v4252
    %v4254 = vpop.f32.mrf.mxu0
    %4255 = vmatprep.mubr.bf16.mxu0 %v3805
    %4256 = vmatmul.mubr.bf16.gmra.mxu0 %v3804
    %v4257 = vpop.f32.mrf.mxu0
    %v4258 = vadd.f32 0.0, %v4257
    %v4259 = vpop.f32.mrf.mxu0
    %v4260 = vpop.f32.mrf.mxu0
    %v4261 = vadd.f32 0.0, %v4260
    %v4262 = vpop.f32.mrf.mxu0
    %4263 = vmatprep.mubr.bf16.mxu0 %v3808
    %4264 = vmatmul.mubr.bf16.gmra.mxu0 %v3807
    %v4265 = vpop.f32.mrf.mxu0
    %v4266 = vadd.f32 0.0, %v4265
    %v4267 = vpop.f32.mrf.mxu0
    %v4268 = vpop.f32.mrf.mxu0
    %v4269 = vadd.f32 0.0, %v4268
    %v4270 = vpop.f32.mrf.mxu0
    %4271 = vmatprep.mubr.bf16.mxu0 %v3811
    %4272 = vmatmul.mubr.bf16.gmra.mxu0 %v3810
    %v4273 = vpop.f32.mrf.mxu0
    %v4274 = vadd.f32 0.0, %v4273
    %v4275 = vpop.f32.mrf.mxu0
    %v4276 = vpop.f32.mrf.mxu0
    %v4277 = vadd.f32 0.0, %v4276
    %v4278 = vpop.f32.mrf.mxu0
    %4279 = vmatprep.mubr.bf16.mxu0 %v3814
    %4280 = vmatmul.mubr.bf16.gmra.mxu0 %v3813
    %v4281 = vpop.f32.mrf.mxu0
    %v4282 = vadd.f32 0.0, %v4281
    %v4283 = vpop.f32.mrf.mxu0
    %v4284 = vpop.f32.mrf.mxu0
    %v4285 = vadd.f32 0.0, %v4284
    %v4286 = vpop.f32.mrf.mxu0
    %4287 = vmatprep.mubr.bf16.mxu0 %v3817
    %4288 = vmatmul.mubr.bf16.gmra.mxu0 %v3816
    %v4289 = vpop.f32.mrf.mxu0
    %v4290 = vadd.f32 0.0, %v4289
    %v4291 = vpop.f32.mrf.mxu0
    %v4292 = vpop.f32.mrf.mxu0
    %v4293 = vadd.f32 0.0, %v4292
    %v4294 = vpop.f32.mrf.mxu0
    %4295 = vmatprep.mubr.bf16.mxu0 %v3820
    %4296 = vmatmul.mubr.bf16.gmra.mxu0 %v3819
    %v4297 = vpop.f32.mrf.mxu0
    %v4298 = vadd.f32 0.0, %v4297
    %v4299 = vpop.f32.mrf.mxu0
    %v4300 = vpop.f32.mrf.mxu0
    %v4301 = vadd.f32 0.0, %v4300
    %v4302 = vpop.f32.mrf.mxu0
    %4303 = vdwg.mxu0
    %4304 = vmatprep.subr.bf16.mxu0 0
    %4305 = vmatpush1.bf16.msra.mxu0 %v3990
    %4306 = vmatprep.subr.bf16.mxu0 0
    %4307 = vmatpush1.bf16.msra.mxu0 %v3989
    %4308 = vmatprep.subr.bf16.mxu0 0
    %4309 = vmatpush1.bf16.msra.mxu0 %v3988
    %4310 = vmatprep.subr.bf16.mxu0 0
    %4311 = vmatpush1.bf16.msra.mxu0 %v3987
    %4312 = vmatprep.subr.bf16.mxu0 0
    %4313 = vmatpush1.bf16.msra.mxu0 %v3986
    %4314 = vmatprep.subr.bf16.mxu0 0
    %4315 = vmatpush1.bf16.msra.mxu0 %v3985
    %4316 = vmatprep.subr.bf16.mxu0 0
    %4317 = vmatpush1.bf16.msra.mxu0 %v3984
    %4318 = vmatprep.subr.bf16.mxu0 0
    %4319 = vmatpush1.bf16.msra.mxu0 %v3983
    %4320 = vmatprep.subr.bf16.mxu0 0
    %4321 = vmatpush2.bf16.msra.mxu0 0
    %4322 = vmatprep.subr.bf16.mxu0 0
    %4323 = vmatpush2.bf16.msra.mxu0 0
    %4324 = vmatprep.subr.bf16.mxu0 0
    %4325 = vmatpush2.bf16.msra.mxu0 0
    %4326 = vmatprep.subr.bf16.mxu0 0
    %4327 = vmatpush2.bf16.msra.mxu0 0
    %4328 = vmatprep.subr.bf16.mxu0 0
    %4329 = vmatpush2.bf16.msra.mxu0 0
    %4330 = vmatprep.subr.bf16.mxu0 0
    %4331 = vmatpush2.bf16.msra.mxu0 0
    %4332 = vmatprep.subr.bf16.mxu0 0
    %4333 = vmatpush2.bf16.msra.mxu0 0
    %4334 = vmatprep.subr.bf16.mxu0 0
    %4335 = vmatpush2.bf16.msra.mxu0 0
    %4336 = vmatprep.mubr.bf16.mxu0 0
    %4337 = vmatmul.mubr.bf16.gmra.mxu0 %v3728
    %v4338 = vpop.f32.mrf.mxu0
    %v4339 = vadd.f32 %v4050, %v4338
    %v4340 = vpop.f32.mrf.mxu0
    %v4341 = vpop.f32.mrf.mxu0
    %v4342 = vadd.f32 %v4053, %v4341
    %v4343 = vpop.f32.mrf.mxu0
    %4344 = vmatprep.mubr.bf16.mxu0 0
    %4345 = vmatmul.mubr.bf16.gmra.mxu0 %v3731
    %v4346 = vpop.f32.mrf.mxu0
    %v4347 = vadd.f32 %v4058, %v4346
    %v4348 = vpop.f32.mrf.mxu0
    %v4349 = vpop.f32.mrf.mxu0
    %v4350 = vadd.f32 %v4061, %v4349
    %v4351 = vpop.f32.mrf.mxu0
    %4352 = vmatprep.mubr.bf16.mxu0 0
    %4353 = vmatmul.mubr.bf16.gmra.mxu0 %v3734
    %v4354 = vpop.f32.mrf.mxu0
    %v4355 = vadd.f32 %v4066, %v4354
    %v4356 = vpop.f32.mrf.mxu0
    %v4357 = vpop.f32.mrf.mxu0
    %v4358 = vadd.f32 %v4069, %v4357
    %v4359 = vpop.f32.mrf.mxu0
    %4360 = vmatprep.mubr.bf16.mxu0 0
    %4361 = vmatmul.mubr.bf16.gmra.mxu0 %v3737
    %v4362 = vpop.f32.mrf.mxu0
    %v4363 = vadd.f32 %v4074, %v4362
    %v4364 = vpop.f32.mrf.mxu0
    %v4365 = vpop.f32.mrf.mxu0
    %v4366 = vadd.f32 %v4077, %v4365
    %v4367 = vpop.f32.mrf.mxu0
    %4368 = vmatprep.mubr.bf16.mxu0 0
    %4369 = vmatmul.mubr.bf16.gmra.mxu0 %v3740
    %v4370 = vpop.f32.mrf.mxu0
    %v4371 = vadd.f32 %v4082, %v4370
    %v4372 = vpop.f32.mrf.mxu0
    %v4373 = vpop.f32.mrf.mxu0
    %v4374 = vadd.f32 %v4085, %v4373
    %v4375 = vpop.f32.mrf.mxu0
    %4376 = vmatprep.mubr.bf16.mxu0 0
    %4377 = vmatmul.mubr.bf16.gmra.mxu0 %v3743
    %v4378 = vpop.f32.mrf.mxu0
    %v4379 = vadd.f32 %v4090, %v4378
    %v4380 = vpop.f32.mrf.mxu0
    %v4381 = vpop.f32.mrf.mxu0
    %v4382 = vadd.f32 %v4093, %v4381
    %v4383 = vpop.f32.mrf.mxu0
    %4384 = vmatprep.mubr.bf16.mxu0 0
    %4385 = vmatmul.mubr.bf16.gmra.mxu0 %v3746
    %v4386 = vpop.f32.mrf.mxu0
    %v4387 = vadd.f32 %v4098, %v4386
    %v4388 = vpop.f32.mrf.mxu0
    %v4389 = vpop.f32.mrf.mxu0
    %v4390 = vadd.f32 %v4101, %v4389
    %v4391 = vpop.f32.mrf.mxu0
    %4392 = vmatprep.mubr.bf16.mxu0 0
    %4393 = vmatmul.mubr.bf16.gmra.mxu0 %v3749
    %v4394 = vpop.f32.mrf.mxu0
    %v4395 = vadd.f32 %v4106, %v4394
    %v4396 = vpop.f32.mrf.mxu0
    %v4397 = vpop.f32.mrf.mxu0
    %v4398 = vadd.f32 %v4109, %v4397
    %v4399 = vpop.f32.mrf.mxu0
    %4400 = vmatprep.mubr.bf16.mxu0 0
    %4401 = vmatmul.mubr.bf16.gmra.mxu0 %v3752
    %v4402 = vpop.f32.mrf.mxu0
    %v4403 = vadd.f32 %v4114, %v4402
    %v4404 = vpop.f32.mrf.mxu0
    %v4405 = vpop.f32.mrf.mxu0
    %v4406 = vadd.f32 %v4117, %v4405
    %v4407 = vpop.f32.mrf.mxu0
    %4408 = vmatprep.mubr.bf16.mxu0 0
    %4409 = vmatmul.mubr.bf16.gmra.mxu0 %v3755
    %v4410 = vpop.f32.mrf.mxu0
    %v4411 = vadd.f32 %v4122, %v4410
    %v4412 = vpop.f32.mrf.mxu0
    %v4413 = vpop.f32.mrf.mxu0
    %v4414 = vadd.f32 %v4125, %v4413
    %v4415 = vpop.f32.mrf.mxu0
    %4416 = vmatprep.mubr.bf16.mxu0 0
    %4417 = vmatmul.mubr.bf16.gmra.mxu0 %v3758
    %v4418 = vpop.f32.mrf.mxu0
    %v4419 = vadd.f32 %v4130, %v4418
    %v4420 = vpop.f32.mrf.mxu0
    %v4421 = vpop.f32.mrf.mxu0
    %v4422 = vadd.f32 %v4133, %v4421
    %v4423 = vpop.f32.mrf.mxu0
    %4424 = vmatprep.mubr.bf16.mxu0 0
    %4425 = vmatmul.mubr.bf16.gmra.mxu0 %v3761
    %v4426 = vpop.f32.mrf.mxu0
    %v4427 = vadd.f32 %v4138, %v4426
    %v4428 = vpop.f32.mrf.mxu0
    %v4429 = vpop.f32.mrf.mxu0
    %v4430 = vadd.f32 %v4141, %v4429
    %v4431 = vpop.f32.mrf.mxu0
    %4432 = vmatprep.mubr.bf16.mxu0 0
    %4433 = vmatmul.mubr.bf16.gmra.mxu0 %v3764
    %v4434 = vpop.f32.mrf.mxu0
    %v4435 = vadd.f32 %v4146, %v4434
    %v4436 = vpop.f32.mrf.mxu0
    %v4437 = vpop.f32.mrf.mxu0
    %v4438 = vadd.f32 %v4149, %v4437
    %v4439 = vpop.f32.mrf.mxu0
    %4440 = vmatprep.mubr.bf16.mxu0 0
    %4441 = vmatmul.mubr.bf16.gmra.mxu0 %v3767
    %v4442 = vpop.f32.mrf.mxu0
    %v4443 = vadd.f32 %v4154, %v4442
    %v4444 = vpop.f32.mrf.mxu0
    %v4445 = vpop.f32.mrf.mxu0
    %v4446 = vadd.f32 %v4157, %v4445
    %v4447 = vpop.f32.mrf.mxu0
    %4448 = vmatprep.mubr.bf16.mxu0 0
    %4449 = vmatmul.mubr.bf16.gmra.mxu0 %v3770
    %v4450 = vpop.f32.mrf.mxu0
    %v4451 = vadd.f32 %v4162, %v4450
    %v4452 = vpop.f32.mrf.mxu0
    %v4453 = vpop.f32.mrf.mxu0
    %v4454 = vadd.f32 %v4165, %v4453
    %v4455 = vpop.f32.mrf.mxu0
    %4456 = vmatprep.mubr.bf16.mxu0 0
    %4457 = vmatmul.mubr.bf16.gmra.mxu0 %v3773
    %v4458 = vpop.f32.mrf.mxu0
    %v4459 = vadd.f32 %v4170, %v4458
    %v4460 = vpop.f32.mrf.mxu0
    %v4461 = vpop.f32.mrf.mxu0
    %v4462 = vadd.f32 %v4173, %v4461
    %v4463 = vpop.f32.mrf.mxu0
    %4464 = vmatprep.mubr.bf16.mxu0 0
    %4465 = vmatmul.mubr.bf16.gmra.mxu0 %v3776
    %v4466 = vpop.f32.mrf.mxu0
    %v4467 = vadd.f32 %v4178, %v4466
    %v4468 = vpop.f32.mrf.mxu0
    %v4469 = vpop.f32.mrf.mxu0
    %v4470 = vadd.f32 %v4181, %v4469
    %v4471 = vpop.f32.mrf.mxu0
    %4472 = vmatprep.mubr.bf16.mxu0 0
    %4473 = vmatmul.mubr.bf16.gmra.mxu0 %v3779
    %v4474 = vpop.f32.mrf.mxu0
    %v4475 = vadd.f32 %v4186, %v4474
    %v4476 = vpop.f32.mrf.mxu0
    %v4477 = vpop.f32.mrf.mxu0
    %v4478 = vadd.f32 %v4189, %v4477
    %v4479 = vpop.f32.mrf.mxu0
    %4480 = vmatprep.mubr.bf16.mxu0 0
    %4481 = vmatmul.mubr.bf16.gmra.mxu0 %v3782
    %v4482 = vpop.f32.mrf.mxu0
    %v4483 = vadd.f32 %v4194, %v4482
    %v4484 = vpop.f32.mrf.mxu0
    %v4485 = vpop.f32.mrf.mxu0
    %v4486 = vadd.f32 %v4197, %v4485
    %v4487 = vpop.f32.mrf.mxu0
    %4488 = vmatprep.mubr.bf16.mxu0 0
    %4489 = vmatmul.mubr.bf16.gmra.mxu0 %v3785
    %v4490 = vpop.f32.mrf.mxu0
    %v4491 = vadd.f32 %v4202, %v4490
    %v4492 = vpop.f32.mrf.mxu0
    %v4493 = vpop.f32.mrf.mxu0
    %v4494 = vadd.f32 %v4205, %v4493
    %v4495 = vpop.f32.mrf.mxu0
    %4496 = vmatprep.mubr.bf16.mxu0 0
    %4497 = vmatmul.mubr.bf16.gmra.mxu0 %v3788
    %v4498 = vpop.f32.mrf.mxu0
    %v4499 = vadd.f32 %v4210, %v4498
    %v4500 = vpop.f32.mrf.mxu0
    %v4501 = vpop.f32.mrf.mxu0
    %v4502 = vadd.f32 %v4213, %v4501
    %v4503 = vpop.f32.mrf.mxu0
    %4504 = vmatprep.mubr.bf16.mxu0 0
    %4505 = vmatmul.mubr.bf16.gmra.mxu0 %v3791
    %v4506 = vpop.f32.mrf.mxu0
    %v4507 = vadd.f32 %v4218, %v4506
    %v4508 = vpop.f32.mrf.mxu0
    %v4509 = vpop.f32.mrf.mxu0
    %v4510 = vadd.f32 %v4221, %v4509
    %v4511 = vpop.f32.mrf.mxu0
    %4512 = vmatprep.mubr.bf16.mxu0 0
    %4513 = vmatmul.mubr.bf16.gmra.mxu0 %v3794
    %v4514 = vpop.f32.mrf.mxu0
    %v4515 = vadd.f32 %v4226, %v4514
    %v4516 = vpop.f32.mrf.mxu0
    %v4517 = vpop.f32.mrf.mxu0
    %v4518 = vadd.f32 %v4229, %v4517
    %v4519 = vpop.f32.mrf.mxu0
    %4520 = vmatprep.mubr.bf16.mxu0 0
    %4521 = vmatmul.mubr.bf16.gmra.mxu0 %v3797
    %v4522 = vpop.f32.mrf.mxu0
    %v4523 = vadd.f32 %v4234, %v4522
    %v4524 = vpop.f32.mrf.mxu0
    %v4525 = vpop.f32.mrf.mxu0
    %v4526 = vadd.f32 %v4237, %v4525
    %v4527 = vpop.f32.mrf.mxu0
    %4528 = vmatprep.mubr.bf16.mxu0 0
    %4529 = vmatmul.mubr.bf16.gmra.mxu0 %v3800
    %v4530 = vpop.f32.mrf.mxu0
    %v4531 = vadd.f32 %v4242, %v4530
    %v4532 = vpop.f32.mrf.mxu0
    %v4533 = vpop.f32.mrf.mxu0
    %v4534 = vadd.f32 %v4245, %v4533
    %v4535 = vpop.f32.mrf.mxu0
    %4536 = vmatprep.mubr.bf16.mxu0 0
    %4537 = vmatmul.mubr.bf16.gmra.mxu0 %v3803
    %v4538 = vpop.f32.mrf.mxu0
    %v4539 = vadd.f32 %v4250, %v4538
    %v4540 = vpop.f32.mrf.mxu0
    %v4541 = vpop.f32.mrf.mxu0
    %v4542 = vadd.f32 %v4253, %v4541
    %v4543 = vpop.f32.mrf.mxu0
    %4544 = vmatprep.mubr.bf16.mxu0 0
    %4545 = vmatmul.mubr.bf16.gmra.mxu0 %v3806
    %v4546 = vpop.f32.mrf.mxu0
    %v4547 = vadd.f32 %v4258, %v4546
    %v4548 = vpop.f32.mrf.mxu0
    %v4549 = vpop.f32.mrf.mxu0
    %v4550 = vadd.f32 %v4261, %v4549
    %v4551 = vpop.f32.mrf.mxu0
    %4552 = vmatprep.mubr.bf16.mxu0 0
    %4553 = vmatmul.mubr.bf16.gmra.mxu0 %v3809
    %v4554 = vpop.f32.mrf.mxu0
    %v4555 = vadd.f32 %v4266, %v4554
    %v4556 = vpop.f32.mrf.mxu0
    %v4557 = vpop.f32.mrf.mxu0
    %v4558 = vadd.f32 %v4269, %v4557
    %v4559 = vpop.f32.mrf.mxu0
    %4560 = vmatprep.mubr.bf16.mxu0 0
    %4561 = vmatmul.mubr.bf16.gmra.mxu0 %v3812
    %v4562 = vpop.f32.mrf.mxu0
    %v4563 = vadd.f32 %v4274, %v4562
    %v4564 = vpop.f32.mrf.mxu0
    %v4565 = vpop.f32.mrf.mxu0
    %v4566 = vadd.f32 %v4277, %v4565
    %v4567 = vpop.f32.mrf.mxu0
    %4568 = vmatprep.mubr.bf16.mxu0 0
    %4569 = vmatmul.mubr.bf16.gmra.mxu0 %v3815
    %v4570 = vpop.f32.mrf.mxu0
    %v4571 = vadd.f32 %v4282, %v4570
    %v4572 = vpop.f32.mrf.mxu0
    %v4573 = vpop.f32.mrf.mxu0
    %v4574 = vadd.f32 %v4285, %v4573
    %v4575 = vpop.f32.mrf.mxu0
    %4576 = vmatprep.mubr.bf16.mxu0 0
    %4577 = vmatmul.mubr.bf16.gmra.mxu0 %v3818
    %v4578 = vpop.f32.mrf.mxu0
    %v4579 = vadd.f32 %v4290, %v4578
    %v4580 = vpop.f32.mrf.mxu0
    %v4581 = vpop.f32.mrf.mxu0
    %v4582 = vadd.f32 %v4293, %v4581
    %v4583 = vpop.f32.mrf.mxu0
    %4584 = vmatprep.mubr.bf16.mxu0 0
    %4585 = vmatmul.mubr.bf16.gmra.mxu0 %v3821
    %v4586 = vpop.f32.mrf.mxu0
    %v4587 = vadd.f32 %v4298, %v4586
    %v4588 = vpop.f32.mrf.mxu0
    %v4589 = vpop.f32.mrf.mxu0
    %v4590 = vadd.f32 %v4301, %v4589
    %v4591 = vpop.f32.mrf.mxu0
    %4592 = vdwg.mxu0
    %v4593 = vadd.f32 %v2831, %v4339
    %v4594 = vadd.f32 %v2834, %v4342
    %v4595 = vadd.f32 %v2839, %v4347
    %v4596 = vadd.f32 %v2842, %v4350
    %v4597 = vadd.f32 %v2847, %v4355
    %v4598 = vadd.f32 %v2850, %v4358
    %v4599 = vadd.f32 %v2855, %v4363
    %v4600 = vadd.f32 %v2858, %v4366
    %v4601 = vadd.f32 %v2863, %v4371
    %v4602 = vadd.f32 %v2866, %v4374
    %v4603 = vadd.f32 %v2871, %v4379
    %v4604 = vadd.f32 %v2874, %v4382
    %v4605 = vadd.f32 %v2879, %v4387
    %v4606 = vadd.f32 %v2882, %v4390
    %v4607 = vadd.f32 %v2887, %v4395
    %v4608 = vadd.f32 %v2890, %v4398
    %v4609 = vadd.f32 %v2895, %v4403
    %v4610 = vadd.f32 %v2898, %v4406
    %v4611 = vadd.f32 %v2903, %v4411
    %v4612 = vadd.f32 %v2906, %v4414
    %v4613 = vadd.f32 %v2911, %v4419
    %v4614 = vadd.f32 %v2914, %v4422
    %v4615 = vadd.f32 %v2919, %v4427
    %v4616 = vadd.f32 %v2922, %v4430
    %v4617 = vadd.f32 %v2927, %v4435
    %v4618 = vadd.f32 %v2930, %v4438
    %v4619 = vadd.f32 %v2935, %v4443
    %v4620 = vadd.f32 %v2938, %v4446
    %v4621 = vadd.f32 %v2943, %v4451
    %v4622 = vadd.f32 %v2946, %v4454
    %v4623 = vadd.f32 %v2951, %v4459
    %v4624 = vadd.f32 %v2954, %v4462
    %v4625 = vadd.f32 %v2959, %v4467
    %v4626 = vadd.f32 %v2962, %v4470
    %v4627 = vadd.f32 %v2967, %v4475
    %v4628 = vadd.f32 %v2970, %v4478
    %v4629 = vadd.f32 %v2975, %v4483
    %v4630 = vadd.f32 %v2978, %v4486
    %v4631 = vadd.f32 %v2983, %v4491
    %v4632 = vadd.f32 %v2986, %v4494
    %v4633 = vadd.f32 %v2991, %v4499
    %v4634 = vadd.f32 %v2994, %v4502
    %v4635 = vadd.f32 %v2999, %v4507
    %v4636 = vadd.f32 %v3002, %v4510
    %v4637 = vadd.f32 %v3007, %v4515
    %v4638 = vadd.f32 %v3010, %v4518
    %v4639 = vadd.f32 %v3015, %v4523
    %v4640 = vadd.f32 %v3018, %v4526
    %v4641 = vadd.f32 %v3023, %v4531
    %v4642 = vadd.f32 %v3026, %v4534
    %v4643 = vadd.f32 %v3031, %v4539
    %v4644 = vadd.f32 %v3034, %v4542
    %v4645 = vadd.f32 %v3039, %v4547
    %v4646 = vadd.f32 %v3042, %v4550
    %v4647 = vadd.f32 %v3047, %v4555
    %v4648 = vadd.f32 %v3050, %v4558
    %v4649 = vadd.f32 %v3055, %v4563
    %v4650 = vadd.f32 %v3058, %v4566
    %v4651 = vadd.f32 %v3063, %v4571
    %v4652 = vadd.f32 %v3066, %v4574
    %v4653 = vadd.f32 %v3071, %v4579
    %v4654 = vadd.f32 %v3074, %v4582
    %v4655 = vadd.f32 %v3079, %v4587
    %v4656 = vadd.f32 %v3082, %v4590
    %v4657 = vadd.f32 %v4593, %v4594
    %v4658 = vadd.f32 %v4657, %v4595
    %v4659 = vadd.f32 %v4658, %v4596
    %v4660 = vadd.f32 %v4659, %v4597
    %v4661 = vadd.f32 %v4660, %v4598
    %v4662 = vadd.f32 %v4661, %v4599
    %v4663 = vadd.f32 %v4662, %v4600
    %v4664 = vadd.f32 %v4663, %v4601
    %v4665 = vadd.f32 %v4664, %v4602
    %v4666 = vadd.f32 %v4665, %v4603
    %v4667 = vadd.f32 %v4666, %v4604
    %v4668 = vadd.f32 %v4667, %v4605
    %v4669 = vadd.f32 %v4668, %v4606
    %v4670 = vadd.f32 %v4669, %v4607
    %v4671 = vadd.f32 %v4670, %v4608
    %v4672 = vadd.f32 %v4671, %v4609
    %v4673 = vadd.f32 %v4672, %v4610
    %v4674 = vadd.f32 %v4673, %v4611
    %v4675 = vadd.f32 %v4674, %v4612
    %v4676 = vadd.f32 %v4675, %v4613
    %v4677 = vadd.f32 %v4676, %v4614
    %v4678 = vadd.f32 %v4677, %v4615
    %v4679 = vadd.f32 %v4678, %v4616
    %v4680 = vadd.f32 %v4679, %v4617
    %v4681 = vadd.f32 %v4680, %v4618
    %v4682 = vadd.f32 %v4681, %v4619
    %v4683 = vadd.f32 %v4682, %v4620
    %v4684 = vadd.f32 %v4683, %v4621
    %v4685 = vadd.f32 %v4684, %v4622
    %v4686 = vadd.f32 %v4685, %v4623
    %v4687 = vadd.f32 %v4686, %v4624
    %v4688 = vadd.f32 %v4687, %v4625
    %v4689 = vadd.f32 %v4688, %v4626
    %v4690 = vadd.f32 %v4689, %v4627
    %v4691 = vadd.f32 %v4690, %v4628
    %v4692 = vadd.f32 %v4691, %v4629
    %v4693 = vadd.f32 %v4692, %v4630
    %v4694 = vadd.f32 %v4693, %v4631
    %v4695 = vadd.f32 %v4694, %v4632
    %v4696 = vadd.f32 %v4695, %v4633
    %v4697 = vadd.f32 %v4696, %v4634
    %v4698 = vadd.f32 %v4697, %v4635
    %v4699 = vadd.f32 %v4698, %v4636
    %v4700 = vadd.f32 %v4699, %v4637
    %v4701 = vadd.f32 %v4700, %v4638
    %v4702 = vadd.f32 %v4701, %v4639
    %v4703 = vadd.f32 %v4702, %v4640
    %v4704 = vadd.f32 %v4703, %v4641
    %v4705 = vadd.f32 %v4704, %v4642
    %v4706 = vadd.f32 %v4705, %v4643
    %v4707 = vadd.f32 %v4706, %v4644
    %v4708 = vadd.f32 %v4707, %v4645
    %v4709 = vadd.f32 %v4708, %v4646
    %v4710 = vadd.f32 %v4709, %v4647
    %v4711 = vadd.f32 %v4710, %v4648
    %v4712 = vadd.f32 %v4711, %v4649
    %v4713 = vadd.f32 %v4712, %v4650
    %v4714 = vadd.f32 %v4713, %v4651
    %v4715 = vadd.f32 %v4714, %v4652
    %v4716 = vadd.f32 %v4715, %v4653
    %v4717 = vadd.f32 %v4716, %v4654
    %v4718 = vadd.f32 %v4717, %v4655
    %v4719 = vadd.f32 %v4718, %v4656
    %v4720 = vrot.slane %v4719, 4
    %v4721 = vadd.f32 %v4719, %v4720
    %v4722 = vrot.slane %v4721, 2
    %v4723 = vadd.f32 %v4721, %v4722
    %v4724 = vrot.slane %v4723, 1
    %v4725 = vadd.f32 %v4723, %v4724
    %v4726 = vmul.f32 %v4593, %v4593
    %v4727 = vmul.f32 %v4594, %v4594
    %v4728 = vmul.f32 %v4595, %v4595
    %v4729 = vmul.f32 %v4596, %v4596
    %v4730 = vmul.f32 %v4597, %v4597
    %v4731 = vmul.f32 %v4598, %v4598
    %v4732 = vmul.f32 %v4599, %v4599
    %v4733 = vmul.f32 %v4600, %v4600
    %v4734 = vmul.f32 %v4601, %v4601
    %v4735 = vmul.f32 %v4602, %v4602
    %v4736 = vmul.f32 %v4603, %v4603
    %v4737 = vmul.f32 %v4604, %v4604
    %v4738 = vmul.f32 %v4605, %v4605
    %v4739 = vmul.f32 %v4606, %v4606
    %v4740 = vmul.f32 %v4607, %v4607
    %v4741 = vmul.f32 %v4608, %v4608
    %v4742 = vmul.f32 %v4609, %v4609
    %v4743 = vmul.f32 %v4610, %v4610
    %v4744 = vmul.f32 %v4611, %v4611
    %v4745 = vmul.f32 %v4612, %v4612
    %v4746 = vmul.f32 %v4613, %v4613
    %v4747 = vmul.f32 %v4614, %v4614
    %v4748 = vmul.f32 %v4615, %v4615
    %v4749 = vmul.f32 %v4616, %v4616
    %v4750 = vmul.f32 %v4617, %v4617
    %v4751 = vmul.f32 %v4618, %v4618
    %v4752 = vmul.f32 %v4619, %v4619
    %v4753 = vmul.f32 %v4620, %v4620
    %v4754 = vmul.f32 %v4621, %v4621
    %v4755 = vmul.f32 %v4622, %v4622
    %v4756 = vmul.f32 %v4623, %v4623
    %v4757 = vmul.f32 %v4624, %v4624
    %v4758 = vmul.f32 %v4625, %v4625
    %v4759 = vmul.f32 %v4626, %v4626
    %v4760 = vmul.f32 %v4627, %v4627
    %v4761 = vmul.f32 %v4628, %v4628
    %v4762 = vmul.f32 %v4629, %v4629
    %v4763 = vmul.f32 %v4630, %v4630
    %v4764 = vmul.f32 %v4631, %v4631
    %v4765 = vmul.f32 %v4632, %v4632
    %v4766 = vmul.f32 %v4633, %v4633
    %v4767 = vmul.f32 %v4634, %v4634
    %v4768 = vmul.f32 %v4635, %v4635
    %v4769 = vmul.f32 %v4636, %v4636
    %v4770 = vmul.f32 %v4637, %v4637
    %v4771 = vmul.f32 %v4638, %v4638
    %v4772 = vmul.f32 %v4639, %v4639
    %v4773 = vmul.f32 %v4640, %v4640
    %v4774 = vmul.f32 %v4641, %v4641
    %v4775 = vmul.f32 %v4642, %v4642
    %v4776 = vmul.f32 %v4643, %v4643
    %v4777 = vmul.f32 %v4644, %v4644
    %v4778 = vmul.f32 %v4645, %v4645
    %v4779 = vmul.f32 %v4646, %v4646
    %v4780 = vmul.f32 %v4647, %v4647
    %v4781 = vmul.f32 %v4648, %v4648
    %v4782 = vmul.f32 %v4649, %v4649
    %v4783 = vmul.f32 %v4650, %v4650
    %v4784 = vmul.f32 %v4651, %v4651
    %v4785 = vmul.f32 %v4652, %v4652
    %v4786 = vmul.f32 %v4653, %v4653
    %v4787 = vmul.f32 %v4654, %v4654
    %v4788 = vmul.f32 %v4655, %v4655
    %v4789 = vmul.f32 %v4656, %v4656
    %v4790 = vadd.f32 %v4726, %v4727
    %v4791 = vadd.f32 %v4790, %v4728
    %v4792 = vadd.f32 %v4791, %v4729
    %v4793 = vadd.f32 %v4792, %v4730
    %v4794 = vadd.f32 %v4793, %v4731
    %v4795 = vadd.f32 %v4794, %v4732
    %v4796 = vadd.f32 %v4795, %v4733
    %v4797 = vadd.f32 %v4796, %v4734
    %v4798 = vadd.f32 %v4797, %v4735
    %v4799 = vadd.f32 %v4798, %v4736
    %v4800 = vadd.f32 %v4799, %v4737
    %v4801 = vadd.f32 %v4800, %v4738
    %v4802 = vadd.f32 %v4801, %v4739
    %v4803 = vadd.f32 %v4802, %v4740
    %v4804 = vadd.f32 %v4803, %v4741
    %v4805 = vadd.f32 %v4804, %v4742
    %v4806 = vadd.f32 %v4805, %v4743
    %v4807 = vadd.f32 %v4806, %v4744
    %v4808 = vadd.f32 %v4807, %v4745
    %v4809 = vadd.f32 %v4808, %v4746
    %v4810 = vadd.f32 %v4809, %v4747
    %v4811 = vadd.f32 %v4810, %v4748
    %v4812 = vadd.f32 %v4811, %v4749
    %v4813 = vadd.f32 %v4812, %v4750
    %v4814 = vadd.f32 %v4813, %v4751
    %v4815 = vadd.f32 %v4814, %v4752
    %v4816 = vadd.f32 %v4815, %v4753
    %v4817 = vadd.f32 %v4816, %v4754
    %v4818 = vadd.f32 %v4817, %v4755
    %v4819 = vadd.f32 %v4818, %v4756
    %v4820 = vadd.f32 %v4819, %v4757
    %v4821 = vadd.f32 %v4820, %v4758
    %v4822 = vadd.f32 %v4821, %v4759
    %v4823 = vadd.f32 %v4822, %v4760
    %v4824 = vadd.f32 %v4823, %v4761
    %v4825 = vadd.f32 %v4824, %v4762
    %v4826 = vadd.f32 %v4825, %v4763
    %v4827 = vadd.f32 %v4826, %v4764
    %v4828 = vadd.f32 %v4827, %v4765
    %v4829 = vadd.f32 %v4828, %v4766
    %v4830 = vadd.f32 %v4829, %v4767
    %v4831 = vadd.f32 %v4830, %v4768
    %v4832 = vadd.f32 %v4831, %v4769
    %v4833 = vadd.f32 %v4832, %v4770
    %v4834 = vadd.f32 %v4833, %v4771
    %v4835 = vadd.f32 %v4834, %v4772
    %v4836 = vadd.f32 %v4835, %v4773
    %v4837 = vadd.f32 %v4836, %v4774
    %v4838 = vadd.f32 %v4837, %v4775
    %v4839 = vadd.f32 %v4838, %v4776
    %v4840 = vadd.f32 %v4839, %v4777
    %v4841 = vadd.f32 %v4840, %v4778
    %v4842 = vadd.f32 %v4841, %v4779
    %v4843 = vadd.f32 %v4842, %v4780
    %v4844 = vadd.f32 %v4843, %v4781
    %v4845 = vadd.f32 %v4844, %v4782
    %v4846 = vadd.f32 %v4845, %v4783
    %v4847 = vadd.f32 %v4846, %v4784
    %v4848 = vadd.f32 %v4847, %v4785
    %v4849 = vadd.f32 %v4848, %v4786
    %v4850 = vadd.f32 %v4849, %v4787
    %v4851 = vadd.f32 %v4850, %v4788
    %v4852 = vadd.f32 %v4851, %v4789
    %v4853 = vrot.slane %v4852, 4
    %v4854 = vadd.f32 %v4852, %v4853
    %v4855 = vrot.slane %v4854, 2
    %v4856 = vadd.f32 %v4854, %v4855
    %v4857 = vrot.slane %v4856, 1
    %v4858 = vadd.f32 %v4856, %v4857
    %v4859 = vmul.f32 %v4725, 0.001953125
    %v4860 = vmul.f32 %v4858, 0.001953125
    %v4861 = vmul.f32 %v4859, %v4859
    %v4862 = vsub.f32 %v4860, %v4861
    %v4863 = vld [vmem:[%s2] sm:$0x1]
    %v4864 = vadd.f32 %v4862, 1e-05
    %v4865 = vrsqrt.pop %v4864
    %v4866 = vmul.f32 %v4863, %v4865
    %v4867 = vld [vmem:[%s3] sm:$0x1]
    %v4868 = vmul.f32 %v4859, %v4866
    %v4869 = vsub.f32 %v4867, %v4868
    %v4871 = vlaneseq
    %v4872 = vshrl.u32 %v4871, 7
    %v4873 = vsub.s32 0, %v4872
    %v4874 = vrot.slane %v4866, %v4873
    %v4876 = vmul.f32 %v4593, %v4874
    %v4877 = vmul.f32 %v4594, %v4874
    %v4878 = vmul.f32 %v4595, %v4874
    %v4879 = vmul.f32 %v4596, %v4874
    %v4880 = vmul.f32 %v4597, %v4874
    %v4881 = vmul.f32 %v4598, %v4874
    %v4882 = vmul.f32 %v4599, %v4874
    %v4883 = vmul.f32 %v4600, %v4874
    %v4884 = vmul.f32 %v4601, %v4874
    %v4885 = vmul.f32 %v4602, %v4874
    %v4886 = vmul.f32 %v4603, %v4874
    %v4887 = vmul.f32 %v4604, %v4874
    %v4888 = vmul.f32 %v4605, %v4874
    %v4889 = vmul.f32 %v4606, %v4874
    %v4890 = vmul.f32 %v4607, %v4874
    %v4891 = vmul.f32 %v4608, %v4874
    %v4892 = vmul.f32 %v4609, %v4874
    %v4893 = vmul.f32 %v4610, %v4874
    %v4894 = vmul.f32 %v4611, %v4874
    %v4895 = vmul.f32 %v4612, %v4874
    %v4896 = vmul.f32 %v4613, %v4874
    %v4897 = vmul.f32 %v4614, %v4874
    %v4898 = vmul.f32 %v4615, %v4874
    %v4899 = vmul.f32 %v4616, %v4874
    %v4900 = vmul.f32 %v4617, %v4874
    %v4901 = vmul.f32 %v4618, %v4874
    %v4902 = vmul.f32 %v4619, %v4874
    %v4903 = vmul.f32 %v4620, %v4874
    %v4904 = vmul.f32 %v4621, %v4874
    %v4905 = vmul.f32 %v4622, %v4874
    %v4906 = vmul.f32 %v4623, %v4874
    %v4907 = vmul.f32 %v4624, %v4874
    %v4908 = vmul.f32 %v4625, %v4874
    %v4909 = vmul.f32 %v4626, %v4874
    %v4910 = vmul.f32 %v4627, %v4874
    %v4911 = vmul.f32 %v4628, %v4874
    %v4912 = vmul.f32 %v4629, %v4874
    %v4913 = vmul.f32 %v4630, %v4874
    %v4914 = vmul.f32 %v4631, %v4874
    %v4915 = vmul.f32 %v4632, %v4874
    %v4916 = vmul.f32 %v4633, %v4874
    %v4917 = vmul.f32 %v4634, %v4874
    %v4918 = vmul.f32 %v4635, %v4874
    %v4919 = vmul.f32 %v4636, %v4874
    %v4920 = vmul.f32 %v4637, %v4874
    %v4921 = vmul.f32 %v4638, %v4874
    %v4922 = vmul.f32 %v4639, %v4874
    %v4923 = vmul.f32 %v4640, %v4874
    %v4924 = vmul.f32 %v4641, %v4874
    %v4925 = vmul.f32 %v4642, %v4874
    %v4926 = vmul.f32 %v4643, %v4874
    %v4927 = vmul.f32 %v4644, %v4874
    %v4928 = vmul.f32 %v4645, %v4874
    %v4929 = vmul.f32 %v4646, %v4874
    %v4930 = vmul.f32 %v4647, %v4874
    %v4931 = vmul.f32 %v4648, %v4874
    %v4932 = vmul.f32 %v4649, %v4874
    %v4933 = vmul.f32 %v4650, %v4874
    %v4934 = vmul.f32 %v4651, %v4874
    %v4935 = vmul.f32 %v4652, %v4874
    %v4936 = vmul.f32 %v4653, %v4874
    %v4937 = vmul.f32 %v4654, %v4874
    %v4938 = vmul.f32 %v4655, %v4874
    %v4939 = vmul.f32 %v4656, %v4874
    %v4941 = vlaneseq
    %v4942 = vshrl.u32 %v4941, 7
    %v4943 = vsub.s32 0, %v4942
    %v4944 = vrot.slane %v4869, %v4943
    %v4946 = vadd.f32 %v4876, %v4944
    %v4947 = vadd.f32 %v4877, %v4944
    %v4948 = vadd.f32 %v4878, %v4944
    %v4949 = vadd.f32 %v4879, %v4944
    %v4950 = vadd.f32 %v4880, %v4944
    %v4951 = vadd.f32 %v4881, %v4944
    %v4952 = vadd.f32 %v4882, %v4944
    %v4953 = vadd.f32 %v4883, %v4944
    %v4954 = vadd.f32 %v4884, %v4944
    %v4955 = vadd.f32 %v4885, %v4944
    %v4956 = vadd.f32 %v4886, %v4944
    %v4957 = vadd.f32 %v4887, %v4944
    %v4958 = vadd.f32 %v4888, %v4944
    %v4959 = vadd.f32 %v4889, %v4944
    %v4960 = vadd.f32 %v4890, %v4944
    %v4961 = vadd.f32 %v4891, %v4944
    %v4962 = vadd.f32 %v4892, %v4944
    %v4963 = vadd.f32 %v4893, %v4944
    %v4964 = vadd.f32 %v4894, %v4944
    %v4965 = vadd.f32 %v4895, %v4944
    %v4966 = vadd.f32 %v4896, %v4944
    %v4967 = vadd.f32 %v4897, %v4944
    %v4968 = vadd.f32 %v4898, %v4944
    %v4969 = vadd.f32 %v4899, %v4944
    %v4970 = vadd.f32 %v4900, %v4944
    %v4971 = vadd.f32 %v4901, %v4944
    %v4972 = vadd.f32 %v4902, %v4944
    %v4973 = vadd.f32 %v4903, %v4944
    %v4974 = vadd.f32 %v4904, %v4944
    %v4975 = vadd.f32 %v4905, %v4944
    %v4976 = vadd.f32 %v4906, %v4944
    %v4977 = vadd.f32 %v4907, %v4944
    %v4978 = vadd.f32 %v4908, %v4944
    %v4979 = vadd.f32 %v4909, %v4944
    %v4980 = vadd.f32 %v4910, %v4944
    %v4981 = vadd.f32 %v4911, %v4944
    %v4982 = vadd.f32 %v4912, %v4944
    %v4983 = vadd.f32 %v4913, %v4944
    %v4984 = vadd.f32 %v4914, %v4944
    %v4985 = vadd.f32 %v4915, %v4944
    %v4986 = vadd.f32 %v4916, %v4944
    %v4987 = vadd.f32 %v4917, %v4944
    %v4988 = vadd.f32 %v4918, %v4944
    %v4989 = vadd.f32 %v4919, %v4944
    %v4990 = vadd.f32 %v4920, %v4944
    %v4991 = vadd.f32 %v4921, %v4944
    %v4992 = vadd.f32 %v4922, %v4944
    %v4993 = vadd.f32 %v4923, %v4944
    %v4994 = vadd.f32 %v4924, %v4944
    %v4995 = vadd.f32 %v4925, %v4944
    %v4996 = vadd.f32 %v4926, %v4944
    %v4997 = vadd.f32 %v4927, %v4944
    %v4998 = vadd.f32 %v4928, %v4944
    %v4999 = vadd.f32 %v4929, %v4944
    %v5000 = vadd.f32 %v4930, %v4944
    %v5001 = vadd.f32 %v4931, %v4944
    %v5002 = vadd.f32 %v4932, %v4944
    %v5003 = vadd.f32 %v4933, %v4944
    %v5004 = vadd.f32 %v4934, %v4944
    %v5005 = vadd.f32 %v4935, %v4944
    %v5006 = vadd.f32 %v4936, %v4944
    %v5007 = vadd.f32 %v4937, %v4944
    %v5008 = vadd.f32 %v4938, %v4944
    %v5009 = vadd.f32 %v4939, %v4944
    %vm5010 = vcmp.ge.f32.partialorder %v4946, 0.0
    %vm5011 = vcmp.ge.f32.partialorder %v4947, 0.0
    %vm5012 = vcmp.ge.f32.partialorder %v4948, 0.0
    %vm5013 = vcmp.ge.f32.partialorder %v4949, 0.0
    %vm5014 = vcmp.ge.f32.partialorder %v4950, 0.0
    %vm5015 = vcmp.ge.f32.partialorder %v4951, 0.0
    %vm5016 = vcmp.ge.f32.partialorder %v4952, 0.0
    %vm5017 = vcmp.ge.f32.partialorder %v4953, 0.0
    %vm5018 = vcmp.ge.f32.partialorder %v4954, 0.0
    %vm5019 = vcmp.ge.f32.partialorder %v4955, 0.0
    %vm5020 = vcmp.ge.f32.partialorder %v4956, 0.0
    %vm5021 = vcmp.ge.f32.partialorder %v4957, 0.0
    %vm5022 = vcmp.ge.f32.partialorder %v4958, 0.0
    %vm5023 = vcmp.ge.f32.partialorder %v4959, 0.0
    %vm5024 = vcmp.ge.f32.partialorder %v4960, 0.0
    %vm5025 = vcmp.ge.f32.partialorder %v4961, 0.0
    %vm5026 = vcmp.ge.f32.partialorder %v4962, 0.0
    %vm5027 = vcmp.ge.f32.partialorder %v4963, 0.0
    %vm5028 = vcmp.ge.f32.partialorder %v4964, 0.0
    %vm5029 = vcmp.ge.f32.partialorder %v4965, 0.0
    %vm5030 = vcmp.ge.f32.partialorder %v4966, 0.0
    %vm5031 = vcmp.ge.f32.partialorder %v4967, 0.0
    %vm5032 = vcmp.ge.f32.partialorder %v4968, 0.0
    %vm5033 = vcmp.ge.f32.partialorder %v4969, 0.0
    %vm5034 = vcmp.ge.f32.partialorder %v4970, 0.0
    %vm5035 = vcmp.ge.f32.partialorder %v4971, 0.0
    %vm5036 = vcmp.ge.f32.partialorder %v4972, 0.0
    %vm5037 = vcmp.ge.f32.partialorder %v4973, 0.0
    %vm5038 = vcmp.ge.f32.partialorder %v4974, 0.0
    %vm5039 = vcmp.ge.f32.partialorder %v4975, 0.0
    %vm5040 = vcmp.ge.f32.partialorder %v4976, 0.0
    %vm5041 = vcmp.ge.f32.partialorder %v4977, 0.0
    %vm5042 = vcmp.ge.f32.partialorder %v4978, 0.0
    %vm5043 = vcmp.ge.f32.partialorder %v4979, 0.0
    %vm5044 = vcmp.ge.f32.partialorder %v4980, 0.0
    %vm5045 = vcmp.ge.f32.partialorder %v4981, 0.0
    %vm5046 = vcmp.ge.f32.partialorder %v4982, 0.0
    %vm5047 = vcmp.ge.f32.partialorder %v4983, 0.0
    %vm5048 = vcmp.ge.f32.partialorder %v4984, 0.0
    %vm5049 = vcmp.ge.f32.partialorder %v4985, 0.0
    %vm5050 = vcmp.ge.f32.partialorder %v4986, 0.0
    %vm5051 = vcmp.ge.f32.partialorder %v4987, 0.0
    %vm5052 = vcmp.ge.f32.partialorder %v4988, 0.0
    %vm5053 = vcmp.ge.f32.partialorder %v4989, 0.0
    %vm5054 = vcmp.ge.f32.partialorder %v4990, 0.0
    %vm5055 = vcmp.ge.f32.partialorder %v4991, 0.0
    %vm5056 = vcmp.ge.f32.partialorder %v4992, 0.0
    %vm5057 = vcmp.ge.f32.partialorder %v4993, 0.0
    %vm5058 = vcmp.ge.f32.partialorder %v4994, 0.0
    %vm5059 = vcmp.ge.f32.partialorder %v4995, 0.0
    %vm5060 = vcmp.ge.f32.partialorder %v4996, 0.0
    %vm5061 = vcmp.ge.f32.partialorder %v4997, 0.0
    %vm5062 = vcmp.ge.f32.partialorder %v4998, 0.0
    %vm5063 = vcmp.ge.f32.partialorder %v4999, 0.0
    %vm5064 = vcmp.ge.f32.partialorder %v5000, 0.0
    %vm5065 = vcmp.ge.f32.partialorder %v5001, 0.0
    %vm5066 = vcmp.ge.f32.partialorder %v5002, 0.0
    %vm5067 = vcmp.ge.f32.partialorder %v5003, 0.0
    %vm5068 = vcmp.ge.f32.partialorder %v5004, 0.0
    %vm5069 = vcmp.ge.f32.partialorder %v5005, 0.0
    %vm5070 = vcmp.ge.f32.partialorder %v5006, 0.0
    %vm5071 = vcmp.ge.f32.partialorder %v5007, 0.0
    %vm5072 = vcmp.ge.f32.partialorder %v5008, 0.0
    %vm5073 = vcmp.ge.f32.partialorder %v5009, 0.0
    %v5074 = vmul.f32 %v4946, 0.01
    %v5075 = vmul.f32 %v4947, 0.01
    %v5076 = vmul.f32 %v4948, 0.01
    %v5077 = vmul.f32 %v4949, 0.01
    %v5078 = vmul.f32 %v4950, 0.01
    %v5079 = vmul.f32 %v4951, 0.01
    %v5080 = vmul.f32 %v4952, 0.01
    %v5081 = vmul.f32 %v4953, 0.01
    %v5082 = vmul.f32 %v4954, 0.01
    %v5083 = vmul.f32 %v4955, 0.01
    %v5084 = vmul.f32 %v4956, 0.01
    %v5085 = vmul.f32 %v4957, 0.01
    %v5086 = vmul.f32 %v4958, 0.01
    %v5087 = vmul.f32 %v4959, 0.01
    %v5088 = vmul.f32 %v4960, 0.01
    %v5089 = vmul.f32 %v4961, 0.01
    %v5090 = vmul.f32 %v4962, 0.01
    %v5091 = vmul.f32 %v4963, 0.01
    %v5092 = vmul.f32 %v4964, 0.01
    %v5093 = vmul.f32 %v4965, 0.01
    %v5094 = vmul.f32 %v4966, 0.01
    %v5095 = vmul.f32 %v4967, 0.01
    %v5096 = vmul.f32 %v4968, 0.01
    %v5097 = vmul.f32 %v4969, 0.01
    %v5098 = vmul.f32 %v4970, 0.01
    %v5099 = vmul.f32 %v4971, 0.01
    %v5100 = vmul.f32 %v4972, 0.01
    %v5101 = vmul.f32 %v4973, 0.01
    %v5102 = vmul.f32 %v4974, 0.01
    %v5103 = vmul.f32 %v4975, 0.01
    %v5104 = vmul.f32 %v4976, 0.01
    %v5105 = vmul.f32 %v4977, 0.01
    %v5106 = vmul.f32 %v4978, 0.01
    %v5107 = vmul.f32 %v4979, 0.01
    %v5108 = vmul.f32 %v4980, 0.01
    %v5109 = vmul.f32 %v4981, 0.01
    %v5110 = vmul.f32 %v4982, 0.01
    %v5111 = vmul.f32 %v4983, 0.01
    %v5112 = vmul.f32 %v4984, 0.01
    %v5113 = vmul.f32 %v4985, 0.01
    %v5114 = vmul.f32 %v4986, 0.01
    %v5115 = vmul.f32 %v4987, 0.01
    %v5116 = vmul.f32 %v4988, 0.01
    %v5117 = vmul.f32 %v4989, 0.01
    %v5118 = vmul.f32 %v4990, 0.01
    %v5119 = vmul.f32 %v4991, 0.01
    %v5120 = vmul.f32 %v4992, 0.01
    %v5121 = vmul.f32 %v4993, 0.01
    %v5122 = vmul.f32 %v4994, 0.01
    %v5123 = vmul.f32 %v4995, 0.01
    %v5124 = vmul.f32 %v4996, 0.01
    %v5125 = vmul.f32 %v4997, 0.01
    %v5126 = vmul.f32 %v4998, 0.01
    %v5127 = vmul.f32 %v4999, 0.01
    %v5128 = vmul.f32 %v5000, 0.01
    %v5129 = vmul.f32 %v5001, 0.01
    %v5130 = vmul.f32 %v5002, 0.01
    %v5131 = vmul.f32 %v5003, 0.01
    %v5132 = vmul.f32 %v5004, 0.01
    %v5133 = vmul.f32 %v5005, 0.01
    %v5134 = vmul.f32 %v5006, 0.01
    %v5135 = vmul.f32 %v5007, 0.01
    %v5136 = vmul.f32 %v5008, 0.01
    %v5137 = vmul.f32 %v5009, 0.01
    %v5138 = vsel %vm5010, %v4946, %v5074
    %v5139 = vsel %vm5011, %v4947, %v5075
    %v5140 = vsel %vm5012, %v4948, %v5076
    %v5141 = vsel %vm5013, %v4949, %v5077
    %v5142 = vsel %vm5014, %v4950, %v5078
    %v5143 = vsel %vm5015, %v4951, %v5079
    %v5144 = vsel %vm5016, %v4952, %v5080
    %v5145 = vsel %vm5017, %v4953, %v5081
    %v5146 = vsel %vm5018, %v4954, %v5082
    %v5147 = vsel %vm5019, %v4955, %v5083
    %v5148 = vsel %vm5020, %v4956, %v5084
    %v5149 = vsel %vm5021, %v4957, %v5085
    %v5150 = vsel %vm5022, %v4958, %v5086
    %v5151 = vsel %vm5023, %v4959, %v5087
    %v5152 = vsel %vm5024, %v4960, %v5088
    %v5153 = vsel %vm5025, %v4961, %v5089
    %v5154 = vsel %vm5026, %v4962, %v5090
    %v5155 = vsel %vm5027, %v4963, %v5091
    %v5156 = vsel %vm5028, %v4964, %v5092
    %v5157 = vsel %vm5029, %v4965, %v5093
    %v5158 = vsel %vm5030, %v4966, %v5094
    %v5159 = vsel %vm5031, %v4967, %v5095
    %v5160 = vsel %vm5032, %v4968, %v5096
    %v5161 = vsel %vm5033, %v4969, %v5097
    %v5162 = vsel %vm5034, %v4970, %v5098
    %v5163 = vsel %vm5035, %v4971, %v5099
    %v5164 = vsel %vm5036, %v4972, %v5100
    %v5165 = vsel %vm5037, %v4973, %v5101
    %v5166 = vsel %vm5038, %v4974, %v5102
    %v5167 = vsel %vm5039, %v4975, %v5103
    %v5168 = vsel %vm5040, %v4976, %v5104
    %v5169 = vsel %vm5041, %v4977, %v5105
    %v5170 = vsel %vm5042, %v4978, %v5106
    %v5171 = vsel %vm5043, %v4979, %v5107
    %v5172 = vsel %vm5044, %v4980, %v5108
    %v5173 = vsel %vm5045, %v4981, %v5109
    %v5174 = vsel %vm5046, %v4982, %v5110
    %v5175 = vsel %vm5047, %v4983, %v5111
    %v5176 = vsel %vm5048, %v4984, %v5112
    %v5177 = vsel %vm5049, %v4985, %v5113
    %v5178 = vsel %vm5050, %v4986, %v5114
    %v5179 = vsel %vm5051, %v4987, %v5115
    %v5180 = vsel %vm5052, %v4988, %v5116
    %v5181 = vsel %vm5053, %v4989, %v5117
    %v5182 = vsel %vm5054, %v4990, %v5118
    %v5183 = vsel %vm5055, %v4991, %v5119
    %v5184 = vsel %vm5056, %v4992, %v5120
    %v5185 = vsel %vm5057, %v4993, %v5121
    %v5186 = vsel %vm5058, %v4994, %v5122
    %v5187 = vsel %vm5059, %v4995, %v5123
    %v5188 = vsel %vm5060, %v4996, %v5124
    %v5189 = vsel %vm5061, %v4997, %v5125
    %v5190 = vsel %vm5062, %v4998, %v5126
    %v5191 = vsel %vm5063, %v4999, %v5127
    %v5192 = vsel %vm5064, %v5000, %v5128
    %v5193 = vsel %vm5065, %v5001, %v5129
    %v5194 = vsel %vm5066, %v5002, %v5130
    %v5195 = vsel %vm5067, %v5003, %v5131
    %v5196 = vsel %vm5068, %v5004, %v5132
    %v5197 = vsel %vm5069, %v5005, %v5133
    %v5198 = vsel %vm5070, %v5006, %v5134
    %v5199 = vsel %vm5071, %v5007, %v5135
    %v5200 = vsel %vm5072, %v5008, %v5136
    %v5201 = vsel %vm5073, %v5009, %v5137
    %5202 = vst [vmem:[#allocation2] sm:$0xff] 0.0
    %5203 = vst [vmem:[#allocation2 + $0x8] sm:$0xff] 0.0
    %5204 = vst [vmem:[#allocation2 + $0x10] sm:$0xff] 0.0
    %5205 = vst [vmem:[#allocation2 + $0x1b0] sm:$0xff] 0.0
    %5206 = vst [vmem:[#allocation2 + $0x1b8] sm:$0xff] 0.0
    %5207 = vst [vmem:[#allocation2 + $0x1c0] sm:$0xff] 0.0
    %s5208 = scalar_lea.vmem [#allocation2], 408
    %5209 = vst [vmem:[%s5208] sm:$0xff] 0.0
    %5210 = vst [vmem:[%s5208 + $0x8] sm:$0xff] 0.0
    %5211 = vst [vmem:[%s5208 + $0x10] sm:$0xff] 0.0
    %5212 = vst [vmem:[%s5208 + $0x1b0] sm:$0xff] 0.0
    %5213 = vst [vmem:[%s5208 + $0x1b8] sm:$0xff] 0.0
    %5214 = vst [vmem:[%s5208 + $0x1c0] sm:$0xff] 0.0
    %5215 = vst [vmem:[#allocation2] sm:$0x1] 0.0
    %5216 = vst [vmem:[#allocation2 + $0x18] sm:$0x1] 0.0
    %5217 = vst [vmem:[#allocation2 + $0x30] sm:$0x1] 0.0
    %5218 = vst [vmem:[#allocation2 + $0x48] sm:$0x1] 0.0
    %5219 = vst [vmem:[#allocation2 + $0x60] sm:$0x1] 0.0
    %5220 = vst [vmem:[#allocation2 + $0x78] sm:$0x1] 0.0
    %5221 = vst [vmem:[#allocation2 + $0x90] sm:$0x1] 0.0
    %5222 = vst [vmem:[#allocation2 + $0xa8] sm:$0x1] 0.0
    %5223 = vst [vmem:[#allocation2 + $0xc0] sm:$0x1] 0.0
    %5224 = vst [vmem:[#allocation2 + $0xd8] sm:$0x1] 0.0
    %5225 = vst [vmem:[#allocation2 + $0xf0] sm:$0x1] 0.0
    %5226 = vst [vmem:[#allocation2 + $0x108] sm:$0x1] 0.0
    %5227 = vst [vmem:[#allocation2 + $0x120] sm:$0x1] 0.0
    %5228 = vst [vmem:[#allocation2 + $0x138] sm:$0x1] 0.0
    %5229 = vst [vmem:[#allocation2 + $0x150] sm:$0x1] 0.0
    %5230 = vst [vmem:[#allocation2 + $0x168] sm:$0x1] 0.0
    %5231 = vst [vmem:[#allocation2 + $0x180] sm:$0x1] 0.0
    %5232 = vst [vmem:[#allocation2 + $0x198] sm:$0x1] 0.0
    %5233 = vst [vmem:[#allocation2 + $0x1b0] sm:$0x1] 0.0
    %5234 = vst [vmem:[#allocation2 + $0x1c8] sm:$0x1] 0.0
    %5235 = vst [vmem:[#allocation2 + $0x1e0] sm:$0x1] 0.0
    %5236 = vst [vmem:[#allocation2 + $0x1f8] sm:$0x1] 0.0
    %5237 = vst [vmem:[#allocation2 + $0x210] sm:$0x1] 0.0
    %5238 = vst [vmem:[#allocation2 + $0x228] sm:$0x1] 0.0
    %5239 = vst [vmem:[#allocation2 + $0x240] sm:$0x1] 0.0
    %5240 = vst [vmem:[#allocation2 + $0x258] sm:$0x1] 0.0
    %5241 = vst [vmem:[#allocation2 + $0x270] sm:$0x1] 0.0
    %5242 = vst [vmem:[#allocation2 + $0x288] sm:$0x1] 0.0
    %5243 = vst [vmem:[#allocation2 + $0x2a0] sm:$0x1] 0.0
    %5244 = vst [vmem:[#allocation2 + $0x2b8] sm:$0x1] 0.0
    %5245 = vst [vmem:[#allocation2 + $0x2d0] sm:$0x1] 0.0
    %5246 = vst [vmem:[#allocation2 + $0x2e8] sm:$0x1] 0.0
    %5247 = vst [vmem:[#allocation2 + $0x300] sm:$0x1] 0.0
    %5248 = vst [vmem:[#allocation2 + $0x318] sm:$0x1] 0.0
    %5249 = vst [vmem:[#allocation2 + $0x330] sm:$0x1] 0.0
    %5250 = vst [vmem:[#allocation2 + $0x348] sm:$0x1] 0.0
    %5251 = vst [vmem:[#allocation2 + $0x11] sm:$0x1] 0.0
    %5252 = vst [vmem:[#allocation2 + $0x29] sm:$0x1] 0.0
    %5253 = vst [vmem:[#allocation2 + $0x41] sm:$0x1] 0.0
    %5254 = vst [vmem:[#allocation2 + $0x59] sm:$0x1] 0.0
    %5255 = vst [vmem:[#allocation2 + $0x71] sm:$0x1] 0.0
    %5256 = vst [vmem:[#allocation2 + $0x89] sm:$0x1] 0.0
    %5257 = vst [vmem:[#allocation2 + $0xa1] sm:$0x1] 0.0
    %5258 = vst [vmem:[#allocation2 + $0xb9] sm:$0x1] 0.0
    %5259 = vst [vmem:[#allocation2 + $0xd1] sm:$0x1] 0.0
    %5260 = vst [vmem:[#allocation2 + $0xe9] sm:$0x1] 0.0
    %5261 = vst [vmem:[#allocation2 + $0x101] sm:$0x1] 0.0
    %5262 = vst [vmem:[#allocation2 + $0x119] sm:$0x1] 0.0
    %5263 = vst [vmem:[#allocation2 + $0x131] sm:$0x1] 0.0
    %5264 = vst [vmem:[#allocation2 + $0x149] sm:$0x1] 0.0
    %5265 = vst [vmem:[#allocation2 + $0x161] sm:$0x1] 0.0
    %5266 = vst [vmem:[#allocation2 + $0x179] sm:$0x1] 0.0
    %5267 = vst [vmem:[#allocation2 + $0x191] sm:$0x1] 0.0
    %5268 = vst [vmem:[#allocation2 + $0x1a9] sm:$0x1] 0.0
    %5269 = vst [vmem:[#allocation2 + $0x1c1] sm:$0x1] 0.0
    %5270 = vst [vmem:[#allocation2 + $0x1d9] sm:$0x1] 0.0
    %5271 = vst [vmem:[#allocation2 + $0x1f1] sm:$0x1] 0.0
    %5272 = vst [vmem:[#allocation2 + $0x209] sm:$0x1] 0.0
    %5273 = vst [vmem:[#allocation2 + $0x221] sm:$0x1] 0.0
    %5274 = vst [vmem:[#allocation2 + $0x239] sm:$0x1] 0.0
    %5275 = vst [vmem:[#allocation2 + $0x251] sm:$0x1] 0.0
    %5276 = vst [vmem:[#allocation2 + $0x269] sm:$0x1] 0.0
    %5277 = vst [vmem:[#allocation2 + $0x281] sm:$0x1] 0.0
    %5278 = vst [vmem:[#allocation2 + $0x299] sm:$0x1] 0.0
    %5279 = vst [vmem:[#allocation2 + $0x2b1] sm:$0x1] 0.0
    %5280 = vst [vmem:[#allocation2 + $0x2c9] sm:$0x1] 0.0
    %5281 = vst [vmem:[#allocation2 + $0x2e1] sm:$0x1] 0.0
    %5282 = vst [vmem:[#allocation2 + $0x2f9] sm:$0x1] 0.0
    %5283 = vst [vmem:[#allocation2 + $0x311] sm:$0x1] 0.0
    %5284 = vst [vmem:[#allocation2 + $0x329] sm:$0x1] 0.0
    %5285 = vst [vmem:[#allocation2 + $0x341] sm:$0x1] 0.0
    %5286 = vst [vmem:[#allocation2 + $0x359] sm:$0x1] 0.0
    %s5287 = scalar_lea.vmem [#allocation2], 24
    %5288 = vst [vmem:[%s5287 + $0x1] sm:$0xff] %v5138
    %5289 = vst [vmem:[%s5287 + $0x9] sm:$0xff] %v5139
    %5290 = vst [vmem:[%s5287 + $0x19] sm:$0xff] %v5140
    %5291 = vst [vmem:[%s5287 + $0x21] sm:$0xff] %v5141
    %5292 = vst [vmem:[%s5287 + $0x31] sm:$0xff] %v5142
    %5293 = vst [vmem:[%s5287 + $0x39] sm:$0xff] %v5143
    %5294 = vst [vmem:[%s5287 + $0x49] sm:$0xff] %v5144
    %5295 = vst [vmem:[%s5287 + $0x51] sm:$0xff] %v5145
    %5296 = vst [vmem:[%s5287 + $0x61] sm:$0xff] %v5146
    %5297 = vst [vmem:[%s5287 + $0x69] sm:$0xff] %v5147
    %5298 = vst [vmem:[%s5287 + $0x79] sm:$0xff] %v5148
    %5299 = vst [vmem:[%s5287 + $0x81] sm:$0xff] %v5149
    %5300 = vst [vmem:[%s5287 + $0x91] sm:$0xff] %v5150
    %5301 = vst [vmem:[%s5287 + $0x99] sm:$0xff] %v5151
    %5302 = vst [vmem:[%s5287 + $0xa9] sm:$0xff] %v5152
    %5303 = vst [vmem:[%s5287 + $0xb1] sm:$0xff] %v5153
    %5304 = vst [vmem:[%s5287 + $0xc1] sm:$0xff] %v5154
    %5305 = vst [vmem:[%s5287 + $0xc9] sm:$0xff] %v5155
    %5306 = vst [vmem:[%s5287 + $0xd9] sm:$0xff] %v5156
    %5307 = vst [vmem:[%s5287 + $0xe1] sm:$0xff] %v5157
    %5308 = vst [vmem:[%s5287 + $0xf1] sm:$0xff] %v5158
    %5309 = vst [vmem:[%s5287 + $0xf9] sm:$0xff] %v5159
    %5310 = vst [vmem:[%s5287 + $0x109] sm:$0xff] %v5160
    %5311 = vst [vmem:[%s5287 + $0x111] sm:$0xff] %v5161
    %5312 = vst [vmem:[%s5287 + $0x121] sm:$0xff] %v5162
    %5313 = vst [vmem:[%s5287 + $0x129] sm:$0xff] %v5163
    %5314 = vst [vmem:[%s5287 + $0x139] sm:$0xff] %v5164
    %5315 = vst [vmem:[%s5287 + $0x141] sm:$0xff] %v5165
    %5316 = vst [vmem:[%s5287 + $0x151] sm:$0xff] %v5166
    %5317 = vst [vmem:[%s5287 + $0x159] sm:$0xff] %v5167
    %5318 = vst [vmem:[%s5287 + $0x169] sm:$0xff] %v5168
    %5319 = vst [vmem:[%s5287 + $0x171] sm:$0xff] %v5169
    %5320 = vst [vmem:[%s5287 + $0x1b1] sm:$0xff] %v5170
    %5321 = vst [vmem:[%s5287 + $0x1b9] sm:$0xff] %v5171
    %5322 = vst [vmem:[%s5287 + $0x1c9] sm:$0xff] %v5172
    %5323 = vst [vmem:[%s5287 + $0x1d1] sm:$0xff] %v5173
    %5324 = vst [vmem:[%s5287 + $0x1e1] sm:$0xff] %v5174
    %5325 = vst [vmem:[%s5287 + $0x1e9] sm:$0xff] %v5175
    %5326 = vst [vmem:[%s5287 + $0x1f9] sm:$0xff] %v5176
    %5327 = vst [vmem:[%s5287 + $0x201] sm:$0xff] %v5177
    %5328 = vst [vmem:[%s5287 + $0x211] sm:$0xff] %v5178
    %5329 = vst [vmem:[%s5287 + $0x219] sm:$0xff] %v5179
    %5330 = vst [vmem:[%s5287 + $0x229] sm:$0xff] %v5180
    %5331 = vst [vmem:[%s5287 + $0x231] sm:$0xff] %v5181
    %5332 = vst [vmem:[%s5287 + $0x241] sm:$0xff] %v5182
    %5333 = vst [vmem:[%s5287 + $0x249] sm:$0xff] %v5183
    %5334 = vst [vmem:[%s5287 + $0x259] sm:$0xff] %v5184
    %5335 = vst [vmem:[%s5287 + $0x261] sm:$0xff] %v5185
    %5336 = vst [vmem:[%s5287 + $0x271] sm:$0xff] %v5186
    %5337 = vst [vmem:[%s5287 + $0x279] sm:$0xff] %v5187
    %5338 = vst [vmem:[%s5287 + $0x289] sm:$0xff] %v5188
    %5339 = vst [vmem:[%s5287 + $0x291] sm:$0xff] %v5189
    %5340 = vst [vmem:[%s5287 + $0x2a1] sm:$0xff] %v5190
    %5341 = vst [vmem:[%s5287 + $0x2a9] sm:$0xff] %v5191
    %5342 = vst [vmem:[%s5287 + $0x2b9] sm:$0xff] %v5192
    %5343 = vst [vmem:[%s5287 + $0x2c1] sm:$0xff] %v5193
    %5344 = vst [vmem:[%s5287 + $0x2d1] sm:$0xff] %v5194
    %5345 = vst [vmem:[%s5287 + $0x2d9] sm:$0xff] %v5195
    %5346 = vst [vmem:[%s5287 + $0x2e9] sm:$0xff] %v5196
    %5347 = vst [vmem:[%s5287 + $0x2f1] sm:$0xff] %v5197
    %5348 = vst [vmem:[%s5287 + $0x301] sm:$0xff] %v5198
    %5349 = vst [vmem:[%s5287 + $0x309] sm:$0xff] %v5199
    %5350 = vst [vmem:[%s5287 + $0x319] sm:$0xff] %v5200
    %5351 = vst [vmem:[%s5287 + $0x321] sm:$0xff] %v5201
    %v5352 = vld [vmem:[#allocation2] sm:$0xff]
    %v5353 = vld [vmem:[#allocation2 + $0x8] sm:$0xff]
    %v5354 = vld [vmem:[#allocation2 + $0x10] sm:$0xff]
    %v5355 = vld [vmem:[#allocation2 + $0x18] sm:$0xff]
    %v5356 = vld [vmem:[#allocation2 + $0x20] sm:$0xff]
    %v5357 = vld [vmem:[#allocation2 + $0x28] sm:$0xff]
    %v5358 = vld [vmem:[#allocation2 + $0x30] sm:$0xff]
    %v5359 = vld [vmem:[#allocation2 + $0x38] sm:$0xff]
    %v5360 = vld [vmem:[#allocation2 + $0x40] sm:$0xff]
    %v5361 = vld [vmem:[#allocation2 + $0x48] sm:$0xff]
    %v5362 = vld [vmem:[#allocation2 + $0x50] sm:$0xff]
    %v5363 = vld [vmem:[#allocation2 + $0x58] sm:$0xff]
    %v5364 = vld [vmem:[#allocation2 + $0x60] sm:$0xff]
    %v5365 = vld [vmem:[#allocation2 + $0x68] sm:$0xff]
    %v5366 = vld [vmem:[#allocation2 + $0x70] sm:$0xff]
    %v5367 = vld [vmem:[#allocation2 + $0x78] sm:$0xff]
    %v5368 = vld [vmem:[#allocation2 + $0x80] sm:$0xff]
    %v5369 = vld [vmem:[#allocation2 + $0x88] sm:$0xff]
    %v5370 = vld [vmem:[#allocation2 + $0x90] sm:$0xff]
    %v5371 = vld [vmem:[#allocation2 + $0x98] sm:$0xff]
    %v5372 = vld [vmem:[#allocation2 + $0xa0] sm:$0xff]
    %v5373 = vld [vmem:[#allocation2 + $0xa8] sm:$0xff]
    %v5374 = vld [vmem:[#allocation2 + $0xb0] sm:$0xff]
    %v5375 = vld [vmem:[#allocation2 + $0xb8] sm:$0xff]
    %v5376 = vld [vmem:[#allocation2 + $0xc0] sm:$0xff]
    %v5377 = vld [vmem:[#allocation2 + $0xc8] sm:$0xff]
    %v5378 = vld [vmem:[#allocation2 + $0xd0] sm:$0xff]
    %v5379 = vld [vmem:[#allocation2 + $0xd8] sm:$0xff]
    %v5380 = vld [vmem:[#allocation2 + $0xe0] sm:$0xff]
    %v5381 = vld [vmem:[#allocation2 + $0xe8] sm:$0xff]
    %v5382 = vld [vmem:[#allocation2 + $0xf0] sm:$0xff]
    %v5383 = vld [vmem:[#allocation2 + $0xf8] sm:$0xff]
    %v5384 = vld [vmem:[#allocation2 + $0x100] sm:$0xff]
    %v5385 = vld [vmem:[#allocation2 + $0x108] sm:$0xff]
    %v5386 = vld [vmem:[#allocation2 + $0x110] sm:$0xff]
    %v5387 = vld [vmem:[#allocation2 + $0x118] sm:$0xff]
    %v5388 = vld [vmem:[#allocation2 + $0x120] sm:$0xff]
    %v5389 = vld [vmem:[#allocation2 + $0x128] sm:$0xff]
    %v5390 = vld [vmem:[#allocation2 + $0x130] sm:$0xff]
    %v5391 = vld [vmem:[#allocation2 + $0x138] sm:$0xff]
    %v5392 = vld [vmem:[#allocation2 + $0x140] sm:$0xff]
    %v5393 = vld [vmem:[#allocation2 + $0x148] sm:$0xff]
    %v5394 = vld [vmem:[#allocation2 + $0x150] sm:$0xff]
    %v5395 = vld [vmem:[#allocation2 + $0x158] sm:$0xff]
    %v5396 = vld [vmem:[#allocation2 + $0x160] sm:$0xff]
    %v5397 = vld [vmem:[#allocation2 + $0x168] sm:$0xff]
    %v5398 = vld [vmem:[#allocation2 + $0x170] sm:$0xff]
    %v5399 = vld [vmem:[#allocation2 + $0x178] sm:$0xff]
    %v5400 = vld [vmem:[#allocation2 + $0x1b0] sm:$0xff]
    %v5401 = vld [vmem:[#allocation2 + $0x1b8] sm:$0xff]
    %v5402 = vld [vmem:[#allocation2 + $0x1c0] sm:$0xff]
    %v5403 = vld [vmem:[#allocation2 + $0x1c8] sm:$0xff]
    %v5404 = vld [vmem:[#allocation2 + $0x1d0] sm:$0xff]
    %v5405 = vld [vmem:[#allocation2 + $0x1d8] sm:$0xff]
    %v5406 = vld [vmem:[#allocation2 + $0x1e0] sm:$0xff]
    %v5407 = vld [vmem:[#allocation2 + $0x1e8] sm:$0xff]
    %v5408 = vld [vmem:[#allocation2 + $0x1f0] sm:$0xff]
    %v5409 = vld [vmem:[#allocation2 + $0x1f8] sm:$0xff]
    %v5410 = vld [vmem:[#allocation2 + $0x200] sm:$0xff]
    %v5411 = vld [vmem:[#allocation2 + $0x208] sm:$0xff]
    %v5412 = vld [vmem:[#allocation2 + $0x210] sm:$0xff]
    %v5413 = vld [vmem:[#allocation2 + $0x218] sm:$0xff]
    %v5414 = vld [vmem:[#allocation2 + $0x220] sm:$0xff]
    %v5415 = vld [vmem:[#allocation2 + $0x228] sm:$0xff]
    %v5416 = vld [vmem:[#allocation2 + $0x230] sm:$0xff]
    %v5417 = vld [vmem:[#allocation2 + $0x238] sm:$0xff]
    %v5418 = vld [vmem:[#allocation2 + $0x240] sm:$0xff]
    %v5419 = vld [vmem:[#allocation2 + $0x248] sm:$0xff]
    %v5420 = vld [vmem:[#allocation2 + $0x250] sm:$0xff]
    %v5421 = vld [vmem:[#allocation2 + $0x258] sm:$0xff]
    %v5422 = vld [vmem:[#allocation2 + $0x260] sm:$0xff]
    %v5423 = vld [vmem:[#allocation2 + $0x268] sm:$0xff]
    %v5424 = vld [vmem:[#allocation2 + $0x270] sm:$0xff]
    %v5425 = vld [vmem:[#allocation2 + $0x278] sm:$0xff]
    %v5426 = vld [vmem:[#allocation2 + $0x280] sm:$0xff]
    %v5427 = vld [vmem:[#allocation2 + $0x288] sm:$0xff]
    %v5428 = vld [vmem:[#allocation2 + $0x290] sm:$0xff]
    %v5429 = vld [vmem:[#allocation2 + $0x298] sm:$0xff]
    %v5430 = vld [vmem:[#allocation2 + $0x2a0] sm:$0xff]
    %v5431 = vld [vmem:[#allocation2 + $0x2a8] sm:$0xff]
    %v5432 = vld [vmem:[#allocation2 + $0x2b0] sm:$0xff]
    %v5433 = vld [vmem:[#allocation2 + $0x2b8] sm:$0xff]
    %v5434 = vld [vmem:[#allocation2 + $0x2c0] sm:$0xff]
    %v5435 = vld [vmem:[#allocation2 + $0x2c8] sm:$0xff]
    %v5436 = vld [vmem:[#allocation2 + $0x2d0] sm:$0xff]
    %v5437 = vld [vmem:[#allocation2 + $0x2d8] sm:$0xff]
    %v5438 = vld [vmem:[#allocation2 + $0x2e0] sm:$0xff]
    %v5439 = vld [vmem:[#allocation2 + $0x2e8] sm:$0xff]
    %v5440 = vld [vmem:[#allocation2 + $0x2f0] sm:$0xff]
    %v5441 = vld [vmem:[#allocation2 + $0x2f8] sm:$0xff]
    %v5442 = vld [vmem:[#allocation2 + $0x300] sm:$0xff]
    %v5443 = vld [vmem:[#allocation2 + $0x308] sm:$0xff]
    %v5444 = vld [vmem:[#allocation2 + $0x310] sm:$0xff]
    %v5445 = vld [vmem:[#allocation2 + $0x318] sm:$0xff]
    %v5446 = vld [vmem:[#allocation2 + $0x320] sm:$0xff]
    %v5447 = vld [vmem:[#allocation2 + $0x328] sm:$0xff]
    %v5544 = vrot.slane %v5352, 1
    %v5545 = vrot.slane %v5353, 1
    %v5546 = vsel %vm261, %v5544, %v5545
    %v5547 = vrot.slane %v5354, 1
    %v5548 = vsel %vm261, %v5545, %v5547
    %v5549 = vrot.slane %v5355, 1
    %v5550 = vrot.slane %v5356, 1
    %v5551 = vsel %vm261, %v5549, %v5550
    %v5552 = vrot.slane %v5357, 1
    %v5553 = vsel %vm261, %v5550, %v5552
    %v5554 = vrot.slane %v5358, 1
    %v5555 = vrot.slane %v5359, 1
    %v5556 = vsel %vm261, %v5554, %v5555
    %v5557 = vrot.slane %v5360, 1
    %v5558 = vsel %vm261, %v5555, %v5557
    %v5559 = vrot.slane %v5361, 1
    %v5560 = vrot.slane %v5362, 1
    %v5561 = vsel %vm261, %v5559, %v5560
    %v5562 = vrot.slane %v5363, 1
    %v5563 = vsel %vm261, %v5560, %v5562
    %v5564 = vrot.slane %v5364, 1
    %v5565 = vrot.slane %v5365, 1
    %v5566 = vsel %vm261, %v5564, %v5565
    %v5567 = vrot.slane %v5366, 1
    %v5568 = vsel %vm261, %v5565, %v5567
    %v5569 = vrot.slane %v5367, 1
    %v5570 = vrot.slane %v5368, 1
    %v5571 = vsel %vm261, %v5569, %v5570
    %v5572 = vrot.slane %v5369, 1
    %v5573 = vsel %vm261, %v5570, %v5572
    %v5574 = vrot.slane %v5370, 1
    %v5575 = vrot.slane %v5371, 1
    %v5576 = vsel %vm261, %v5574, %v5575
    %v5577 = vrot.slane %v5372, 1
    %v5578 = vsel %vm261, %v5575, %v5577
    %v5579 = vrot.slane %v5373, 1
    %v5580 = vrot.slane %v5374, 1
    %v5581 = vsel %vm261, %v5579, %v5580
    %v5582 = vrot.slane %v5375, 1
    %v5583 = vsel %vm261, %v5580, %v5582
    %v5584 = vrot.slane %v5376, 1
    %v5585 = vrot.slane %v5377, 1
    %v5586 = vsel %vm261, %v5584, %v5585
    %v5587 = vrot.slane %v5378, 1
    %v5588 = vsel %vm261, %v5585, %v5587
    %v5589 = vrot.slane %v5379, 1
    %v5590 = vrot.slane %v5380, 1
    %v5591 = vsel %vm261, %v5589, %v5590
    %v5592 = vrot.slane %v5381, 1
    %v5593 = vsel %vm261, %v5590, %v5592
    %v5594 = vrot.slane %v5382, 1
    %v5595 = vrot.slane %v5383, 1
    %v5596 = vsel %vm261, %v5594, %v5595
    %v5597 = vrot.slane %v5384, 1
    %v5598 = vsel %vm261, %v5595, %v5597
    %v5599 = vrot.slane %v5385, 1
    %v5600 = vrot.slane %v5386, 1
    %v5601 = vsel %vm261, %v5599, %v5600
    %v5602 = vrot.slane %v5387, 1
    %v5603 = vsel %vm261, %v5600, %v5602
    %v5604 = vrot.slane %v5388, 1
    %v5605 = vrot.slane %v5389, 1
    %v5606 = vsel %vm261, %v5604, %v5605
    %v5607 = vrot.slane %v5390, 1
    %v5608 = vsel %vm261, %v5605, %v5607
    %v5609 = vrot.slane %v5391, 1
    %v5610 = vrot.slane %v5392, 1
    %v5611 = vsel %vm261, %v5609, %v5610
    %v5612 = vrot.slane %v5393, 1
    %v5613 = vsel %vm261, %v5610, %v5612
    %v5614 = vrot.slane %v5394, 1
    %v5615 = vrot.slane %v5395, 1
    %v5616 = vsel %vm261, %v5614, %v5615
    %v5617 = vrot.slane %v5396, 1
    %v5618 = vsel %vm261, %v5615, %v5617
    %v5619 = vrot.slane %v5397, 1
    %v5620 = vrot.slane %v5398, 1
    %v5621 = vsel %vm261, %v5619, %v5620
    %v5622 = vrot.slane %v5399, 1
    %v5623 = vsel %vm261, %v5620, %v5622
    %v5624 = vrot.slane %v5400, 1
    %v5625 = vrot.slane %v5401, 1
    %v5626 = vsel %vm261, %v5624, %v5625
    %v5627 = vrot.slane %v5402, 1
    %v5628 = vsel %vm261, %v5625, %v5627
    %v5629 = vrot.slane %v5403, 1
    %v5630 = vrot.slane %v5404, 1
    %v5631 = vsel %vm261, %v5629, %v5630
    %v5632 = vrot.slane %v5405, 1
    %v5633 = vsel %vm261, %v5630, %v5632
    %v5634 = vrot.slane %v5406, 1
    %v5635 = vrot.slane %v5407, 1
    %v5636 = vsel %vm261, %v5634, %v5635
    %v5637 = vrot.slane %v5408, 1
    %v5638 = vsel %vm261, %v5635, %v5637
    %v5639 = vrot.slane %v5409, 1
    %v5640 = vrot.slane %v5410, 1
    %v5641 = vsel %vm261, %v5639, %v5640
    %v5642 = vrot.slane %v5411, 1
    %v5643 = vsel %vm261, %v5640, %v5642
    %v5644 = vrot.slane %v5412, 1
    %v5645 = vrot.slane %v5413, 1
    %v5646 = vsel %vm261, %v5644, %v5645
    %v5647 = vrot.slane %v5414, 1
    %v5648 = vsel %vm261, %v5645, %v5647
    %v5649 = vrot.slane %v5415, 1
    %v5650 = vrot.slane %v5416, 1
    %v5651 = vsel %vm261, %v5649, %v5650
    %v5652 = vrot.slane %v5417, 1
    %v5653 = vsel %vm261, %v5650, %v5652
    %v5654 = vrot.slane %v5418, 1
    %v5655 = vrot.slane %v5419, 1
    %v5656 = vsel %vm261, %v5654, %v5655
    %v5657 = vrot.slane %v5420, 1
    %v5658 = vsel %vm261, %v5655, %v5657
    %v5659 = vrot.slane %v5421, 1
    %v5660 = vrot.slane %v5422, 1
    %v5661 = vsel %vm261, %v5659, %v5660
    %v5662 = vrot.slane %v5423, 1
    %v5663 = vsel %vm261, %v5660, %v5662
    %v5664 = vrot.slane %v5424, 1
    %v5665 = vrot.slane %v5425, 1
    %v5666 = vsel %vm261, %v5664, %v5665
    %v5667 = vrot.slane %v5426, 1
    %v5668 = vsel %vm261, %v5665, %v5667
    %v5669 = vrot.slane %v5427, 1
    %v5670 = vrot.slane %v5428, 1
    %v5671 = vsel %vm261, %v5669, %v5670
    %v5672 = vrot.slane %v5429, 1
    %v5673 = vsel %vm261, %v5670, %v5672
    %v5674 = vrot.slane %v5430, 1
    %v5675 = vrot.slane %v5431, 1
    %v5676 = vsel %vm261, %v5674, %v5675
    %v5677 = vrot.slane %v5432, 1
    %v5678 = vsel %vm261, %v5675, %v5677
    %v5679 = vrot.slane %v5433, 1
    %v5680 = vrot.slane %v5434, 1
    %v5681 = vsel %vm261, %v5679, %v5680
    %v5682 = vrot.slane %v5435, 1
    %v5683 = vsel %vm261, %v5680, %v5682
    %v5684 = vrot.slane %v5436, 1
    %v5685 = vrot.slane %v5437, 1
    %v5686 = vsel %vm261, %v5684, %v5685
    %v5687 = vrot.slane %v5438, 1
    %v5688 = vsel %vm261, %v5685, %v5687
    %v5689 = vrot.slane %v5439, 1
    %v5690 = vrot.slane %v5440, 1
    %v5691 = vsel %vm261, %v5689, %v5690
    %v5692 = vrot.slane %v5441, 1
    %v5693 = vsel %vm261, %v5690, %v5692
    %v5694 = vrot.slane %v5442, 1
    %v5695 = vrot.slane %v5443, 1
    %v5696 = vsel %vm261, %v5694, %v5695
    %v5697 = vrot.slane %v5444, 1
    %v5698 = vsel %vm261, %v5695, %v5697
    %v5699 = vrot.slane %v5445, 1
    %v5700 = vrot.slane %v5446, 1
    %v5701 = vsel %vm261, %v5699, %v5700
    %v5702 = vrot.slane %v5447, 1
    %v5703 = vsel %vm261, %v5700, %v5702
    %v5768 = vrot.slane %v5352, 2
    %v5769 = vrot.slane %v5353, 2
    %v5770 = vsel %vm486, %v5768, %v5769
    %v5771 = vrot.slane %v5354, 2
    %v5772 = vsel %vm486, %v5769, %v5771
    %v5773 = vrot.slane %v5355, 2
    %v5774 = vrot.slane %v5356, 2
    %v5775 = vsel %vm486, %v5773, %v5774
    %v5776 = vrot.slane %v5357, 2
    %v5777 = vsel %vm486, %v5774, %v5776
    %v5778 = vrot.slane %v5358, 2
    %v5779 = vrot.slane %v5359, 2
    %v5780 = vsel %vm486, %v5778, %v5779
    %v5781 = vrot.slane %v5360, 2
    %v5782 = vsel %vm486, %v5779, %v5781
    %v5783 = vrot.slane %v5361, 2
    %v5784 = vrot.slane %v5362, 2
    %v5785 = vsel %vm486, %v5783, %v5784
    %v5786 = vrot.slane %v5363, 2
    %v5787 = vsel %vm486, %v5784, %v5786
    %v5788 = vrot.slane %v5364, 2
    %v5789 = vrot.slane %v5365, 2
    %v5790 = vsel %vm486, %v5788, %v5789
    %v5791 = vrot.slane %v5366, 2
    %v5792 = vsel %vm486, %v5789, %v5791
    %v5793 = vrot.slane %v5367, 2
    %v5794 = vrot.slane %v5368, 2
    %v5795 = vsel %vm486, %v5793, %v5794
    %v5796 = vrot.slane %v5369, 2
    %v5797 = vsel %vm486, %v5794, %v5796
    %v5798 = vrot.slane %v5370, 2
    %v5799 = vrot.slane %v5371, 2
    %v5800 = vsel %vm486, %v5798, %v5799
    %v5801 = vrot.slane %v5372, 2
    %v5802 = vsel %vm486, %v5799, %v5801
    %v5803 = vrot.slane %v5373, 2
    %v5804 = vrot.slane %v5374, 2
    %v5805 = vsel %vm486, %v5803, %v5804
    %v5806 = vrot.slane %v5375, 2
    %v5807 = vsel %vm486, %v5804, %v5806
    %v5808 = vrot.slane %v5376, 2
    %v5809 = vrot.slane %v5377, 2
    %v5810 = vsel %vm486, %v5808, %v5809
    %v5811 = vrot.slane %v5378, 2
    %v5812 = vsel %vm486, %v5809, %v5811
    %v5813 = vrot.slane %v5379, 2
    %v5814 = vrot.slane %v5380, 2
    %v5815 = vsel %vm486, %v5813, %v5814
    %v5816 = vrot.slane %v5381, 2
    %v5817 = vsel %vm486, %v5814, %v5816
    %v5818 = vrot.slane %v5382, 2
    %v5819 = vrot.slane %v5383, 2
    %v5820 = vsel %vm486, %v5818, %v5819
    %v5821 = vrot.slane %v5384, 2
    %v5822 = vsel %vm486, %v5819, %v5821
    %v5823 = vrot.slane %v5385, 2
    %v5824 = vrot.slane %v5386, 2
    %v5825 = vsel %vm486, %v5823, %v5824
    %v5826 = vrot.slane %v5387, 2
    %v5827 = vsel %vm486, %v5824, %v5826
    %v5828 = vrot.slane %v5388, 2
    %v5829 = vrot.slane %v5389, 2
    %v5830 = vsel %vm486, %v5828, %v5829
    %v5831 = vrot.slane %v5390, 2
    %v5832 = vsel %vm486, %v5829, %v5831
    %v5833 = vrot.slane %v5391, 2
    %v5834 = vrot.slane %v5392, 2
    %v5835 = vsel %vm486, %v5833, %v5834
    %v5836 = vrot.slane %v5393, 2
    %v5837 = vsel %vm486, %v5834, %v5836
    %v5838 = vrot.slane %v5394, 2
    %v5839 = vrot.slane %v5395, 2
    %v5840 = vsel %vm486, %v5838, %v5839
    %v5841 = vrot.slane %v5396, 2
    %v5842 = vsel %vm486, %v5839, %v5841
    %v5843 = vrot.slane %v5397, 2
    %v5844 = vrot.slane %v5398, 2
    %v5845 = vsel %vm486, %v5843, %v5844
    %v5846 = vrot.slane %v5399, 2
    %v5847 = vsel %vm486, %v5844, %v5846
    %v5848 = vrot.slane %v5400, 2
    %v5849 = vrot.slane %v5401, 2
    %v5850 = vsel %vm486, %v5848, %v5849
    %v5851 = vrot.slane %v5402, 2
    %v5852 = vsel %vm486, %v5849, %v5851
    %v5853 = vrot.slane %v5403, 2
    %v5854 = vrot.slane %v5404, 2
    %v5855 = vsel %vm486, %v5853, %v5854
    %v5856 = vrot.slane %v5405, 2
    %v5857 = vsel %vm486, %v5854, %v5856
    %v5858 = vrot.slane %v5406, 2
    %v5859 = vrot.slane %v5407, 2
    %v5860 = vsel %vm486, %v5858, %v5859
    %v5861 = vrot.slane %v5408, 2
    %v5862 = vsel %vm486, %v5859, %v5861
    %v5863 = vrot.slane %v5409, 2
    %v5864 = vrot.slane %v5410, 2
    %v5865 = vsel %vm486, %v5863, %v5864
    %v5866 = vrot.slane %v5411, 2
    %v5867 = vsel %vm486, %v5864, %v5866
    %v5868 = vrot.slane %v5412, 2
    %v5869 = vrot.slane %v5413, 2
    %v5870 = vsel %vm486, %v5868, %v5869
    %v5871 = vrot.slane %v5414, 2
    %v5872 = vsel %vm486, %v5869, %v5871
    %v5873 = vrot.slane %v5415, 2
    %v5874 = vrot.slane %v5416, 2
    %v5875 = vsel %vm486, %v5873, %v5874
    %v5876 = vrot.slane %v5417, 2
    %v5877 = vsel %vm486, %v5874, %v5876
    %v5878 = vrot.slane %v5418, 2
    %v5879 = vrot.slane %v5419, 2
    %v5880 = vsel %vm486, %v5878, %v5879
    %v5881 = vrot.slane %v5420, 2
    %v5882 = vsel %vm486, %v5879, %v5881
    %v5883 = vrot.slane %v5421, 2
    %v5884 = vrot.slane %v5422, 2
    %v5885 = vsel %vm486, %v5883, %v5884
    %v5886 = vrot.slane %v5423, 2
    %v5887 = vsel %vm486, %v5884, %v5886
    %v5888 = vrot.slane %v5424, 2
    %v5889 = vrot.slane %v5425, 2
    %v5890 = vsel %vm486, %v5888, %v5889
    %v5891 = vrot.slane %v5426, 2
    %v5892 = vsel %vm486, %v5889, %v5891
    %v5893 = vrot.slane %v5427, 2
    %v5894 = vrot.slane %v5428, 2
    %v5895 = vsel %vm486, %v5893, %v5894
    %v5896 = vrot.slane %v5429, 2
    %v5897 = vsel %vm486, %v5894, %v5896
    %v5898 = vrot.slane %v5430, 2
    %v5899 = vrot.slane %v5431, 2
    %v5900 = vsel %vm486, %v5898, %v5899
    %v5901 = vrot.slane %v5432, 2
    %v5902 = vsel %vm486, %v5899, %v5901
    %v5903 = vrot.slane %v5433, 2
    %v5904 = vrot.slane %v5434, 2
    %v5905 = vsel %vm486, %v5903, %v5904
    %v5906 = vrot.slane %v5435, 2
    %v5907 = vsel %vm486, %v5904, %v5906
    %v5908 = vrot.slane %v5436, 2
    %v5909 = vrot.slane %v5437, 2
    %v5910 = vsel %vm486, %v5908, %v5909
    %v5911 = vrot.slane %v5438, 2
    %v5912 = vsel %vm486, %v5909, %v5911
    %v5913 = vrot.slane %v5439, 2
    %v5914 = vrot.slane %v5440, 2
    %v5915 = vsel %vm486, %v5913, %v5914
    %v5916 = vrot.slane %v5441, 2
    %v5917 = vsel %vm486, %v5914, %v5916
    %v5918 = vrot.slane %v5442, 2
    %v5919 = vrot.slane %v5443, 2
    %v5920 = vsel %vm486, %v5918, %v5919
    %v5921 = vrot.slane %v5444, 2
    %v5922 = vsel %vm486, %v5919, %v5921
    %v5923 = vrot.slane %v5445, 2
    %v5924 = vrot.slane %v5446, 2
    %v5925 = vsel %vm486, %v5923, %v5924
    %v5926 = vrot.slane %v5447, 2
    %v5927 = vsel %vm486, %v5924, %v5926
    %v5992 = vpack.c.bf16 %v5353, %v5352
    %v5993 = vpack.c.bf16 %v5548, %v5546
    %v5994 = vpack.c.bf16 %v5772, %v5770
    %v5995 = vpack.c.bf16 %v5356, %v5355
    %v5996 = vpack.c.bf16 %v5553, %v5551
    %v5997 = vpack.c.bf16 %v5777, %v5775
    %v5998 = vpack.c.bf16 %v5359, %v5358
    %v5999 = vpack.c.bf16 %v5558, %v5556
    %v6000 = vpack.c.bf16 %v5782, %v5780
    %v6001 = vpack.c.bf16 %v5362, %v5361
    %v6002 = vpack.c.bf16 %v5563, %v5561
    %v6003 = vpack.c.bf16 %v5787, %v5785
    %v6004 = vpack.c.bf16 %v5365, %v5364
    %v6005 = vpack.c.bf16 %v5568, %v5566
    %v6006 = vpack.c.bf16 %v5792, %v5790
    %v6007 = vpack.c.bf16 %v5368, %v5367
    %v6008 = vpack.c.bf16 %v5573, %v5571
    %v6009 = vpack.c.bf16 %v5797, %v5795
    %v6010 = vpack.c.bf16 %v5371, %v5370
    %v6011 = vpack.c.bf16 %v5578, %v5576
    %v6012 = vpack.c.bf16 %v5802, %v5800
    %v6013 = vpack.c.bf16 %v5374, %v5373
    %v6014 = vpack.c.bf16 %v5583, %v5581
    %v6015 = vpack.c.bf16 %v5807, %v5805
    %v6016 = vpack.c.bf16 %v5377, %v5376
    %v6017 = vpack.c.bf16 %v5588, %v5586
    %v6018 = vpack.c.bf16 %v5812, %v5810
    %v6019 = vpack.c.bf16 %v5380, %v5379
    %v6020 = vpack.c.bf16 %v5593, %v5591
    %v6021 = vpack.c.bf16 %v5817, %v5815
    %v6022 = vpack.c.bf16 %v5383, %v5382
    %v6023 = vpack.c.bf16 %v5598, %v5596
    %v6024 = vpack.c.bf16 %v5822, %v5820
    %v6025 = vpack.c.bf16 %v5386, %v5385
    %v6026 = vpack.c.bf16 %v5603, %v5601
    %v6027 = vpack.c.bf16 %v5827, %v5825
    %v6028 = vpack.c.bf16 %v5389, %v5388
    %v6029 = vpack.c.bf16 %v5608, %v5606
    %v6030 = vpack.c.bf16 %v5832, %v5830
    %v6031 = vpack.c.bf16 %v5392, %v5391
    %v6032 = vpack.c.bf16 %v5613, %v5611
    %v6033 = vpack.c.bf16 %v5837, %v5835
    %v6034 = vpack.c.bf16 %v5395, %v5394
    %v6035 = vpack.c.bf16 %v5618, %v5616
    %v6036 = vpack.c.bf16 %v5842, %v5840
    %v6037 = vpack.c.bf16 %v5398, %v5397
    %v6038 = vpack.c.bf16 %v5623, %v5621
    %v6039 = vpack.c.bf16 %v5847, %v5845
    %v6040 = vpack.c.bf16 %v5401, %v5400
    %v6041 = vpack.c.bf16 %v5628, %v5626
    %v6042 = vpack.c.bf16 %v5852, %v5850
    %v6043 = vpack.c.bf16 %v5404, %v5403
    %v6044 = vpack.c.bf16 %v5633, %v5631
    %v6045 = vpack.c.bf16 %v5857, %v5855
    %v6046 = vpack.c.bf16 %v5407, %v5406
    %v6047 = vpack.c.bf16 %v5638, %v5636
    %v6048 = vpack.c.bf16 %v5862, %v5860
    %v6049 = vpack.c.bf16 %v5410, %v5409
    %v6050 = vpack.c.bf16 %v5643, %v5641
    %v6051 = vpack.c.bf16 %v5867, %v5865
    %v6052 = vpack.c.bf16 %v5413, %v5412
    %v6053 = vpack.c.bf16 %v5648, %v5646
    %v6054 = vpack.c.bf16 %v5872, %v5870
    %v6055 = vpack.c.bf16 %v5416, %v5415
    %v6056 = vpack.c.bf16 %v5653, %v5651
    %v6057 = vpack.c.bf16 %v5877, %v5875
    %v6058 = vpack.c.bf16 %v5419, %v5418
    %v6059 = vpack.c.bf16 %v5658, %v5656
    %v6060 = vpack.c.bf16 %v5882, %v5880
    %v6061 = vpack.c.bf16 %v5422, %v5421
    %v6062 = vpack.c.bf16 %v5663, %v5661
    %v6063 = vpack.c.bf16 %v5887, %v5885
    %v6064 = vpack.c.bf16 %v5425, %v5424
    %v6065 = vpack.c.bf16 %v5668, %v5666
    %v6066 = vpack.c.bf16 %v5892, %v5890
    %v6067 = vpack.c.bf16 %v5428, %v5427
    %v6068 = vpack.c.bf16 %v5673, %v5671
    %v6069 = vpack.c.bf16 %v5897, %v5895
    %v6070 = vpack.c.bf16 %v5431, %v5430
    %v6071 = vpack.c.bf16 %v5678, %v5676
    %v6072 = vpack.c.bf16 %v5902, %v5900
    %v6073 = vpack.c.bf16 %v5434, %v5433
    %v6074 = vpack.c.bf16 %v5683, %v5681
    %v6075 = vpack.c.bf16 %v5907, %v5905
    %v6076 = vpack.c.bf16 %v5437, %v5436
    %v6077 = vpack.c.bf16 %v5688, %v5686
    %v6078 = vpack.c.bf16 %v5912, %v5910
    %v6079 = vpack.c.bf16 %v5440, %v5439
    %v6080 = vpack.c.bf16 %v5693, %v5691
    %v6081 = vpack.c.bf16 %v5917, %v5915
    %v6082 = vpack.c.bf16 %v5443, %v5442
    %v6083 = vpack.c.bf16 %v5698, %v5696
    %v6084 = vpack.c.bf16 %v5922, %v5920
    %v6085 = vpack.c.bf16 %v5446, %v5445
    %v6086 = vpack.c.bf16 %v5703, %v5701
    %v6087 = vpack.c.bf16 %v5927, %v5925
    %v6088 = vld [vmem:[#allocation8] sm:$0xf]
    %v6089 = vld [vmem:[#allocation8 + $0x4] sm:$0xf]
    %v6090 = vld [vmem:[#allocation8 + $0x8] sm:$0xf]
    %v6091 = vld [vmem:[#allocation8 + $0xc] sm:$0xf]
    %v6092 = vld [vmem:[#allocation8 + $0x10] sm:$0xf]
    %v6093 = vld [vmem:[#allocation8 + $0x14] sm:$0xf]
    %v6094 = vld [vmem:[#allocation8 + $0x18] sm:$0xf]
    %v6095 = vld [vmem:[#allocation8 + $0x1c] sm:$0xf]
    %v6096 = vld [vmem:[#allocation8 + $0x20] sm:$0xf]
    %v6097 = vld [vmem:[#allocation8 + $0x24] sm:$0xf]
    %v6098 = vld [vmem:[#allocation8 + $0x28] sm:$0xf]
    %v6099 = vld [vmem:[#allocation8 + $0x2c] sm:$0xf]
    %v6100 = vld [vmem:[#allocation8 + $0x30] sm:$0xf]
    %v6101 = vld [vmem:[#allocation8 + $0x34] sm:$0xf]
    %v6102 = vld [vmem:[#allocation8 + $0x38] sm:$0xf]
    %v6103 = vld [vmem:[#allocation8 + $0x3c] sm:$0xf]
    %v6104 = vld [vmem:[#allocation8 + $0x40] sm:$0xf]
    %v6105 = vld [vmem:[#allocation8 + $0x44] sm:$0xf]
    %v6106 = vld [vmem:[#allocation8 + $0x48] sm:$0xf]
    %v6107 = vld [vmem:[#allocation8 + $0x4c] sm:$0xf]
    %v6108 = vld [vmem:[#allocation8 + $0x50] sm:$0xf]
    %v6109 = vld [vmem:[#allocation8 + $0x54] sm:$0xf]
    %v6110 = vld [vmem:[#allocation8 + $0x58] sm:$0xf]
    %v6111 = vld [vmem:[#allocation8 + $0x5c] sm:$0xf]
    %v6112 = vld [vmem:[#allocation8 + $0x60] sm:$0xf]
    %v6113 = vld [vmem:[#allocation8 + $0x64] sm:$0xf]
    %v6114 = vld [vmem:[#allocation8 + $0x68] sm:$0xf]
    %v6115 = vld [vmem:[#allocation8 + $0x6c] sm:$0xf]
    %v6116 = vld [vmem:[#allocation8 + $0x70] sm:$0xf]
    %v6117 = vld [vmem:[#allocation8 + $0x74] sm:$0xf]
    %v6118 = vld [vmem:[#allocation8 + $0x78] sm:$0xf]
    %v6119 = vld [vmem:[#allocation8 + $0x7c] sm:$0xf]
    %v6120 = vld [vmem:[#allocation8 + $0x80] sm:$0xf]
    %v6121 = vld [vmem:[#allocation8 + $0x84] sm:$0xf]
    %v6122 = vld [vmem:[#allocation8 + $0x88] sm:$0xf]
    %v6123 = vld [vmem:[#allocation8 + $0x8c] sm:$0xf]
    %v6124 = vld [vmem:[#allocation8 + $0x90] sm:$0xf]
    %v6125 = vld [vmem:[#allocation8 + $0x94] sm:$0xf]
    %v6126 = vld [vmem:[#allocation8 + $0x98] sm:$0xf]
    %v6127 = vld [vmem:[#allocation8 + $0x9c] sm:$0xf]
    %v6128 = vld [vmem:[#allocation8 + $0xa0] sm:$0xf]
    %v6129 = vld [vmem:[#allocation8 + $0xa4] sm:$0xf]
    %v6130 = vld [vmem:[#allocation8 + $0xa8] sm:$0xf]
    %v6131 = vld [vmem:[#allocation8 + $0xac] sm:$0xf]
    %v6132 = vld [vmem:[#allocation8 + $0xb0] sm:$0xf]
    %v6133 = vld [vmem:[#allocation8 + $0xb4] sm:$0xf]
    %v6134 = vld [vmem:[#allocation8 + $0xb8] sm:$0xf]
    %v6135 = vld [vmem:[#allocation8 + $0xbc] sm:$0xf]
    %v6136 = vld [vmem:[%s5287] sm:$0xff]
    %v6137 = vld [vmem:[%s5287 + $0x8] sm:$0xff]
    %v6138 = vld [vmem:[%s5287 + $0x10] sm:$0xff]
    %v6139 = vld [vmem:[%s5287 + $0x18] sm:$0xff]
    %v6140 = vld [vmem:[%s5287 + $0x20] sm:$0xff]
    %v6141 = vld [vmem:[%s5287 + $0x28] sm:$0xff]
    %v6142 = vld [vmem:[%s5287 + $0x30] sm:$0xff]
    %v6143 = vld [vmem:[%s5287 + $0x38] sm:$0xff]
    %v6144 = vld [vmem:[%s5287 + $0x40] sm:$0xff]
    %v6145 = vld [vmem:[%s5287 + $0x48] sm:$0xff]
    %v6146 = vld [vmem:[%s5287 + $0x50] sm:$0xff]
    %v6147 = vld [vmem:[%s5287 + $0x58] sm:$0xff]
    %v6148 = vld [vmem:[%s5287 + $0x60] sm:$0xff]
    %v6149 = vld [vmem:[%s5287 + $0x68] sm:$0xff]
    %v6150 = vld [vmem:[%s5287 + $0x70] sm:$0xff]
    %v6151 = vld [vmem:[%s5287 + $0x78] sm:$0xff]
    %v6152 = vld [vmem:[%s5287 + $0x80] sm:$0xff]
    %v6153 = vld [vmem:[%s5287 + $0x88] sm:$0xff]
    %v6154 = vld [vmem:[%s5287 + $0x90] sm:$0xff]
    %v6155 = vld [vmem:[%s5287 + $0x98] sm:$0xff]
    %v6156 = vld [vmem:[%s5287 + $0xa0] sm:$0xff]
    %v6157 = vld [vmem:[%s5287 + $0xa8] sm:$0xff]
    %v6158 = vld [vmem:[%s5287 + $0xb0] sm:$0xff]
    %v6159 = vld [vmem:[%s5287 + $0xb8] sm:$0xff]
    %v6160 = vld [vmem:[%s5287 + $0xc0] sm:$0xff]
    %v6161 = vld [vmem:[%s5287 + $0xc8] sm:$0xff]
    %v6162 = vld [vmem:[%s5287 + $0xd0] sm:$0xff]
    %v6163 = vld [vmem:[%s5287 + $0xd8] sm:$0xff]
    %v6164 = vld [vmem:[%s5287 + $0xe0] sm:$0xff]
    %v6165 = vld [vmem:[%s5287 + $0xe8] sm:$0xff]
    %v6166 = vld [vmem:[%s5287 + $0xf0] sm:$0xff]
    %v6167 = vld [vmem:[%s5287 + $0xf8] sm:$0xff]
    %v6168 = vld [vmem:[%s5287 + $0x100] sm:$0xff]
    %v6169 = vld [vmem:[%s5287 + $0x108] sm:$0xff]
    %v6170 = vld [vmem:[%s5287 + $0x110] sm:$0xff]
    %v6171 = vld [vmem:[%s5287 + $0x118] sm:$0xff]
    %v6172 = vld [vmem:[%s5287 + $0x120] sm:$0xff]
    %v6173 = vld [vmem:[%s5287 + $0x128] sm:$0xff]
    %v6174 = vld [vmem:[%s5287 + $0x130] sm:$0xff]
    %v6175 = vld [vmem:[%s5287 + $0x138] sm:$0xff]
    %v6176 = vld [vmem:[%s5287 + $0x140] sm:$0xff]
    %v6177 = vld [vmem:[%s5287 + $0x148] sm:$0xff]
    %v6178 = vld [vmem:[%s5287 + $0x150] sm:$0xff]
    %v6179 = vld [vmem:[%s5287 + $0x158] sm:$0xff]
    %v6180 = vld [vmem:[%s5287 + $0x160] sm:$0xff]
    %v6181 = vld [vmem:[%s5287 + $0x168] sm:$0xff]
    %v6182 = vld [vmem:[%s5287 + $0x170] sm:$0xff]
    %v6183 = vld [vmem:[%s5287 + $0x178] sm:$0xff]
    %v6184 = vld [vmem:[%s5287 + $0x1b0] sm:$0xff]
    %v6185 = vld [vmem:[%s5287 + $0x1b8] sm:$0xff]
    %v6186 = vld [vmem:[%s5287 + $0x1c0] sm:$0xff]
    %v6187 = vld [vmem:[%s5287 + $0x1c8] sm:$0xff]
    %v6188 = vld [vmem:[%s5287 + $0x1d0] sm:$0xff]
    %v6189 = vld [vmem:[%s5287 + $0x1d8] sm:$0xff]
    %v6190 = vld [vmem:[%s5287 + $0x1e0] sm:$0xff]
    %v6191 = vld [vmem:[%s5287 + $0x1e8] sm:$0xff]
    %v6192 = vld [vmem:[%s5287 + $0x1f0] sm:$0xff]
    %v6193 = vld [vmem:[%s5287 + $0x1f8] sm:$0xff]
    %v6194 = vld [vmem:[%s5287 + $0x200] sm:$0xff]
    %v6195 = vld [vmem:[%s5287 + $0x208] sm:$0xff]
    %v6196 = vld [vmem:[%s5287 + $0x210] sm:$0xff]
    %v6197 = vld [vmem:[%s5287 + $0x218] sm:$0xff]
    %v6198 = vld [vmem:[%s5287 + $0x220] sm:$0xff]
    %v6199 = vld [vmem:[%s5287 + $0x228] sm:$0xff]
    %v6200 = vld [vmem:[%s5287 + $0x230] sm:$0xff]
    %v6201 = vld [vmem:[%s5287 + $0x238] sm:$0xff]
    %v6202 = vld [vmem:[%s5287 + $0x240] sm:$0xff]
    %v6203 = vld [vmem:[%s5287 + $0x248] sm:$0xff]
    %v6204 = vld [vmem:[%s5287 + $0x250] sm:$0xff]
    %v6205 = vld [vmem:[%s5287 + $0x258] sm:$0xff]
    %v6206 = vld [vmem:[%s5287 + $0x260] sm:$0xff]
    %v6207 = vld [vmem:[%s5287 + $0x268] sm:$0xff]
    %v6208 = vld [vmem:[%s5287 + $0x270] sm:$0xff]
    %v6209 = vld [vmem:[%s5287 + $0x278] sm:$0xff]
    %v6210 = vld [vmem:[%s5287 + $0x280] sm:$0xff]
    %v6211 = vld [vmem:[%s5287 + $0x288] sm:$0xff]
    %v6212 = vld [vmem:[%s5287 + $0x290] sm:$0xff]
    %v6213 = vld [vmem:[%s5287 + $0x298] sm:$0xff]
    %v6214 = vld [vmem:[%s5287 + $0x2a0] sm:$0xff]
    %v6215 = vld [vmem:[%s5287 + $0x2a8] sm:$0xff]
    %v6216 = vld [vmem:[%s5287 + $0x2b0] sm:$0xff]
    %v6217 = vld [vmem:[%s5287 + $0x2b8] sm:$0xff]
    %v6218 = vld [vmem:[%s5287 + $0x2c0] sm:$0xff]
    %v6219 = vld [vmem:[%s5287 + $0x2c8] sm:$0xff]
    %v6220 = vld [vmem:[%s5287 + $0x2d0] sm:$0xff]
    %v6221 = vld [vmem:[%s5287 + $0x2d8] sm:$0xff]
    %v6222 = vld [vmem:[%s5287 + $0x2e0] sm:$0xff]
    %v6223 = vld [vmem:[%s5287 + $0x2e8] sm:$0xff]
    %v6224 = vld [vmem:[%s5287 + $0x2f0] sm:$0xff]
    %v6225 = vld [vmem:[%s5287 + $0x2f8] sm:$0xff]
    %v6226 = vld [vmem:[%s5287 + $0x300] sm:$0xff]
    %v6227 = vld [vmem:[%s5287 + $0x308] sm:$0xff]
    %v6228 = vld [vmem:[%s5287 + $0x310] sm:$0xff]
    %v6229 = vld [vmem:[%s5287 + $0x318] sm:$0xff]
    %v6230 = vld [vmem:[%s5287 + $0x320] sm:$0xff]
    %v6231 = vld [vmem:[%s5287 + $0x328] sm:$0xff]
    %v6328 = vrot.slane %v6136, 1
    %v6329 = vrot.slane %v6137, 1
    %v6330 = vsel %vm261, %v6328, %v6329
    %v6331 = vrot.slane %v6138, 1
    %v6332 = vsel %vm261, %v6329, %v6331
    %v6333 = vrot.slane %v6139, 1
    %v6334 = vrot.slane %v6140, 1
    %v6335 = vsel %vm261, %v6333, %v6334
    %v6336 = vrot.slane %v6141, 1
    %v6337 = vsel %vm261, %v6334, %v6336
    %v6338 = vrot.slane %v6142, 1
    %v6339 = vrot.slane %v6143, 1
    %v6340 = vsel %vm261, %v6338, %v6339
    %v6341 = vrot.slane %v6144, 1
    %v6342 = vsel %vm261, %v6339, %v6341
    %v6343 = vrot.slane %v6145, 1
    %v6344 = vrot.slane %v6146, 1
    %v6345 = vsel %vm261, %v6343, %v6344
    %v6346 = vrot.slane %v6147, 1
    %v6347 = vsel %vm261, %v6344, %v6346
    %v6348 = vrot.slane %v6148, 1
    %v6349 = vrot.slane %v6149, 1
    %v6350 = vsel %vm261, %v6348, %v6349
    %v6351 = vrot.slane %v6150, 1
    %v6352 = vsel %vm261, %v6349, %v6351
    %v6353 = vrot.slane %v6151, 1
    %v6354 = vrot.slane %v6152, 1
    %v6355 = vsel %vm261, %v6353, %v6354
    %v6356 = vrot.slane %v6153, 1
    %v6357 = vsel %vm261, %v6354, %v6356
    %v6358 = vrot.slane %v6154, 1
    %v6359 = vrot.slane %v6155, 1
    %v6360 = vsel %vm261, %v6358, %v6359
    %v6361 = vrot.slane %v6156, 1
    %v6362 = vsel %vm261, %v6359, %v6361
    %v6363 = vrot.slane %v6157, 1
    %v6364 = vrot.slane %v6158, 1
    %v6365 = vsel %vm261, %v6363, %v6364
    %v6366 = vrot.slane %v6159, 1
    %v6367 = vsel %vm261, %v6364, %v6366
    %v6368 = vrot.slane %v6160, 1
    %v6369 = vrot.slane %v6161, 1
    %v6370 = vsel %vm261, %v6368, %v6369
    %v6371 = vrot.slane %v6162, 1
    %v6372 = vsel %vm261, %v6369, %v6371
    %v6373 = vrot.slane %v6163, 1
    %v6374 = vrot.slane %v6164, 1
    %v6375 = vsel %vm261, %v6373, %v6374
    %v6376 = vrot.slane %v6165, 1
    %v6377 = vsel %vm261, %v6374, %v6376
    %v6378 = vrot.slane %v6166, 1
    %v6379 = vrot.slane %v6167, 1
    %v6380 = vsel %vm261, %v6378, %v6379
    %v6381 = vrot.slane %v6168, 1
    %v6382 = vsel %vm261, %v6379, %v6381
    %v6383 = vrot.slane %v6169, 1
    %v6384 = vrot.slane %v6170, 1
    %v6385 = vsel %vm261, %v6383, %v6384
    %v6386 = vrot.slane %v6171, 1
    %v6387 = vsel %vm261, %v6384, %v6386
    %v6388 = vrot.slane %v6172, 1
    %v6389 = vrot.slane %v6173, 1
    %v6390 = vsel %vm261, %v6388, %v6389
    %v6391 = vrot.slane %v6174, 1
    %v6392 = vsel %vm261, %v6389, %v6391
    %v6393 = vrot.slane %v6175, 1
    %v6394 = vrot.slane %v6176, 1
    %v6395 = vsel %vm261, %v6393, %v6394
    %v6396 = vrot.slane %v6177, 1
    %v6397 = vsel %vm261, %v6394, %v6396
    %v6398 = vrot.slane %v6178, 1
    %v6399 = vrot.slane %v6179, 1
    %v6400 = vsel %vm261, %v6398, %v6399
    %v6401 = vrot.slane %v6180, 1
    %v6402 = vsel %vm261, %v6399, %v6401
    %v6403 = vrot.slane %v6181, 1
    %v6404 = vrot.slane %v6182, 1
    %v6405 = vsel %vm261, %v6403, %v6404
    %v6406 = vrot.slane %v6183, 1
    %v6407 = vsel %vm261, %v6404, %v6406
    %v6408 = vrot.slane %v6184, 1
    %v6409 = vrot.slane %v6185, 1
    %v6410 = vsel %vm261, %v6408, %v6409
    %v6411 = vrot.slane %v6186, 1
    %v6412 = vsel %vm261, %v6409, %v6411
    %v6413 = vrot.slane %v6187, 1
    %v6414 = vrot.slane %v6188, 1
    %v6415 = vsel %vm261, %v6413, %v6414
    %v6416 = vrot.slane %v6189, 1
    %v6417 = vsel %vm261, %v6414, %v6416
    %v6418 = vrot.slane %v6190, 1
    %v6419 = vrot.slane %v6191, 1
    %v6420 = vsel %vm261, %v6418, %v6419
    %v6421 = vrot.slane %v6192, 1
    %v6422 = vsel %vm261, %v6419, %v6421
    %v6423 = vrot.slane %v6193, 1
    %v6424 = vrot.slane %v6194, 1
    %v6425 = vsel %vm261, %v6423, %v6424
    %v6426 = vrot.slane %v6195, 1
    %v6427 = vsel %vm261, %v6424, %v6426
    %v6428 = vrot.slane %v6196, 1
    %v6429 = vrot.slane %v6197, 1
    %v6430 = vsel %vm261, %v6428, %v6429
    %v6431 = vrot.slane %v6198, 1
    %v6432 = vsel %vm261, %v6429, %v6431
    %v6433 = vrot.slane %v6199, 1
    %v6434 = vrot.slane %v6200, 1
    %v6435 = vsel %vm261, %v6433, %v6434
    %v6436 = vrot.slane %v6201, 1
    %v6437 = vsel %vm261, %v6434, %v6436
    %v6438 = vrot.slane %v6202, 1
    %v6439 = vrot.slane %v6203, 1
    %v6440 = vsel %vm261, %v6438, %v6439
    %v6441 = vrot.slane %v6204, 1
    %v6442 = vsel %vm261, %v6439, %v6441
    %v6443 = vrot.slane %v6205, 1
    %v6444 = vrot.slane %v6206, 1
    %v6445 = vsel %vm261, %v6443, %v6444
    %v6446 = vrot.slane %v6207, 1
    %v6447 = vsel %vm261, %v6444, %v6446
    %v6448 = vrot.slane %v6208, 1
    %v6449 = vrot.slane %v6209, 1
    %v6450 = vsel %vm261, %v6448, %v6449
    %v6451 = vrot.slane %v6210, 1
    %v6452 = vsel %vm261, %v6449, %v6451
    %v6453 = vrot.slane %v6211, 1
    %v6454 = vrot.slane %v6212, 1
    %v6455 = vsel %vm261, %v6453, %v6454
    %v6456 = vrot.slane %v6213, 1
    %v6457 = vsel %vm261, %v6454, %v6456
    %v6458 = vrot.slane %v6214, 1
    %v6459 = vrot.slane %v6215, 1
    %v6460 = vsel %vm261, %v6458, %v6459
    %v6461 = vrot.slane %v6216, 1
    %v6462 = vsel %vm261, %v6459, %v6461
    %v6463 = vrot.slane %v6217, 1
    %v6464 = vrot.slane %v6218, 1
    %v6465 = vsel %vm261, %v6463, %v6464
    %v6466 = vrot.slane %v6219, 1
    %v6467 = vsel %vm261, %v6464, %v6466
    %v6468 = vrot.slane %v6220, 1
    %v6469 = vrot.slane %v6221, 1
    %v6470 = vsel %vm261, %v6468, %v6469
    %v6471 = vrot.slane %v6222, 1
    %v6472 = vsel %vm261, %v6469, %v6471
    %v6473 = vrot.slane %v6223, 1
    %v6474 = vrot.slane %v6224, 1
    %v6475 = vsel %vm261, %v6473, %v6474
    %v6476 = vrot.slane %v6225, 1
    %v6477 = vsel %vm261, %v6474, %v6476
    %v6478 = vrot.slane %v6226, 1
    %v6479 = vrot.slane %v6227, 1
    %v6480 = vsel %vm261, %v6478, %v6479
    %v6481 = vrot.slane %v6228, 1
    %v6482 = vsel %vm261, %v6479, %v6481
    %v6483 = vrot.slane %v6229, 1
    %v6484 = vrot.slane %v6230, 1
    %v6485 = vsel %vm261, %v6483, %v6484
    %v6486 = vrot.slane %v6231, 1
    %v6487 = vsel %vm261, %v6484, %v6486
    %v6552 = vrot.slane %v6136, 2
    %v6553 = vrot.slane %v6137, 2
    %v6554 = vsel %vm486, %v6552, %v6553
    %v6555 = vrot.slane %v6138, 2
    %v6556 = vsel %vm486, %v6553, %v6555
    %v6557 = vrot.slane %v6139, 2
    %v6558 = vrot.slane %v6140, 2
    %v6559 = vsel %vm486, %v6557, %v6558
    %v6560 = vrot.slane %v6141, 2
    %v6561 = vsel %vm486, %v6558, %v6560
    %v6562 = vrot.slane %v6142, 2
    %v6563 = vrot.slane %v6143, 2
    %v6564 = vsel %vm486, %v6562, %v6563
    %v6565 = vrot.slane %v6144, 2
    %v6566 = vsel %vm486, %v6563, %v6565
    %v6567 = vrot.slane %v6145, 2
    %v6568 = vrot.slane %v6146, 2
    %v6569 = vsel %vm486, %v6567, %v6568
    %v6570 = vrot.slane %v6147, 2
    %v6571 = vsel %vm486, %v6568, %v6570
    %v6572 = vrot.slane %v6148, 2
    %v6573 = vrot.slane %v6149, 2
    %v6574 = vsel %vm486, %v6572, %v6573
    %v6575 = vrot.slane %v6150, 2
    %v6576 = vsel %vm486, %v6573, %v6575
    %v6577 = vrot.slane %v6151, 2
    %v6578 = vrot.slane %v6152, 2
    %v6579 = vsel %vm486, %v6577, %v6578
    %v6580 = vrot.slane %v6153, 2
    %v6581 = vsel %vm486, %v6578, %v6580
    %v6582 = vrot.slane %v6154, 2
    %v6583 = vrot.slane %v6155, 2
    %v6584 = vsel %vm486, %v6582, %v6583
    %v6585 = vrot.slane %v6156, 2
    %v6586 = vsel %vm486, %v6583, %v6585
    %v6587 = vrot.slane %v6157, 2
    %v6588 = vrot.slane %v6158, 2
    %v6589 = vsel %vm486, %v6587, %v6588
    %v6590 = vrot.slane %v6159, 2
    %v6591 = vsel %vm486, %v6588, %v6590
    %v6592 = vrot.slane %v6160, 2
    %v6593 = vrot.slane %v6161, 2
    %v6594 = vsel %vm486, %v6592, %v6593
    %v6595 = vrot.slane %v6162, 2
    %v6596 = vsel %vm486, %v6593, %v6595
    %v6597 = vrot.slane %v6163, 2
    %v6598 = vrot.slane %v6164, 2
    %v6599 = vsel %vm486, %v6597, %v6598
    %v6600 = vrot.slane %v6165, 2
    %v6601 = vsel %vm486, %v6598, %v6600
    %v6602 = vrot.slane %v6166, 2
    %v6603 = vrot.slane %v6167, 2
    %v6604 = vsel %vm486, %v6602, %v6603
    %v6605 = vrot.slane %v6168, 2
    %v6606 = vsel %vm486, %v6603, %v6605
    %v6607 = vrot.slane %v6169, 2
    %v6608 = vrot.slane %v6170, 2
    %v6609 = vsel %vm486, %v6607, %v6608
    %v6610 = vrot.slane %v6171, 2
    %v6611 = vsel %vm486, %v6608, %v6610
    %v6612 = vrot.slane %v6172, 2
    %v6613 = vrot.slane %v6173, 2
    %v6614 = vsel %vm486, %v6612, %v6613
    %v6615 = vrot.slane %v6174, 2
    %v6616 = vsel %vm486, %v6613, %v6615
    %v6617 = vrot.slane %v6175, 2
    %v6618 = vrot.slane %v6176, 2
    %v6619 = vsel %vm486, %v6617, %v6618
    %v6620 = vrot.slane %v6177, 2
    %v6621 = vsel %vm486, %v6618, %v6620
    %v6622 = vrot.slane %v6178, 2
    %v6623 = vrot.slane %v6179, 2
    %v6624 = vsel %vm486, %v6622, %v6623
    %v6625 = vrot.slane %v6180, 2
    %v6626 = vsel %vm486, %v6623, %v6625
    %v6627 = vrot.slane %v6181, 2
    %v6628 = vrot.slane %v6182, 2
    %v6629 = vsel %vm486, %v6627, %v6628
    %v6630 = vrot.slane %v6183, 2
    %v6631 = vsel %vm486, %v6628, %v6630
    %v6632 = vrot.slane %v6184, 2
    %v6633 = vrot.slane %v6185, 2
    %v6634 = vsel %vm486, %v6632, %v6633
    %v6635 = vrot.slane %v6186, 2
    %v6636 = vsel %vm486, %v6633, %v6635
    %v6637 = vrot.slane %v6187, 2
    %v6638 = vrot.slane %v6188, 2
    %v6639 = vsel %vm486, %v6637, %v6638
    %v6640 = vrot.slane %v6189, 2
    %v6641 = vsel %vm486, %v6638, %v6640
    %v6642 = vrot.slane %v6190, 2
    %v6643 = vrot.slane %v6191, 2
    %v6644 = vsel %vm486, %v6642, %v6643
    %v6645 = vrot.slane %v6192, 2
    %v6646 = vsel %vm486, %v6643, %v6645
    %v6647 = vrot.slane %v6193, 2
    %v6648 = vrot.slane %v6194, 2
    %v6649 = vsel %vm486, %v6647, %v6648
    %v6650 = vrot.slane %v6195, 2
    %v6651 = vsel %vm486, %v6648, %v6650
    %v6652 = vrot.slane %v6196, 2
    %v6653 = vrot.slane %v6197, 2
    %v6654 = vsel %vm486, %v6652, %v6653
    %v6655 = vrot.slane %v6198, 2
    %v6656 = vsel %vm486, %v6653, %v6655
    %v6657 = vrot.slane %v6199, 2
    %v6658 = vrot.slane %v6200, 2
    %v6659 = vsel %vm486, %v6657, %v6658
    %v6660 = vrot.slane %v6201, 2
    %v6661 = vsel %vm486, %v6658, %v6660
    %v6662 = vrot.slane %v6202, 2
    %v6663 = vrot.slane %v6203, 2
    %v6664 = vsel %vm486, %v6662, %v6663
    %v6665 = vrot.slane %v6204, 2
    %v6666 = vsel %vm486, %v6663, %v6665
    %v6667 = vrot.slane %v6205, 2
    %v6668 = vrot.slane %v6206, 2
    %v6669 = vsel %vm486, %v6667, %v6668
    %v6670 = vrot.slane %v6207, 2
    %v6671 = vsel %vm486, %v6668, %v6670
    %v6672 = vrot.slane %v6208, 2
    %v6673 = vrot.slane %v6209, 2
    %v6674 = vsel %vm486, %v6672, %v6673
    %v6675 = vrot.slane %v6210, 2
    %v6676 = vsel %vm486, %v6673, %v6675
    %v6677 = vrot.slane %v6211, 2
    %v6678 = vrot.slane %v6212, 2
    %v6679 = vsel %vm486, %v6677, %v6678
    %v6680 = vrot.slane %v6213, 2
    %v6681 = vsel %vm486, %v6678, %v6680
    %v6682 = vrot.slane %v6214, 2
    %v6683 = vrot.slane %v6215, 2
    %v6684 = vsel %vm486, %v6682, %v6683
    %v6685 = vrot.slane %v6216, 2
    %v6686 = vsel %vm486, %v6683, %v6685
    %v6687 = vrot.slane %v6217, 2
    %v6688 = vrot.slane %v6218, 2
    %v6689 = vsel %vm486, %v6687, %v6688
    %v6690 = vrot.slane %v6219, 2
    %v6691 = vsel %vm486, %v6688, %v6690
    %v6692 = vrot.slane %v6220, 2
    %v6693 = vrot.slane %v6221, 2
    %v6694 = vsel %vm486, %v6692, %v6693
    %v6695 = vrot.slane %v6222, 2
    %v6696 = vsel %vm486, %v6693, %v6695
    %v6697 = vrot.slane %v6223, 2
    %v6698 = vrot.slane %v6224, 2
    %v6699 = vsel %vm486, %v6697, %v6698
    %v6700 = vrot.slane %v6225, 2
    %v6701 = vsel %vm486, %v6698, %v6700
    %v6702 = vrot.slane %v6226, 2
    %v6703 = vrot.slane %v6227, 2
    %v6704 = vsel %vm486, %v6702, %v6703
    %v6705 = vrot.slane %v6228, 2
    %v6706 = vsel %vm486, %v6703, %v6705
    %v6707 = vrot.slane %v6229, 2
    %v6708 = vrot.slane %v6230, 2
    %v6709 = vsel %vm486, %v6707, %v6708
    %v6710 = vrot.slane %v6231, 2
    %v6711 = vsel %vm486, %v6708, %v6710
    %v6776 = vpack.c.bf16 %v6137, %v6136
    %v6777 = vpack.c.bf16 %v6332, %v6330
    %v6778 = vpack.c.bf16 %v6556, %v6554
    %v6779 = vpack.c.bf16 %v6140, %v6139
    %v6780 = vpack.c.bf16 %v6337, %v6335
    %v6781 = vpack.c.bf16 %v6561, %v6559
    %v6782 = vpack.c.bf16 %v6143, %v6142
    %v6783 = vpack.c.bf16 %v6342, %v6340
    %v6784 = vpack.c.bf16 %v6566, %v6564
    %v6785 = vpack.c.bf16 %v6146, %v6145
    %v6786 = vpack.c.bf16 %v6347, %v6345
    %v6787 = vpack.c.bf16 %v6571, %v6569
    %v6788 = vpack.c.bf16 %v6149, %v6148
    %v6789 = vpack.c.bf16 %v6352, %v6350
    %v6790 = vpack.c.bf16 %v6576, %v6574
    %v6791 = vpack.c.bf16 %v6152, %v6151
    %v6792 = vpack.c.bf16 %v6357, %v6355
    %v6793 = vpack.c.bf16 %v6581, %v6579
    %v6794 = vpack.c.bf16 %v6155, %v6154
    %v6795 = vpack.c.bf16 %v6362, %v6360
    %v6796 = vpack.c.bf16 %v6586, %v6584
    %v6797 = vpack.c.bf16 %v6158, %v6157
    %v6798 = vpack.c.bf16 %v6367, %v6365
    %v6799 = vpack.c.bf16 %v6591, %v6589
    %v6800 = vpack.c.bf16 %v6161, %v6160
    %v6801 = vpack.c.bf16 %v6372, %v6370
    %v6802 = vpack.c.bf16 %v6596, %v6594
    %v6803 = vpack.c.bf16 %v6164, %v6163
    %v6804 = vpack.c.bf16 %v6377, %v6375
    %v6805 = vpack.c.bf16 %v6601, %v6599
    %v6806 = vpack.c.bf16 %v6167, %v6166
    %v6807 = vpack.c.bf16 %v6382, %v6380
    %v6808 = vpack.c.bf16 %v6606, %v6604
    %v6809 = vpack.c.bf16 %v6170, %v6169
    %v6810 = vpack.c.bf16 %v6387, %v6385
    %v6811 = vpack.c.bf16 %v6611, %v6609
    %v6812 = vpack.c.bf16 %v6173, %v6172
    %v6813 = vpack.c.bf16 %v6392, %v6390
    %v6814 = vpack.c.bf16 %v6616, %v6614
    %v6815 = vpack.c.bf16 %v6176, %v6175
    %v6816 = vpack.c.bf16 %v6397, %v6395
    %v6817 = vpack.c.bf16 %v6621, %v6619
    %v6818 = vpack.c.bf16 %v6179, %v6178
    %v6819 = vpack.c.bf16 %v6402, %v6400
    %v6820 = vpack.c.bf16 %v6626, %v6624
    %v6821 = vpack.c.bf16 %v6182, %v6181
    %v6822 = vpack.c.bf16 %v6407, %v6405
    %v6823 = vpack.c.bf16 %v6631, %v6629
    %v6824 = vpack.c.bf16 %v6185, %v6184
    %v6825 = vpack.c.bf16 %v6412, %v6410
    %v6826 = vpack.c.bf16 %v6636, %v6634
    %v6827 = vpack.c.bf16 %v6188, %v6187
    %v6828 = vpack.c.bf16 %v6417, %v6415
    %v6829 = vpack.c.bf16 %v6641, %v6639
    %v6830 = vpack.c.bf16 %v6191, %v6190
    %v6831 = vpack.c.bf16 %v6422, %v6420
    %v6832 = vpack.c.bf16 %v6646, %v6644
    %v6833 = vpack.c.bf16 %v6194, %v6193
    %v6834 = vpack.c.bf16 %v6427, %v6425
    %v6835 = vpack.c.bf16 %v6651, %v6649
    %v6836 = vpack.c.bf16 %v6197, %v6196
    %v6837 = vpack.c.bf16 %v6432, %v6430
    %v6838 = vpack.c.bf16 %v6656, %v6654
    %v6839 = vpack.c.bf16 %v6200, %v6199
    %v6840 = vpack.c.bf16 %v6437, %v6435
    %v6841 = vpack.c.bf16 %v6661, %v6659
    %v6842 = vpack.c.bf16 %v6203, %v6202
    %v6843 = vpack.c.bf16 %v6442, %v6440
    %v6844 = vpack.c.bf16 %v6666, %v6664
    %v6845 = vpack.c.bf16 %v6206, %v6205
    %v6846 = vpack.c.bf16 %v6447, %v6445
    %v6847 = vpack.c.bf16 %v6671, %v6669
    %v6848 = vpack.c.bf16 %v6209, %v6208
    %v6849 = vpack.c.bf16 %v6452, %v6450
    %v6850 = vpack.c.bf16 %v6676, %v6674
    %v6851 = vpack.c.bf16 %v6212, %v6211
    %v6852 = vpack.c.bf16 %v6457, %v6455
    %v6853 = vpack.c.bf16 %v6681, %v6679
    %v6854 = vpack.c.bf16 %v6215, %v6214
    %v6855 = vpack.c.bf16 %v6462, %v6460
    %v6856 = vpack.c.bf16 %v6686, %v6684
    %v6857 = vpack.c.bf16 %v6218, %v6217
    %v6858 = vpack.c.bf16 %v6467, %v6465
    %v6859 = vpack.c.bf16 %v6691, %v6689
    %v6860 = vpack.c.bf16 %v6221, %v6220
    %v6861 = vpack.c.bf16 %v6472, %v6470
    %v6862 = vpack.c.bf16 %v6696, %v6694
    %v6863 = vpack.c.bf16 %v6224, %v6223
    %v6864 = vpack.c.bf16 %v6477, %v6475
    %v6865 = vpack.c.bf16 %v6701, %v6699
    %v6866 = vpack.c.bf16 %v6227, %v6226
    %v6867 = vpack.c.bf16 %v6482, %v6480
    %v6868 = vpack.c.bf16 %v6706, %v6704
    %v6869 = vpack.c.bf16 %v6230, %v6229
    %v6870 = vpack.c.bf16 %v6487, %v6485
    %v6871 = vpack.c.bf16 %v6711, %v6709
    %s6872 = scalar_lea.vmem [#allocation8], 192
    %v6873 = vld [vmem:[%s6872] sm:$0xf]
    %v6874 = vld [vmem:[%s6872 + $0x4] sm:$0xf]
    %v6875 = vld [vmem:[%s6872 + $0x8] sm:$0xf]
    %v6876 = vld [vmem:[%s6872 + $0xc] sm:$0xf]
    %v6877 = vld [vmem:[%s6872 + $0x10] sm:$0xf]
    %v6878 = vld [vmem:[%s6872 + $0x14] sm:$0xf]
    %v6879 = vld [vmem:[%s6872 + $0x18] sm:$0xf]
    %v6880 = vld [vmem:[%s6872 + $0x1c] sm:$0xf]
    %v6881 = vld [vmem:[%s6872 + $0x20] sm:$0xf]
    %v6882 = vld [vmem:[%s6872 + $0x24] sm:$0xf]
    %v6883 = vld [vmem:[%s6872 + $0x28] sm:$0xf]
    %v6884 = vld [vmem:[%s6872 + $0x2c] sm:$0xf]
    %v6885 = vld [vmem:[%s6872 + $0x30] sm:$0xf]
    %v6886 = vld [vmem:[%s6872 + $0x34] sm:$0xf]
    %v6887 = vld [vmem:[%s6872 + $0x38] sm:$0xf]
    %v6888 = vld [vmem:[%s6872 + $0x3c] sm:$0xf]
    %v6889 = vld [vmem:[%s6872 + $0x40] sm:$0xf]
    %v6890 = vld [vmem:[%s6872 + $0x44] sm:$0xf]
    %v6891 = vld [vmem:[%s6872 + $0x48] sm:$0xf]
    %v6892 = vld [vmem:[%s6872 + $0x4c] sm:$0xf]
    %v6893 = vld [vmem:[%s6872 + $0x50] sm:$0xf]
    %v6894 = vld [vmem:[%s6872 + $0x54] sm:$0xf]
    %v6895 = vld [vmem:[%s6872 + $0x58] sm:$0xf]
    %v6896 = vld [vmem:[%s6872 + $0x5c] sm:$0xf]
    %v6897 = vld [vmem:[%s6872 + $0x60] sm:$0xf]
    %v6898 = vld [vmem:[%s6872 + $0x64] sm:$0xf]
    %v6899 = vld [vmem:[%s6872 + $0x68] sm:$0xf]
    %v6900 = vld [vmem:[%s6872 + $0x6c] sm:$0xf]
    %v6901 = vld [vmem:[%s6872 + $0x70] sm:$0xf]
    %v6902 = vld [vmem:[%s6872 + $0x74] sm:$0xf]
    %v6903 = vld [vmem:[%s6872 + $0x78] sm:$0xf]
    %v6904 = vld [vmem:[%s6872 + $0x7c] sm:$0xf]
    %v6905 = vld [vmem:[%s6872 + $0x80] sm:$0xf]
    %v6906 = vld [vmem:[%s6872 + $0x84] sm:$0xf]
    %v6907 = vld [vmem:[%s6872 + $0x88] sm:$0xf]
    %v6908 = vld [vmem:[%s6872 + $0x8c] sm:$0xf]
    %v6909 = vld [vmem:[%s6872 + $0x90] sm:$0xf]
    %v6910 = vld [vmem:[%s6872 + $0x94] sm:$0xf]
    %v6911 = vld [vmem:[%s6872 + $0x98] sm:$0xf]
    %v6912 = vld [vmem:[%s6872 + $0x9c] sm:$0xf]
    %v6913 = vld [vmem:[%s6872 + $0xa0] sm:$0xf]
    %v6914 = vld [vmem:[%s6872 + $0xa4] sm:$0xf]
    %v6915 = vld [vmem:[%s6872 + $0xa8] sm:$0xf]
    %v6916 = vld [vmem:[%s6872 + $0xac] sm:$0xf]
    %v6917 = vld [vmem:[%s6872 + $0xb0] sm:$0xf]
    %v6918 = vld [vmem:[%s6872 + $0xb4] sm:$0xf]
    %v6919 = vld [vmem:[%s6872 + $0xb8] sm:$0xf]
    %v6920 = vld [vmem:[%s6872 + $0xbc] sm:$0xf]
    %v6969 = vunpack.c.l.b16 %v6873
    %v6970 = vunpack.c.l.b16 %v6874
    %v6971 = vunpack.c.l.b16 %v6875
    %v6972 = vunpack.c.l.b16 %v6876
    %v6973 = vunpack.c.l.b16 %v6877
    %v6974 = vunpack.c.l.b16 %v6878
    %v6975 = vunpack.c.l.b16 %v6879
    %v6976 = vunpack.c.l.b16 %v6880
    %v6977 = vunpack.c.l.b16 %v6881
    %v6978 = vunpack.c.l.b16 %v6882
    %v6979 = vunpack.c.l.b16 %v6883
    %v6980 = vunpack.c.l.b16 %v6884
    %v6981 = vunpack.c.l.b16 %v6885
    %v6982 = vunpack.c.l.b16 %v6886
    %v6983 = vunpack.c.l.b16 %v6887
    %v6984 = vunpack.c.l.b16 %v6888
    %v6985 = vunpack.c.l.b16 %v6889
    %v6986 = vunpack.c.l.b16 %v6890
    %v6987 = vunpack.c.l.b16 %v6891
    %v6988 = vunpack.c.l.b16 %v6892
    %v6989 = vunpack.c.l.b16 %v6893
    %v6990 = vunpack.c.l.b16 %v6894
    %v6991 = vunpack.c.l.b16 %v6895
    %v6992 = vunpack.c.l.b16 %v6896
    %v6993 = vunpack.c.l.b16 %v6897
    %v6994 = vunpack.c.l.b16 %v6898
    %v6995 = vunpack.c.l.b16 %v6899
    %v6996 = vunpack.c.l.b16 %v6900
    %v6997 = vunpack.c.l.b16 %v6901
    %v6998 = vunpack.c.l.b16 %v6902
    %v6999 = vunpack.c.l.b16 %v6903
    %v7000 = vunpack.c.l.b16 %v6904
    %v7001 = vunpack.c.l.b16 %v6905
    %v7002 = vunpack.c.l.b16 %v6906
    %v7003 = vunpack.c.l.b16 %v6907
    %v7004 = vunpack.c.l.b16 %v6908
    %v7005 = vunpack.c.l.b16 %v6909
    %v7006 = vunpack.c.l.b16 %v6910
    %v7007 = vunpack.c.l.b16 %v6911
    %v7008 = vunpack.c.l.b16 %v6912
    %v7009 = vunpack.c.l.b16 %v6913
    %v7010 = vunpack.c.l.b16 %v6914
    %v7011 = vunpack.c.l.b16 %v6915
    %v7012 = vunpack.c.l.b16 %v6916
    %v7013 = vunpack.c.l.b16 %v6917
    %v7014 = vunpack.c.l.b16 %v6918
    %v7015 = vunpack.c.l.b16 %v6919
    %v7016 = vunpack.c.l.b16 %v6920
    %v7017 = vpack.c.b16 %v6970, %v6969
    %v7018 = vpack.c.b16 %v6972, %v6971
    %v7019 = vpack.c.b16 %v6974, %v6973
    %v7020 = vpack.c.b16 %v6976, %v6975
    %v7021 = vpack.c.b16 %v6978, %v6977
    %v7022 = vpack.c.b16 %v6980, %v6979
    %v7023 = vpack.c.b16 %v6982, %v6981
    %v7024 = vpack.c.b16 %v6984, %v6983
    %v7025 = vpack.c.b16 %v6986, %v6985
    %v7026 = vpack.c.b16 %v6988, %v6987
    %v7027 = vpack.c.b16 %v6990, %v6989
    %v7028 = vpack.c.b16 %v6992, %v6991
    %v7029 = vpack.c.b16 %v6994, %v6993
    %v7030 = vpack.c.b16 %v6996, %v6995
    %v7031 = vpack.c.b16 %v6998, %v6997
    %v7032 = vpack.c.b16 %v7000, %v6999
    %v7033 = vpack.c.b16 %v7002, %v7001
    %v7034 = vpack.c.b16 %v7004, %v7003
    %v7035 = vpack.c.b16 %v7006, %v7005
    %v7036 = vpack.c.b16 %v7008, %v7007
    %v7037 = vpack.c.b16 %v7010, %v7009
    %v7038 = vpack.c.b16 %v7012, %v7011
    %v7039 = vpack.c.b16 %v7014, %v7013
    %v7040 = vpack.c.b16 %v7016, %v7015
    %7065 = vmatprep.subr.bf16.mxu0 0
    %7066 = vmatpush1.bf16.msra.mxu0 %v7024
    %7067 = vmatprep.subr.bf16.mxu0 0
    %7068 = vmatpush1.bf16.msra.mxu0 %v7023
    %7069 = vmatprep.subr.bf16.mxu0 0
    %7070 = vmatpush1.bf16.msra.mxu0 %v7022
    %7071 = vmatprep.subr.bf16.mxu0 0
    %7072 = vmatpush1.bf16.msra.mxu0 %v7021
    %7073 = vmatprep.subr.bf16.mxu0 0
    %7074 = vmatpush1.bf16.msra.mxu0 %v7020
    %7075 = vmatprep.subr.bf16.mxu0 0
    %7076 = vmatpush1.bf16.msra.mxu0 %v7019
    %7077 = vmatprep.subr.bf16.mxu0 0
    %7078 = vmatpush1.bf16.msra.mxu0 %v7018
    %7079 = vmatprep.subr.bf16.mxu0 0
    %7080 = vmatpush1.bf16.msra.mxu0 %v7017
    %7081 = vmatprep.subr.bf16.mxu0 0
    %7082 = vmatpush2.bf16.msra.mxu0 %v7032
    %7083 = vmatprep.subr.bf16.mxu0 0
    %7084 = vmatpush2.bf16.msra.mxu0 %v7031
    %7085 = vmatprep.subr.bf16.mxu0 0
    %7086 = vmatpush2.bf16.msra.mxu0 %v7030
    %7087 = vmatprep.subr.bf16.mxu0 0
    %7088 = vmatpush2.bf16.msra.mxu0 %v7029
    %7089 = vmatprep.subr.bf16.mxu0 0
    %7090 = vmatpush2.bf16.msra.mxu0 %v7028
    %7091 = vmatprep.subr.bf16.mxu0 0
    %7092 = vmatpush2.bf16.msra.mxu0 %v7027
    %7093 = vmatprep.subr.bf16.mxu0 0
    %7094 = vmatpush2.bf16.msra.mxu0 %v7026
    %7095 = vmatprep.subr.bf16.mxu0 0
    %7096 = vmatpush2.bf16.msra.mxu0 %v7025
    %7097 = vmatprep.mubr.bf16.mxu0 %v6777
    %7098 = vmatmul.mubr.bf16.gmra.mxu0 %v6776
    %v7099 = vpop.f32.mrf.mxu0
    %v7100 = vadd.f32 0.0, %v7099
    %v7101 = vpop.f32.mrf.mxu0
    %v7102 = vpop.f32.mrf.mxu0
    %v7103 = vadd.f32 0.0, %v7102
    %v7104 = vpop.f32.mrf.mxu0
    %7105 = vmatprep.mubr.bf16.mxu0 %v6780
    %7106 = vmatmul.mubr.bf16.gmra.mxu0 %v6779
    %v7107 = vpop.f32.mrf.mxu0
    %v7108 = vadd.f32 0.0, %v7107
    %v7109 = vpop.f32.mrf.mxu0
    %v7110 = vpop.f32.mrf.mxu0
    %v7111 = vadd.f32 0.0, %v7110
    %v7112 = vpop.f32.mrf.mxu0
    %7113 = vmatprep.mubr.bf16.mxu0 %v6783
    %7114 = vmatmul.mubr.bf16.gmra.mxu0 %v6782
    %v7115 = vpop.f32.mrf.mxu0
    %v7116 = vadd.f32 0.0, %v7115
    %v7117 = vpop.f32.mrf.mxu0
    %v7118 = vpop.f32.mrf.mxu0
    %v7119 = vadd.f32 0.0, %v7118
    %v7120 = vpop.f32.mrf.mxu0
    %7121 = vmatprep.mubr.bf16.mxu0 %v6786
    %7122 = vmatmul.mubr.bf16.gmra.mxu0 %v6785
    %v7123 = vpop.f32.mrf.mxu0
    %v7124 = vadd.f32 0.0, %v7123
    %v7125 = vpop.f32.mrf.mxu0
    %v7126 = vpop.f32.mrf.mxu0
    %v7127 = vadd.f32 0.0, %v7126
    %v7128 = vpop.f32.mrf.mxu0
    %7129 = vmatprep.mubr.bf16.mxu0 %v6789
    %7130 = vmatmul.mubr.bf16.gmra.mxu0 %v6788
    %v7131 = vpop.f32.mrf.mxu0
    %v7132 = vadd.f32 0.0, %v7131
    %v7133 = vpop.f32.mrf.mxu0
    %v7134 = vpop.f32.mrf.mxu0
    %v7135 = vadd.f32 0.0, %v7134
    %v7136 = vpop.f32.mrf.mxu0
    %7137 = vmatprep.mubr.bf16.mxu0 %v6792
    %7138 = vmatmul.mubr.bf16.gmra.mxu0 %v6791
    %v7139 = vpop.f32.mrf.mxu0
    %v7140 = vadd.f32 0.0, %v7139
    %v7141 = vpop.f32.mrf.mxu0
    %v7142 = vpop.f32.mrf.mxu0
    %v7143 = vadd.f32 0.0, %v7142
    %v7144 = vpop.f32.mrf.mxu0
    %7145 = vmatprep.mubr.bf16.mxu0 %v6795
    %7146 = vmatmul.mubr.bf16.gmra.mxu0 %v6794
    %v7147 = vpop.f32.mrf.mxu0
    %v7148 = vadd.f32 0.0, %v7147
    %v7149 = vpop.f32.mrf.mxu0
    %v7150 = vpop.f32.mrf.mxu0
    %v7151 = vadd.f32 0.0, %v7150
    %v7152 = vpop.f32.mrf.mxu0
    %7153 = vmatprep.mubr.bf16.mxu0 %v6798
    %7154 = vmatmul.mubr.bf16.gmra.mxu0 %v6797
    %v7155 = vpop.f32.mrf.mxu0
    %v7156 = vadd.f32 0.0, %v7155
    %v7157 = vpop.f32.mrf.mxu0
    %v7158 = vpop.f32.mrf.mxu0
    %v7159 = vadd.f32 0.0, %v7158
    %v7160 = vpop.f32.mrf.mxu0
    %7161 = vmatprep.mubr.bf16.mxu0 %v6801
    %7162 = vmatmul.mubr.bf16.gmra.mxu0 %v6800
    %v7163 = vpop.f32.mrf.mxu0
    %v7164 = vadd.f32 0.0, %v7163
    %v7165 = vpop.f32.mrf.mxu0
    %v7166 = vpop.f32.mrf.mxu0
    %v7167 = vadd.f32 0.0, %v7166
    %v7168 = vpop.f32.mrf.mxu0
    %7169 = vmatprep.mubr.bf16.mxu0 %v6804
    %7170 = vmatmul.mubr.bf16.gmra.mxu0 %v6803
    %v7171 = vpop.f32.mrf.mxu0
    %v7172 = vadd.f32 0.0, %v7171
    %v7173 = vpop.f32.mrf.mxu0
    %v7174 = vpop.f32.mrf.mxu0
    %v7175 = vadd.f32 0.0, %v7174
    %v7176 = vpop.f32.mrf.mxu0
    %7177 = vmatprep.mubr.bf16.mxu0 %v6807
    %7178 = vmatmul.mubr.bf16.gmra.mxu0 %v6806
    %v7179 = vpop.f32.mrf.mxu0
    %v7180 = vadd.f32 0.0, %v7179
    %v7181 = vpop.f32.mrf.mxu0
    %v7182 = vpop.f32.mrf.mxu0
    %v7183 = vadd.f32 0.0, %v7182
    %v7184 = vpop.f32.mrf.mxu0
    %7185 = vmatprep.mubr.bf16.mxu0 %v6810
    %7186 = vmatmul.mubr.bf16.gmra.mxu0 %v6809
    %v7187 = vpop.f32.mrf.mxu0
    %v7188 = vadd.f32 0.0, %v7187
    %v7189 = vpop.f32.mrf.mxu0
    %v7190 = vpop.f32.mrf.mxu0
    %v7191 = vadd.f32 0.0, %v7190
    %v7192 = vpop.f32.mrf.mxu0
    %7193 = vmatprep.mubr.bf16.mxu0 %v6813
    %7194 = vmatmul.mubr.bf16.gmra.mxu0 %v6812
    %v7195 = vpop.f32.mrf.mxu0
    %v7196 = vadd.f32 0.0, %v7195
    %v7197 = vpop.f32.mrf.mxu0
    %v7198 = vpop.f32.mrf.mxu0
    %v7199 = vadd.f32 0.0, %v7198
    %v7200 = vpop.f32.mrf.mxu0
    %7201 = vmatprep.mubr.bf16.mxu0 %v6816
    %7202 = vmatmul.mubr.bf16.gmra.mxu0 %v6815
    %v7203 = vpop.f32.mrf.mxu0
    %v7204 = vadd.f32 0.0, %v7203
    %v7205 = vpop.f32.mrf.mxu0
    %v7206 = vpop.f32.mrf.mxu0
    %v7207 = vadd.f32 0.0, %v7206
    %v7208 = vpop.f32.mrf.mxu0
    %7209 = vmatprep.mubr.bf16.mxu0 %v6819
    %7210 = vmatmul.mubr.bf16.gmra.mxu0 %v6818
    %v7211 = vpop.f32.mrf.mxu0
    %v7212 = vadd.f32 0.0, %v7211
    %v7213 = vpop.f32.mrf.mxu0
    %v7214 = vpop.f32.mrf.mxu0
    %v7215 = vadd.f32 0.0, %v7214
    %v7216 = vpop.f32.mrf.mxu0
    %7217 = vmatprep.mubr.bf16.mxu0 %v6822
    %7218 = vmatmul.mubr.bf16.gmra.mxu0 %v6821
    %v7219 = vpop.f32.mrf.mxu0
    %v7220 = vadd.f32 0.0, %v7219
    %v7221 = vpop.f32.mrf.mxu0
    %v7222 = vpop.f32.mrf.mxu0
    %v7223 = vadd.f32 0.0, %v7222
    %v7224 = vpop.f32.mrf.mxu0
    %7225 = vmatprep.mubr.bf16.mxu0 %v6825
    %7226 = vmatmul.mubr.bf16.gmra.mxu0 %v6824
    %v7227 = vpop.f32.mrf.mxu0
    %v7228 = vadd.f32 0.0, %v7227
    %v7229 = vpop.f32.mrf.mxu0
    %v7230 = vpop.f32.mrf.mxu0
    %v7231 = vadd.f32 0.0, %v7230
    %v7232 = vpop.f32.mrf.mxu0
    %7233 = vmatprep.mubr.bf16.mxu0 %v6828
    %7234 = vmatmul.mubr.bf16.gmra.mxu0 %v6827
    %v7235 = vpop.f32.mrf.mxu0
    %v7236 = vadd.f32 0.0, %v7235
    %v7237 = vpop.f32.mrf.mxu0
    %v7238 = vpop.f32.mrf.mxu0
    %v7239 = vadd.f32 0.0, %v7238
    %v7240 = vpop.f32.mrf.mxu0
    %7241 = vmatprep.mubr.bf16.mxu0 %v6831
    %7242 = vmatmul.mubr.bf16.gmra.mxu0 %v6830
    %v7243 = vpop.f32.mrf.mxu0
    %v7244 = vadd.f32 0.0, %v7243
    %v7245 = vpop.f32.mrf.mxu0
    %v7246 = vpop.f32.mrf.mxu0
    %v7247 = vadd.f32 0.0, %v7246
    %v7248 = vpop.f32.mrf.mxu0
    %7249 = vmatprep.mubr.bf16.mxu0 %v6834
    %7250 = vmatmul.mubr.bf16.gmra.mxu0 %v6833
    %v7251 = vpop.f32.mrf.mxu0
    %v7252 = vadd.f32 0.0, %v7251
    %v7253 = vpop.f32.mrf.mxu0
    %v7254 = vpop.f32.mrf.mxu0
    %v7255 = vadd.f32 0.0, %v7254
    %v7256 = vpop.f32.mrf.mxu0
    %7257 = vmatprep.mubr.bf16.mxu0 %v6837
    %7258 = vmatmul.mubr.bf16.gmra.mxu0 %v6836
    %v7259 = vpop.f32.mrf.mxu0
    %v7260 = vadd.f32 0.0, %v7259
    %v7261 = vpop.f32.mrf.mxu0
    %v7262 = vpop.f32.mrf.mxu0
    %v7263 = vadd.f32 0.0, %v7262
    %v7264 = vpop.f32.mrf.mxu0
    %7265 = vmatprep.mubr.bf16.mxu0 %v6840
    %7266 = vmatmul.mubr.bf16.gmra.mxu0 %v6839
    %v7267 = vpop.f32.mrf.mxu0
    %v7268 = vadd.f32 0.0, %v7267
    %v7269 = vpop.f32.mrf.mxu0
    %v7270 = vpop.f32.mrf.mxu0
    %v7271 = vadd.f32 0.0, %v7270
    %v7272 = vpop.f32.mrf.mxu0
    %7273 = vmatprep.mubr.bf16.mxu0 %v6843
    %7274 = vmatmul.mubr.bf16.gmra.mxu0 %v6842
    %v7275 = vpop.f32.mrf.mxu0
    %v7276 = vadd.f32 0.0, %v7275
    %v7277 = vpop.f32.mrf.mxu0
    %v7278 = vpop.f32.mrf.mxu0
    %v7279 = vadd.f32 0.0, %v7278
    %v7280 = vpop.f32.mrf.mxu0
    %7281 = vmatprep.mubr.bf16.mxu0 %v6846
    %7282 = vmatmul.mubr.bf16.gmra.mxu0 %v6845
    %v7283 = vpop.f32.mrf.mxu0
    %v7284 = vadd.f32 0.0, %v7283
    %v7285 = vpop.f32.mrf.mxu0
    %v7286 = vpop.f32.mrf.mxu0
    %v7287 = vadd.f32 0.0, %v7286
    %v7288 = vpop.f32.mrf.mxu0
    %7289 = vmatprep.mubr.bf16.mxu0 %v6849
    %7290 = vmatmul.mubr.bf16.gmra.mxu0 %v6848
    %v7291 = vpop.f32.mrf.mxu0
    %v7292 = vadd.f32 0.0, %v7291
    %v7293 = vpop.f32.mrf.mxu0
    %v7294 = vpop.f32.mrf.mxu0
    %v7295 = vadd.f32 0.0, %v7294
    %v7296 = vpop.f32.mrf.mxu0
    %7297 = vmatprep.mubr.bf16.mxu0 %v6852
    %7298 = vmatmul.mubr.bf16.gmra.mxu0 %v6851
    %v7299 = vpop.f32.mrf.mxu0
    %v7300 = vadd.f32 0.0, %v7299
    %v7301 = vpop.f32.mrf.mxu0
    %v7302 = vpop.f32.mrf.mxu0
    %v7303 = vadd.f32 0.0, %v7302
    %v7304 = vpop.f32.mrf.mxu0
    %7305 = vmatprep.mubr.bf16.mxu0 %v6855
    %7306 = vmatmul.mubr.bf16.gmra.mxu0 %v6854
    %v7307 = vpop.f32.mrf.mxu0
    %v7308 = vadd.f32 0.0, %v7307
    %v7309 = vpop.f32.mrf.mxu0
    %v7310 = vpop.f32.mrf.mxu0
    %v7311 = vadd.f32 0.0, %v7310
    %v7312 = vpop.f32.mrf.mxu0
    %7313 = vmatprep.mubr.bf16.mxu0 %v6858
    %7314 = vmatmul.mubr.bf16.gmra.mxu0 %v6857
    %v7315 = vpop.f32.mrf.mxu0
    %v7316 = vadd.f32 0.0, %v7315
    %v7317 = vpop.f32.mrf.mxu0
    %v7318 = vpop.f32.mrf.mxu0
    %v7319 = vadd.f32 0.0, %v7318
    %v7320 = vpop.f32.mrf.mxu0
    %7321 = vmatprep.mubr.bf16.mxu0 %v6861
    %7322 = vmatmul.mubr.bf16.gmra.mxu0 %v6860
    %v7323 = vpop.f32.mrf.mxu0
    %v7324 = vadd.f32 0.0, %v7323
    %v7325 = vpop.f32.mrf.mxu0
    %v7326 = vpop.f32.mrf.mxu0
    %v7327 = vadd.f32 0.0, %v7326
    %v7328 = vpop.f32.mrf.mxu0
    %7329 = vmatprep.mubr.bf16.mxu0 %v6864
    %7330 = vmatmul.mubr.bf16.gmra.mxu0 %v6863
    %v7331 = vpop.f32.mrf.mxu0
    %v7332 = vadd.f32 0.0, %v7331
    %v7333 = vpop.f32.mrf.mxu0
    %v7334 = vpop.f32.mrf.mxu0
    %v7335 = vadd.f32 0.0, %v7334
    %v7336 = vpop.f32.mrf.mxu0
    %7337 = vmatprep.mubr.bf16.mxu0 %v6867
    %7338 = vmatmul.mubr.bf16.gmra.mxu0 %v6866
    %v7339 = vpop.f32.mrf.mxu0
    %v7340 = vadd.f32 0.0, %v7339
    %v7341 = vpop.f32.mrf.mxu0
    %v7342 = vpop.f32.mrf.mxu0
    %v7343 = vadd.f32 0.0, %v7342
    %v7344 = vpop.f32.mrf.mxu0
    %7345 = vmatprep.mubr.bf16.mxu0 %v6870
    %7346 = vmatmul.mubr.bf16.gmra.mxu0 %v6869
    %v7347 = vpop.f32.mrf.mxu0
    %v7348 = vadd.f32 0.0, %v7347
    %v7349 = vpop.f32.mrf.mxu0
    %v7350 = vpop.f32.mrf.mxu0
    %v7351 = vadd.f32 0.0, %v7350
    %v7352 = vpop.f32.mrf.mxu0
    %7353 = vdwg.mxu0
    %7354 = vmatprep.subr.bf16.mxu0 0
    %7355 = vmatpush1.bf16.msra.mxu0 %v7040
    %7356 = vmatprep.subr.bf16.mxu0 0
    %7357 = vmatpush1.bf16.msra.mxu0 %v7039
    %7358 = vmatprep.subr.bf16.mxu0 0
    %7359 = vmatpush1.bf16.msra.mxu0 %v7038
    %7360 = vmatprep.subr.bf16.mxu0 0
    %7361 = vmatpush1.bf16.msra.mxu0 %v7037
    %7362 = vmatprep.subr.bf16.mxu0 0
    %7363 = vmatpush1.bf16.msra.mxu0 %v7036
    %7364 = vmatprep.subr.bf16.mxu0 0
    %7365 = vmatpush1.bf16.msra.mxu0 %v7035
    %7366 = vmatprep.subr.bf16.mxu0 0
    %7367 = vmatpush1.bf16.msra.mxu0 %v7034
    %7368 = vmatprep.subr.bf16.mxu0 0
    %7369 = vmatpush1.bf16.msra.mxu0 %v7033
    %7370 = vmatprep.subr.bf16.mxu0 0
    %7371 = vmatpush2.bf16.msra.mxu0 0
    %7372 = vmatprep.subr.bf16.mxu0 0
    %7373 = vmatpush2.bf16.msra.mxu0 0
    %7374 = vmatprep.subr.bf16.mxu0 0
    %7375 = vmatpush2.bf16.msra.mxu0 0
    %7376 = vmatprep.subr.bf16.mxu0 0
    %7377 = vmatpush2.bf16.msra.mxu0 0
    %7378 = vmatprep.subr.bf16.mxu0 0
    %7379 = vmatpush2.bf16.msra.mxu0 0
    %7380 = vmatprep.subr.bf16.mxu0 0
    %7381 = vmatpush2.bf16.msra.mxu0 0
    %7382 = vmatprep.subr.bf16.mxu0 0
    %7383 = vmatpush2.bf16.msra.mxu0 0
    %7384 = vmatprep.subr.bf16.mxu0 0
    %7385 = vmatpush2.bf16.msra.mxu0 0
    %7386 = vmatprep.mubr.bf16.mxu0 0
    %7387 = vmatmul.mubr.bf16.gmra.mxu0 %v6778
    %v7388 = vpop.f32.mrf.mxu0
    %v7389 = vadd.f32 %v7100, %v7388
    %v7390 = vpop.f32.mrf.mxu0
    %v7391 = vpop.f32.mrf.mxu0
    %v7392 = vadd.f32 %v7103, %v7391
    %v7393 = vpop.f32.mrf.mxu0
    %7394 = vmatprep.mubr.bf16.mxu0 0
    %7395 = vmatmul.mubr.bf16.gmra.mxu0 %v6781
    %v7396 = vpop.f32.mrf.mxu0
    %v7397 = vadd.f32 %v7108, %v7396
    %v7398 = vpop.f32.mrf.mxu0
    %v7399 = vpop.f32.mrf.mxu0
    %v7400 = vadd.f32 %v7111, %v7399
    %v7401 = vpop.f32.mrf.mxu0
    %7402 = vmatprep.mubr.bf16.mxu0 0
    %7403 = vmatmul.mubr.bf16.gmra.mxu0 %v6784
    %v7404 = vpop.f32.mrf.mxu0
    %v7405 = vadd.f32 %v7116, %v7404
    %v7406 = vpop.f32.mrf.mxu0
    %v7407 = vpop.f32.mrf.mxu0
    %v7408 = vadd.f32 %v7119, %v7407
    %v7409 = vpop.f32.mrf.mxu0
    %7410 = vmatprep.mubr.bf16.mxu0 0
    %7411 = vmatmul.mubr.bf16.gmra.mxu0 %v6787
    %v7412 = vpop.f32.mrf.mxu0
    %v7413 = vadd.f32 %v7124, %v7412
    %v7414 = vpop.f32.mrf.mxu0
    %v7415 = vpop.f32.mrf.mxu0
    %v7416 = vadd.f32 %v7127, %v7415
    %v7417 = vpop.f32.mrf.mxu0
    %7418 = vmatprep.mubr.bf16.mxu0 0
    %7419 = vmatmul.mubr.bf16.gmra.mxu0 %v6790
    %v7420 = vpop.f32.mrf.mxu0
    %v7421 = vadd.f32 %v7132, %v7420
    %v7422 = vpop.f32.mrf.mxu0
    %v7423 = vpop.f32.mrf.mxu0
    %v7424 = vadd.f32 %v7135, %v7423
    %v7425 = vpop.f32.mrf.mxu0
    %7426 = vmatprep.mubr.bf16.mxu0 0
    %7427 = vmatmul.mubr.bf16.gmra.mxu0 %v6793
    %v7428 = vpop.f32.mrf.mxu0
    %v7429 = vadd.f32 %v7140, %v7428
    %v7430 = vpop.f32.mrf.mxu0
    %v7431 = vpop.f32.mrf.mxu0
    %v7432 = vadd.f32 %v7143, %v7431
    %v7433 = vpop.f32.mrf.mxu0
    %7434 = vmatprep.mubr.bf16.mxu0 0
    %7435 = vmatmul.mubr.bf16.gmra.mxu0 %v6796
    %v7436 = vpop.f32.mrf.mxu0
    %v7437 = vadd.f32 %v7148, %v7436
    %v7438 = vpop.f32.mrf.mxu0
    %v7439 = vpop.f32.mrf.mxu0
    %v7440 = vadd.f32 %v7151, %v7439
    %v7441 = vpop.f32.mrf.mxu0
    %7442 = vmatprep.mubr.bf16.mxu0 0
    %7443 = vmatmul.mubr.bf16.gmra.mxu0 %v6799
    %v7444 = vpop.f32.mrf.mxu0
    %v7445 = vadd.f32 %v7156, %v7444
    %v7446 = vpop.f32.mrf.mxu0
    %v7447 = vpop.f32.mrf.mxu0
    %v7448 = vadd.f32 %v7159, %v7447
    %v7449 = vpop.f32.mrf.mxu0
    %7450 = vmatprep.mubr.bf16.mxu0 0
    %7451 = vmatmul.mubr.bf16.gmra.mxu0 %v6802
    %v7452 = vpop.f32.mrf.mxu0
    %v7453 = vadd.f32 %v7164, %v7452
    %v7454 = vpop.f32.mrf.mxu0
    %v7455 = vpop.f32.mrf.mxu0
    %v7456 = vadd.f32 %v7167, %v7455
    %v7457 = vpop.f32.mrf.mxu0
    %7458 = vmatprep.mubr.bf16.mxu0 0
    %7459 = vmatmul.mubr.bf16.gmra.mxu0 %v6805
    %v7460 = vpop.f32.mrf.mxu0
    %v7461 = vadd.f32 %v7172, %v7460
    %v7462 = vpop.f32.mrf.mxu0
    %v7463 = vpop.f32.mrf.mxu0
    %v7464 = vadd.f32 %v7175, %v7463
    %v7465 = vpop.f32.mrf.mxu0
    %7466 = vmatprep.mubr.bf16.mxu0 0
    %7467 = vmatmul.mubr.bf16.gmra.mxu0 %v6808
    %v7468 = vpop.f32.mrf.mxu0
    %v7469 = vadd.f32 %v7180, %v7468
    %v7470 = vpop.f32.mrf.mxu0
    %v7471 = vpop.f32.mrf.mxu0
    %v7472 = vadd.f32 %v7183, %v7471
    %v7473 = vpop.f32.mrf.mxu0
    %7474 = vmatprep.mubr.bf16.mxu0 0
    %7475 = vmatmul.mubr.bf16.gmra.mxu0 %v6811
    %v7476 = vpop.f32.mrf.mxu0
    %v7477 = vadd.f32 %v7188, %v7476
    %v7478 = vpop.f32.mrf.mxu0
    %v7479 = vpop.f32.mrf.mxu0
    %v7480 = vadd.f32 %v7191, %v7479
    %v7481 = vpop.f32.mrf.mxu0
    %7482 = vmatprep.mubr.bf16.mxu0 0
    %7483 = vmatmul.mubr.bf16.gmra.mxu0 %v6814
    %v7484 = vpop.f32.mrf.mxu0
    %v7485 = vadd.f32 %v7196, %v7484
    %v7486 = vpop.f32.mrf.mxu0
    %v7487 = vpop.f32.mrf.mxu0
    %v7488 = vadd.f32 %v7199, %v7487
    %v7489 = vpop.f32.mrf.mxu0
    %7490 = vmatprep.mubr.bf16.mxu0 0
    %7491 = vmatmul.mubr.bf16.gmra.mxu0 %v6817
    %v7492 = vpop.f32.mrf.mxu0
    %v7493 = vadd.f32 %v7204, %v7492
    %v7494 = vpop.f32.mrf.mxu0
    %v7495 = vpop.f32.mrf.mxu0
    %v7496 = vadd.f32 %v7207, %v7495
    %v7497 = vpop.f32.mrf.mxu0
    %7498 = vmatprep.mubr.bf16.mxu0 0
    %7499 = vmatmul.mubr.bf16.gmra.mxu0 %v6820
    %v7500 = vpop.f32.mrf.mxu0
    %v7501 = vadd.f32 %v7212, %v7500
    %v7502 = vpop.f32.mrf.mxu0
    %v7503 = vpop.f32.mrf.mxu0
    %v7504 = vadd.f32 %v7215, %v7503
    %v7505 = vpop.f32.mrf.mxu0
    %7506 = vmatprep.mubr.bf16.mxu0 0
    %7507 = vmatmul.mubr.bf16.gmra.mxu0 %v6823
    %v7508 = vpop.f32.mrf.mxu0
    %v7509 = vadd.f32 %v7220, %v7508
    %v7510 = vpop.f32.mrf.mxu0
    %v7511 = vpop.f32.mrf.mxu0
    %v7512 = vadd.f32 %v7223, %v7511
    %v7513 = vpop.f32.mrf.mxu0
    %7514 = vmatprep.mubr.bf16.mxu0 0
    %7515 = vmatmul.mubr.bf16.gmra.mxu0 %v6826
    %v7516 = vpop.f32.mrf.mxu0
    %v7517 = vadd.f32 %v7228, %v7516
    %v7518 = vpop.f32.mrf.mxu0
    %v7519 = vpop.f32.mrf.mxu0
    %v7520 = vadd.f32 %v7231, %v7519
    %v7521 = vpop.f32.mrf.mxu0
    %7522 = vmatprep.mubr.bf16.mxu0 0
    %7523 = vmatmul.mubr.bf16.gmra.mxu0 %v6829
    %v7524 = vpop.f32.mrf.mxu0
    %v7525 = vadd.f32 %v7236, %v7524
    %v7526 = vpop.f32.mrf.mxu0
    %v7527 = vpop.f32.mrf.mxu0
    %v7528 = vadd.f32 %v7239, %v7527
    %v7529 = vpop.f32.mrf.mxu0
    %7530 = vmatprep.mubr.bf16.mxu0 0
    %7531 = vmatmul.mubr.bf16.gmra.mxu0 %v6832
    %v7532 = vpop.f32.mrf.mxu0
    %v7533 = vadd.f32 %v7244, %v7532
    %v7534 = vpop.f32.mrf.mxu0
    %v7535 = vpop.f32.mrf.mxu0
    %v7536 = vadd.f32 %v7247, %v7535
    %v7537 = vpop.f32.mrf.mxu0
    %7538 = vmatprep.mubr.bf16.mxu0 0
    %7539 = vmatmul.mubr.bf16.gmra.mxu0 %v6835
    %v7540 = vpop.f32.mrf.mxu0
    %v7541 = vadd.f32 %v7252, %v7540
    %v7542 = vpop.f32.mrf.mxu0
    %v7543 = vpop.f32.mrf.mxu0
    %v7544 = vadd.f32 %v7255, %v7543
    %v7545 = vpop.f32.mrf.mxu0
    %7546 = vmatprep.mubr.bf16.mxu0 0
    %7547 = vmatmul.mubr.bf16.gmra.mxu0 %v6838
    %v7548 = vpop.f32.mrf.mxu0
    %v7549 = vadd.f32 %v7260, %v7548
    %v7550 = vpop.f32.mrf.mxu0
    %v7551 = vpop.f32.mrf.mxu0
    %v7552 = vadd.f32 %v7263, %v7551
    %v7553 = vpop.f32.mrf.mxu0
    %7554 = vmatprep.mubr.bf16.mxu0 0
    %7555 = vmatmul.mubr.bf16.gmra.mxu0 %v6841
    %v7556 = vpop.f32.mrf.mxu0
    %v7557 = vadd.f32 %v7268, %v7556
    %v7558 = vpop.f32.mrf.mxu0
    %v7559 = vpop.f32.mrf.mxu0
    %v7560 = vadd.f32 %v7271, %v7559
    %v7561 = vpop.f32.mrf.mxu0
    %7562 = vmatprep.mubr.bf16.mxu0 0
    %7563 = vmatmul.mubr.bf16.gmra.mxu0 %v6844
    %v7564 = vpop.f32.mrf.mxu0
    %v7565 = vadd.f32 %v7276, %v7564
    %v7566 = vpop.f32.mrf.mxu0
    %v7567 = vpop.f32.mrf.mxu0
    %v7568 = vadd.f32 %v7279, %v7567
    %v7569 = vpop.f32.mrf.mxu0
    %7570 = vmatprep.mubr.bf16.mxu0 0
    %7571 = vmatmul.mubr.bf16.gmra.mxu0 %v6847
    %v7572 = vpop.f32.mrf.mxu0
    %v7573 = vadd.f32 %v7284, %v7572
    %v7574 = vpop.f32.mrf.mxu0
    %v7575 = vpop.f32.mrf.mxu0
    %v7576 = vadd.f32 %v7287, %v7575
    %v7577 = vpop.f32.mrf.mxu0
    %7578 = vmatprep.mubr.bf16.mxu0 0
    %7579 = vmatmul.mubr.bf16.gmra.mxu0 %v6850
    %v7580 = vpop.f32.mrf.mxu0
    %v7581 = vadd.f32 %v7292, %v7580
    %v7582 = vpop.f32.mrf.mxu0
    %v7583 = vpop.f32.mrf.mxu0
    %v7584 = vadd.f32 %v7295, %v7583
    %v7585 = vpop.f32.mrf.mxu0
    %7586 = vmatprep.mubr.bf16.mxu0 0
    %7587 = vmatmul.mubr.bf16.gmra.mxu0 %v6853
    %v7588 = vpop.f32.mrf.mxu0
    %v7589 = vadd.f32 %v7300, %v7588
    %v7590 = vpop.f32.mrf.mxu0
    %v7591 = vpop.f32.mrf.mxu0
    %v7592 = vadd.f32 %v7303, %v7591
    %v7593 = vpop.f32.mrf.mxu0
    %7594 = vmatprep.mubr.bf16.mxu0 0
    %7595 = vmatmul.mubr.bf16.gmra.mxu0 %v6856
    %v7596 = vpop.f32.mrf.mxu0
    %v7597 = vadd.f32 %v7308, %v7596
    %v7598 = vpop.f32.mrf.mxu0
    %v7599 = vpop.f32.mrf.mxu0
    %v7600 = vadd.f32 %v7311, %v7599
    %v7601 = vpop.f32.mrf.mxu0
    %7602 = vmatprep.mubr.bf16.mxu0 0
    %7603 = vmatmul.mubr.bf16.gmra.mxu0 %v6859
    %v7604 = vpop.f32.mrf.mxu0
    %v7605 = vadd.f32 %v7316, %v7604
    %v7606 = vpop.f32.mrf.mxu0
    %v7607 = vpop.f32.mrf.mxu0
    %v7608 = vadd.f32 %v7319, %v7607
    %v7609 = vpop.f32.mrf.mxu0
    %7610 = vmatprep.mubr.bf16.mxu0 0
    %7611 = vmatmul.mubr.bf16.gmra.mxu0 %v6862
    %v7612 = vpop.f32.mrf.mxu0
    %v7613 = vadd.f32 %v7324, %v7612
    %v7614 = vpop.f32.mrf.mxu0
    %v7615 = vpop.f32.mrf.mxu0
    %v7616 = vadd.f32 %v7327, %v7615
    %v7617 = vpop.f32.mrf.mxu0
    %7618 = vmatprep.mubr.bf16.mxu0 0
    %7619 = vmatmul.mubr.bf16.gmra.mxu0 %v6865
    %v7620 = vpop.f32.mrf.mxu0
    %v7621 = vadd.f32 %v7332, %v7620
    %v7622 = vpop.f32.mrf.mxu0
    %v7623 = vpop.f32.mrf.mxu0
    %v7624 = vadd.f32 %v7335, %v7623
    %v7625 = vpop.f32.mrf.mxu0
    %7626 = vmatprep.mubr.bf16.mxu0 0
    %7627 = vmatmul.mubr.bf16.gmra.mxu0 %v6868
    %v7628 = vpop.f32.mrf.mxu0
    %v7629 = vadd.f32 %v7340, %v7628
    %v7630 = vpop.f32.mrf.mxu0
    %v7631 = vpop.f32.mrf.mxu0
    %v7632 = vadd.f32 %v7343, %v7631
    %v7633 = vpop.f32.mrf.mxu0
    %7634 = vmatprep.mubr.bf16.mxu0 0
    %7635 = vmatmul.mubr.bf16.gmra.mxu0 %v6871
    %v7636 = vpop.f32.mrf.mxu0
    %v7637 = vadd.f32 %v7348, %v7636
    %v7638 = vpop.f32.mrf.mxu0
    %v7639 = vpop.f32.mrf.mxu0
    %v7640 = vadd.f32 %v7351, %v7639
    %v7641 = vpop.f32.mrf.mxu0
    %7642 = vdwg.mxu0
    %v7691 = vunpack.c.l.b16 %v6088
    %v7692 = vunpack.c.l.b16 %v6089
    %v7693 = vunpack.c.l.b16 %v6090
    %v7694 = vunpack.c.l.b16 %v6091
    %v7695 = vunpack.c.l.b16 %v6092
    %v7696 = vunpack.c.l.b16 %v6093
    %v7697 = vunpack.c.l.b16 %v6094
    %v7698 = vunpack.c.l.b16 %v6095
    %v7699 = vunpack.c.l.b16 %v6096
    %v7700 = vunpack.c.l.b16 %v6097
    %v7701 = vunpack.c.l.b16 %v6098
    %v7702 = vunpack.c.l.b16 %v6099
    %v7703 = vunpack.c.l.b16 %v6100
    %v7704 = vunpack.c.l.b16 %v6101
    %v7705 = vunpack.c.l.b16 %v6102
    %v7706 = vunpack.c.l.b16 %v6103
    %v7707 = vunpack.c.l.b16 %v6104
    %v7708 = vunpack.c.l.b16 %v6105
    %v7709 = vunpack.c.l.b16 %v6106
    %v7710 = vunpack.c.l.b16 %v6107
    %v7711 = vunpack.c.l.b16 %v6108
    %v7712 = vunpack.c.l.b16 %v6109
    %v7713 = vunpack.c.l.b16 %v6110
    %v7714 = vunpack.c.l.b16 %v6111
    %v7715 = vunpack.c.l.b16 %v6112
    %v7716 = vunpack.c.l.b16 %v6113
    %v7717 = vunpack.c.l.b16 %v6114
    %v7718 = vunpack.c.l.b16 %v6115
    %v7719 = vunpack.c.l.b16 %v6116
    %v7720 = vunpack.c.l.b16 %v6117
    %v7721 = vunpack.c.l.b16 %v6118
    %v7722 = vunpack.c.l.b16 %v6119
    %v7723 = vunpack.c.l.b16 %v6120
    %v7724 = vunpack.c.l.b16 %v6121
    %v7725 = vunpack.c.l.b16 %v6122
    %v7726 = vunpack.c.l.b16 %v6123
    %v7727 = vunpack.c.l.b16 %v6124
    %v7728 = vunpack.c.l.b16 %v6125
    %v7729 = vunpack.c.l.b16 %v6126
    %v7730 = vunpack.c.l.b16 %v6127
    %v7731 = vunpack.c.l.b16 %v6128
    %v7732 = vunpack.c.l.b16 %v6129
    %v7733 = vunpack.c.l.b16 %v6130
    %v7734 = vunpack.c.l.b16 %v6131
    %v7735 = vunpack.c.l.b16 %v6132
    %v7736 = vunpack.c.l.b16 %v6133
    %v7737 = vunpack.c.l.b16 %v6134
    %v7738 = vunpack.c.l.b16 %v6135
    %v7739 = vpack.c.b16 %v7692, %v7691
    %v7740 = vpack.c.b16 %v7694, %v7693
    %v7741 = vpack.c.b16 %v7696, %v7695
    %v7742 = vpack.c.b16 %v7698, %v7697
    %v7743 = vpack.c.b16 %v7700, %v7699
    %v7744 = vpack.c.b16 %v7702, %v7701
    %v7745 = vpack.c.b16 %v7704, %v7703
    %v7746 = vpack.c.b16 %v7706, %v7705
    %v7747 = vpack.c.b16 %v7708, %v7707
    %v7748 = vpack.c.b16 %v7710, %v7709
    %v7749 = vpack.c.b16 %v7712, %v7711
    %v7750 = vpack.c.b16 %v7714, %v7713
    %v7751 = vpack.c.b16 %v7716, %v7715
    %v7752 = vpack.c.b16 %v7718, %v7717
    %v7753 = vpack.c.b16 %v7720, %v7719
    %v7754 = vpack.c.b16 %v7722, %v7721
    %v7755 = vpack.c.b16 %v7724, %v7723
    %v7756 = vpack.c.b16 %v7726, %v7725
    %v7757 = vpack.c.b16 %v7728, %v7727
    %v7758 = vpack.c.b16 %v7730, %v7729
    %v7759 = vpack.c.b16 %v7732, %v7731
    %v7760 = vpack.c.b16 %v7734, %v7733
    %v7761 = vpack.c.b16 %v7736, %v7735
    %v7762 = vpack.c.b16 %v7738, %v7737
    %7787 = vmatprep.subr.bf16.mxu0 0
    %7788 = vmatpush1.bf16.msra.mxu0 %v7746
    %7789 = vmatprep.subr.bf16.mxu0 0
    %7790 = vmatpush1.bf16.msra.mxu0 %v7745
    %7791 = vmatprep.subr.bf16.mxu0 0
    %7792 = vmatpush1.bf16.msra.mxu0 %v7744
    %7793 = vmatprep.subr.bf16.mxu0 0
    %7794 = vmatpush1.bf16.msra.mxu0 %v7743
    %7795 = vmatprep.subr.bf16.mxu0 0
    %7796 = vmatpush1.bf16.msra.mxu0 %v7742
    %7797 = vmatprep.subr.bf16.mxu0 0
    %7798 = vmatpush1.bf16.msra.mxu0 %v7741
    %7799 = vmatprep.subr.bf16.mxu0 0
    %7800 = vmatpush1.bf16.msra.mxu0 %v7740
    %7801 = vmatprep.subr.bf16.mxu0 0
    %7802 = vmatpush1.bf16.msra.mxu0 %v7739
    %7803 = vmatprep.subr.bf16.mxu0 0
    %7804 = vmatpush2.bf16.msra.mxu0 %v7754
    %7805 = vmatprep.subr.bf16.mxu0 0
    %7806 = vmatpush2.bf16.msra.mxu0 %v7753
    %7807 = vmatprep.subr.bf16.mxu0 0
    %7808 = vmatpush2.bf16.msra.mxu0 %v7752
    %7809 = vmatprep.subr.bf16.mxu0 0
    %7810 = vmatpush2.bf16.msra.mxu0 %v7751
    %7811 = vmatprep.subr.bf16.mxu0 0
    %7812 = vmatpush2.bf16.msra.mxu0 %v7750
    %7813 = vmatprep.subr.bf16.mxu0 0
    %7814 = vmatpush2.bf16.msra.mxu0 %v7749
    %7815 = vmatprep.subr.bf16.mxu0 0
    %7816 = vmatpush2.bf16.msra.mxu0 %v7748
    %7817 = vmatprep.subr.bf16.mxu0 0
    %7818 = vmatpush2.bf16.msra.mxu0 %v7747
    %7819 = vmatprep.mubr.bf16.mxu0 %v5993
    %7820 = vmatmul.mubr.bf16.gmra.mxu0 %v5992
    %v7821 = vpop.f32.mrf.mxu0
    %v7822 = vadd.f32 %v7389, %v7821
    %v7823 = vpop.f32.mrf.mxu0
    %v7824 = vpop.f32.mrf.mxu0
    %v7825 = vadd.f32 %v7392, %v7824
    %v7826 = vpop.f32.mrf.mxu0
    %7827 = vmatprep.mubr.bf16.mxu0 %v5996
    %7828 = vmatmul.mubr.bf16.gmra.mxu0 %v5995
    %v7829 = vpop.f32.mrf.mxu0
    %v7830 = vadd.f32 %v7397, %v7829
    %v7831 = vpop.f32.mrf.mxu0
    %v7832 = vpop.f32.mrf.mxu0
    %v7833 = vadd.f32 %v7400, %v7832
    %v7834 = vpop.f32.mrf.mxu0
    %7835 = vmatprep.mubr.bf16.mxu0 %v5999
    %7836 = vmatmul.mubr.bf16.gmra.mxu0 %v5998
    %v7837 = vpop.f32.mrf.mxu0
    %v7838 = vadd.f32 %v7405, %v7837
    %v7839 = vpop.f32.mrf.mxu0
    %v7840 = vpop.f32.mrf.mxu0
    %v7841 = vadd.f32 %v7408, %v7840
    %v7842 = vpop.f32.mrf.mxu0
    %7843 = vmatprep.mubr.bf16.mxu0 %v6002
    %7844 = vmatmul.mubr.bf16.gmra.mxu0 %v6001
    %v7845 = vpop.f32.mrf.mxu0
    %v7846 = vadd.f32 %v7413, %v7845
    %v7847 = vpop.f32.mrf.mxu0
    %v7848 = vpop.f32.mrf.mxu0
    %v7849 = vadd.f32 %v7416, %v7848
    %v7850 = vpop.f32.mrf.mxu0
    %7851 = vmatprep.mubr.bf16.mxu0 %v6005
    %7852 = vmatmul.mubr.bf16.gmra.mxu0 %v6004
    %v7853 = vpop.f32.mrf.mxu0
    %v7854 = vadd.f32 %v7421, %v7853
    %v7855 = vpop.f32.mrf.mxu0
    %v7856 = vpop.f32.mrf.mxu0
    %v7857 = vadd.f32 %v7424, %v7856
    %v7858 = vpop.f32.mrf.mxu0
    %7859 = vmatprep.mubr.bf16.mxu0 %v6008
    %7860 = vmatmul.mubr.bf16.gmra.mxu0 %v6007
    %v7861 = vpop.f32.mrf.mxu0
    %v7862 = vadd.f32 %v7429, %v7861
    %v7863 = vpop.f32.mrf.mxu0
    %v7864 = vpop.f32.mrf.mxu0
    %v7865 = vadd.f32 %v7432, %v7864
    %v7866 = vpop.f32.mrf.mxu0
    %7867 = vmatprep.mubr.bf16.mxu0 %v6011
    %7868 = vmatmul.mubr.bf16.gmra.mxu0 %v6010
    %v7869 = vpop.f32.mrf.mxu0
    %v7870 = vadd.f32 %v7437, %v7869
    %v7871 = vpop.f32.mrf.mxu0
    %v7872 = vpop.f32.mrf.mxu0
    %v7873 = vadd.f32 %v7440, %v7872
    %v7874 = vpop.f32.mrf.mxu0
    %7875 = vmatprep.mubr.bf16.mxu0 %v6014
    %7876 = vmatmul.mubr.bf16.gmra.mxu0 %v6013
    %v7877 = vpop.f32.mrf.mxu0
    %v7878 = vadd.f32 %v7445, %v7877
    %v7879 = vpop.f32.mrf.mxu0
    %v7880 = vpop.f32.mrf.mxu0
    %v7881 = vadd.f32 %v7448, %v7880
    %v7882 = vpop.f32.mrf.mxu0
    %7883 = vmatprep.mubr.bf16.mxu0 %v6017
    %7884 = vmatmul.mubr.bf16.gmra.mxu0 %v6016
    %v7885 = vpop.f32.mrf.mxu0
    %v7886 = vadd.f32 %v7453, %v7885
    %v7887 = vpop.f32.mrf.mxu0
    %v7888 = vpop.f32.mrf.mxu0
    %v7889 = vadd.f32 %v7456, %v7888
    %v7890 = vpop.f32.mrf.mxu0
    %7891 = vmatprep.mubr.bf16.mxu0 %v6020
    %7892 = vmatmul.mubr.bf16.gmra.mxu0 %v6019
    %v7893 = vpop.f32.mrf.mxu0
    %v7894 = vadd.f32 %v7461, %v7893
    %v7895 = vpop.f32.mrf.mxu0
    %v7896 = vpop.f32.mrf.mxu0
    %v7897 = vadd.f32 %v7464, %v7896
    %v7898 = vpop.f32.mrf.mxu0
    %7899 = vmatprep.mubr.bf16.mxu0 %v6023
    %7900 = vmatmul.mubr.bf16.gmra.mxu0 %v6022
    %v7901 = vpop.f32.mrf.mxu0
    %v7902 = vadd.f32 %v7469, %v7901
    %v7903 = vpop.f32.mrf.mxu0
    %v7904 = vpop.f32.mrf.mxu0
    %v7905 = vadd.f32 %v7472, %v7904
    %v7906 = vpop.f32.mrf.mxu0
    %7907 = vmatprep.mubr.bf16.mxu0 %v6026
    %7908 = vmatmul.mubr.bf16.gmra.mxu0 %v6025
    %v7909 = vpop.f32.mrf.mxu0
    %v7910 = vadd.f32 %v7477, %v7909
    %v7911 = vpop.f32.mrf.mxu0
    %v7912 = vpop.f32.mrf.mxu0
    %v7913 = vadd.f32 %v7480, %v7912
    %v7914 = vpop.f32.mrf.mxu0
    %7915 = vmatprep.mubr.bf16.mxu0 %v6029
    %7916 = vmatmul.mubr.bf16.gmra.mxu0 %v6028
    %v7917 = vpop.f32.mrf.mxu0
    %v7918 = vadd.f32 %v7485, %v7917
    %v7919 = vpop.f32.mrf.mxu0
    %v7920 = vpop.f32.mrf.mxu0
    %v7921 = vadd.f32 %v7488, %v7920
    %v7922 = vpop.f32.mrf.mxu0
    %7923 = vmatprep.mubr.bf16.mxu0 %v6032
    %7924 = vmatmul.mubr.bf16.gmra.mxu0 %v6031
    %v7925 = vpop.f32.mrf.mxu0
    %v7926 = vadd.f32 %v7493, %v7925
    %v7927 = vpop.f32.mrf.mxu0
    %v7928 = vpop.f32.mrf.mxu0
    %v7929 = vadd.f32 %v7496, %v7928
    %v7930 = vpop.f32.mrf.mxu0
    %7931 = vmatprep.mubr.bf16.mxu0 %v6035
    %7932 = vmatmul.mubr.bf16.gmra.mxu0 %v6034
    %v7933 = vpop.f32.mrf.mxu0
    %v7934 = vadd.f32 %v7501, %v7933
    %v7935 = vpop.f32.mrf.mxu0
    %v7936 = vpop.f32.mrf.mxu0
    %v7937 = vadd.f32 %v7504, %v7936
    %v7938 = vpop.f32.mrf.mxu0
    %7939 = vmatprep.mubr.bf16.mxu0 %v6038
    %7940 = vmatmul.mubr.bf16.gmra.mxu0 %v6037
    %v7941 = vpop.f32.mrf.mxu0
    %v7942 = vadd.f32 %v7509, %v7941
    %v7943 = vpop.f32.mrf.mxu0
    %v7944 = vpop.f32.mrf.mxu0
    %v7945 = vadd.f32 %v7512, %v7944
    %v7946 = vpop.f32.mrf.mxu0
    %7947 = vmatprep.mubr.bf16.mxu0 %v6041
    %7948 = vmatmul.mubr.bf16.gmra.mxu0 %v6040
    %v7949 = vpop.f32.mrf.mxu0
    %v7950 = vadd.f32 %v7517, %v7949
    %v7951 = vpop.f32.mrf.mxu0
    %v7952 = vpop.f32.mrf.mxu0
    %v7953 = vadd.f32 %v7520, %v7952
    %v7954 = vpop.f32.mrf.mxu0
    %7955 = vmatprep.mubr.bf16.mxu0 %v6044
    %7956 = vmatmul.mubr.bf16.gmra.mxu0 %v6043
    %v7957 = vpop.f32.mrf.mxu0
    %v7958 = vadd.f32 %v7525, %v7957
    %v7959 = vpop.f32.mrf.mxu0
    %v7960 = vpop.f32.mrf.mxu0
    %v7961 = vadd.f32 %v7528, %v7960
    %v7962 = vpop.f32.mrf.mxu0
    %7963 = vmatprep.mubr.bf16.mxu0 %v6047
    %7964 = vmatmul.mubr.bf16.gmra.mxu0 %v6046
    %v7965 = vpop.f32.mrf.mxu0
    %v7966 = vadd.f32 %v7533, %v7965
    %v7967 = vpop.f32.mrf.mxu0
    %v7968 = vpop.f32.mrf.mxu0
    %v7969 = vadd.f32 %v7536, %v7968
    %v7970 = vpop.f32.mrf.mxu0
    %7971 = vmatprep.mubr.bf16.mxu0 %v6050
    %7972 = vmatmul.mubr.bf16.gmra.mxu0 %v6049
    %v7973 = vpop.f32.mrf.mxu0
    %v7974 = vadd.f32 %v7541, %v7973
    %v7975 = vpop.f32.mrf.mxu0
    %v7976 = vpop.f32.mrf.mxu0
    %v7977 = vadd.f32 %v7544, %v7976
    %v7978 = vpop.f32.mrf.mxu0
    %7979 = vmatprep.mubr.bf16.mxu0 %v6053
    %7980 = vmatmul.mubr.bf16.gmra.mxu0 %v6052
    %v7981 = vpop.f32.mrf.mxu0
    %v7982 = vadd.f32 %v7549, %v7981
    %v7983 = vpop.f32.mrf.mxu0
    %v7984 = vpop.f32.mrf.mxu0
    %v7985 = vadd.f32 %v7552, %v7984
    %v7986 = vpop.f32.mrf.mxu0
    %7987 = vmatprep.mubr.bf16.mxu0 %v6056
    %7988 = vmatmul.mubr.bf16.gmra.mxu0 %v6055
    %v7989 = vpop.f32.mrf.mxu0
    %v7990 = vadd.f32 %v7557, %v7989
    %v7991 = vpop.f32.mrf.mxu0
    %v7992 = vpop.f32.mrf.mxu0
    %v7993 = vadd.f32 %v7560, %v7992
    %v7994 = vpop.f32.mrf.mxu0
    %7995 = vmatprep.mubr.bf16.mxu0 %v6059
    %7996 = vmatmul.mubr.bf16.gmra.mxu0 %v6058
    %v7997 = vpop.f32.mrf.mxu0
    %v7998 = vadd.f32 %v7565, %v7997
    %v7999 = vpop.f32.mrf.mxu0
    %v8000 = vpop.f32.mrf.mxu0
    %v8001 = vadd.f32 %v7568, %v8000
    %v8002 = vpop.f32.mrf.mxu0
    %8003 = vmatprep.mubr.bf16.mxu0 %v6062
    %8004 = vmatmul.mubr.bf16.gmra.mxu0 %v6061
    %v8005 = vpop.f32.mrf.mxu0
    %v8006 = vadd.f32 %v7573, %v8005
    %v8007 = vpop.f32.mrf.mxu0
    %v8008 = vpop.f32.mrf.mxu0
    %v8009 = vadd.f32 %v7576, %v8008
    %v8010 = vpop.f32.mrf.mxu0
    %8011 = vmatprep.mubr.bf16.mxu0 %v6065
    %8012 = vmatmul.mubr.bf16.gmra.mxu0 %v6064
    %v8013 = vpop.f32.mrf.mxu0
    %v8014 = vadd.f32 %v7581, %v8013
    %v8015 = vpop.f32.mrf.mxu0
    %v8016 = vpop.f32.mrf.mxu0
    %v8017 = vadd.f32 %v7584, %v8016
    %v8018 = vpop.f32.mrf.mxu0
    %8019 = vmatprep.mubr.bf16.mxu0 %v6068
    %8020 = vmatmul.mubr.bf16.gmra.mxu0 %v6067
    %v8021 = vpop.f32.mrf.mxu0
    %v8022 = vadd.f32 %v7589, %v8021
    %v8023 = vpop.f32.mrf.mxu0
    %v8024 = vpop.f32.mrf.mxu0
    %v8025 = vadd.f32 %v7592, %v8024
    %v8026 = vpop.f32.mrf.mxu0
    %8027 = vmatprep.mubr.bf16.mxu0 %v6071
    %8028 = vmatmul.mubr.bf16.gmra.mxu0 %v6070
    %v8029 = vpop.f32.mrf.mxu0
    %v8030 = vadd.f32 %v7597, %v8029
    %v8031 = vpop.f32.mrf.mxu0
    %v8032 = vpop.f32.mrf.mxu0
    %v8033 = vadd.f32 %v7600, %v8032
    %v8034 = vpop.f32.mrf.mxu0
    %8035 = vmatprep.mubr.bf16.mxu0 %v6074
    %8036 = vmatmul.mubr.bf16.gmra.mxu0 %v6073
    %v8037 = vpop.f32.mrf.mxu0
    %v8038 = vadd.f32 %v7605, %v8037
    %v8039 = vpop.f32.mrf.mxu0
    %v8040 = vpop.f32.mrf.mxu0
    %v8041 = vadd.f32 %v7608, %v8040
    %v8042 = vpop.f32.mrf.mxu0
    %8043 = vmatprep.mubr.bf16.mxu0 %v6077
    %8044 = vmatmul.mubr.bf16.gmra.mxu0 %v6076
    %v8045 = vpop.f32.mrf.mxu0
    %v8046 = vadd.f32 %v7613, %v8045
    %v8047 = vpop.f32.mrf.mxu0
    %v8048 = vpop.f32.mrf.mxu0
    %v8049 = vadd.f32 %v7616, %v8048
    %v8050 = vpop.f32.mrf.mxu0
    %8051 = vmatprep.mubr.bf16.mxu0 %v6080
    %8052 = vmatmul.mubr.bf16.gmra.mxu0 %v6079
    %v8053 = vpop.f32.mrf.mxu0
    %v8054 = vadd.f32 %v7621, %v8053
    %v8055 = vpop.f32.mrf.mxu0
    %v8056 = vpop.f32.mrf.mxu0
    %v8057 = vadd.f32 %v7624, %v8056
    %v8058 = vpop.f32.mrf.mxu0
    %8059 = vmatprep.mubr.bf16.mxu0 %v6083
    %8060 = vmatmul.mubr.bf16.gmra.mxu0 %v6082
    %v8061 = vpop.f32.mrf.mxu0
    %v8062 = vadd.f32 %v7629, %v8061
    %v8063 = vpop.f32.mrf.mxu0
    %v8064 = vpop.f32.mrf.mxu0
    %v8065 = vadd.f32 %v7632, %v8064
    %v8066 = vpop.f32.mrf.mxu0
    %8067 = vmatprep.mubr.bf16.mxu0 %v6086
    %8068 = vmatmul.mubr.bf16.gmra.mxu0 %v6085
    %v8069 = vpop.f32.mrf.mxu0
    %v8070 = vadd.f32 %v7637, %v8069
    %v8071 = vpop.f32.mrf.mxu0
    %v8072 = vpop.f32.mrf.mxu0
    %v8073 = vadd.f32 %v7640, %v8072
    %v8074 = vpop.f32.mrf.mxu0
    %8075 = vdwg.mxu0
    %8076 = vmatprep.subr.bf16.mxu0 0
    %8077 = vmatpush1.bf16.msra.mxu0 %v7762
    %8078 = vmatprep.subr.bf16.mxu0 0
    %8079 = vmatpush1.bf16.msra.mxu0 %v7761
    %8080 = vmatprep.subr.bf16.mxu0 0
    %8081 = vmatpush1.bf16.msra.mxu0 %v7760
    %8082 = vmatprep.subr.bf16.mxu0 0
    %8083 = vmatpush1.bf16.msra.mxu0 %v7759
    %8084 = vmatprep.subr.bf16.mxu0 0
    %8085 = vmatpush1.bf16.msra.mxu0 %v7758
    %8086 = vmatprep.subr.bf16.mxu0 0
    %8087 = vmatpush1.bf16.msra.mxu0 %v7757
    %8088 = vmatprep.subr.bf16.mxu0 0
    %8089 = vmatpush1.bf16.msra.mxu0 %v7756
    %8090 = vmatprep.subr.bf16.mxu0 0
    %8091 = vmatpush1.bf16.msra.mxu0 %v7755
    %8092 = vmatprep.subr.bf16.mxu0 0
    %8093 = vmatpush2.bf16.msra.mxu0 0
    %8094 = vmatprep.subr.bf16.mxu0 0
    %8095 = vmatpush2.bf16.msra.mxu0 0
    %8096 = vmatprep.subr.bf16.mxu0 0
    %8097 = vmatpush2.bf16.msra.mxu0 0
    %8098 = vmatprep.subr.bf16.mxu0 0
    %8099 = vmatpush2.bf16.msra.mxu0 0
    %8100 = vmatprep.subr.bf16.mxu0 0
    %8101 = vmatpush2.bf16.msra.mxu0 0
    %8102 = vmatprep.subr.bf16.mxu0 0
    %8103 = vmatpush2.bf16.msra.mxu0 0
    %8104 = vmatprep.subr.bf16.mxu0 0
    %8105 = vmatpush2.bf16.msra.mxu0 0
    %8106 = vmatprep.subr.bf16.mxu0 0
    %8107 = vmatpush2.bf16.msra.mxu0 0
    %8108 = vmatprep.mubr.bf16.mxu0 0
    %8109 = vmatmul.mubr.bf16.gmra.mxu0 %v5994
    %v8110 = vpop.f32.mrf.mxu0
    %v8111 = vadd.f32 %v7822, %v8110
    %v8112 = vpop.f32.mrf.mxu0
    %v8113 = vpop.f32.mrf.mxu0
    %v8114 = vadd.f32 %v7825, %v8113
    %v8115 = vpop.f32.mrf.mxu0
    %8116 = vmatprep.mubr.bf16.mxu0 0
    %8117 = vmatmul.mubr.bf16.gmra.mxu0 %v5997
    %v8118 = vpop.f32.mrf.mxu0
    %v8119 = vadd.f32 %v7830, %v8118
    %v8120 = vpop.f32.mrf.mxu0
    %v8121 = vpop.f32.mrf.mxu0
    %v8122 = vadd.f32 %v7833, %v8121
    %v8123 = vpop.f32.mrf.mxu0
    %8124 = vmatprep.mubr.bf16.mxu0 0
    %8125 = vmatmul.mubr.bf16.gmra.mxu0 %v6000
    %v8126 = vpop.f32.mrf.mxu0
    %v8127 = vadd.f32 %v7838, %v8126
    %v8128 = vpop.f32.mrf.mxu0
    %v8129 = vpop.f32.mrf.mxu0
    %v8130 = vadd.f32 %v7841, %v8129
    %v8131 = vpop.f32.mrf.mxu0
    %8132 = vmatprep.mubr.bf16.mxu0 0
    %8133 = vmatmul.mubr.bf16.gmra.mxu0 %v6003
    %v8134 = vpop.f32.mrf.mxu0
    %v8135 = vadd.f32 %v7846, %v8134
    %v8136 = vpop.f32.mrf.mxu0
    %v8137 = vpop.f32.mrf.mxu0
    %v8138 = vadd.f32 %v7849, %v8137
    %v8139 = vpop.f32.mrf.mxu0
    %8140 = vmatprep.mubr.bf16.mxu0 0
    %8141 = vmatmul.mubr.bf16.gmra.mxu0 %v6006
    %v8142 = vpop.f32.mrf.mxu0
    %v8143 = vadd.f32 %v7854, %v8142
    %v8144 = vpop.f32.mrf.mxu0
    %v8145 = vpop.f32.mrf.mxu0
    %v8146 = vadd.f32 %v7857, %v8145
    %v8147 = vpop.f32.mrf.mxu0
    %8148 = vmatprep.mubr.bf16.mxu0 0
    %8149 = vmatmul.mubr.bf16.gmra.mxu0 %v6009
    %v8150 = vpop.f32.mrf.mxu0
    %v8151 = vadd.f32 %v7862, %v8150
    %v8152 = vpop.f32.mrf.mxu0
    %v8153 = vpop.f32.mrf.mxu0
    %v8154 = vadd.f32 %v7865, %v8153
    %v8155 = vpop.f32.mrf.mxu0
    %8156 = vmatprep.mubr.bf16.mxu0 0
    %8157 = vmatmul.mubr.bf16.gmra.mxu0 %v6012
    %v8158 = vpop.f32.mrf.mxu0
    %v8159 = vadd.f32 %v7870, %v8158
    %v8160 = vpop.f32.mrf.mxu0
    %v8161 = vpop.f32.mrf.mxu0
    %v8162 = vadd.f32 %v7873, %v8161
    %v8163 = vpop.f32.mrf.mxu0
    %8164 = vmatprep.mubr.bf16.mxu0 0
    %8165 = vmatmul.mubr.bf16.gmra.mxu0 %v6015
    %v8166 = vpop.f32.mrf.mxu0
    %v8167 = vadd.f32 %v7878, %v8166
    %v8168 = vpop.f32.mrf.mxu0
    %v8169 = vpop.f32.mrf.mxu0
    %v8170 = vadd.f32 %v7881, %v8169
    %v8171 = vpop.f32.mrf.mxu0
    %8172 = vmatprep.mubr.bf16.mxu0 0
    %8173 = vmatmul.mubr.bf16.gmra.mxu0 %v6018
    %v8174 = vpop.f32.mrf.mxu0
    %v8175 = vadd.f32 %v7886, %v8174
    %v8176 = vpop.f32.mrf.mxu0
    %v8177 = vpop.f32.mrf.mxu0
    %v8178 = vadd.f32 %v7889, %v8177
    %v8179 = vpop.f32.mrf.mxu0
    %8180 = vmatprep.mubr.bf16.mxu0 0
    %8181 = vmatmul.mubr.bf16.gmra.mxu0 %v6021
    %v8182 = vpop.f32.mrf.mxu0
    %v8183 = vadd.f32 %v7894, %v8182
    %v8184 = vpop.f32.mrf.mxu0
    %v8185 = vpop.f32.mrf.mxu0
    %v8186 = vadd.f32 %v7897, %v8185
    %v8187 = vpop.f32.mrf.mxu0
    %8188 = vmatprep.mubr.bf16.mxu0 0
    %8189 = vmatmul.mubr.bf16.gmra.mxu0 %v6024
    %v8190 = vpop.f32.mrf.mxu0
    %v8191 = vadd.f32 %v7902, %v8190
    %v8192 = vpop.f32.mrf.mxu0
    %v8193 = vpop.f32.mrf.mxu0
    %v8194 = vadd.f32 %v7905, %v8193
    %v8195 = vpop.f32.mrf.mxu0
    %8196 = vmatprep.mubr.bf16.mxu0 0
    %8197 = vmatmul.mubr.bf16.gmra.mxu0 %v6027
    %v8198 = vpop.f32.mrf.mxu0
    %v8199 = vadd.f32 %v7910, %v8198
    %v8200 = vpop.f32.mrf.mxu0
    %v8201 = vpop.f32.mrf.mxu0
    %v8202 = vadd.f32 %v7913, %v8201
    %v8203 = vpop.f32.mrf.mxu0
    %8204 = vmatprep.mubr.bf16.mxu0 0
    %8205 = vmatmul.mubr.bf16.gmra.mxu0 %v6030
    %v8206 = vpop.f32.mrf.mxu0
    %v8207 = vadd.f32 %v7918, %v8206
    %v8208 = vpop.f32.mrf.mxu0
    %v8209 = vpop.f32.mrf.mxu0
    %v8210 = vadd.f32 %v7921, %v8209
    %v8211 = vpop.f32.mrf.mxu0
    %8212 = vmatprep.mubr.bf16.mxu0 0
    %8213 = vmatmul.mubr.bf16.gmra.mxu0 %v6033
    %v8214 = vpop.f32.mrf.mxu0
    %v8215 = vadd.f32 %v7926, %v8214
    %v8216 = vpop.f32.mrf.mxu0
    %v8217 = vpop.f32.mrf.mxu0
    %v8218 = vadd.f32 %v7929, %v8217
    %v8219 = vpop.f32.mrf.mxu0
    %8220 = vmatprep.mubr.bf16.mxu0 0
    %8221 = vmatmul.mubr.bf16.gmra.mxu0 %v6036
    %v8222 = vpop.f32.mrf.mxu0
    %v8223 = vadd.f32 %v7934, %v8222
    %v8224 = vpop.f32.mrf.mxu0
    %v8225 = vpop.f32.mrf.mxu0
    %v8226 = vadd.f32 %v7937, %v8225
    %v8227 = vpop.f32.mrf.mxu0
    %8228 = vmatprep.mubr.bf16.mxu0 0
    %8229 = vmatmul.mubr.bf16.gmra.mxu0 %v6039
    %v8230 = vpop.f32.mrf.mxu0
    %v8231 = vadd.f32 %v7942, %v8230
    %v8232 = vpop.f32.mrf.mxu0
    %v8233 = vpop.f32.mrf.mxu0
    %v8234 = vadd.f32 %v7945, %v8233
    %v8235 = vpop.f32.mrf.mxu0
    %8236 = vmatprep.mubr.bf16.mxu0 0
    %8237 = vmatmul.mubr.bf16.gmra.mxu0 %v6042
    %v8238 = vpop.f32.mrf.mxu0
    %v8239 = vadd.f32 %v7950, %v8238
    %v8240 = vpop.f32.mrf.mxu0
    %v8241 = vpop.f32.mrf.mxu0
    %v8242 = vadd.f32 %v7953, %v8241
    %v8243 = vpop.f32.mrf.mxu0
    %8244 = vmatprep.mubr.bf16.mxu0 0
    %8245 = vmatmul.mubr.bf16.gmra.mxu0 %v6045
    %v8246 = vpop.f32.mrf.mxu0
    %v8247 = vadd.f32 %v7958, %v8246
    %v8248 = vpop.f32.mrf.mxu0
    %v8249 = vpop.f32.mrf.mxu0
    %v8250 = vadd.f32 %v7961, %v8249
    %v8251 = vpop.f32.mrf.mxu0
    %8252 = vmatprep.mubr.bf16.mxu0 0
    %8253 = vmatmul.mubr.bf16.gmra.mxu0 %v6048
    %v8254 = vpop.f32.mrf.mxu0
    %v8255 = vadd.f32 %v7966, %v8254
    %v8256 = vpop.f32.mrf.mxu0
    %v8257 = vpop.f32.mrf.mxu0
    %v8258 = vadd.f32 %v7969, %v8257
    %v8259 = vpop.f32.mrf.mxu0
    %8260 = vmatprep.mubr.bf16.mxu0 0
    %8261 = vmatmul.mubr.bf16.gmra.mxu0 %v6051
    %v8262 = vpop.f32.mrf.mxu0
    %v8263 = vadd.f32 %v7974, %v8262
    %v8264 = vpop.f32.mrf.mxu0
    %v8265 = vpop.f32.mrf.mxu0
    %v8266 = vadd.f32 %v7977, %v8265
    %v8267 = vpop.f32.mrf.mxu0
    %8268 = vmatprep.mubr.bf16.mxu0 0
    %8269 = vmatmul.mubr.bf16.gmra.mxu0 %v6054
    %v8270 = vpop.f32.mrf.mxu0
    %v8271 = vadd.f32 %v7982, %v8270
    %v8272 = vpop.f32.mrf.mxu0
    %v8273 = vpop.f32.mrf.mxu0
    %v8274 = vadd.f32 %v7985, %v8273
    %v8275 = vpop.f32.mrf.mxu0
    %8276 = vmatprep.mubr.bf16.mxu0 0
    %8277 = vmatmul.mubr.bf16.gmra.mxu0 %v6057
    %v8278 = vpop.f32.mrf.mxu0
    %v8279 = vadd.f32 %v7990, %v8278
    %v8280 = vpop.f32.mrf.mxu0
    %v8281 = vpop.f32.mrf.mxu0
    %v8282 = vadd.f32 %v7993, %v8281
    %v8283 = vpop.f32.mrf.mxu0
    %8284 = vmatprep.mubr.bf16.mxu0 0
    %8285 = vmatmul.mubr.bf16.gmra.mxu0 %v6060
    %v8286 = vpop.f32.mrf.mxu0
    %v8287 = vadd.f32 %v7998, %v8286
    %v8288 = vpop.f32.mrf.mxu0
    %v8289 = vpop.f32.mrf.mxu0
    %v8290 = vadd.f32 %v8001, %v8289
    %v8291 = vpop.f32.mrf.mxu0
    %8292 = vmatprep.mubr.bf16.mxu0 0
    %8293 = vmatmul.mubr.bf16.gmra.mxu0 %v6063
    %v8294 = vpop.f32.mrf.mxu0
    %v8295 = vadd.f32 %v8006, %v8294
    %v8296 = vpop.f32.mrf.mxu0
    %v8297 = vpop.f32.mrf.mxu0
    %v8298 = vadd.f32 %v8009, %v8297
    %v8299 = vpop.f32.mrf.mxu0
    %8300 = vmatprep.mubr.bf16.mxu0 0
    %8301 = vmatmul.mubr.bf16.gmra.mxu0 %v6066
    %v8302 = vpop.f32.mrf.mxu0
    %v8303 = vadd.f32 %v8014, %v8302
    %v8304 = vpop.f32.mrf.mxu0
    %v8305 = vpop.f32.mrf.mxu0
    %v8306 = vadd.f32 %v8017, %v8305
    %v8307 = vpop.f32.mrf.mxu0
    %8308 = vmatprep.mubr.bf16.mxu0 0
    %8309 = vmatmul.mubr.bf16.gmra.mxu0 %v6069
    %v8310 = vpop.f32.mrf.mxu0
    %v8311 = vadd.f32 %v8022, %v8310
    %v8312 = vpop.f32.mrf.mxu0
    %v8313 = vpop.f32.mrf.mxu0
    %v8314 = vadd.f32 %v8025, %v8313
    %v8315 = vpop.f32.mrf.mxu0
    %8316 = vmatprep.mubr.bf16.mxu0 0
    %8317 = vmatmul.mubr.bf16.gmra.mxu0 %v6072
    %v8318 = vpop.f32.mrf.mxu0
    %v8319 = vadd.f32 %v8030, %v8318
    %v8320 = vpop.f32.mrf.mxu0
    %v8321 = vpop.f32.mrf.mxu0
    %v8322 = vadd.f32 %v8033, %v8321
    %v8323 = vpop.f32.mrf.mxu0
    %8324 = vmatprep.mubr.bf16.mxu0 0
    %8325 = vmatmul.mubr.bf16.gmra.mxu0 %v6075
    %v8326 = vpop.f32.mrf.mxu0
    %v8327 = vadd.f32 %v8038, %v8326
    %v8328 = vpop.f32.mrf.mxu0
    %v8329 = vpop.f32.mrf.mxu0
    %v8330 = vadd.f32 %v8041, %v8329
    %v8331 = vpop.f32.mrf.mxu0
    %8332 = vmatprep.mubr.bf16.mxu0 0
    %8333 = vmatmul.mubr.bf16.gmra.mxu0 %v6078
    %v8334 = vpop.f32.mrf.mxu0
    %v8335 = vadd.f32 %v8046, %v8334
    %v8336 = vpop.f32.mrf.mxu0
    %v8337 = vpop.f32.mrf.mxu0
    %v8338 = vadd.f32 %v8049, %v8337
    %v8339 = vpop.f32.mrf.mxu0
    %8340 = vmatprep.mubr.bf16.mxu0 0
    %8341 = vmatmul.mubr.bf16.gmra.mxu0 %v6081
    %v8342 = vpop.f32.mrf.mxu0
    %v8343 = vadd.f32 %v8054, %v8342
    %v8344 = vpop.f32.mrf.mxu0
    %v8345 = vpop.f32.mrf.mxu0
    %v8346 = vadd.f32 %v8057, %v8345
    %v8347 = vpop.f32.mrf.mxu0
    %8348 = vmatprep.mubr.bf16.mxu0 0
    %8349 = vmatmul.mubr.bf16.gmra.mxu0 %v6084
    %v8350 = vpop.f32.mrf.mxu0
    %v8351 = vadd.f32 %v8062, %v8350
    %v8352 = vpop.f32.mrf.mxu0
    %v8353 = vpop.f32.mrf.mxu0
    %v8354 = vadd.f32 %v8065, %v8353
    %v8355 = vpop.f32.mrf.mxu0
    %8356 = vmatprep.mubr.bf16.mxu0 0
    %8357 = vmatmul.mubr.bf16.gmra.mxu0 %v6087
    %v8358 = vpop.f32.mrf.mxu0
    %v8359 = vadd.f32 %v8070, %v8358
    %v8360 = vpop.f32.mrf.mxu0
    %v8361 = vpop.f32.mrf.mxu0
    %v8362 = vadd.f32 %v8073, %v8361
    %v8363 = vpop.f32.mrf.mxu0
    %8364 = vdwg.mxu0
    %s8365 = scalar_lea.vmem [#allocation2], 48
    %v8366 = vld [vmem:[%s8365] sm:$0xff]
    %v8367 = vld [vmem:[%s8365 + $0x8] sm:$0xff]
    %v8368 = vld [vmem:[%s8365 + $0x10] sm:$0xff]
    %v8369 = vld [vmem:[%s8365 + $0x18] sm:$0xff]
    %v8370 = vld [vmem:[%s8365 + $0x20] sm:$0xff]
    %v8371 = vld [vmem:[%s8365 + $0x28] sm:$0xff]
    %v8372 = vld [vmem:[%s8365 + $0x30] sm:$0xff]
    %v8373 = vld [vmem:[%s8365 + $0x38] sm:$0xff]
    %v8374 = vld [vmem:[%s8365 + $0x40] sm:$0xff]
    %v8375 = vld [vmem:[%s8365 + $0x48] sm:$0xff]
    %v8376 = vld [vmem:[%s8365 + $0x50] sm:$0xff]
    %v8377 = vld [vmem:[%s8365 + $0x58] sm:$0xff]
    %v8378 = vld [vmem:[%s8365 + $0x60] sm:$0xff]
    %v8379 = vld [vmem:[%s8365 + $0x68] sm:$0xff]
    %v8380 = vld [vmem:[%s8365 + $0x70] sm:$0xff]
    %v8381 = vld [vmem:[%s8365 + $0x78] sm:$0xff]
    %v8382 = vld [vmem:[%s8365 + $0x80] sm:$0xff]
    %v8383 = vld [vmem:[%s8365 + $0x88] sm:$0xff]
    %v8384 = vld [vmem:[%s8365 + $0x90] sm:$0xff]
    %v8385 = vld [vmem:[%s8365 + $0x98] sm:$0xff]
    %v8386 = vld [vmem:[%s8365 + $0xa0] sm:$0xff]
    %v8387 = vld [vmem:[%s8365 + $0xa8] sm:$0xff]
    %v8388 = vld [vmem:[%s8365 + $0xb0] sm:$0xff]
    %v8389 = vld [vmem:[%s8365 + $0xb8] sm:$0xff]
    %v8390 = vld [vmem:[%s8365 + $0xc0] sm:$0xff]
    %v8391 = vld [vmem:[%s8365 + $0xc8] sm:$0xff]
    %v8392 = vld [vmem:[%s8365 + $0xd0] sm:$0xff]
    %v8393 = vld [vmem:[%s8365 + $0xd8] sm:$0xff]
    %v8394 = vld [vmem:[%s8365 + $0xe0] sm:$0xff]
    %v8395 = vld [vmem:[%s8365 + $0xe8] sm:$0xff]
    %v8396 = vld [vmem:[%s8365 + $0xf0] sm:$0xff]
    %v8397 = vld [vmem:[%s8365 + $0xf8] sm:$0xff]
    %v8398 = vld [vmem:[%s8365 + $0x100] sm:$0xff]
    %v8399 = vld [vmem:[%s8365 + $0x108] sm:$0xff]
    %v8400 = vld [vmem:[%s8365 + $0x110] sm:$0xff]
    %v8401 = vld [vmem:[%s8365 + $0x118] sm:$0xff]
    %v8402 = vld [vmem:[%s8365 + $0x120] sm:$0xff]
    %v8403 = vld [vmem:[%s8365 + $0x128] sm:$0xff]
    %v8404 = vld [vmem:[%s8365 + $0x130] sm:$0xff]
    %v8405 = vld [vmem:[%s8365 + $0x138] sm:$0xff]
    %v8406 = vld [vmem:[%s8365 + $0x140] sm:$0xff]
    %v8407 = vld [vmem:[%s8365 + $0x148] sm:$0xff]
    %v8408 = vld [vmem:[%s8365 + $0x150] sm:$0xff]
    %v8409 = vld [vmem:[%s8365 + $0x158] sm:$0xff]
    %v8410 = vld [vmem:[%s8365 + $0x160] sm:$0xff]
    %v8411 = vld [vmem:[%s8365 + $0x168] sm:$0xff]
    %v8412 = vld [vmem:[%s8365 + $0x170] sm:$0xff]
    %v8413 = vld [vmem:[%s8365 + $0x178] sm:$0xff]
    %v8414 = vld [vmem:[%s8365 + $0x1b0] sm:$0xff]
    %v8415 = vld [vmem:[%s8365 + $0x1b8] sm:$0xff]
    %v8416 = vld [vmem:[%s8365 + $0x1c0] sm:$0xff]
    %v8417 = vld [vmem:[%s8365 + $0x1c8] sm:$0xff]
    %v8418 = vld [vmem:[%s8365 + $0x1d0] sm:$0xff]
    %v8419 = vld [vmem:[%s8365 + $0x1d8] sm:$0xff]
    %v8420 = vld [vmem:[%s8365 + $0x1e0] sm:$0xff]
    %v8421 = vld [vmem:[%s8365 + $0x1e8] sm:$0xff]
    %v8422 = vld [vmem:[%s8365 + $0x1f0] sm:$0xff]
    %v8423 = vld [vmem:[%s8365 + $0x1f8] sm:$0xff]
    %v8424 = vld [vmem:[%s8365 + $0x200] sm:$0xff]
    %v8425 = vld [vmem:[%s8365 + $0x208] sm:$0xff]
    %v8426 = vld [vmem:[%s8365 + $0x210] sm:$0xff]
    %v8427 = vld [vmem:[%s8365 + $0x218] sm:$0xff]
    %v8428 = vld [vmem:[%s8365 + $0x220] sm:$0xff]
    %v8429 = vld [vmem:[%s8365 + $0x228] sm:$0xff]
    %v8430 = vld [vmem:[%s8365 + $0x230] sm:$0xff]
    %v8431 = vld [vmem:[%s8365 + $0x238] sm:$0xff]
    %v8432 = vld [vmem:[%s8365 + $0x240] sm:$0xff]
    %v8433 = vld [vmem:[%s8365 + $0x248] sm:$0xff]
    %v8434 = vld [vmem:[%s8365 + $0x250] sm:$0xff]
    %v8435 = vld [vmem:[%s8365 + $0x258] sm:$0xff]
    %v8436 = vld [vmem:[%s8365 + $0x260] sm:$0xff]
    %v8437 = vld [vmem:[%s8365 + $0x268] sm:$0xff]
    %v8438 = vld [vmem:[%s8365 + $0x270] sm:$0xff]
    %v8439 = vld [vmem:[%s8365 + $0x278] sm:$0xff]
    %v8440 = vld [vmem:[%s8365 + $0x280] sm:$0xff]
    %v8441 = vld [vmem:[%s8365 + $0x288] sm:$0xff]
    %v8442 = vld [vmem:[%s8365 + $0x290] sm:$0xff]
    %v8443 = vld [vmem:[%s8365 + $0x298] sm:$0xff]
    %v8444 = vld [vmem:[%s8365 + $0x2a0] sm:$0xff]
    %v8445 = vld [vmem:[%s8365 + $0x2a8] sm:$0xff]
    %v8446 = vld [vmem:[%s8365 + $0x2b0] sm:$0xff]
    %v8447 = vld [vmem:[%s8365 + $0x2b8] sm:$0xff]
    %v8448 = vld [vmem:[%s8365 + $0x2c0] sm:$0xff]
    %v8449 = vld [vmem:[%s8365 + $0x2c8] sm:$0xff]
    %v8450 = vld [vmem:[%s8365 + $0x2d0] sm:$0xff]
    %v8451 = vld [vmem:[%s8365 + $0x2d8] sm:$0xff]
    %v8452 = vld [vmem:[%s8365 + $0x2e0] sm:$0xff]
    %v8453 = vld [vmem:[%s8365 + $0x2e8] sm:$0xff]
    %v8454 = vld [vmem:[%s8365 + $0x2f0] sm:$0xff]
    %v8455 = vld [vmem:[%s8365 + $0x2f8] sm:$0xff]
    %v8456 = vld [vmem:[%s8365 + $0x300] sm:$0xff]
    %v8457 = vld [vmem:[%s8365 + $0x308] sm:$0xff]
    %v8458 = vld [vmem:[%s8365 + $0x310] sm:$0xff]
    %v8459 = vld [vmem:[%s8365 + $0x318] sm:$0xff]
    %v8460 = vld [vmem:[%s8365 + $0x320] sm:$0xff]
    %v8461 = vld [vmem:[%s8365 + $0x328] sm:$0xff]
    %v8558 = vrot.slane %v8366, 1
    %v8559 = vrot.slane %v8367, 1
    %v8560 = vsel %vm261, %v8558, %v8559
    %v8561 = vrot.slane %v8368, 1
    %v8562 = vsel %vm261, %v8559, %v8561
    %v8563 = vrot.slane %v8369, 1
    %v8564 = vrot.slane %v8370, 1
    %v8565 = vsel %vm261, %v8563, %v8564
    %v8566 = vrot.slane %v8371, 1
    %v8567 = vsel %vm261, %v8564, %v8566
    %v8568 = vrot.slane %v8372, 1
    %v8569 = vrot.slane %v8373, 1
    %v8570 = vsel %vm261, %v8568, %v8569
    %v8571 = vrot.slane %v8374, 1
    %v8572 = vsel %vm261, %v8569, %v8571
    %v8573 = vrot.slane %v8375, 1
    %v8574 = vrot.slane %v8376, 1
    %v8575 = vsel %vm261, %v8573, %v8574
    %v8576 = vrot.slane %v8377, 1
    %v8577 = vsel %vm261, %v8574, %v8576
    %v8578 = vrot.slane %v8378, 1
    %v8579 = vrot.slane %v8379, 1
    %v8580 = vsel %vm261, %v8578, %v8579
    %v8581 = vrot.slane %v8380, 1
    %v8582 = vsel %vm261, %v8579, %v8581
    %v8583 = vrot.slane %v8381, 1
    %v8584 = vrot.slane %v8382, 1
    %v8585 = vsel %vm261, %v8583, %v8584
    %v8586 = vrot.slane %v8383, 1
    %v8587 = vsel %vm261, %v8584, %v8586
    %v8588 = vrot.slane %v8384, 1
    %v8589 = vrot.slane %v8385, 1
    %v8590 = vsel %vm261, %v8588, %v8589
    %v8591 = vrot.slane %v8386, 1
    %v8592 = vsel %vm261, %v8589, %v8591
    %v8593 = vrot.slane %v8387, 1
    %v8594 = vrot.slane %v8388, 1
    %v8595 = vsel %vm261, %v8593, %v8594
    %v8596 = vrot.slane %v8389, 1
    %v8597 = vsel %vm261, %v8594, %v8596
    %v8598 = vrot.slane %v8390, 1
    %v8599 = vrot.slane %v8391, 1
    %v8600 = vsel %vm261, %v8598, %v8599
    %v8601 = vrot.slane %v8392, 1
    %v8602 = vsel %vm261, %v8599, %v8601
    %v8603 = vrot.slane %v8393, 1
    %v8604 = vrot.slane %v8394, 1
    %v8605 = vsel %vm261, %v8603, %v8604
    %v8606 = vrot.slane %v8395, 1
    %v8607 = vsel %vm261, %v8604, %v8606
    %v8608 = vrot.slane %v8396, 1
    %v8609 = vrot.slane %v8397, 1
    %v8610 = vsel %vm261, %v8608, %v8609
    %v8611 = vrot.slane %v8398, 1
    %v8612 = vsel %vm261, %v8609, %v8611
    %v8613 = vrot.slane %v8399, 1
    %v8614 = vrot.slane %v8400, 1
    %v8615 = vsel %vm261, %v8613, %v8614
    %v8616 = vrot.slane %v8401, 1
    %v8617 = vsel %vm261, %v8614, %v8616
    %v8618 = vrot.slane %v8402, 1
    %v8619 = vrot.slane %v8403, 1
    %v8620 = vsel %vm261, %v8618, %v8619
    %v8621 = vrot.slane %v8404, 1
    %v8622 = vsel %vm261, %v8619, %v8621
    %v8623 = vrot.slane %v8405, 1
    %v8624 = vrot.slane %v8406, 1
    %v8625 = vsel %vm261, %v8623, %v8624
    %v8626 = vrot.slane %v8407, 1
    %v8627 = vsel %vm261, %v8624, %v8626
    %v8628 = vrot.slane %v8408, 1
    %v8629 = vrot.slane %v8409, 1
    %v8630 = vsel %vm261, %v8628, %v8629
    %v8631 = vrot.slane %v8410, 1
    %v8632 = vsel %vm261, %v8629, %v8631
    %v8633 = vrot.slane %v8411, 1
    %v8634 = vrot.slane %v8412, 1
    %v8635 = vsel %vm261, %v8633, %v8634
    %v8636 = vrot.slane %v8413, 1
    %v8637 = vsel %vm261, %v8634, %v8636
    %v8638 = vrot.slane %v8414, 1
    %v8639 = vrot.slane %v8415, 1
    %v8640 = vsel %vm261, %v8638, %v8639
    %v8641 = vrot.slane %v8416, 1
    %v8642 = vsel %vm261, %v8639, %v8641
    %v8643 = vrot.slane %v8417, 1
    %v8644 = vrot.slane %v8418, 1
    %v8645 = vsel %vm261, %v8643, %v8644
    %v8646 = vrot.slane %v8419, 1
    %v8647 = vsel %vm261, %v8644, %v8646
    %v8648 = vrot.slane %v8420, 1
    %v8649 = vrot.slane %v8421, 1
    %v8650 = vsel %vm261, %v8648, %v8649
    %v8651 = vrot.slane %v8422, 1
    %v8652 = vsel %vm261, %v8649, %v8651
    %v8653 = vrot.slane %v8423, 1
    %v8654 = vrot.slane %v8424, 1
    %v8655 = vsel %vm261, %v8653, %v8654
    %v8656 = vrot.slane %v8425, 1
    %v8657 = vsel %vm261, %v8654, %v8656
    %v8658 = vrot.slane %v8426, 1
    %v8659 = vrot.slane %v8427, 1
    %v8660 = vsel %vm261, %v8658, %v8659
    %v8661 = vrot.slane %v8428, 1
    %v8662 = vsel %vm261, %v8659, %v8661
    %v8663 = vrot.slane %v8429, 1
    %v8664 = vrot.slane %v8430, 1
    %v8665 = vsel %vm261, %v8663, %v8664
    %v8666 = vrot.slane %v8431, 1
    %v8667 = vsel %vm261, %v8664, %v8666
    %v8668 = vrot.slane %v8432, 1
    %v8669 = vrot.slane %v8433, 1
    %v8670 = vsel %vm261, %v8668, %v8669
    %v8671 = vrot.slane %v8434, 1
    %v8672 = vsel %vm261, %v8669, %v8671
    %v8673 = vrot.slane %v8435, 1
    %v8674 = vrot.slane %v8436, 1
    %v8675 = vsel %vm261, %v8673, %v8674
    %v8676 = vrot.slane %v8437, 1
    %v8677 = vsel %vm261, %v8674, %v8676
    %v8678 = vrot.slane %v8438, 1
    %v8679 = vrot.slane %v8439, 1
    %v8680 = vsel %vm261, %v8678, %v8679
    %v8681 = vrot.slane %v8440, 1
    %v8682 = vsel %vm261, %v8679, %v8681
    %v8683 = vrot.slane %v8441, 1
    %v8684 = vrot.slane %v8442, 1
    %v8685 = vsel %vm261, %v8683, %v8684
    %v8686 = vrot.slane %v8443, 1
    %v8687 = vsel %vm261, %v8684, %v8686
    %v8688 = vrot.slane %v8444, 1
    %v8689 = vrot.slane %v8445, 1
    %v8690 = vsel %vm261, %v8688, %v8689
    %v8691 = vrot.slane %v8446, 1
    %v8692 = vsel %vm261, %v8689, %v8691
    %v8693 = vrot.slane %v8447, 1
    %v8694 = vrot.slane %v8448, 1
    %v8695 = vsel %vm261, %v8693, %v8694
    %v8696 = vrot.slane %v8449, 1
    %v8697 = vsel %vm261, %v8694, %v8696
    %v8698 = vrot.slane %v8450, 1
    %v8699 = vrot.slane %v8451, 1
    %v8700 = vsel %vm261, %v8698, %v8699
    %v8701 = vrot.slane %v8452, 1
    %v8702 = vsel %vm261, %v8699, %v8701
    %v8703 = vrot.slane %v8453, 1
    %v8704 = vrot.slane %v8454, 1
    %v8705 = vsel %vm261, %v8703, %v8704
    %v8706 = vrot.slane %v8455, 1
    %v8707 = vsel %vm261, %v8704, %v8706
    %v8708 = vrot.slane %v8456, 1
    %v8709 = vrot.slane %v8457, 1
    %v8710 = vsel %vm261, %v8708, %v8709
    %v8711 = vrot.slane %v8458, 1
    %v8712 = vsel %vm261, %v8709, %v8711
    %v8713 = vrot.slane %v8459, 1
    %v8714 = vrot.slane %v8460, 1
    %v8715 = vsel %vm261, %v8713, %v8714
    %v8716 = vrot.slane %v8461, 1
    %v8717 = vsel %vm261, %v8714, %v8716
    %v8782 = vrot.slane %v8366, 2
    %v8783 = vrot.slane %v8367, 2
    %v8784 = vsel %vm486, %v8782, %v8783
    %v8785 = vrot.slane %v8368, 2
    %v8786 = vsel %vm486, %v8783, %v8785
    %v8787 = vrot.slane %v8369, 2
    %v8788 = vrot.slane %v8370, 2
    %v8789 = vsel %vm486, %v8787, %v8788
    %v8790 = vrot.slane %v8371, 2
    %v8791 = vsel %vm486, %v8788, %v8790
    %v8792 = vrot.slane %v8372, 2
    %v8793 = vrot.slane %v8373, 2
    %v8794 = vsel %vm486, %v8792, %v8793
    %v8795 = vrot.slane %v8374, 2
    %v8796 = vsel %vm486, %v8793, %v8795
    %v8797 = vrot.slane %v8375, 2
    %v8798 = vrot.slane %v8376, 2
    %v8799 = vsel %vm486, %v8797, %v8798
    %v8800 = vrot.slane %v8377, 2
    %v8801 = vsel %vm486, %v8798, %v8800
    %v8802 = vrot.slane %v8378, 2
    %v8803 = vrot.slane %v8379, 2
    %v8804 = vsel %vm486, %v8802, %v8803
    %v8805 = vrot.slane %v8380, 2
    %v8806 = vsel %vm486, %v8803, %v8805
    %v8807 = vrot.slane %v8381, 2
    %v8808 = vrot.slane %v8382, 2
    %v8809 = vsel %vm486, %v8807, %v8808
    %v8810 = vrot.slane %v8383, 2
    %v8811 = vsel %vm486, %v8808, %v8810
    %v8812 = vrot.slane %v8384, 2
    %v8813 = vrot.slane %v8385, 2
    %v8814 = vsel %vm486, %v8812, %v8813
    %v8815 = vrot.slane %v8386, 2
    %v8816 = vsel %vm486, %v8813, %v8815
    %v8817 = vrot.slane %v8387, 2
    %v8818 = vrot.slane %v8388, 2
    %v8819 = vsel %vm486, %v8817, %v8818
    %v8820 = vrot.slane %v8389, 2
    %v8821 = vsel %vm486, %v8818, %v8820
    %v8822 = vrot.slane %v8390, 2
    %v8823 = vrot.slane %v8391, 2
    %v8824 = vsel %vm486, %v8822, %v8823
    %v8825 = vrot.slane %v8392, 2
    %v8826 = vsel %vm486, %v8823, %v8825
    %v8827 = vrot.slane %v8393, 2
    %v8828 = vrot.slane %v8394, 2
    %v8829 = vsel %vm486, %v8827, %v8828
    %v8830 = vrot.slane %v8395, 2
    %v8831 = vsel %vm486, %v8828, %v8830
    %v8832 = vrot.slane %v8396, 2
    %v8833 = vrot.slane %v8397, 2
    %v8834 = vsel %vm486, %v8832, %v8833
    %v8835 = vrot.slane %v8398, 2
    %v8836 = vsel %vm486, %v8833, %v8835
    %v8837 = vrot.slane %v8399, 2
    %v8838 = vrot.slane %v8400, 2
    %v8839 = vsel %vm486, %v8837, %v8838
    %v8840 = vrot.slane %v8401, 2
    %v8841 = vsel %vm486, %v8838, %v8840
    %v8842 = vrot.slane %v8402, 2
    %v8843 = vrot.slane %v8403, 2
    %v8844 = vsel %vm486, %v8842, %v8843
    %v8845 = vrot.slane %v8404, 2
    %v8846 = vsel %vm486, %v8843, %v8845
    %v8847 = vrot.slane %v8405, 2
    %v8848 = vrot.slane %v8406, 2
    %v8849 = vsel %vm486, %v8847, %v8848
    %v8850 = vrot.slane %v8407, 2
    %v8851 = vsel %vm486, %v8848, %v8850
    %v8852 = vrot.slane %v8408, 2
    %v8853 = vrot.slane %v8409, 2
    %v8854 = vsel %vm486, %v8852, %v8853
    %v8855 = vrot.slane %v8410, 2
    %v8856 = vsel %vm486, %v8853, %v8855
    %v8857 = vrot.slane %v8411, 2
    %v8858 = vrot.slane %v8412, 2
    %v8859 = vsel %vm486, %v8857, %v8858
    %v8860 = vrot.slane %v8413, 2
    %v8861 = vsel %vm486, %v8858, %v8860
    %v8862 = vrot.slane %v8414, 2
    %v8863 = vrot.slane %v8415, 2
    %v8864 = vsel %vm486, %v8862, %v8863
    %v8865 = vrot.slane %v8416, 2
    %v8866 = vsel %vm486, %v8863, %v8865
    %v8867 = vrot.slane %v8417, 2
    %v8868 = vrot.slane %v8418, 2
    %v8869 = vsel %vm486, %v8867, %v8868
    %v8870 = vrot.slane %v8419, 2
    %v8871 = vsel %vm486, %v8868, %v8870
    %v8872 = vrot.slane %v8420, 2
    %v8873 = vrot.slane %v8421, 2
    %v8874 = vsel %vm486, %v8872, %v8873
    %v8875 = vrot.slane %v8422, 2
    %v8876 = vsel %vm486, %v8873, %v8875
    %v8877 = vrot.slane %v8423, 2
    %v8878 = vrot.slane %v8424, 2
    %v8879 = vsel %vm486, %v8877, %v8878
    %v8880 = vrot.slane %v8425, 2
    %v8881 = vsel %vm486, %v8878, %v8880
    %v8882 = vrot.slane %v8426, 2
    %v8883 = vrot.slane %v8427, 2
    %v8884 = vsel %vm486, %v8882, %v8883
    %v8885 = vrot.slane %v8428, 2
    %v8886 = vsel %vm486, %v8883, %v8885
    %v8887 = vrot.slane %v8429, 2
    %v8888 = vrot.slane %v8430, 2
    %v8889 = vsel %vm486, %v8887, %v8888
    %v8890 = vrot.slane %v8431, 2
    %v8891 = vsel %vm486, %v8888, %v8890
    %v8892 = vrot.slane %v8432, 2
    %v8893 = vrot.slane %v8433, 2
    %v8894 = vsel %vm486, %v8892, %v8893
    %v8895 = vrot.slane %v8434, 2
    %v8896 = vsel %vm486, %v8893, %v8895
    %v8897 = vrot.slane %v8435, 2
    %v8898 = vrot.slane %v8436, 2
    %v8899 = vsel %vm486, %v8897, %v8898
    %v8900 = vrot.slane %v8437, 2
    %v8901 = vsel %vm486, %v8898, %v8900
    %v8902 = vrot.slane %v8438, 2
    %v8903 = vrot.slane %v8439, 2
    %v8904 = vsel %vm486, %v8902, %v8903
    %v8905 = vrot.slane %v8440, 2
    %v8906 = vsel %vm486, %v8903, %v8905
    %v8907 = vrot.slane %v8441, 2
    %v8908 = vrot.slane %v8442, 2
    %v8909 = vsel %vm486, %v8907, %v8908
    %v8910 = vrot.slane %v8443, 2
    %v8911 = vsel %vm486, %v8908, %v8910
    %v8912 = vrot.slane %v8444, 2
    %v8913 = vrot.slane %v8445, 2
    %v8914 = vsel %vm486, %v8912, %v8913
    %v8915 = vrot.slane %v8446, 2
    %v8916 = vsel %vm486, %v8913, %v8915
    %v8917 = vrot.slane %v8447, 2
    %v8918 = vrot.slane %v8448, 2
    %v8919 = vsel %vm486, %v8917, %v8918
    %v8920 = vrot.slane %v8449, 2
    %v8921 = vsel %vm486, %v8918, %v8920
    %v8922 = vrot.slane %v8450, 2
    %v8923 = vrot.slane %v8451, 2
    %v8924 = vsel %vm486, %v8922, %v8923
    %v8925 = vrot.slane %v8452, 2
    %v8926 = vsel %vm486, %v8923, %v8925
    %v8927 = vrot.slane %v8453, 2
    %v8928 = vrot.slane %v8454, 2
    %v8929 = vsel %vm486, %v8927, %v8928
    %v8930 = vrot.slane %v8455, 2
    %v8931 = vsel %vm486, %v8928, %v8930
    %v8932 = vrot.slane %v8456, 2
    %v8933 = vrot.slane %v8457, 2
    %v8934 = vsel %vm486, %v8932, %v8933
    %v8935 = vrot.slane %v8458, 2
    %v8936 = vsel %vm486, %v8933, %v8935
    %v8937 = vrot.slane %v8459, 2
    %v8938 = vrot.slane %v8460, 2
    %v8939 = vsel %vm486, %v8937, %v8938
    %v8940 = vrot.slane %v8461, 2
    %v8941 = vsel %vm486, %v8938, %v8940
    %v9006 = vpack.c.bf16 %v8367, %v8366
    %v9007 = vpack.c.bf16 %v8562, %v8560
    %v9008 = vpack.c.bf16 %v8786, %v8784
    %v9009 = vpack.c.bf16 %v8370, %v8369
    %v9010 = vpack.c.bf16 %v8567, %v8565
    %v9011 = vpack.c.bf16 %v8791, %v8789
    %v9012 = vpack.c.bf16 %v8373, %v8372
    %v9013 = vpack.c.bf16 %v8572, %v8570
    %v9014 = vpack.c.bf16 %v8796, %v8794
    %v9015 = vpack.c.bf16 %v8376, %v8375
    %v9016 = vpack.c.bf16 %v8577, %v8575
    %v9017 = vpack.c.bf16 %v8801, %v8799
    %v9018 = vpack.c.bf16 %v8379, %v8378
    %v9019 = vpack.c.bf16 %v8582, %v8580
    %v9020 = vpack.c.bf16 %v8806, %v8804
    %v9021 = vpack.c.bf16 %v8382, %v8381
    %v9022 = vpack.c.bf16 %v8587, %v8585
    %v9023 = vpack.c.bf16 %v8811, %v8809
    %v9024 = vpack.c.bf16 %v8385, %v8384
    %v9025 = vpack.c.bf16 %v8592, %v8590
    %v9026 = vpack.c.bf16 %v8816, %v8814
    %v9027 = vpack.c.bf16 %v8388, %v8387
    %v9028 = vpack.c.bf16 %v8597, %v8595
    %v9029 = vpack.c.bf16 %v8821, %v8819
    %v9030 = vpack.c.bf16 %v8391, %v8390
    %v9031 = vpack.c.bf16 %v8602, %v8600
    %v9032 = vpack.c.bf16 %v8826, %v8824
    %v9033 = vpack.c.bf16 %v8394, %v8393
    %v9034 = vpack.c.bf16 %v8607, %v8605
    %v9035 = vpack.c.bf16 %v8831, %v8829
    %v9036 = vpack.c.bf16 %v8397, %v8396
    %v9037 = vpack.c.bf16 %v8612, %v8610
    %v9038 = vpack.c.bf16 %v8836, %v8834
    %v9039 = vpack.c.bf16 %v8400, %v8399
    %v9040 = vpack.c.bf16 %v8617, %v8615
    %v9041 = vpack.c.bf16 %v8841, %v8839
    %v9042 = vpack.c.bf16 %v8403, %v8402
    %v9043 = vpack.c.bf16 %v8622, %v8620
    %v9044 = vpack.c.bf16 %v8846, %v8844
    %v9045 = vpack.c.bf16 %v8406, %v8405
    %v9046 = vpack.c.bf16 %v8627, %v8625
    %v9047 = vpack.c.bf16 %v8851, %v8849
    %v9048 = vpack.c.bf16 %v8409, %v8408
    %v9049 = vpack.c.bf16 %v8632, %v8630
    %v9050 = vpack.c.bf16 %v8856, %v8854
    %v9051 = vpack.c.bf16 %v8412, %v8411
    %v9052 = vpack.c.bf16 %v8637, %v8635
    %v9053 = vpack.c.bf16 %v8861, %v8859
    %v9054 = vpack.c.bf16 %v8415, %v8414
    %v9055 = vpack.c.bf16 %v8642, %v8640
    %v9056 = vpack.c.bf16 %v8866, %v8864
    %v9057 = vpack.c.bf16 %v8418, %v8417
    %v9058 = vpack.c.bf16 %v8647, %v8645
    %v9059 = vpack.c.bf16 %v8871, %v8869
    %v9060 = vpack.c.bf16 %v8421, %v8420
    %v9061 = vpack.c.bf16 %v8652, %v8650
    %v9062 = vpack.c.bf16 %v8876, %v8874
    %v9063 = vpack.c.bf16 %v8424, %v8423
    %v9064 = vpack.c.bf16 %v8657, %v8655
    %v9065 = vpack.c.bf16 %v8881, %v8879
    %v9066 = vpack.c.bf16 %v8427, %v8426
    %v9067 = vpack.c.bf16 %v8662, %v8660
    %v9068 = vpack.c.bf16 %v8886, %v8884
    %v9069 = vpack.c.bf16 %v8430, %v8429
    %v9070 = vpack.c.bf16 %v8667, %v8665
    %v9071 = vpack.c.bf16 %v8891, %v8889
    %v9072 = vpack.c.bf16 %v8433, %v8432
    %v9073 = vpack.c.bf16 %v8672, %v8670
    %v9074 = vpack.c.bf16 %v8896, %v8894
    %v9075 = vpack.c.bf16 %v8436, %v8435
    %v9076 = vpack.c.bf16 %v8677, %v8675
    %v9077 = vpack.c.bf16 %v8901, %v8899
    %v9078 = vpack.c.bf16 %v8439, %v8438
    %v9079 = vpack.c.bf16 %v8682, %v8680
    %v9080 = vpack.c.bf16 %v8906, %v8904
    %v9081 = vpack.c.bf16 %v8442, %v8441
    %v9082 = vpack.c.bf16 %v8687, %v8685
    %v9083 = vpack.c.bf16 %v8911, %v8909
    %v9084 = vpack.c.bf16 %v8445, %v8444
    %v9085 = vpack.c.bf16 %v8692, %v8690
    %v9086 = vpack.c.bf16 %v8916, %v8914
    %v9087 = vpack.c.bf16 %v8448, %v8447
    %v9088 = vpack.c.bf16 %v8697, %v8695
    %v9089 = vpack.c.bf16 %v8921, %v8919
    %v9090 = vpack.c.bf16 %v8451, %v8450
    %v9091 = vpack.c.bf16 %v8702, %v8700
    %v9092 = vpack.c.bf16 %v8926, %v8924
    %v9093 = vpack.c.bf16 %v8454, %v8453
    %v9094 = vpack.c.bf16 %v8707, %v8705
    %v9095 = vpack.c.bf16 %v8931, %v8929
    %v9096 = vpack.c.bf16 %v8457, %v8456
    %v9097 = vpack.c.bf16 %v8712, %v8710
    %v9098 = vpack.c.bf16 %v8936, %v8934
    %v9099 = vpack.c.bf16 %v8460, %v8459
    %v9100 = vpack.c.bf16 %v8717, %v8715
    %v9101 = vpack.c.bf16 %v8941, %v8939
    %s9102 = scalar_lea.vmem [#allocation8], 384
    %v9103 = vld [vmem:[%s9102] sm:$0xf]
    %v9104 = vld [vmem:[%s9102 + $0x4] sm:$0xf]
    %v9105 = vld [vmem:[%s9102 + $0x8] sm:$0xf]
    %v9106 = vld [vmem:[%s9102 + $0xc] sm:$0xf]
    %v9107 = vld [vmem:[%s9102 + $0x10] sm:$0xf]
    %v9108 = vld [vmem:[%s9102 + $0x14] sm:$0xf]
    %v9109 = vld [vmem:[%s9102 + $0x18] sm:$0xf]
    %v9110 = vld [vmem:[%s9102 + $0x1c] sm:$0xf]
    %v9111 = vld [vmem:[%s9102 + $0x20] sm:$0xf]
    %v9112 = vld [vmem:[%s9102 + $0x24] sm:$0xf]
    %v9113 = vld [vmem:[%s9102 + $0x28] sm:$0xf]
    %v9114 = vld [vmem:[%s9102 + $0x2c] sm:$0xf]
    %v9115 = vld [vmem:[%s9102 + $0x30] sm:$0xf]
    %v9116 = vld [vmem:[%s9102 + $0x34] sm:$0xf]
    %v9117 = vld [vmem:[%s9102 + $0x38] sm:$0xf]
    %v9118 = vld [vmem:[%s9102 + $0x3c] sm:$0xf]
    %v9119 = vld [vmem:[%s9102 + $0x40] sm:$0xf]
    %v9120 = vld [vmem:[%s9102 + $0x44] sm:$0xf]
    %v9121 = vld [vmem:[%s9102 + $0x48] sm:$0xf]
    %v9122 = vld [vmem:[%s9102 + $0x4c] sm:$0xf]
    %v9123 = vld [vmem:[%s9102 + $0x50] sm:$0xf]
    %v9124 = vld [vmem:[%s9102 + $0x54] sm:$0xf]
    %v9125 = vld [vmem:[%s9102 + $0x58] sm:$0xf]
    %v9126 = vld [vmem:[%s9102 + $0x5c] sm:$0xf]
    %v9127 = vld [vmem:[%s9102 + $0x60] sm:$0xf]
    %v9128 = vld [vmem:[%s9102 + $0x64] sm:$0xf]
    %v9129 = vld [vmem:[%s9102 + $0x68] sm:$0xf]
    %v9130 = vld [vmem:[%s9102 + $0x6c] sm:$0xf]
    %v9131 = vld [vmem:[%s9102 + $0x70] sm:$0xf]
    %v9132 = vld [vmem:[%s9102 + $0x74] sm:$0xf]
    %v9133 = vld [vmem:[%s9102 + $0x78] sm:$0xf]
    %v9134 = vld [vmem:[%s9102 + $0x7c] sm:$0xf]
    %v9135 = vld [vmem:[%s9102 + $0x80] sm:$0xf]
    %v9136 = vld [vmem:[%s9102 + $0x84] sm:$0xf]
    %v9137 = vld [vmem:[%s9102 + $0x88] sm:$0xf]
    %v9138 = vld [vmem:[%s9102 + $0x8c] sm:$0xf]
    %v9139 = vld [vmem:[%s9102 + $0x90] sm:$0xf]
    %v9140 = vld [vmem:[%s9102 + $0x94] sm:$0xf]
    %v9141 = vld [vmem:[%s9102 + $0x98] sm:$0xf]
    %v9142 = vld [vmem:[%s9102 + $0x9c] sm:$0xf]
    %v9143 = vld [vmem:[%s9102 + $0xa0] sm:$0xf]
    %v9144 = vld [vmem:[%s9102 + $0xa4] sm:$0xf]
    %v9145 = vld [vmem:[%s9102 + $0xa8] sm:$0xf]
    %v9146 = vld [vmem:[%s9102 + $0xac] sm:$0xf]
    %v9147 = vld [vmem:[%s9102 + $0xb0] sm:$0xf]
    %v9148 = vld [vmem:[%s9102 + $0xb4] sm:$0xf]
    %v9149 = vld [vmem:[%s9102 + $0xb8] sm:$0xf]
    %v9150 = vld [vmem:[%s9102 + $0xbc] sm:$0xf]
    %v9199 = vunpack.c.l.b16 %v9103
    %v9200 = vunpack.c.l.b16 %v9104
    %v9201 = vunpack.c.l.b16 %v9105
    %v9202 = vunpack.c.l.b16 %v9106
    %v9203 = vunpack.c.l.b16 %v9107
    %v9204 = vunpack.c.l.b16 %v9108
    %v9205 = vunpack.c.l.b16 %v9109
    %v9206 = vunpack.c.l.b16 %v9110
    %v9207 = vunpack.c.l.b16 %v9111
    %v9208 = vunpack.c.l.b16 %v9112
    %v9209 = vunpack.c.l.b16 %v9113
    %v9210 = vunpack.c.l.b16 %v9114
    %v9211 = vunpack.c.l.b16 %v9115
    %v9212 = vunpack.c.l.b16 %v9116
    %v9213 = vunpack.c.l.b16 %v9117
    %v9214 = vunpack.c.l.b16 %v9118
    %v9215 = vunpack.c.l.b16 %v9119
    %v9216 = vunpack.c.l.b16 %v9120
    %v9217 = vunpack.c.l.b16 %v9121
    %v9218 = vunpack.c.l.b16 %v9122
    %v9219 = vunpack.c.l.b16 %v9123
    %v9220 = vunpack.c.l.b16 %v9124
    %v9221 = vunpack.c.l.b16 %v9125
    %v9222 = vunpack.c.l.b16 %v9126
    %v9223 = vunpack.c.l.b16 %v9127
    %v9224 = vunpack.c.l.b16 %v9128
    %v9225 = vunpack.c.l.b16 %v9129
    %v9226 = vunpack.c.l.b16 %v9130
    %v9227 = vunpack.c.l.b16 %v9131
    %v9228 = vunpack.c.l.b16 %v9132
    %v9229 = vunpack.c.l.b16 %v9133
    %v9230 = vunpack.c.l.b16 %v9134
    %v9231 = vunpack.c.l.b16 %v9135
    %v9232 = vunpack.c.l.b16 %v9136
    %v9233 = vunpack.c.l.b16 %v9137
    %v9234 = vunpack.c.l.b16 %v9138
    %v9235 = vunpack.c.l.b16 %v9139
    %v9236 = vunpack.c.l.b16 %v9140
    %v9237 = vunpack.c.l.b16 %v9141
    %v9238 = vunpack.c.l.b16 %v9142
    %v9239 = vunpack.c.l.b16 %v9143
    %v9240 = vunpack.c.l.b16 %v9144
    %v9241 = vunpack.c.l.b16 %v9145
    %v9242 = vunpack.c.l.b16 %v9146
    %v9243 = vunpack.c.l.b16 %v9147
    %v9244 = vunpack.c.l.b16 %v9148
    %v9245 = vunpack.c.l.b16 %v9149
    %v9246 = vunpack.c.l.b16 %v9150
    %v9247 = vpack.c.b16 %v9200, %v9199
    %v9248 = vpack.c.b16 %v9202, %v9201
    %v9249 = vpack.c.b16 %v9204, %v9203
    %v9250 = vpack.c.b16 %v9206, %v9205
    %v9251 = vpack.c.b16 %v9208, %v9207
    %v9252 = vpack.c.b16 %v9210, %v9209
    %v9253 = vpack.c.b16 %v9212, %v9211
    %v9254 = vpack.c.b16 %v9214, %v9213
    %v9255 = vpack.c.b16 %v9216, %v9215
    %v9256 = vpack.c.b16 %v9218, %v9217
    %v9257 = vpack.c.b16 %v9220, %v9219
    %v9258 = vpack.c.b16 %v9222, %v9221
    %v9259 = vpack.c.b16 %v9224, %v9223
    %v9260 = vpack.c.b16 %v9226, %v9225
    %v9261 = vpack.c.b16 %v9228, %v9227
    %v9262 = vpack.c.b16 %v9230, %v9229
    %v9263 = vpack.c.b16 %v9232, %v9231
    %v9264 = vpack.c.b16 %v9234, %v9233
    %v9265 = vpack.c.b16 %v9236, %v9235
    %v9266 = vpack.c.b16 %v9238, %v9237
    %v9267 = vpack.c.b16 %v9240, %v9239
    %v9268 = vpack.c.b16 %v9242, %v9241
    %v9269 = vpack.c.b16 %v9244, %v9243
    %v9270 = vpack.c.b16 %v9246, %v9245
    %9295 = vmatprep.subr.bf16.mxu0 0
    %9296 = vmatpush1.bf16.msra.mxu0 %v9254
    %9297 = vmatprep.subr.bf16.mxu0 0
    %9298 = vmatpush1.bf16.msra.mxu0 %v9253
    %9299 = vmatprep.subr.bf16.mxu0 0
    %9300 = vmatpush1.bf16.msra.mxu0 %v9252
    %9301 = vmatprep.subr.bf16.mxu0 0
    %9302 = vmatpush1.bf16.msra.mxu0 %v9251
    %9303 = vmatprep.subr.bf16.mxu0 0
    %9304 = vmatpush1.bf16.msra.mxu0 %v9250
    %9305 = vmatprep.subr.bf16.mxu0 0
    %9306 = vmatpush1.bf16.msra.mxu0 %v9249
    %9307 = vmatprep.subr.bf16.mxu0 0
    %9308 = vmatpush1.bf16.msra.mxu0 %v9248
    %9309 = vmatprep.subr.bf16.mxu0 0
    %9310 = vmatpush1.bf16.msra.mxu0 %v9247
    %9311 = vmatprep.subr.bf16.mxu0 0
    %9312 = vmatpush2.bf16.msra.mxu0 %v9262
    %9313 = vmatprep.subr.bf16.mxu0 0
    %9314 = vmatpush2.bf16.msra.mxu0 %v9261
    %9315 = vmatprep.subr.bf16.mxu0 0
    %9316 = vmatpush2.bf16.msra.mxu0 %v9260
    %9317 = vmatprep.subr.bf16.mxu0 0
    %9318 = vmatpush2.bf16.msra.mxu0 %v9259
    %9319 = vmatprep.subr.bf16.mxu0 0
    %9320 = vmatpush2.bf16.msra.mxu0 %v9258
    %9321 = vmatprep.subr.bf16.mxu0 0
    %9322 = vmatpush2.bf16.msra.mxu0 %v9257
    %9323 = vmatprep.subr.bf16.mxu0 0
    %9324 = vmatpush2.bf16.msra.mxu0 %v9256
    %9325 = vmatprep.subr.bf16.mxu0 0
    %9326 = vmatpush2.bf16.msra.mxu0 %v9255
    %9327 = vmatprep.mubr.bf16.mxu0 %v9007
    %9328 = vmatmul.mubr.bf16.gmra.mxu0 %v9006
    %v9329 = vpop.f32.mrf.mxu0
    %v9330 = vadd.f32 0.0, %v9329
    %v9331 = vpop.f32.mrf.mxu0
    %v9332 = vpop.f32.mrf.mxu0
    %v9333 = vadd.f32 0.0, %v9332
    %v9334 = vpop.f32.mrf.mxu0
    %9335 = vmatprep.mubr.bf16.mxu0 %v9010
    %9336 = vmatmul.mubr.bf16.gmra.mxu0 %v9009
    %v9337 = vpop.f32.mrf.mxu0
    %v9338 = vadd.f32 0.0, %v9337
    %v9339 = vpop.f32.mrf.mxu0
    %v9340 = vpop.f32.mrf.mxu0
    %v9341 = vadd.f32 0.0, %v9340
    %v9342 = vpop.f32.mrf.mxu0
    %9343 = vmatprep.mubr.bf16.mxu0 %v9013
    %9344 = vmatmul.mubr.bf16.gmra.mxu0 %v9012
    %v9345 = vpop.f32.mrf.mxu0
    %v9346 = vadd.f32 0.0, %v9345
    %v9347 = vpop.f32.mrf.mxu0
    %v9348 = vpop.f32.mrf.mxu0
    %v9349 = vadd.f32 0.0, %v9348
    %v9350 = vpop.f32.mrf.mxu0
    %9351 = vmatprep.mubr.bf16.mxu0 %v9016
    %9352 = vmatmul.mubr.bf16.gmra.mxu0 %v9015
    %v9353 = vpop.f32.mrf.mxu0
    %v9354 = vadd.f32 0.0, %v9353
    %v9355 = vpop.f32.mrf.mxu0
    %v9356 = vpop.f32.mrf.mxu0
    %v9357 = vadd.f32 0.0, %v9356
    %v9358 = vpop.f32.mrf.mxu0
    %9359 = vmatprep.mubr.bf16.mxu0 %v9019
    %9360 = vmatmul.mubr.bf16.gmra.mxu0 %v9018
    %v9361 = vpop.f32.mrf.mxu0
    %v9362 = vadd.f32 0.0, %v9361
    %v9363 = vpop.f32.mrf.mxu0
    %v9364 = vpop.f32.mrf.mxu0
    %v9365 = vadd.f32 0.0, %v9364
    %v9366 = vpop.f32.mrf.mxu0
    %9367 = vmatprep.mubr.bf16.mxu0 %v9022
    %9368 = vmatmul.mubr.bf16.gmra.mxu0 %v9021
    %v9369 = vpop.f32.mrf.mxu0
    %v9370 = vadd.f32 0.0, %v9369
    %v9371 = vpop.f32.mrf.mxu0
    %v9372 = vpop.f32.mrf.mxu0
    %v9373 = vadd.f32 0.0, %v9372
    %v9374 = vpop.f32.mrf.mxu0
    %9375 = vmatprep.mubr.bf16.mxu0 %v9025
    %9376 = vmatmul.mubr.bf16.gmra.mxu0 %v9024
    %v9377 = vpop.f32.mrf.mxu0
    %v9378 = vadd.f32 0.0, %v9377
    %v9379 = vpop.f32.mrf.mxu0
    %v9380 = vpop.f32.mrf.mxu0
    %v9381 = vadd.f32 0.0, %v9380
    %v9382 = vpop.f32.mrf.mxu0
    %9383 = vmatprep.mubr.bf16.mxu0 %v9028
    %9384 = vmatmul.mubr.bf16.gmra.mxu0 %v9027
    %v9385 = vpop.f32.mrf.mxu0
    %v9386 = vadd.f32 0.0, %v9385
    %v9387 = vpop.f32.mrf.mxu0
    %v9388 = vpop.f32.mrf.mxu0
    %v9389 = vadd.f32 0.0, %v9388
    %v9390 = vpop.f32.mrf.mxu0
    %9391 = vmatprep.mubr.bf16.mxu0 %v9031
    %9392 = vmatmul.mubr.bf16.gmra.mxu0 %v9030
    %v9393 = vpop.f32.mrf.mxu0
    %v9394 = vadd.f32 0.0, %v9393
    %v9395 = vpop.f32.mrf.mxu0
    %v9396 = vpop.f32.mrf.mxu0
    %v9397 = vadd.f32 0.0, %v9396
    %v9398 = vpop.f32.mrf.mxu0
    %9399 = vmatprep.mubr.bf16.mxu0 %v9034
    %9400 = vmatmul.mubr.bf16.gmra.mxu0 %v9033
    %v9401 = vpop.f32.mrf.mxu0
    %v9402 = vadd.f32 0.0, %v9401
    %v9403 = vpop.f32.mrf.mxu0
    %v9404 = vpop.f32.mrf.mxu0
    %v9405 = vadd.f32 0.0, %v9404
    %v9406 = vpop.f32.mrf.mxu0
    %9407 = vmatprep.mubr.bf16.mxu0 %v9037
    %9408 = vmatmul.mubr.bf16.gmra.mxu0 %v9036
    %v9409 = vpop.f32.mrf.mxu0
    %v9410 = vadd.f32 0.0, %v9409
    %v9411 = vpop.f32.mrf.mxu0
    %v9412 = vpop.f32.mrf.mxu0
    %v9413 = vadd.f32 0.0, %v9412
    %v9414 = vpop.f32.mrf.mxu0
    %9415 = vmatprep.mubr.bf16.mxu0 %v9040
    %9416 = vmatmul.mubr.bf16.gmra.mxu0 %v9039
    %v9417 = vpop.f32.mrf.mxu0
    %v9418 = vadd.f32 0.0, %v9417
    %v9419 = vpop.f32.mrf.mxu0
    %v9420 = vpop.f32.mrf.mxu0
    %v9421 = vadd.f32 0.0, %v9420
    %v9422 = vpop.f32.mrf.mxu0
    %9423 = vmatprep.mubr.bf16.mxu0 %v9043
    %9424 = vmatmul.mubr.bf16.gmra.mxu0 %v9042
    %v9425 = vpop.f32.mrf.mxu0
    %v9426 = vadd.f32 0.0, %v9425
    %v9427 = vpop.f32.mrf.mxu0
    %v9428 = vpop.f32.mrf.mxu0
    %v9429 = vadd.f32 0.0, %v9428
    %v9430 = vpop.f32.mrf.mxu0
    %9431 = vmatprep.mubr.bf16.mxu0 %v9046
    %9432 = vmatmul.mubr.bf16.gmra.mxu0 %v9045
    %v9433 = vpop.f32.mrf.mxu0
    %v9434 = vadd.f32 0.0, %v9433
    %v9435 = vpop.f32.mrf.mxu0
    %v9436 = vpop.f32.mrf.mxu0
    %v9437 = vadd.f32 0.0, %v9436
    %v9438 = vpop.f32.mrf.mxu0
    %9439 = vmatprep.mubr.bf16.mxu0 %v9049
    %9440 = vmatmul.mubr.bf16.gmra.mxu0 %v9048
    %v9441 = vpop.f32.mrf.mxu0
    %v9442 = vadd.f32 0.0, %v9441
    %v9443 = vpop.f32.mrf.mxu0
    %v9444 = vpop.f32.mrf.mxu0
    %v9445 = vadd.f32 0.0, %v9444
    %v9446 = vpop.f32.mrf.mxu0
    %9447 = vmatprep.mubr.bf16.mxu0 %v9052
    %9448 = vmatmul.mubr.bf16.gmra.mxu0 %v9051
    %v9449 = vpop.f32.mrf.mxu0
    %v9450 = vadd.f32 0.0, %v9449
    %v9451 = vpop.f32.mrf.mxu0
    %v9452 = vpop.f32.mrf.mxu0
    %v9453 = vadd.f32 0.0, %v9452
    %v9454 = vpop.f32.mrf.mxu0
    %9455 = vmatprep.mubr.bf16.mxu0 %v9055
    %9456 = vmatmul.mubr.bf16.gmra.mxu0 %v9054
    %v9457 = vpop.f32.mrf.mxu0
    %v9458 = vadd.f32 0.0, %v9457
    %v9459 = vpop.f32.mrf.mxu0
    %v9460 = vpop.f32.mrf.mxu0
    %v9461 = vadd.f32 0.0, %v9460
    %v9462 = vpop.f32.mrf.mxu0
    %9463 = vmatprep.mubr.bf16.mxu0 %v9058
    %9464 = vmatmul.mubr.bf16.gmra.mxu0 %v9057
    %v9465 = vpop.f32.mrf.mxu0
    %v9466 = vadd.f32 0.0, %v9465
    %v9467 = vpop.f32.mrf.mxu0
    %v9468 = vpop.f32.mrf.mxu0
    %v9469 = vadd.f32 0.0, %v9468
    %v9470 = vpop.f32.mrf.mxu0
    %9471 = vmatprep.mubr.bf16.mxu0 %v9061
    %9472 = vmatmul.mubr.bf16.gmra.mxu0 %v9060
    %v9473 = vpop.f32.mrf.mxu0
    %v9474 = vadd.f32 0.0, %v9473
    %v9475 = vpop.f32.mrf.mxu0
    %v9476 = vpop.f32.mrf.mxu0
    %v9477 = vadd.f32 0.0, %v9476
    %v9478 = vpop.f32.mrf.mxu0
    %9479 = vmatprep.mubr.bf16.mxu0 %v9064
    %9480 = vmatmul.mubr.bf16.gmra.mxu0 %v9063
    %v9481 = vpop.f32.mrf.mxu0
    %v9482 = vadd.f32 0.0, %v9481
    %v9483 = vpop.f32.mrf.mxu0
    %v9484 = vpop.f32.mrf.mxu0
    %v9485 = vadd.f32 0.0, %v9484
    %v9486 = vpop.f32.mrf.mxu0
    %9487 = vmatprep.mubr.bf16.mxu0 %v9067
    %9488 = vmatmul.mubr.bf16.gmra.mxu0 %v9066
    %v9489 = vpop.f32.mrf.mxu0
    %v9490 = vadd.f32 0.0, %v9489
    %v9491 = vpop.f32.mrf.mxu0
    %v9492 = vpop.f32.mrf.mxu0
    %v9493 = vadd.f32 0.0, %v9492
    %v9494 = vpop.f32.mrf.mxu0
    %9495 = vmatprep.mubr.bf16.mxu0 %v9070
    %9496 = vmatmul.mubr.bf16.gmra.mxu0 %v9069
    %v9497 = vpop.f32.mrf.mxu0
    %v9498 = vadd.f32 0.0, %v9497
    %v9499 = vpop.f32.mrf.mxu0
    %v9500 = vpop.f32.mrf.mxu0
    %v9501 = vadd.f32 0.0, %v9500
    %v9502 = vpop.f32.mrf.mxu0
    %9503 = vmatprep.mubr.bf16.mxu0 %v9073
    %9504 = vmatmul.mubr.bf16.gmra.mxu0 %v9072
    %v9505 = vpop.f32.mrf.mxu0
    %v9506 = vadd.f32 0.0, %v9505
    %v9507 = vpop.f32.mrf.mxu0
    %v9508 = vpop.f32.mrf.mxu0
    %v9509 = vadd.f32 0.0, %v9508
    %v9510 = vpop.f32.mrf.mxu0
    %9511 = vmatprep.mubr.bf16.mxu0 %v9076
    %9512 = vmatmul.mubr.bf16.gmra.mxu0 %v9075
    %v9513 = vpop.f32.mrf.mxu0
    %v9514 = vadd.f32 0.0, %v9513
    %v9515 = vpop.f32.mrf.mxu0
    %v9516 = vpop.f32.mrf.mxu0
    %v9517 = vadd.f32 0.0, %v9516
    %v9518 = vpop.f32.mrf.mxu0
    %9519 = vmatprep.mubr.bf16.mxu0 %v9079
    %9520 = vmatmul.mubr.bf16.gmra.mxu0 %v9078
    %v9521 = vpop.f32.mrf.mxu0
    %v9522 = vadd.f32 0.0, %v9521
    %v9523 = vpop.f32.mrf.mxu0
    %v9524 = vpop.f32.mrf.mxu0
    %v9525 = vadd.f32 0.0, %v9524
    %v9526 = vpop.f32.mrf.mxu0
    %9527 = vmatprep.mubr.bf16.mxu0 %v9082
    %9528 = vmatmul.mubr.bf16.gmra.mxu0 %v9081
    %v9529 = vpop.f32.mrf.mxu0
    %v9530 = vadd.f32 0.0, %v9529
    %v9531 = vpop.f32.mrf.mxu0
    %v9532 = vpop.f32.mrf.mxu0
    %v9533 = vadd.f32 0.0, %v9532
    %v9534 = vpop.f32.mrf.mxu0
    %9535 = vmatprep.mubr.bf16.mxu0 %v9085
    %9536 = vmatmul.mubr.bf16.gmra.mxu0 %v9084
    %v9537 = vpop.f32.mrf.mxu0
    %v9538 = vadd.f32 0.0, %v9537
    %v9539 = vpop.f32.mrf.mxu0
    %v9540 = vpop.f32.mrf.mxu0
    %v9541 = vadd.f32 0.0, %v9540
    %v9542 = vpop.f32.mrf.mxu0
    %9543 = vmatprep.mubr.bf16.mxu0 %v9088
    %9544 = vmatmul.mubr.bf16.gmra.mxu0 %v9087
    %v9545 = vpop.f32.mrf.mxu0
    %v9546 = vadd.f32 0.0, %v9545
    %v9547 = vpop.f32.mrf.mxu0
    %v9548 = vpop.f32.mrf.mxu0
    %v9549 = vadd.f32 0.0, %v9548
    %v9550 = vpop.f32.mrf.mxu0
    %9551 = vmatprep.mubr.bf16.mxu0 %v9091
    %9552 = vmatmul.mubr.bf16.gmra.mxu0 %v9090
    %v9553 = vpop.f32.mrf.mxu0
    %v9554 = vadd.f32 0.0, %v9553
    %v9555 = vpop.f32.mrf.mxu0
    %v9556 = vpop.f32.mrf.mxu0
    %v9557 = vadd.f32 0.0, %v9556
    %v9558 = vpop.f32.mrf.mxu0
    %9559 = vmatprep.mubr.bf16.mxu0 %v9094
    %9560 = vmatmul.mubr.bf16.gmra.mxu0 %v9093
    %v9561 = vpop.f32.mrf.mxu0
    %v9562 = vadd.f32 0.0, %v9561
    %v9563 = vpop.f32.mrf.mxu0
    %v9564 = vpop.f32.mrf.mxu0
    %v9565 = vadd.f32 0.0, %v9564
    %v9566 = vpop.f32.mrf.mxu0
    %9567 = vmatprep.mubr.bf16.mxu0 %v9097
    %9568 = vmatmul.mubr.bf16.gmra.mxu0 %v9096
    %v9569 = vpop.f32.mrf.mxu0
    %v9570 = vadd.f32 0.0, %v9569
    %v9571 = vpop.f32.mrf.mxu0
    %v9572 = vpop.f32.mrf.mxu0
    %v9573 = vadd.f32 0.0, %v9572
    %v9574 = vpop.f32.mrf.mxu0
    %9575 = vmatprep.mubr.bf16.mxu0 %v9100
    %9576 = vmatmul.mubr.bf16.gmra.mxu0 %v9099
    %v9577 = vpop.f32.mrf.mxu0
    %v9578 = vadd.f32 0.0, %v9577
    %v9579 = vpop.f32.mrf.mxu0
    %v9580 = vpop.f32.mrf.mxu0
    %v9581 = vadd.f32 0.0, %v9580
    %v9582 = vpop.f32.mrf.mxu0
    %9583 = vdwg.mxu0
    %9584 = vmatprep.subr.bf16.mxu0 0
    %9585 = vmatpush1.bf16.msra.mxu0 %v9270
    %9586 = vmatprep.subr.bf16.mxu0 0
    %9587 = vmatpush1.bf16.msra.mxu0 %v9269
    %9588 = vmatprep.subr.bf16.mxu0 0
    %9589 = vmatpush1.bf16.msra.mxu0 %v9268
    %9590 = vmatprep.subr.bf16.mxu0 0
    %9591 = vmatpush1.bf16.msra.mxu0 %v9267
    %9592 = vmatprep.subr.bf16.mxu0 0
    %9593 = vmatpush1.bf16.msra.mxu0 %v9266
    %9594 = vmatprep.subr.bf16.mxu0 0
    %9595 = vmatpush1.bf16.msra.mxu0 %v9265
    %9596 = vmatprep.subr.bf16.mxu0 0
    %9597 = vmatpush1.bf16.msra.mxu0 %v9264
    %9598 = vmatprep.subr.bf16.mxu0 0
    %9599 = vmatpush1.bf16.msra.mxu0 %v9263
    %9600 = vmatprep.subr.bf16.mxu0 0
    %9601 = vmatpush2.bf16.msra.mxu0 0
    %9602 = vmatprep.subr.bf16.mxu0 0
    %9603 = vmatpush2.bf16.msra.mxu0 0
    %9604 = vmatprep.subr.bf16.mxu0 0
    %9605 = vmatpush2.bf16.msra.mxu0 0
    %9606 = vmatprep.subr.bf16.mxu0 0
    %9607 = vmatpush2.bf16.msra.mxu0 0
    %9608 = vmatprep.subr.bf16.mxu0 0
    %9609 = vmatpush2.bf16.msra.mxu0 0
    %9610 = vmatprep.subr.bf16.mxu0 0
    %9611 = vmatpush2.bf16.msra.mxu0 0
    %9612 = vmatprep.subr.bf16.mxu0 0
    %9613 = vmatpush2.bf16.msra.mxu0 0
    %9614 = vmatprep.subr.bf16.mxu0 0
    %9615 = vmatpush2.bf16.msra.mxu0 0
    %9616 = vmatprep.mubr.bf16.mxu0 0
    %9617 = vmatmul.mubr.bf16.gmra.mxu0 %v9008
    %v9618 = vpop.f32.mrf.mxu0
    %v9619 = vadd.f32 %v9330, %v9618
    %v9620 = vpop.f32.mrf.mxu0
    %v9621 = vpop.f32.mrf.mxu0
    %v9622 = vadd.f32 %v9333, %v9621
    %v9623 = vpop.f32.mrf.mxu0
    %9624 = vmatprep.mubr.bf16.mxu0 0
    %9625 = vmatmul.mubr.bf16.gmra.mxu0 %v9011
    %v9626 = vpop.f32.mrf.mxu0
    %v9627 = vadd.f32 %v9338, %v9626
    %v9628 = vpop.f32.mrf.mxu0
    %v9629 = vpop.f32.mrf.mxu0
    %v9630 = vadd.f32 %v9341, %v9629
    %v9631 = vpop.f32.mrf.mxu0
    %9632 = vmatprep.mubr.bf16.mxu0 0
    %9633 = vmatmul.mubr.bf16.gmra.mxu0 %v9014
    %v9634 = vpop.f32.mrf.mxu0
    %v9635 = vadd.f32 %v9346, %v9634
    %v9636 = vpop.f32.mrf.mxu0
    %v9637 = vpop.f32.mrf.mxu0
    %v9638 = vadd.f32 %v9349, %v9637
    %v9639 = vpop.f32.mrf.mxu0
    %9640 = vmatprep.mubr.bf16.mxu0 0
    %9641 = vmatmul.mubr.bf16.gmra.mxu0 %v9017
    %v9642 = vpop.f32.mrf.mxu0
    %v9643 = vadd.f32 %v9354, %v9642
    %v9644 = vpop.f32.mrf.mxu0
    %v9645 = vpop.f32.mrf.mxu0
    %v9646 = vadd.f32 %v9357, %v9645
    %v9647 = vpop.f32.mrf.mxu0
    %9648 = vmatprep.mubr.bf16.mxu0 0
    %9649 = vmatmul.mubr.bf16.gmra.mxu0 %v9020
    %v9650 = vpop.f32.mrf.mxu0
    %v9651 = vadd.f32 %v9362, %v9650
    %v9652 = vpop.f32.mrf.mxu0
    %v9653 = vpop.f32.mrf.mxu0
    %v9654 = vadd.f32 %v9365, %v9653
    %v9655 = vpop.f32.mrf.mxu0
    %9656 = vmatprep.mubr.bf16.mxu0 0
    %9657 = vmatmul.mubr.bf16.gmra.mxu0 %v9023
    %v9658 = vpop.f32.mrf.mxu0
    %v9659 = vadd.f32 %v9370, %v9658
    %v9660 = vpop.f32.mrf.mxu0
    %v9661 = vpop.f32.mrf.mxu0
    %v9662 = vadd.f32 %v9373, %v9661
    %v9663 = vpop.f32.mrf.mxu0
    %9664 = vmatprep.mubr.bf16.mxu0 0
    %9665 = vmatmul.mubr.bf16.gmra.mxu0 %v9026
    %v9666 = vpop.f32.mrf.mxu0
    %v9667 = vadd.f32 %v9378, %v9666
    %v9668 = vpop.f32.mrf.mxu0
    %v9669 = vpop.f32.mrf.mxu0
    %v9670 = vadd.f32 %v9381, %v9669
    %v9671 = vpop.f32.mrf.mxu0
    %9672 = vmatprep.mubr.bf16.mxu0 0
    %9673 = vmatmul.mubr.bf16.gmra.mxu0 %v9029
    %v9674 = vpop.f32.mrf.mxu0
    %v9675 = vadd.f32 %v9386, %v9674
    %v9676 = vpop.f32.mrf.mxu0
    %v9677 = vpop.f32.mrf.mxu0
    %v9678 = vadd.f32 %v9389, %v9677
    %v9679 = vpop.f32.mrf.mxu0
    %9680 = vmatprep.mubr.bf16.mxu0 0
    %9681 = vmatmul.mubr.bf16.gmra.mxu0 %v9032
    %v9682 = vpop.f32.mrf.mxu0
    %v9683 = vadd.f32 %v9394, %v9682
    %v9684 = vpop.f32.mrf.mxu0
    %v9685 = vpop.f32.mrf.mxu0
    %v9686 = vadd.f32 %v9397, %v9685
    %v9687 = vpop.f32.mrf.mxu0
    %9688 = vmatprep.mubr.bf16.mxu0 0
    %9689 = vmatmul.mubr.bf16.gmra.mxu0 %v9035
    %v9690 = vpop.f32.mrf.mxu0
    %v9691 = vadd.f32 %v9402, %v9690
    %v9692 = vpop.f32.mrf.mxu0
    %v9693 = vpop.f32.mrf.mxu0
    %v9694 = vadd.f32 %v9405, %v9693
    %v9695 = vpop.f32.mrf.mxu0
    %9696 = vmatprep.mubr.bf16.mxu0 0
    %9697 = vmatmul.mubr.bf16.gmra.mxu0 %v9038
    %v9698 = vpop.f32.mrf.mxu0
    %v9699 = vadd.f32 %v9410, %v9698
    %v9700 = vpop.f32.mrf.mxu0
    %v9701 = vpop.f32.mrf.mxu0
    %v9702 = vadd.f32 %v9413, %v9701
    %v9703 = vpop.f32.mrf.mxu0
    %9704 = vmatprep.mubr.bf16.mxu0 0
    %9705 = vmatmul.mubr.bf16.gmra.mxu0 %v9041
    %v9706 = vpop.f32.mrf.mxu0
    %v9707 = vadd.f32 %v9418, %v9706
    %v9708 = vpop.f32.mrf.mxu0
    %v9709 = vpop.f32.mrf.mxu0
    %v9710 = vadd.f32 %v9421, %v9709
    %v9711 = vpop.f32.mrf.mxu0
    %9712 = vmatprep.mubr.bf16.mxu0 0
    %9713 = vmatmul.mubr.bf16.gmra.mxu0 %v9044
    %v9714 = vpop.f32.mrf.mxu0
    %v9715 = vadd.f32 %v9426, %v9714
    %v9716 = vpop.f32.mrf.mxu0
    %v9717 = vpop.f32.mrf.mxu0
    %v9718 = vadd.f32 %v9429, %v9717
    %v9719 = vpop.f32.mrf.mxu0
    %9720 = vmatprep.mubr.bf16.mxu0 0
    %9721 = vmatmul.mubr.bf16.gmra.mxu0 %v9047
    %v9722 = vpop.f32.mrf.mxu0
    %v9723 = vadd.f32 %v9434, %v9722
    %v9724 = vpop.f32.mrf.mxu0
    %v9725 = vpop.f32.mrf.mxu0
    %v9726 = vadd.f32 %v9437, %v9725
    %v9727 = vpop.f32.mrf.mxu0
    %9728 = vmatprep.mubr.bf16.mxu0 0
    %9729 = vmatmul.mubr.bf16.gmra.mxu0 %v9050
    %v9730 = vpop.f32.mrf.mxu0
    %v9731 = vadd.f32 %v9442, %v9730
    %v9732 = vpop.f32.mrf.mxu0
    %v9733 = vpop.f32.mrf.mxu0
    %v9734 = vadd.f32 %v9445, %v9733
    %v9735 = vpop.f32.mrf.mxu0
    %9736 = vmatprep.mubr.bf16.mxu0 0
    %9737 = vmatmul.mubr.bf16.gmra.mxu0 %v9053
    %v9738 = vpop.f32.mrf.mxu0
    %v9739 = vadd.f32 %v9450, %v9738
    %v9740 = vpop.f32.mrf.mxu0
    %v9741 = vpop.f32.mrf.mxu0
    %v9742 = vadd.f32 %v9453, %v9741
    %v9743 = vpop.f32.mrf.mxu0
    %9744 = vmatprep.mubr.bf16.mxu0 0
    %9745 = vmatmul.mubr.bf16.gmra.mxu0 %v9056
    %v9746 = vpop.f32.mrf.mxu0
    %v9747 = vadd.f32 %v9458, %v9746
    %v9748 = vpop.f32.mrf.mxu0
    %v9749 = vpop.f32.mrf.mxu0
    %v9750 = vadd.f32 %v9461, %v9749
    %v9751 = vpop.f32.mrf.mxu0
    %9752 = vmatprep.mubr.bf16.mxu0 0
    %9753 = vmatmul.mubr.bf16.gmra.mxu0 %v9059
    %v9754 = vpop.f32.mrf.mxu0
    %v9755 = vadd.f32 %v9466, %v9754
    %v9756 = vpop.f32.mrf.mxu0
    %v9757 = vpop.f32.mrf.mxu0
    %v9758 = vadd.f32 %v9469, %v9757
    %v9759 = vpop.f32.mrf.mxu0
    %9760 = vmatprep.mubr.bf16.mxu0 0
    %9761 = vmatmul.mubr.bf16.gmra.mxu0 %v9062
    %v9762 = vpop.f32.mrf.mxu0
    %v9763 = vadd.f32 %v9474, %v9762
    %v9764 = vpop.f32.mrf.mxu0
    %v9765 = vpop.f32.mrf.mxu0
    %v9766 = vadd.f32 %v9477, %v9765
    %v9767 = vpop.f32.mrf.mxu0
    %9768 = vmatprep.mubr.bf16.mxu0 0
    %9769 = vmatmul.mubr.bf16.gmra.mxu0 %v9065
    %v9770 = vpop.f32.mrf.mxu0
    %v9771 = vadd.f32 %v9482, %v9770
    %v9772 = vpop.f32.mrf.mxu0
    %v9773 = vpop.f32.mrf.mxu0
    %v9774 = vadd.f32 %v9485, %v9773
    %v9775 = vpop.f32.mrf.mxu0
    %9776 = vmatprep.mubr.bf16.mxu0 0
    %9777 = vmatmul.mubr.bf16.gmra.mxu0 %v9068
    %v9778 = vpop.f32.mrf.mxu0
    %v9779 = vadd.f32 %v9490, %v9778
    %v9780 = vpop.f32.mrf.mxu0
    %v9781 = vpop.f32.mrf.mxu0
    %v9782 = vadd.f32 %v9493, %v9781
    %v9783 = vpop.f32.mrf.mxu0
    %9784 = vmatprep.mubr.bf16.mxu0 0
    %9785 = vmatmul.mubr.bf16.gmra.mxu0 %v9071
    %v9786 = vpop.f32.mrf.mxu0
    %v9787 = vadd.f32 %v9498, %v9786
    %v9788 = vpop.f32.mrf.mxu0
    %v9789 = vpop.f32.mrf.mxu0
    %v9790 = vadd.f32 %v9501, %v9789
    %v9791 = vpop.f32.mrf.mxu0
    %9792 = vmatprep.mubr.bf16.mxu0 0
    %9793 = vmatmul.mubr.bf16.gmra.mxu0 %v9074
    %v9794 = vpop.f32.mrf.mxu0
    %v9795 = vadd.f32 %v9506, %v9794
    %v9796 = vpop.f32.mrf.mxu0
    %v9797 = vpop.f32.mrf.mxu0
    %v9798 = vadd.f32 %v9509, %v9797
    %v9799 = vpop.f32.mrf.mxu0
    %9800 = vmatprep.mubr.bf16.mxu0 0
    %9801 = vmatmul.mubr.bf16.gmra.mxu0 %v9077
    %v9802 = vpop.f32.mrf.mxu0
    %v9803 = vadd.f32 %v9514, %v9802
    %v9804 = vpop.f32.mrf.mxu0
    %v9805 = vpop.f32.mrf.mxu0
    %v9806 = vadd.f32 %v9517, %v9805
    %v9807 = vpop.f32.mrf.mxu0
    %9808 = vmatprep.mubr.bf16.mxu0 0
    %9809 = vmatmul.mubr.bf16.gmra.mxu0 %v9080
    %v9810 = vpop.f32.mrf.mxu0
    %v9811 = vadd.f32 %v9522, %v9810
    %v9812 = vpop.f32.mrf.mxu0
    %v9813 = vpop.f32.mrf.mxu0
    %v9814 = vadd.f32 %v9525, %v9813
    %v9815 = vpop.f32.mrf.mxu0
    %9816 = vmatprep.mubr.bf16.mxu0 0
    %9817 = vmatmul.mubr.bf16.gmra.mxu0 %v9083
    %v9818 = vpop.f32.mrf.mxu0
    %v9819 = vadd.f32 %v9530, %v9818
    %v9820 = vpop.f32.mrf.mxu0
    %v9821 = vpop.f32.mrf.mxu0
    %v9822 = vadd.f32 %v9533, %v9821
    %v9823 = vpop.f32.mrf.mxu0
    %9824 = vmatprep.mubr.bf16.mxu0 0
    %9825 = vmatmul.mubr.bf16.gmra.mxu0 %v9086
    %v9826 = vpop.f32.mrf.mxu0
    %v9827 = vadd.f32 %v9538, %v9826
    %v9828 = vpop.f32.mrf.mxu0
    %v9829 = vpop.f32.mrf.mxu0
    %v9830 = vadd.f32 %v9541, %v9829
    %v9831 = vpop.f32.mrf.mxu0
    %9832 = vmatprep.mubr.bf16.mxu0 0
    %9833 = vmatmul.mubr.bf16.gmra.mxu0 %v9089
    %v9834 = vpop.f32.mrf.mxu0
    %v9835 = vadd.f32 %v9546, %v9834
    %v9836 = vpop.f32.mrf.mxu0
    %v9837 = vpop.f32.mrf.mxu0
    %v9838 = vadd.f32 %v9549, %v9837
    %v9839 = vpop.f32.mrf.mxu0
    %9840 = vmatprep.mubr.bf16.mxu0 0
    %9841 = vmatmul.mubr.bf16.gmra.mxu0 %v9092
    %v9842 = vpop.f32.mrf.mxu0
    %v9843 = vadd.f32 %v9554, %v9842
    %v9844 = vpop.f32.mrf.mxu0
    %v9845 = vpop.f32.mrf.mxu0
    %v9846 = vadd.f32 %v9557, %v9845
    %v9847 = vpop.f32.mrf.mxu0
    %9848 = vmatprep.mubr.bf16.mxu0 0
    %9849 = vmatmul.mubr.bf16.gmra.mxu0 %v9095
    %v9850 = vpop.f32.mrf.mxu0
    %v9851 = vadd.f32 %v9562, %v9850
    %v9852 = vpop.f32.mrf.mxu0
    %v9853 = vpop.f32.mrf.mxu0
    %v9854 = vadd.f32 %v9565, %v9853
    %v9855 = vpop.f32.mrf.mxu0
    %9856 = vmatprep.mubr.bf16.mxu0 0
    %9857 = vmatmul.mubr.bf16.gmra.mxu0 %v9098
    %v9858 = vpop.f32.mrf.mxu0
    %v9859 = vadd.f32 %v9570, %v9858
    %v9860 = vpop.f32.mrf.mxu0
    %v9861 = vpop.f32.mrf.mxu0
    %v9862 = vadd.f32 %v9573, %v9861
    %v9863 = vpop.f32.mrf.mxu0
    %9864 = vmatprep.mubr.bf16.mxu0 0
    %9865 = vmatmul.mubr.bf16.gmra.mxu0 %v9101
    %v9866 = vpop.f32.mrf.mxu0
    %v9867 = vadd.f32 %v9578, %v9866
    %v9868 = vpop.f32.mrf.mxu0
    %v9869 = vpop.f32.mrf.mxu0
    %v9870 = vadd.f32 %v9581, %v9869
    %v9871 = vpop.f32.mrf.mxu0
    %9872 = vdwg.mxu0
    %v9873 = vadd.f32 %v8111, %v9619
    %v9874 = vadd.f32 %v8114, %v9622
    %v9875 = vadd.f32 %v8119, %v9627
    %v9876 = vadd.f32 %v8122, %v9630
    %v9877 = vadd.f32 %v8127, %v9635
    %v9878 = vadd.f32 %v8130, %v9638
    %v9879 = vadd.f32 %v8135, %v9643
    %v9880 = vadd.f32 %v8138, %v9646
    %v9881 = vadd.f32 %v8143, %v9651
    %v9882 = vadd.f32 %v8146, %v9654
    %v9883 = vadd.f32 %v8151, %v9659
    %v9884 = vadd.f32 %v8154, %v9662
    %v9885 = vadd.f32 %v8159, %v9667
    %v9886 = vadd.f32 %v8162, %v9670
    %v9887 = vadd.f32 %v8167, %v9675
    %v9888 = vadd.f32 %v8170, %v9678
    %v9889 = vadd.f32 %v8175, %v9683
    %v9890 = vadd.f32 %v8178, %v9686
    %v9891 = vadd.f32 %v8183, %v9691
    %v9892 = vadd.f32 %v8186, %v9694
    %v9893 = vadd.f32 %v8191, %v9699
    %v9894 = vadd.f32 %v8194, %v9702
    %v9895 = vadd.f32 %v8199, %v9707
    %v9896 = vadd.f32 %v8202, %v9710
    %v9897 = vadd.f32 %v8207, %v9715
    %v9898 = vadd.f32 %v8210, %v9718
    %v9899 = vadd.f32 %v8215, %v9723
    %v9900 = vadd.f32 %v8218, %v9726
    %v9901 = vadd.f32 %v8223, %v9731
    %v9902 = vadd.f32 %v8226, %v9734
    %v9903 = vadd.f32 %v8231, %v9739
    %v9904 = vadd.f32 %v8234, %v9742
    %v9905 = vadd.f32 %v8239, %v9747
    %v9906 = vadd.f32 %v8242, %v9750
    %v9907 = vadd.f32 %v8247, %v9755
    %v9908 = vadd.f32 %v8250, %v9758
    %v9909 = vadd.f32 %v8255, %v9763
    %v9910 = vadd.f32 %v8258, %v9766
    %v9911 = vadd.f32 %v8263, %v9771
    %v9912 = vadd.f32 %v8266, %v9774
    %v9913 = vadd.f32 %v8271, %v9779
    %v9914 = vadd.f32 %v8274, %v9782
    %v9915 = vadd.f32 %v8279, %v9787
    %v9916 = vadd.f32 %v8282, %v9790
    %v9917 = vadd.f32 %v8287, %v9795
    %v9918 = vadd.f32 %v8290, %v9798
    %v9919 = vadd.f32 %v8295, %v9803
    %v9920 = vadd.f32 %v8298, %v9806
    %v9921 = vadd.f32 %v8303, %v9811
    %v9922 = vadd.f32 %v8306, %v9814
    %v9923 = vadd.f32 %v8311, %v9819
    %v9924 = vadd.f32 %v8314, %v9822
    %v9925 = vadd.f32 %v8319, %v9827
    %v9926 = vadd.f32 %v8322, %v9830
    %v9927 = vadd.f32 %v8327, %v9835
    %v9928 = vadd.f32 %v8330, %v9838
    %v9929 = vadd.f32 %v8335, %v9843
    %v9930 = vadd.f32 %v8338, %v9846
    %v9931 = vadd.f32 %v8343, %v9851
    %v9932 = vadd.f32 %v8346, %v9854
    %v9933 = vadd.f32 %v8351, %v9859
    %v9934 = vadd.f32 %v8354, %v9862
    %v9935 = vadd.f32 %v8359, %v9867
    %v9936 = vadd.f32 %v8362, %v9870
    %v9937 = vadd.f32 %v9873, %v9874
    %v9938 = vadd.f32 %v9937, %v9875
    %v9939 = vadd.f32 %v9938, %v9876
    %v9940 = vadd.f32 %v9939, %v9877
    %v9941 = vadd.f32 %v9940, %v9878
    %v9942 = vadd.f32 %v9941, %v9879
    %v9943 = vadd.f32 %v9942, %v9880
    %v9944 = vadd.f32 %v9943, %v9881
    %v9945 = vadd.f32 %v9944, %v9882
    %v9946 = vadd.f32 %v9945, %v9883
    %v9947 = vadd.f32 %v9946, %v9884
    %v9948 = vadd.f32 %v9947, %v9885
    %v9949 = vadd.f32 %v9948, %v9886
    %v9950 = vadd.f32 %v9949, %v9887
    %v9951 = vadd.f32 %v9950, %v9888
    %v9952 = vadd.f32 %v9951, %v9889
    %v9953 = vadd.f32 %v9952, %v9890
    %v9954 = vadd.f32 %v9953, %v9891
    %v9955 = vadd.f32 %v9954, %v9892
    %v9956 = vadd.f32 %v9955, %v9893
    %v9957 = vadd.f32 %v9956, %v9894
    %v9958 = vadd.f32 %v9957, %v9895
    %v9959 = vadd.f32 %v9958, %v9896
    %v9960 = vadd.f32 %v9959, %v9897
    %v9961 = vadd.f32 %v9960, %v9898
    %v9962 = vadd.f32 %v9961, %v9899
    %v9963 = vadd.f32 %v9962, %v9900
    %v9964 = vadd.f32 %v9963, %v9901
    %v9965 = vadd.f32 %v9964, %v9902
    %v9966 = vadd.f32 %v9965, %v9903
    %v9967 = vadd.f32 %v9966, %v9904
    %v9968 = vadd.f32 %v9967, %v9905
    %v9969 = vadd.f32 %v9968, %v9906
    %v9970 = vadd.f32 %v9969, %v9907
    %v9971 = vadd.f32 %v9970, %v9908
    %v9972 = vadd.f32 %v9971, %v9909
    %v9973 = vadd.f32 %v9972, %v9910
    %v9974 = vadd.f32 %v9973, %v9911
    %v9975 = vadd.f32 %v9974, %v9912
    %v9976 = vadd.f32 %v9975, %v9913
    %v9977 = vadd.f32 %v9976, %v9914
    %v9978 = vadd.f32 %v9977, %v9915
    %v9979 = vadd.f32 %v9978, %v9916
    %v9980 = vadd.f32 %v9979, %v9917
    %v9981 = vadd.f32 %v9980, %v9918
    %v9982 = vadd.f32 %v9981, %v9919
    %v9983 = vadd.f32 %v9982, %v9920
    %v9984 = vadd.f32 %v9983, %v9921
    %v9985 = vadd.f32 %v9984, %v9922
    %v9986 = vadd.f32 %v9985, %v9923
    %v9987 = vadd.f32 %v9986, %v9924
    %v9988 = vadd.f32 %v9987, %v9925
    %v9989 = vadd.f32 %v9988, %v9926
    %v9990 = vadd.f32 %v9989, %v9927
    %v9991 = vadd.f32 %v9990, %v9928
    %v9992 = vadd.f32 %v9991, %v9929
    %v9993 = vadd.f32 %v9992, %v9930
    %v9994 = vadd.f32 %v9993, %v9931
    %v9995 = vadd.f32 %v9994, %v9932
    %v9996 = vadd.f32 %v9995, %v9933
    %v9997 = vadd.f32 %v9996, %v9934
    %v9998 = vadd.f32 %v9997, %v9935
    %v9999 = vadd.f32 %v9998, %v9936
    %v10000 = vrot.slane %v9999, 4
    %v10001 = vadd.f32 %v9999, %v10000
    %v10002 = vrot.slane %v10001, 2
    %v10003 = vadd.f32 %v10001, %v10002
    %v10004 = vrot.slane %v10003, 1
    %v10005 = vadd.f32 %v10003, %v10004
    %v10006 = vmul.f32 %v9873, %v9873
    %v10007 = vmul.f32 %v9874, %v9874
    %v10008 = vmul.f32 %v9875, %v9875
    %v10009 = vmul.f32 %v9876, %v9876
    %v10010 = vmul.f32 %v9877, %v9877
    %v10011 = vmul.f32 %v9878, %v9878
    %v10012 = vmul.f32 %v9879, %v9879
    %v10013 = vmul.f32 %v9880, %v9880
    %v10014 = vmul.f32 %v9881, %v9881
    %v10015 = vmul.f32 %v9882, %v9882
    %v10016 = vmul.f32 %v9883, %v9883
    %v10017 = vmul.f32 %v9884, %v9884
    %v10018 = vmul.f32 %v9885, %v9885
    %v10019 = vmul.f32 %v9886, %v9886
    %v10020 = vmul.f32 %v9887, %v9887
    %v10021 = vmul.f32 %v9888, %v9888
    %v10022 = vmul.f32 %v9889, %v9889
    %v10023 = vmul.f32 %v9890, %v9890
    %v10024 = vmul.f32 %v9891, %v9891
    %v10025 = vmul.f32 %v9892, %v9892
    %v10026 = vmul.f32 %v9893, %v9893
    %v10027 = vmul.f32 %v9894, %v9894
    %v10028 = vmul.f32 %v9895, %v9895
    %v10029 = vmul.f32 %v9896, %v9896
    %v10030 = vmul.f32 %v9897, %v9897
    %v10031 = vmul.f32 %v9898, %v9898
    %v10032 = vmul.f32 %v9899, %v9899
    %v10033 = vmul.f32 %v9900, %v9900
    %v10034 = vmul.f32 %v9901, %v9901
    %v10035 = vmul.f32 %v9902, %v9902
    %v10036 = vmul.f32 %v9903, %v9903
    %v10037 = vmul.f32 %v9904, %v9904
    %v10038 = vmul.f32 %v9905, %v9905
    %v10039 = vmul.f32 %v9906, %v9906
    %v10040 = vmul.f32 %v9907, %v9907
    %v10041 = vmul.f32 %v9908, %v9908
    %v10042 = vmul.f32 %v9909, %v9909
    %v10043 = vmul.f32 %v9910, %v9910
    %v10044 = vmul.f32 %v9911, %v9911
    %v10045 = vmul.f32 %v9912, %v9912
    %v10046 = vmul.f32 %v9913, %v9913
    %v10047 = vmul.f32 %v9914, %v9914
    %v10048 = vmul.f32 %v9915, %v9915
    %v10049 = vmul.f32 %v9916, %v9916
    %v10050 = vmul.f32 %v9917, %v9917
    %v10051 = vmul.f32 %v9918, %v9918
    %v10052 = vmul.f32 %v9919, %v9919
    %v10053 = vmul.f32 %v9920, %v9920
    %v10054 = vmul.f32 %v9921, %v9921
    %v10055 = vmul.f32 %v9922, %v9922
    %v10056 = vmul.f32 %v9923, %v9923
    %v10057 = vmul.f32 %v9924, %v9924
    %v10058 = vmul.f32 %v9925, %v9925
    %v10059 = vmul.f32 %v9926, %v9926
    %v10060 = vmul.f32 %v9927, %v9927
    %v10061 = vmul.f32 %v9928, %v9928
    %v10062 = vmul.f32 %v9929, %v9929
    %v10063 = vmul.f32 %v9930, %v9930
    %v10064 = vmul.f32 %v9931, %v9931
    %v10065 = vmul.f32 %v9932, %v9932
    %v10066 = vmul.f32 %v9933, %v9933
    %v10067 = vmul.f32 %v9934, %v9934
    %v10068 = vmul.f32 %v9935, %v9935
    %v10069 = vmul.f32 %v9936, %v9936
    %v10070 = vadd.f32 %v10006, %v10007
    %v10071 = vadd.f32 %v10070, %v10008
    %v10072 = vadd.f32 %v10071, %v10009
    %v10073 = vadd.f32 %v10072, %v10010
    %v10074 = vadd.f32 %v10073, %v10011
    %v10075 = vadd.f32 %v10074, %v10012
    %v10076 = vadd.f32 %v10075, %v10013
    %v10077 = vadd.f32 %v10076, %v10014
    %v10078 = vadd.f32 %v10077, %v10015
    %v10079 = vadd.f32 %v10078, %v10016
    %v10080 = vadd.f32 %v10079, %v10017
    %v10081 = vadd.f32 %v10080, %v10018
    %v10082 = vadd.f32 %v10081, %v10019
    %v10083 = vadd.f32 %v10082, %v10020
    %v10084 = vadd.f32 %v10083, %v10021
    %v10085 = vadd.f32 %v10084, %v10022
    %v10086 = vadd.f32 %v10085, %v10023
    %v10087 = vadd.f32 %v10086, %v10024
    %v10088 = vadd.f32 %v10087, %v10025
    %v10089 = vadd.f32 %v10088, %v10026
    %v10090 = vadd.f32 %v10089, %v10027
    %v10091 = vadd.f32 %v10090, %v10028
    %v10092 = vadd.f32 %v10091, %v10029
    %v10093 = vadd.f32 %v10092, %v10030
    %v10094 = vadd.f32 %v10093, %v10031
    %v10095 = vadd.f32 %v10094, %v10032
    %v10096 = vadd.f32 %v10095, %v10033
    %v10097 = vadd.f32 %v10096, %v10034
    %v10098 = vadd.f32 %v10097, %v10035
    %v10099 = vadd.f32 %v10098, %v10036
    %v10100 = vadd.f32 %v10099, %v10037
    %v10101 = vadd.f32 %v10100, %v10038
    %v10102 = vadd.f32 %v10101, %v10039
    %v10103 = vadd.f32 %v10102, %v10040
    %v10104 = vadd.f32 %v10103, %v10041
    %v10105 = vadd.f32 %v10104, %v10042
    %v10106 = vadd.f32 %v10105, %v10043
    %v10107 = vadd.f32 %v10106, %v10044
    %v10108 = vadd.f32 %v10107, %v10045
    %v10109 = vadd.f32 %v10108, %v10046
    %v10110 = vadd.f32 %v10109, %v10047
    %v10111 = vadd.f32 %v10110, %v10048
    %v10112 = vadd.f32 %v10111, %v10049
    %v10113 = vadd.f32 %v10112, %v10050
    %v10114 = vadd.f32 %v10113, %v10051
    %v10115 = vadd.f32 %v10114, %v10052
    %v10116 = vadd.f32 %v10115, %v10053
    %v10117 = vadd.f32 %v10116, %v10054
    %v10118 = vadd.f32 %v10117, %v10055
    %v10119 = vadd.f32 %v10118, %v10056
    %v10120 = vadd.f32 %v10119, %v10057
    %v10121 = vadd.f32 %v10120, %v10058
    %v10122 = vadd.f32 %v10121, %v10059
    %v10123 = vadd.f32 %v10122, %v10060
    %v10124 = vadd.f32 %v10123, %v10061
    %v10125 = vadd.f32 %v10124, %v10062
    %v10126 = vadd.f32 %v10125, %v10063
    %v10127 = vadd.f32 %v10126, %v10064
    %v10128 = vadd.f32 %v10127, %v10065
    %v10129 = vadd.f32 %v10128, %v10066
    %v10130 = vadd.f32 %v10129, %v10067
    %v10131 = vadd.f32 %v10130, %v10068
    %v10132 = vadd.f32 %v10131, %v10069
    %v10133 = vrot.slane %v10132, 4
    %v10134 = vadd.f32 %v10132, %v10133
    %v10135 = vrot.slane %v10134, 2
    %v10136 = vadd.f32 %v10134, %v10135
    %v10137 = vrot.slane %v10136, 1
    %v10138 = vadd.f32 %v10136, %v10137
    %v10139 = vmul.f32 %v10005, 0.001953125
    %v10140 = vmul.f32 %v10138, 0.001953125
    %v10141 = vmul.f32 %v10139, %v10139
    %v10142 = vsub.f32 %v10140, %v10141
    %v10143 = vld [vmem:[%s5] sm:$0x1]
    %v10144 = vadd.f32 %v10142, 1e-05
    %v10145 = vrsqrt.pop %v10144
    %v10146 = vmul.f32 %v10143, %v10145
    %v10147 = vld [vmem:[%s6] sm:$0x1]
    %v10148 = vmul.f32 %v10139, %v10146
    %v10149 = vsub.f32 %v10147, %v10148
    %v10151 = vlaneseq
    %v10152 = vshrl.u32 %v10151, 7
    %v10153 = vsub.s32 0, %v10152
    %v10154 = vrot.slane %v10146, %v10153
    %v10156 = vmul.f32 %v9873, %v10154
    %v10157 = vmul.f32 %v9874, %v10154
    %v10158 = vmul.f32 %v9875, %v10154
    %v10159 = vmul.f32 %v9876, %v10154
    %v10160 = vmul.f32 %v9877, %v10154
    %v10161 = vmul.f32 %v9878, %v10154
    %v10162 = vmul.f32 %v9879, %v10154
    %v10163 = vmul.f32 %v9880, %v10154
    %v10164 = vmul.f32 %v9881, %v10154
    %v10165 = vmul.f32 %v9882, %v10154
    %v10166 = vmul.f32 %v9883, %v10154
    %v10167 = vmul.f32 %v9884, %v10154
    %v10168 = vmul.f32 %v9885, %v10154
    %v10169 = vmul.f32 %v9886, %v10154
    %v10170 = vmul.f32 %v9887, %v10154
    %v10171 = vmul.f32 %v9888, %v10154
    %v10172 = vmul.f32 %v9889, %v10154
    %v10173 = vmul.f32 %v9890, %v10154
    %v10174 = vmul.f32 %v9891, %v10154
    %v10175 = vmul.f32 %v9892, %v10154
    %v10176 = vmul.f32 %v9893, %v10154
    %v10177 = vmul.f32 %v9894, %v10154
    %v10178 = vmul.f32 %v9895, %v10154
    %v10179 = vmul.f32 %v9896, %v10154
    %v10180 = vmul.f32 %v9897, %v10154
    %v10181 = vmul.f32 %v9898, %v10154
    %v10182 = vmul.f32 %v9899, %v10154
    %v10183 = vmul.f32 %v9900, %v10154
    %v10184 = vmul.f32 %v9901, %v10154
    %v10185 = vmul.f32 %v9902, %v10154
    %v10186 = vmul.f32 %v9903, %v10154
    %v10187 = vmul.f32 %v9904, %v10154
    %v10188 = vmul.f32 %v9905, %v10154
    %v10189 = vmul.f32 %v9906, %v10154
    %v10190 = vmul.f32 %v9907, %v10154
    %v10191 = vmul.f32 %v9908, %v10154
    %v10192 = vmul.f32 %v9909, %v10154
    %v10193 = vmul.f32 %v9910, %v10154
    %v10194 = vmul.f32 %v9911, %v10154
    %v10195 = vmul.f32 %v9912, %v10154
    %v10196 = vmul.f32 %v9913, %v10154
    %v10197 = vmul.f32 %v9914, %v10154
    %v10198 = vmul.f32 %v9915, %v10154
    %v10199 = vmul.f32 %v9916, %v10154
    %v10200 = vmul.f32 %v9917, %v10154
    %v10201 = vmul.f32 %v9918, %v10154
    %v10202 = vmul.f32 %v9919, %v10154
    %v10203 = vmul.f32 %v9920, %v10154
    %v10204 = vmul.f32 %v9921, %v10154
    %v10205 = vmul.f32 %v9922, %v10154
    %v10206 = vmul.f32 %v9923, %v10154
    %v10207 = vmul.f32 %v9924, %v10154
    %v10208 = vmul.f32 %v9925, %v10154
    %v10209 = vmul.f32 %v9926, %v10154
    %v10210 = vmul.f32 %v9927, %v10154
    %v10211 = vmul.f32 %v9928, %v10154
    %v10212 = vmul.f32 %v9929, %v10154
    %v10213 = vmul.f32 %v9930, %v10154
    %v10214 = vmul.f32 %v9931, %v10154
    %v10215 = vmul.f32 %v9932, %v10154
    %v10216 = vmul.f32 %v9933, %v10154
    %v10217 = vmul.f32 %v9934, %v10154
    %v10218 = vmul.f32 %v9935, %v10154
    %v10219 = vmul.f32 %v9936, %v10154
    %v10221 = vlaneseq
    %v10222 = vshrl.u32 %v10221, 7
    %v10223 = vsub.s32 0, %v10222
    %v10224 = vrot.slane %v10149, %v10223
    %v10226 = vadd.f32 %v10156, %v10224
    %v10227 = vadd.f32 %v10157, %v10224
    %v10228 = vadd.f32 %v10158, %v10224
    %v10229 = vadd.f32 %v10159, %v10224
    %v10230 = vadd.f32 %v10160, %v10224
    %v10231 = vadd.f32 %v10161, %v10224
    %v10232 = vadd.f32 %v10162, %v10224
    %v10233 = vadd.f32 %v10163, %v10224
    %v10234 = vadd.f32 %v10164, %v10224
    %v10235 = vadd.f32 %v10165, %v10224
    %v10236 = vadd.f32 %v10166, %v10224
    %v10237 = vadd.f32 %v10167, %v10224
    %v10238 = vadd.f32 %v10168, %v10224
    %v10239 = vadd.f32 %v10169, %v10224
    %v10240 = vadd.f32 %v10170, %v10224
    %v10241 = vadd.f32 %v10171, %v10224
    %v10242 = vadd.f32 %v10172, %v10224
    %v10243 = vadd.f32 %v10173, %v10224
    %v10244 = vadd.f32 %v10174, %v10224
    %v10245 = vadd.f32 %v10175, %v10224
    %v10246 = vadd.f32 %v10176, %v10224
    %v10247 = vadd.f32 %v10177, %v10224
    %v10248 = vadd.f32 %v10178, %v10224
    %v10249 = vadd.f32 %v10179, %v10224
    %v10250 = vadd.f32 %v10180, %v10224
    %v10251 = vadd.f32 %v10181, %v10224
    %v10252 = vadd.f32 %v10182, %v10224
    %v10253 = vadd.f32 %v10183, %v10224
    %v10254 = vadd.f32 %v10184, %v10224
    %v10255 = vadd.f32 %v10185, %v10224
    %v10256 = vadd.f32 %v10186, %v10224
    %v10257 = vadd.f32 %v10187, %v10224
    %v10258 = vadd.f32 %v10188, %v10224
    %v10259 = vadd.f32 %v10189, %v10224
    %v10260 = vadd.f32 %v10190, %v10224
    %v10261 = vadd.f32 %v10191, %v10224
    %v10262 = vadd.f32 %v10192, %v10224
    %v10263 = vadd.f32 %v10193, %v10224
    %v10264 = vadd.f32 %v10194, %v10224
    %v10265 = vadd.f32 %v10195, %v10224
    %v10266 = vadd.f32 %v10196, %v10224
    %v10267 = vadd.f32 %v10197, %v10224
    %v10268 = vadd.f32 %v10198, %v10224
    %v10269 = vadd.f32 %v10199, %v10224
    %v10270 = vadd.f32 %v10200, %v10224
    %v10271 = vadd.f32 %v10201, %v10224
    %v10272 = vadd.f32 %v10202, %v10224
    %v10273 = vadd.f32 %v10203, %v10224
    %v10274 = vadd.f32 %v10204, %v10224
    %v10275 = vadd.f32 %v10205, %v10224
    %v10276 = vadd.f32 %v10206, %v10224
    %v10277 = vadd.f32 %v10207, %v10224
    %v10278 = vadd.f32 %v10208, %v10224
    %v10279 = vadd.f32 %v10209, %v10224
    %v10280 = vadd.f32 %v10210, %v10224
    %v10281 = vadd.f32 %v10211, %v10224
    %v10282 = vadd.f32 %v10212, %v10224
    %v10283 = vadd.f32 %v10213, %v10224
    %v10284 = vadd.f32 %v10214, %v10224
    %v10285 = vadd.f32 %v10215, %v10224
    %v10286 = vadd.f32 %v10216, %v10224
    %v10287 = vadd.f32 %v10217, %v10224
    %v10288 = vadd.f32 %v10218, %v10224
    %v10289 = vadd.f32 %v10219, %v10224
    %v10290 = vld [vmem:[%s855 + $0x1] sm:$0xff]
    %v10291 = vld [vmem:[%s855 + $0x9] sm:$0xff]
    %v10292 = vld [vmem:[%s855 + $0x19] sm:$0xff]
    %v10293 = vld [vmem:[%s855 + $0x21] sm:$0xff]
    %v10294 = vld [vmem:[%s855 + $0x31] sm:$0xff]
    %v10295 = vld [vmem:[%s855 + $0x39] sm:$0xff]
    %v10296 = vld [vmem:[%s855 + $0x49] sm:$0xff]
    %v10297 = vld [vmem:[%s855 + $0x51] sm:$0xff]
    %v10298 = vld [vmem:[%s855 + $0x61] sm:$0xff]
    %v10299 = vld [vmem:[%s855 + $0x69] sm:$0xff]
    %v10300 = vld [vmem:[%s855 + $0x79] sm:$0xff]
    %v10301 = vld [vmem:[%s855 + $0x81] sm:$0xff]
    %v10302 = vld [vmem:[%s855 + $0x91] sm:$0xff]
    %v10303 = vld [vmem:[%s855 + $0x99] sm:$0xff]
    %v10304 = vld [vmem:[%s855 + $0xa9] sm:$0xff]
    %v10305 = vld [vmem:[%s855 + $0xb1] sm:$0xff]
    %v10306 = vld [vmem:[%s855 + $0xc1] sm:$0xff]
    %v10307 = vld [vmem:[%s855 + $0xc9] sm:$0xff]
    %v10308 = vld [vmem:[%s855 + $0xd9] sm:$0xff]
    %v10309 = vld [vmem:[%s855 + $0xe1] sm:$0xff]
    %v10310 = vld [vmem:[%s855 + $0xf1] sm:$0xff]
    %v10311 = vld [vmem:[%s855 + $0xf9] sm:$0xff]
    %v10312 = vld [vmem:[%s855 + $0x109] sm:$0xff]
    %v10313 = vld [vmem:[%s855 + $0x111] sm:$0xff]
    %v10314 = vld [vmem:[%s855 + $0x121] sm:$0xff]
    %v10315 = vld [vmem:[%s855 + $0x129] sm:$0xff]
    %v10316 = vld [vmem:[%s855 + $0x139] sm:$0xff]
    %v10317 = vld [vmem:[%s855 + $0x141] sm:$0xff]
    %v10318 = vld [vmem:[%s855 + $0x151] sm:$0xff]
    %v10319 = vld [vmem:[%s855 + $0x159] sm:$0xff]
    %v10320 = vld [vmem:[%s855 + $0x169] sm:$0xff]
    %v10321 = vld [vmem:[%s855 + $0x171] sm:$0xff]
    %v10322 = vld [vmem:[%s855 + $0x1b1] sm:$0xff]
    %v10323 = vld [vmem:[%s855 + $0x1b9] sm:$0xff]
    %v10324 = vld [vmem:[%s855 + $0x1c9] sm:$0xff]
    %v10325 = vld [vmem:[%s855 + $0x1d1] sm:$0xff]
    %v10326 = vld [vmem:[%s855 + $0x1e1] sm:$0xff]
    %v10327 = vld [vmem:[%s855 + $0x1e9] sm:$0xff]
    %v10328 = vld [vmem:[%s855 + $0x1f9] sm:$0xff]
    %v10329 = vld [vmem:[%s855 + $0x201] sm:$0xff]
    %v10330 = vld [vmem:[%s855 + $0x211] sm:$0xff]
    %v10331 = vld [vmem:[%s855 + $0x219] sm:$0xff]
    %v10332 = vld [vmem:[%s855 + $0x229] sm:$0xff]
    %v10333 = vld [vmem:[%s855 + $0x231] sm:$0xff]
    %v10334 = vld [vmem:[%s855 + $0x241] sm:$0xff]
    %v10335 = vld [vmem:[%s855 + $0x249] sm:$0xff]
    %v10336 = vld [vmem:[%s855 + $0x259] sm:$0xff]
    %v10337 = vld [vmem:[%s855 + $0x261] sm:$0xff]
    %v10338 = vld [vmem:[%s855 + $0x271] sm:$0xff]
    %v10339 = vld [vmem:[%s855 + $0x279] sm:$0xff]
    %v10340 = vld [vmem:[%s855 + $0x289] sm:$0xff]
    %v10341 = vld [vmem:[%s855 + $0x291] sm:$0xff]
    %v10342 = vld [vmem:[%s855 + $0x2a1] sm:$0xff]
    %v10343 = vld [vmem:[%s855 + $0x2a9] sm:$0xff]
    %v10344 = vld [vmem:[%s855 + $0x2b9] sm:$0xff]
    %v10345 = vld [vmem:[%s855 + $0x2c1] sm:$0xff]
    %v10346 = vld [vmem:[%s855 + $0x2d1] sm:$0xff]
    %v10347 = vld [vmem:[%s855 + $0x2d9] sm:$0xff]
    %v10348 = vld [vmem:[%s855 + $0x2e9] sm:$0xff]
    %v10349 = vld [vmem:[%s855 + $0x2f1] sm:$0xff]
    %v10350 = vld [vmem:[%s855 + $0x301] sm:$0xff]
    %v10351 = vld [vmem:[%s855 + $0x309] sm:$0xff]
    %v10352 = vld [vmem:[%s855 + $0x319] sm:$0xff]
    %v10353 = vld [vmem:[%s855 + $0x321] sm:$0xff]
    %v10354 = vadd.f32 %v10290, %v10226
    %v10355 = vadd.f32 %v10291, %v10227
    %v10356 = vadd.f32 %v10292, %v10228
    %v10357 = vadd.f32 %v10293, %v10229
    %v10358 = vadd.f32 %v10294, %v10230
    %v10359 = vadd.f32 %v10295, %v10231
    %v10360 = vadd.f32 %v10296, %v10232
    %v10361 = vadd.f32 %v10297, %v10233
    %v10362 = vadd.f32 %v10298, %v10234
    %v10363 = vadd.f32 %v10299, %v10235
    %v10364 = vadd.f32 %v10300, %v10236
    %v10365 = vadd.f32 %v10301, %v10237
    %v10366 = vadd.f32 %v10302, %v10238
    %v10367 = vadd.f32 %v10303, %v10239
    %v10368 = vadd.f32 %v10304, %v10240
    %v10369 = vadd.f32 %v10305, %v10241
    %v10370 = vadd.f32 %v10306, %v10242
    %v10371 = vadd.f32 %v10307, %v10243
    %v10372 = vadd.f32 %v10308, %v10244
    %v10373 = vadd.f32 %v10309, %v10245
    %v10374 = vadd.f32 %v10310, %v10246
    %v10375 = vadd.f32 %v10311, %v10247
    %v10376 = vadd.f32 %v10312, %v10248
    %v10377 = vadd.f32 %v10313, %v10249
    %v10378 = vadd.f32 %v10314, %v10250
    %v10379 = vadd.f32 %v10315, %v10251
    %v10380 = vadd.f32 %v10316, %v10252
    %v10381 = vadd.f32 %v10317, %v10253
    %v10382 = vadd.f32 %v10318, %v10254
    %v10383 = vadd.f32 %v10319, %v10255
    %v10384 = vadd.f32 %v10320, %v10256
    %v10385 = vadd.f32 %v10321, %v10257
    %v10386 = vadd.f32 %v10322, %v10258
    %v10387 = vadd.f32 %v10323, %v10259
    %v10388 = vadd.f32 %v10324, %v10260
    %v10389 = vadd.f32 %v10325, %v10261
    %v10390 = vadd.f32 %v10326, %v10262
    %v10391 = vadd.f32 %v10327, %v10263
    %v10392 = vadd.f32 %v10328, %v10264
    %v10393 = vadd.f32 %v10329, %v10265
    %v10394 = vadd.f32 %v10330, %v10266
    %v10395 = vadd.f32 %v10331, %v10267
    %v10396 = vadd.f32 %v10332, %v10268
    %v10397 = vadd.f32 %v10333, %v10269
    %v10398 = vadd.f32 %v10334, %v10270
    %v10399 = vadd.f32 %v10335, %v10271
    %v10400 = vadd.f32 %v10336, %v10272
    %v10401 = vadd.f32 %v10337, %v10273
    %v10402 = vadd.f32 %v10338, %v10274
    %v10403 = vadd.f32 %v10339, %v10275
    %v10404 = vadd.f32 %v10340, %v10276
    %v10405 = vadd.f32 %v10341, %v10277
    %v10406 = vadd.f32 %v10342, %v10278
    %v10407 = vadd.f32 %v10343, %v10279
    %v10408 = vadd.f32 %v10344, %v10280
    %v10409 = vadd.f32 %v10345, %v10281
    %v10410 = vadd.f32 %v10346, %v10282
    %v10411 = vadd.f32 %v10347, %v10283
    %v10412 = vadd.f32 %v10348, %v10284
    %v10413 = vadd.f32 %v10349, %v10285
    %v10414 = vadd.f32 %v10350, %v10286
    %v10415 = vadd.f32 %v10351, %v10287
    %v10416 = vadd.f32 %v10352, %v10288
    %v10417 = vadd.f32 %v10353, %v10289
    %10418 = vst [vmem:[#allocation9] sm:$0xff] %v10354
    %10419 = vst [vmem:[#allocation9 + $0x8] sm:$0xff] %v10355
    %10420 = vst [vmem:[#allocation9 + $0x10] sm:$0xff] %v10356
    %10421 = vst [vmem:[#allocation9 + $0x18] sm:$0xff] %v10357
    %10422 = vst [vmem:[#allocation9 + $0x20] sm:$0xff] %v10358
    %10423 = vst [vmem:[#allocation9 + $0x28] sm:$0xff] %v10359
    %10424 = vst [vmem:[#allocation9 + $0x30] sm:$0xff] %v10360
    %10425 = vst [vmem:[#allocation9 + $0x38] sm:$0xff] %v10361
    %10426 = vst [vmem:[#allocation9 + $0x40] sm:$0xff] %v10362
    %10427 = vst [vmem:[#allocation9 + $0x48] sm:$0xff] %v10363
    %10428 = vst [vmem:[#allocation9 + $0x50] sm:$0xff] %v10364
    %10429 = vst [vmem:[#allocation9 + $0x58] sm:$0xff] %v10365
    %10430 = vst [vmem:[#allocation9 + $0x60] sm:$0xff] %v10366
    %10431 = vst [vmem:[#allocation9 + $0x68] sm:$0xff] %v10367
    %10432 = vst [vmem:[#allocation9 + $0x70] sm:$0xff] %v10368
    %10433 = vst [vmem:[#allocation9 + $0x78] sm:$0xff] %v10369
    %10434 = vst [vmem:[#allocation9 + $0x80] sm:$0xff] %v10370
    %10435 = vst [vmem:[#allocation9 + $0x88] sm:$0xff] %v10371
    %10436 = vst [vmem:[#allocation9 + $0x90] sm:$0xff] %v10372
    %10437 = vst [vmem:[#allocation9 + $0x98] sm:$0xff] %v10373
    %10438 = vst [vmem:[#allocation9 + $0xa0] sm:$0xff] %v10374
    %10439 = vst [vmem:[#allocation9 + $0xa8] sm:$0xff] %v10375
    %10440 = vst [vmem:[#allocation9 + $0xb0] sm:$0xff] %v10376
    %10441 = vst [vmem:[#allocation9 + $0xb8] sm:$0xff] %v10377
    %10442 = vst [vmem:[#allocation9 + $0xc0] sm:$0xff] %v10378
    %10443 = vst [vmem:[#allocation9 + $0xc8] sm:$0xff] %v10379
    %10444 = vst [vmem:[#allocation9 + $0xd0] sm:$0xff] %v10380
    %10445 = vst [vmem:[#allocation9 + $0xd8] sm:$0xff] %v10381
    %10446 = vst [vmem:[#allocation9 + $0xe0] sm:$0xff] %v10382
    %10447 = vst [vmem:[#allocation9 + $0xe8] sm:$0xff] %v10383
    %10448 = vst [vmem:[#allocation9 + $0xf0] sm:$0xff] %v10384
    %10449 = vst [vmem:[#allocation9 + $0xf8] sm:$0xff] %v10385
    %10450 = vst [vmem:[#allocation9 + $0x100] sm:$0xff] %v10386
    %10451 = vst [vmem:[#allocation9 + $0x108] sm:$0xff] %v10387
    %10452 = vst [vmem:[#allocation9 + $0x110] sm:$0xff] %v10388
    %10453 = vst [vmem:[#allocation9 + $0x118] sm:$0xff] %v10389
    %10454 = vst [vmem:[#allocation9 + $0x120] sm:$0xff] %v10390
    %10455 = vst [vmem:[#allocation9 + $0x128] sm:$0xff] %v10391
    %10456 = vst [vmem:[#allocation9 + $0x130] sm:$0xff] %v10392
    %10457 = vst [vmem:[#allocation9 + $0x138] sm:$0xff] %v10393
    %10458 = vst [vmem:[#allocation9 + $0x140] sm:$0xff] %v10394
    %10459 = vst [vmem:[#allocation9 + $0x148] sm:$0xff] %v10395
    %10460 = vst [vmem:[#allocation9 + $0x150] sm:$0xff] %v10396
    %10461 = vst [vmem:[#allocation9 + $0x158] sm:$0xff] %v10397
    %10462 = vst [vmem:[#allocation9 + $0x160] sm:$0xff] %v10398
    %10463 = vst [vmem:[#allocation9 + $0x168] sm:$0xff] %v10399
    %10464 = vst [vmem:[#allocation9 + $0x170] sm:$0xff] %v10400
    %10465 = vst [vmem:[#allocation9 + $0x178] sm:$0xff] %v10401
    %10466 = vst [vmem:[#allocation9 + $0x180] sm:$0xff] %v10402
    %10467 = vst [vmem:[#allocation9 + $0x188] sm:$0xff] %v10403
    %10468 = vst [vmem:[#allocation9 + $0x190] sm:$0xff] %v10404
    %10469 = vst [vmem:[#allocation9 + $0x198] sm:$0xff] %v10405
    %10470 = vst [vmem:[#allocation9 + $0x1a0] sm:$0xff] %v10406
    %10471 = vst [vmem:[#allocation9 + $0x1a8] sm:$0xff] %v10407
    %10472 = vst [vmem:[#allocation9 + $0x1b0] sm:$0xff] %v10408
    %10473 = vst [vmem:[#allocation9 + $0x1b8] sm:$0xff] %v10409
    %10474 = vst [vmem:[#allocation9 + $0x1c0] sm:$0xff] %v10410
    %10475 = vst [vmem:[#allocation9 + $0x1c8] sm:$0xff] %v10411
    %10476 = vst [vmem:[#allocation9 + $0x1d0] sm:$0xff] %v10412
    %10477 = vst [vmem:[#allocation9 + $0x1d8] sm:$0xff] %v10413
    %10478 = vst [vmem:[#allocation9 + $0x1e0] sm:$0xff] %v10414
    %10479 = vst [vmem:[#allocation9 + $0x1e8] sm:$0xff] %v10415
    %10480 = vst [vmem:[#allocation9 + $0x1f0] sm:$0xff] %v10416
    %10481 = vst [vmem:[#allocation9 + $0x1f8] sm:$0xff] %v10417
    // Predicated region
    $region42: #{tpu_custom_call.1} parent=1 // pred_check
      _
    $region43: #{tpu_custom_call.1} parent=1 // pred_check_branch
      %10483 = sbr.rel (0) target = $region45
    $region44: #{tpu_custom_call.1} parent=1 // pred_region
      %s10485 = ssub.s32 8192, 8192
      %10486 = vsyncadd [#allocation5], %s10485
      %s10487 = sshll.u32 [#allocation9], 4
      %s10488 = int_to_ptr.vmem [resolvable:$true] %s10487
      %10493 = dma.vmem_to_hbm [thread:$0]  %s10488, 8192, %s7, [#allocation5], 128, 128, 8
    $region45: #{tpu_custom_call.1} parent=1 // pred_fallthru
      _
    // Predicated region
    $region46: #{tpu_custom_call.1} parent=1 // pred_check
      _
    $region47: #{tpu_custom_call.1} parent=1 // pred_check_branch
      %10495 = sbr.rel (0) target = $region49
    $region48: #{tpu_custom_call.1} parent=1 // pred_region
      %10496 = dma.done [#allocation5], 8192
    $region49: #{tpu_custom_call.1} parent=1 // pred_fallthru
      _
    %10497 = vsyncpa [#allocation4], 1
    %10498 = vsyncpa [#allocation7], 1
    %10499 = vsyncpa [#allocation5], 1

</llo_original>
